<compile_context>
chip_gen: v7x
topology: tpu7x:2x2x1
jax: 0.10.0
libtpu: 0.0.40
codegen_flags: <defaults>
</compile_context>

<pallas_src>
import functools

import jax
import jax.numpy as jnp
import numpy as np
from jax.experimental import pallas as pl
from jax.experimental.pallas import tpu as pltpu

EPS = 1e-5
LANE = 128   # channel lane-tile: all conv inputs/outputs are padded to 128 lanes


# ----------------------------------------------------------------------------
# Pallas kernel: 3x3 conv (stride 1, pad 1) on one (image, row-strip) block
# ----------------------------------------------------------------------------
def conv3x3_kernel(TH, W, fuse_pre_bnrelu, post_prelu, emit_stats,
                   x_ref, w_ref, b_ref, scale_ref, shift_ref, alpha_ref,
                   z_ref, stats_ref):
    """One (image n, row-strip s) per grid step; grid = (N, S).

    x_ref     : (1, TH+2, W+2, LANE) bf16  strip with 1-pixel halo, lane-padded
    w_ref     : (9, LANE, LANE)      bf16  per-tap weight tiles (zero-padded)
    b_ref     : (1, LANE)            f32
    scale_ref : (1, LANE)            f32   fused previous-stage BN scale
    shift_ref : (1, LANE)            f32   fused previous-stage BN shift
    alpha_ref : (1, LANE)            f32   PReLU slope
    z_ref     : (1, TH*W, LANE)      bf16  lane-dense conv output (pre-BN)
    stats_ref : (1, 8, LANE)         f32   row0 = per-channel sum, row1 = sumsq
    """
    x = x_ref[0]                                            # (TH+2, W+2, LANE)

    if fuse_pre_bnrelu:
        # previous stage's BatchNorm + ReLU fused into this conv's input read,
        # applied on the full 128-lane block (pad lanes have scale=shift=0).
        xf = x.astype(jnp.float32) * scale_ref[...] + shift_ref[...]
        xf = jnp.maximum(xf, 0.0)
        # The conv's zero padding must survive the fused affine: re-zero ONLY the
        # global border ring (interior strip halo rows are neighbour data and keep BN).
        rows = jax.lax.broadcasted_iota(jnp.int32, (TH + 2, W + 2, LANE), 0)
        cols = jax.lax.broadcasted_iota(jnp.int32, (TH + 2, W + 2, LANE), 1)
        s = pl.program_id(1)
        border = (((rows == 0) & (s == 0))
                  | ((rows == TH + 1) & (s == pl.num_programs(1) - 1))
                  | (cols == 0) | (cols == W + 1))
        xf = jnp.where(border, 0.0, xf)
        x = xf.astype(jnp.bfloat16)

    # 3x3 conv = 9 tap-accumulated MXU matmuls read directly from the halo block
    # (no im2col slab, no scratch, no zero-fills); f32 accumulation.
    acc = None
    for kh in range(3):
        for kw in range(3):
            t = kh * 3 + kw
            patch = x[kh:kh + TH, kw:kw + W, :].reshape(TH * W, LANE)
            d = jnp.dot(patch, w_ref[t], preferred_element_type=jnp.float32)
            acc = d if acc is None else acc + d
    z = acc + b_ref[...]                                    # (TH*W, LANE) f32

    if emit_stats:
        # per-strip BN partial statistics from the f32 accumulator (pre bf16 cast)
        stats_ref[0, 0:1, :] = jnp.sum(z, axis=0, keepdims=True)
        stats_ref[0, 1:2, :] = jnp.sum(z * z, axis=0, keepdims=True)
        # rows 2..7 of the stats block are never read downstream -> left stale

    if post_prelu:
        z = jnp.where(z > 0, z, z * alpha_ref[...])

    z_ref[0] = z.astype(jnp.bfloat16)


def _choose_strip_height(H, W):
    """Largest divisor of H whose per-strip working set fits a conservative VMEM
    budget (covers v5e's 16 MiB default scoped limit and v7x's 64 MiB physical)."""
    budget = 8 << 20

    def strip_bytes(th):
        x_in = 2 * (th + 2) * (W + 2) * LANE * 2   # double-buffered bf16 input strip
        z_out = 2 * th * W * LANE * 2              # double-buffered bf16 output
        acc = 2 * th * W * LANE * 4                # f32 accumulator / tap temps
        wgt = 2 * 9 * LANE * LANE * 2              # weight tiles
        return x_in + z_out + acc + wgt

    for th in range(H, 0, -1):
        if H % th == 0 and strip_bytes(th) <= budget:
            return th
    return 1


def conv3x3_pallas(x_nhwc, w9, b_pad, scale_pad, shift_pad, alpha_pad, *,
                   fuse_pre_bnrelu, post_prelu, emit_stats=True):
    """3x3 / stride-1 / pad-1 conv.  x_nhwc: (N, H, W, C) bf16 with C <= LANE.
    Returns z: (N, H, W, LANE) bf16 and stats: (N*S, 8, LANE) f32 partials."""
    N, H, W, C = x_nhwc.shape
    assert C <= LANE  # TODO(synk): add channel tiling for widths beyond one lane tile
    if C < LANE:
        # lane-pad channels so every in-kernel access is lane-dense (128 wide)
        x_nhwc = jnp.pad(x_nhwc, ((0, 0), (0, 0), (0, 0), (0, LANE - C)))
    # conv "padding=1" zero halo built in the XLA glue (no in-kernel zero-fill)
    xp = jnp.pad(x_nhwc, ((0, 0), (1, 1), (1, 1), (0, 0)))

    TH = _choose_strip_height(H, W)
    S = H // TH
    if S == 1:
        xs = xp                                            # (N, H+2, W+2, LANE)
    else:
        # overlapping row strips (1-row halo each side), stacked once in HBM
        xs = jnp.stack([xp[:, s * TH:s * TH + TH + 2] for s in range(S)],
                       axis=1).reshape(N * S, TH + 2, W + 2, LANE)

    kernel = functools.partial(conv3x3_kernel, TH, W,
                               fuse_pre_bnrelu, post_prelu, emit_stats)
    z, stats = pl.pallas_call(
        kernel,
        out_shape=(
            jax.ShapeDtypeStruct((N * S, TH * W, LANE), jnp.bfloat16),
            jax.ShapeDtypeStruct((N * S, 8, LANE), jnp.float32),
        ),
        grid=(N, S),
        in_specs=[
            pl.BlockSpec((1, TH + 2, W + 2, LANE), lambda n, s: (n * S + s, 0, 0, 0)),
            pl.BlockSpec((9, LANE, LANE), lambda n, s: (0, 0, 0)),
            pl.BlockSpec((1, LANE), lambda n, s: (0, 0)),
            pl.BlockSpec((1, LANE), lambda n, s: (0, 0)),
            pl.BlockSpec((1, LANE), lambda n, s: (0, 0)),
            pl.BlockSpec((1, LANE), lambda n, s: (0, 0)),
        ],
        out_specs=(
            pl.BlockSpec((1, TH * W, LANE), lambda n, s: (n * S + s, 0, 0)),
            pl.BlockSpec((1, 8, LANE), lambda n, s: (n * S + s, 0, 0)),
        ),
        # per-strip partial stats -> no carried accumulator -> both axes parallel
        compiler_params=pltpu.CompilerParams(
            dimension_semantics=("parallel", "parallel")),
    )(xs, w9, b_pad, scale_pad, shift_pad, alpha_pad)
    return z.reshape(N, H, W, LANE), stats


# ----------------------------------------------------------------------------
# Parameter packing / BN glue (plain JAX)
# ----------------------------------------------------------------------------
def _pack_w(w_hwio):
    """(3, 3, cin, cout) -> (9, LANE, LANE) bf16 per-tap weight tiles (zero-padded)."""
    kh, kw, cin, cout = w_hwio.shape
    assert kh == 3 and kw == 3 and cin <= LANE and cout <= LANE
    w9 = w_hwio.reshape(9, cin, cout).astype(jnp.float32)
    w9 = jnp.pad(w9, ((0, 0), (0, LANE - cin), (0, LANE - cout)))
    return w9.astype(jnp.bfloat16)


def _pad_vec(v):
    """(c,) -> (1, LANE) f32."""
    return jnp.pad(v.astype(jnp.float32), (0, LANE - v.shape[0])).reshape(1, LANE)


def _bn_affine(stats, cout, gamma, beta, count):
    """Training-mode BN scale/shift from per-strip (sum, sumsq) partials."""
    s = jnp.sum(stats[:, 0, :cout], axis=0)
    q = jnp.sum(stats[:, 1, :cout], axis=0)
    mean = s / count
    var = q / count - mean * mean          # biased variance (what BN normalizes with)
    scale = gamma * jax.lax.rsqrt(var + EPS)
    shift = beta - mean * scale
    return scale, shift


# ----------------------------------------------------------------------------
# Forward pass of `up`
# ----------------------------------------------------------------------------
def up_forward(x1_nchw, x2_nchw, params):
    (w1, b1, alpha, wa, ba, ga, bea, wb, bb, gb, beb) = params
    N = x1_nchw.shape[0]
    c1out = w1.shape[3]           # 2 * in_ch
    cout = wa.shape[3]            # out_ch

    zeros = jnp.zeros((1, LANE), jnp.float32)
    alpha_pad = jnp.full((1, LANE), alpha, jnp.float32)

    # ---- conv1 + PReLU (scalar-slope PReLU commutes with the PixelShuffle permutation)
    x1 = jnp.transpose(x1_nchw, (0, 2, 3, 1)).astype(jnp.bfloat16)   # NHWC
    H1, W1 = x1.shape[1], x1.shape[2]
    z1, _ = conv3x3_pallas(x1, _pack_w(w1), _pad_vec(b1), zeros, zeros, alpha_pad,
                           fuse_pre_bnrelu=False, post_prelu=True, emit_stats=False)

    # ---- PixelShuffle(2) + skip pad + channel concat: HBM-bound XLA glue, kept bf16
    cps = c1out // 4
    y = z1[..., :c1out]                                              # (N,H1,W1,c1out) bf16
    y = y.reshape(N, H1, W1, cps, 2, 2).transpose(0, 1, 4, 2, 5, 3)
    y = y.reshape(N, 2 * H1, 2 * W1, cps)

    x2 = jnp.transpose(x2_nchw, (0, 2, 3, 1)).astype(jnp.bfloat16)
    diffX = y.shape[1] - x2.shape[1]            # torch: x1.size(2) - x2.size(2)
    diffY = y.shape[2] - x2.shape[2]            # torch: x1.size(3) - x2.size(3)
    # F.pad(x2, (diffX//2, trunc(diffX/2), diffY//2, trunc(diffY/2)))  [W pair, H pair]
    x2 = jax.lax.pad(x2, jnp.array(0.0, x2.dtype),
                     ((0, 0, 0),
                      (diffY // 2, int(diffY / 2), 0),
                      (diffX // 2, int(diffX / 2), 0),
                      (0, 0, 0)))
    x = jnp.concatenate([x2, y], axis=-1)                            # (N,H2,W2,in_ch) bf16
    H2, W2 = x.shape[1], x.shape[2]
    count = N * H2 * W2

    # ---- double_conv, conv A (emits BN batch-stat partials)
    za, sa = conv3x3_pallas(x, _pack_w(wa), _pad_vec(ba), zeros, zeros, zeros,
                            fuse_pre_bnrelu=False, post_prelu=False)
    scale1, shift1 = _bn_affine(sa, cout, ga, bea, count)

    # ---- double_conv, conv B with BN1 + ReLU fused into its (already 128-lane) input
    zb, sb = conv3x3_pallas(za, _pack_w(wb), _pad_vec(bb),
                            _pad_vec(scale1), _pad_vec(shift1), zeros,
                            fuse_pre_bnrelu=True, post_prelu=False)
    scale2, shift2 = _bn_affine(sb, cout, gb, beb, count)

    # ---- final BN2 + ReLU + back to NCHW (left to XLA fusion)
    y2 = jnp.maximum(zb[..., :cout].astype(jnp.float32) * scale2 + shift2, 0.0)
    return jnp.transpose(y2, (0, 3, 1, 2))


# ----------------------------------------------------------------------------
# Pure-JAX f32 reference (mirrors the PyTorch module)
# ----------------------------------------------------------------------------
def ref_up(x1_nchw, x2_nchw, params):
    (w1, b1, alpha, wa, ba, ga, bea, wb, bb, gb, beb) = params
    x1 = jnp.transpose(x1_nchw, (0, 2, 3, 1)).astype(jnp.float32)
    x2 = jnp.transpose(x2_nchw, (0, 2, 3, 1)).astype(jnp.float32)

    def conv(x, w, b):
        return jax.lax.conv_general_dilated(
            x, w, (1, 1), ((1, 1), (1, 1)),
            dimension_numbers=("NHWC", "HWIO", "NHWC")) + b

    y = conv(x1, w1, b1)
    N, H, W, c4 = y.shape
    cps = c4 // 4
    y = y.reshape(N, H, W, cps, 2, 2).transpose(0, 1, 4, 2, 5, 3)
    y = y.reshape(N, 2 * H, 2 * W, cps)
    y = jnp.where(y > 0, y, alpha * y)                         # PReLU (scalar slope)

    diffX = y.shape[1] - x2.shape[1]
    diffY = y.shape[2] - x2.shape[2]
    x2 = jax.lax.pad(x2, jnp.array(0.0, x2.dtype),
                     ((0, 0, 0),
                      (diffY // 2, int(diffY / 2), 0),
                      (diffX // 2, int(diffX / 2), 0),
                      (0, 0, 0)))
    x = jnp.concatenate([x2, y], axis=-1)

    def block(x, w, b, g, be):
        z = conv(x, w, b)
        mean = jnp.mean(z, axis=(0, 1, 2))
        var = jnp.var(z, axis=(0, 1, 2))
        return jnp.maximum((z - mean) * jax.lax.rsqrt(var + EPS) * g + be, 0.0)

    out = block(x, wa, ba, ga, bea)
    out = block(out, wb, bb, gb, beb)
    return jnp.transpose(out, (0, 3, 1, 2))


# ----------------------------------------------------------------------------
if __name__ == "__main__":
    in_ch, out_ch = 4, 8
    N, H1, W1 = 2, 8, 8          # x1 at half resolution; x2 at full (16x16)

    key = jax.random.PRNGKey(0)
    ks = jax.random.split(key, 8)

    x1 = jax.random.normal(ks[0], (N, in_ch // 2, H1, W1), jnp.float32)
    x2 = jax.random.normal(ks[1], (N, in_ch // 2, 2 * H1, 2 * W1), jnp.float32)

    # Conv weights stored HWIO (== PyTorch OIHW transposed via (2, 3, 1, 0)).
    w1 = jax.random.normal(ks[2], (3, 3, in_ch // 2, 2 * in_ch), jnp.float32) * 0.3
    b1 = jax.random.normal(ks[3], (2 * in_ch,), jnp.float32) * 0.1
    alpha = jnp.float32(0.25)                       # nn.PReLU() default init
    wa = jax.random.normal(ks[4], (3, 3, in_ch, out_ch), jnp.float32) * 0.2
    ba = jax.random.normal(ks[5], (out_ch,), jnp.float32) * 0.1
    wb = jax.random.normal(ks[6], (3, 3, out_ch, out_ch), jnp.float32) * 0.2
    bb = jax.random.normal(ks[7], (out_ch,), jnp.float32) * 0.1
    # BatchNorm affine params at PyTorch __init__ defaults.
    ga = jnp.ones((out_ch,), jnp.float32)
    bea = jnp.zeros((out_ch,), jnp.float32)
    gb = jnp.ones((out_ch,), jnp.float32)
    beb = jnp.zeros((out_ch,), jnp.float32)
    params = (w1, b1, alpha, wa, ba, ga, bea, wb, bb, gb, beb)

    out = jax.block_until_ready(jax.jit(up_forward)(x1, x2, params))
    ref = jax.block_until_ready(ref_up(x1, x2, params))

    assert out.shape == (N, out_ch, 2 * H1, 2 * W1), out.shape
    # bf16 matmuls + bf16 activation storage -> compare at bf16-level tolerance
    np.testing.assert_allclose(np.asarray(out), np.asarray(ref), atol=5e-2, rtol=5e-2)

    print("KERNEL_OK")
</pallas_src>

<mosaic_0001>
module attributes {stable_mosaic.version = 11 : i64} {
  func.func @conv3x3_kernel(%arg0: i32, %arg1: i32, %arg2: memref<1x10x10x128xbf16, #tpu.memory_space<vmem>>, %arg3: memref<9x128x128xbf16, #tpu.memory_space<vmem>>, %arg4: memref<1x128xf32, #tpu.memory_space<vmem>>, %arg5: memref<1x128xf32, #tpu.memory_space<vmem>>, %arg6: memref<1x128xf32, #tpu.memory_space<vmem>>, %arg7: memref<1x128xf32, #tpu.memory_space<vmem>>, %arg8: memref<1x64x128xbf16, #tpu.memory_space<vmem>>, %arg9: memref<1x8x128xf32, #tpu.memory_space<vmem>>) attributes {dimension_semantics = [#tpu.dimension_semantics<parallel>, #tpu.dimension_semantics<parallel>], iteration_bounds = array<i64: 2, 1>, scalar_prefetch = 0 : i64, scratch_operands = 0 : i64, tpu.core_type = #tpu.core_type<tc>, window_params = [{transform_indices = @transform_0, window_bounds = array<i64: 1, 10, 10, 128>}, {pipeline_mode = #tpu.pipeline_mode<synchronous>, transform_indices = @transform_1, window_bounds = array<i64: 9, 128, 128>}, {pipeline_mode = #tpu.pipeline_mode<synchronous>, transform_indices = @transform_2, window_bounds = array<i64: 1, 128>}, {pipeline_mode = #tpu.pipeline_mode<synchronous>, transform_indices = @transform_3, window_bounds = array<i64: 1, 128>}, {pipeline_mode = #tpu.pipeline_mode<synchronous>, transform_indices = @transform_4, window_bounds = array<i64: 1, 128>}, {pipeline_mode = #tpu.pipeline_mode<synchronous>, transform_indices = @transform_5, window_bounds = array<i64: 1, 128>}, {transform_indices = @transform_6, window_bounds = array<i64: 1, 64, 128>}, {transform_indices = @transform_7, window_bounds = array<i64: 1, 8, 128>}]} {
    %c0 = arith.constant 0 : index
    %c0_0 = arith.constant 0 : index
    %c0_1 = arith.constant 0 : index
    %c0_2 = arith.constant 0 : index
    %0 = vector.load %arg2[%c0, %c0_0, %c0_1, %c0_2] : memref<1x10x10x128xbf16, #tpu.memory_space<vmem>>, vector<1x10x10x128xbf16>
    %1 = vector.shape_cast %0 : vector<1x10x10x128xbf16> to vector<10x10x128xbf16>
    %2 = vector.extract_strided_slice %1 {offsets = [0, 0, 0], sizes = [8, 8, 128], strides = [1, 1, 1]} : vector<10x10x128xbf16> to vector<8x8x128xbf16>
    %3 = vector.shape_cast %2 : vector<8x8x128xbf16> to vector<64x128xbf16>
    %c0_3 = arith.constant 0 : index
    %c0_4 = arith.constant 0 : index
    %c0_5 = arith.constant 0 : index
    %4 = vector.load %arg3[%c0_3, %c0_4, %c0_5] : memref<9x128x128xbf16, #tpu.memory_space<vmem>>, vector<1x128x128xbf16>
    %5 = vector.shape_cast %4 : vector<1x128x128xbf16> to vector<128x128xbf16>
    %cst = arith.constant dense<0.000000e+00> : vector<64x128xf32>
    %6 = tpu.matmul %3, %5, %cst {dimension_numbers = #tpu.dot_dimension_numbers<[1], [0], [0], [1], [0, 0, 1, 1], [], []>} : vector<64x128xbf16>, vector<128x128xbf16>, vector<64x128xf32> -> vector<64x128xf32>
    %7 = vector.extract_strided_slice %1 {offsets = [0, 1, 0], sizes = [8, 8, 128], strides = [1, 1, 1]} : vector<10x10x128xbf16> to vector<8x8x128xbf16>
    %8 = vector.shape_cast %7 : vector<8x8x128xbf16> to vector<64x128xbf16>
    %c1 = arith.constant 1 : index
    %c0_6 = arith.constant 0 : index
    %c0_7 = arith.constant 0 : index
    %9 = vector.load %arg3[%c1, %c0_6, %c0_7] : memref<9x128x128xbf16, #tpu.memory_space<vmem>>, vector<1x128x128xbf16>
    %10 = vector.shape_cast %9 : vector<1x128x128xbf16> to vector<128x128xbf16>
    %cst_8 = arith.constant dense<0.000000e+00> : vector<64x128xf32>
    %11 = tpu.matmul %8, %10, %cst_8 {dimension_numbers = #tpu.dot_dimension_numbers<[1], [0], [0], [1], [0, 0, 1, 1], [], []>} : vector<64x128xbf16>, vector<128x128xbf16>, vector<64x128xf32> -> vector<64x128xf32>
    %12 = arith.addf %6, %11 : vector<64x128xf32>
    %13 = vector.extract_strided_slice %1 {offsets = [0, 2, 0], sizes = [8, 8, 128], strides = [1, 1, 1]} : vector<10x10x128xbf16> to vector<8x8x128xbf16>
    %14 = vector.shape_cast %13 : vector<8x8x128xbf16> to vector<64x128xbf16>
    %c2 = arith.constant 2 : index
    %c0_9 = arith.constant 0 : index
    %c0_10 = arith.constant 0 : index
    %15 = vector.load %arg3[%c2, %c0_9, %c0_10] : memref<9x128x128xbf16, #tpu.memory_space<vmem>>, vector<1x128x128xbf16>
    %16 = vector.shape_cast %15 : vector<1x128x128xbf16> to vector<128x128xbf16>
    %cst_11 = arith.constant dense<0.000000e+00> : vector<64x128xf32>
    %17 = tpu.matmul %14, %16, %cst_11 {dimension_numbers = #tpu.dot_dimension_numbers<[1], [0], [0], [1], [0, 0, 1, 1], [], []>} : vector<64x128xbf16>, vector<128x128xbf16>, vector<64x128xf32> -> vector<64x128xf32>
    %18 = arith.addf %12, %17 : vector<64x128xf32>
    %19 = vector.extract_strided_slice %1 {offsets = [1, 0, 0], sizes = [8, 8, 128], strides = [1, 1, 1]} : vector<10x10x128xbf16> to vector<8x8x128xbf16>
    %20 = vector.shape_cast %19 : vector<8x8x128xbf16> to vector<64x128xbf16>
    %c3 = arith.constant 3 : index
    %c0_12 = arith.constant 0 : index
    %c0_13 = arith.constant 0 : index
    %21 = vector.load %arg3[%c3, %c0_12, %c0_13] : memref<9x128x128xbf16, #tpu.memory_space<vmem>>, vector<1x128x128xbf16>
    %22 = vector.shape_cast %21 : vector<1x128x128xbf16> to vector<128x128xbf16>
    %cst_14 = arith.constant dense<0.000000e+00> : vector<64x128xf32>
    %23 = tpu.matmul %20, %22, %cst_14 {dimension_numbers = #tpu.dot_dimension_numbers<[1], [0], [0], [1], [0, 0, 1, 1], [], []>} : vector<64x128xbf16>, vector<128x128xbf16>, vector<64x128xf32> -> vector<64x128xf32>
    %24 = arith.addf %18, %23 : vector<64x128xf32>
    %25 = vector.extract_strided_slice %1 {offsets = [1, 1, 0], sizes = [8, 8, 128], strides = [1, 1, 1]} : vector<10x10x128xbf16> to vector<8x8x128xbf16>
    %26 = vector.shape_cast %25 : vector<8x8x128xbf16> to vector<64x128xbf16>
    %c4 = arith.constant 4 : index
    %c0_15 = arith.constant 0 : index
    %c0_16 = arith.constant 0 : index
    %27 = vector.load %arg3[%c4, %c0_15, %c0_16] : memref<9x128x128xbf16, #tpu.memory_space<vmem>>, vector<1x128x128xbf16>
    %28 = vector.shape_cast %27 : vector<1x128x128xbf16> to vector<128x128xbf16>
    %cst_17 = arith.constant dense<0.000000e+00> : vector<64x128xf32>
    %29 = tpu.matmul %26, %28, %cst_17 {dimension_numbers = #tpu.dot_dimension_numbers<[1], [0], [0], [1], [0, 0, 1, 1], [], []>} : vector<64x128xbf16>, vector<128x128xbf16>, vector<64x128xf32> -> vector<64x128xf32>
    %30 = arith.addf %24, %29 : vector<64x128xf32>
    %31 = vector.extract_strided_slice %1 {offsets = [1, 2, 0], sizes = [8, 8, 128], strides = [1, 1, 1]} : vector<10x10x128xbf16> to vector<8x8x128xbf16>
    %32 = vector.shape_cast %31 : vector<8x8x128xbf16> to vector<64x128xbf16>
    %c5 = arith.constant 5 : index
    %c0_18 = arith.constant 0 : index
    %c0_19 = arith.constant 0 : index
    %33 = vector.load %arg3[%c5, %c0_18, %c0_19] : memref<9x128x128xbf16, #tpu.memory_space<vmem>>, vector<1x128x128xbf16>
    %34 = vector.shape_cast %33 : vector<1x128x128xbf16> to vector<128x128xbf16>
    %cst_20 = arith.constant dense<0.000000e+00> : vector<64x128xf32>
    %35 = tpu.matmul %32, %34, %cst_20 {dimension_numbers = #tpu.dot_dimension_numbers<[1], [0], [0], [1], [0, 0, 1, 1], [], []>} : vector<64x128xbf16>, vector<128x128xbf16>, vector<64x128xf32> -> vector<64x128xf32>
    %36 = arith.addf %30, %35 : vector<64x128xf32>
    %37 = vector.extract_strided_slice %1 {offsets = [2, 0, 0], sizes = [8, 8, 128], strides = [1, 1, 1]} : vector<10x10x128xbf16> to vector<8x8x128xbf16>
    %38 = vector.shape_cast %37 : vector<8x8x128xbf16> to vector<64x128xbf16>
    %c6 = arith.constant 6 : index
    %c0_21 = arith.constant 0 : index
    %c0_22 = arith.constant 0 : index
    %39 = vector.load %arg3[%c6, %c0_21, %c0_22] : memref<9x128x128xbf16, #tpu.memory_space<vmem>>, vector<1x128x128xbf16>
    %40 = vector.shape_cast %39 : vector<1x128x128xbf16> to vector<128x128xbf16>
    %cst_23 = arith.constant dense<0.000000e+00> : vector<64x128xf32>
    %41 = tpu.matmul %38, %40, %cst_23 {dimension_numbers = #tpu.dot_dimension_numbers<[1], [0], [0], [1], [0, 0, 1, 1], [], []>} : vector<64x128xbf16>, vector<128x128xbf16>, vector<64x128xf32> -> vector<64x128xf32>
    %42 = arith.addf %36, %41 : vector<64x128xf32>
    %43 = vector.extract_strided_slice %1 {offsets = [2, 1, 0], sizes = [8, 8, 128], strides = [1, 1, 1]} : vector<10x10x128xbf16> to vector<8x8x128xbf16>
    %44 = vector.shape_cast %43 : vector<8x8x128xbf16> to vector<64x128xbf16>
    %c7 = arith.constant 7 : index
    %c0_24 = arith.constant 0 : index
    %c0_25 = arith.constant 0 : index
    %45 = vector.load %arg3[%c7, %c0_24, %c0_25] : memref<9x128x128xbf16, #tpu.memory_space<vmem>>, vector<1x128x128xbf16>
    %46 = vector.shape_cast %45 : vector<1x128x128xbf16> to vector<128x128xbf16>
    %cst_26 = arith.constant dense<0.000000e+00> : vector<64x128xf32>
    %47 = tpu.matmul %44, %46, %cst_26 {dimension_numbers = #tpu.dot_dimension_numbers<[1], [0], [0], [1], [0, 0, 1, 1], [], []>} : vector<64x128xbf16>, vector<128x128xbf16>, vector<64x128xf32> -> vector<64x128xf32>
    %48 = arith.addf %42, %47 : vector<64x128xf32>
    %49 = vector.extract_strided_slice %1 {offsets = [2, 2, 0], sizes = [8, 8, 128], strides = [1, 1, 1]} : vector<10x10x128xbf16> to vector<8x8x128xbf16>
    %50 = vector.shape_cast %49 : vector<8x8x128xbf16> to vector<64x128xbf16>
    %c8 = arith.constant 8 : index
    %c0_27 = arith.constant 0 : index
    %c0_28 = arith.constant 0 : index
    %51 = vector.load %arg3[%c8, %c0_27, %c0_28] : memref<9x128x128xbf16, #tpu.memory_space<vmem>>, vector<1x128x128xbf16>
    %52 = vector.shape_cast %51 : vector<1x128x128xbf16> to vector<128x128xbf16>
    %cst_29 = arith.constant dense<0.000000e+00> : vector<64x128xf32>
    %53 = tpu.matmul %50, %52, %cst_29 {dimension_numbers = #tpu.dot_dimension_numbers<[1], [0], [0], [1], [0, 0, 1, 1], [], []>} : vector<64x128xbf16>, vector<128x128xbf16>, vector<64x128xf32> -> vector<64x128xf32>
    %54 = arith.addf %48, %53 : vector<64x128xf32>
    %c0_30 = arith.constant 0 : index
    %c0_31 = arith.constant 0 : index
    %55 = vector.load %arg4[%c0_30, %c0_31] : memref<1x128xf32, #tpu.memory_space<vmem>>, vector<1x128xf32>
    %56 = vector.broadcast %55 : vector<1x128xf32> to vector<64x128xf32>
    %57 = arith.addf %54, %56 : vector<64x128xf32>
    %cst_32 = arith.constant 0.000000e+00 : f32
    %58 = vector.broadcast %cst_32 : f32 to vector<64x128xf32>
    %59 = arith.cmpf ogt, %57, %58 : vector<64x128xf32>
    %c0_33 = arith.constant 0 : index
    %c0_34 = arith.constant 0 : index
    %60 = vector.load %arg7[%c0_33, %c0_34] : memref<1x128xf32, #tpu.memory_space<vmem>>, vector<1x128xf32>
    %61 = vector.broadcast %60 : vector<1x128xf32> to vector<64x128xf32>
    %62 = arith.mulf %57, %61 : vector<64x128xf32>
    %63 = arith.select %59, %57, %62 : vector<64x128xi1>, vector<64x128xf32>
    %64 = arith.truncf %63 : vector<64x128xf32> to vector<64x128xbf16>
    %c0_35 = arith.constant 0 : index
    %c0_36 = arith.constant 0 : index
    %c0_37 = arith.constant 0 : index
    %65 = vector.load %arg8[%c0_35, %c0_36, %c0_37] : memref<1x64x128xbf16, #tpu.memory_space<vmem>>, vector<1x64x128xbf16>
    %66 = vector.shape_cast %65 : vector<1x64x128xbf16> to vector<64x128xbf16>
    %67 = vector.shape_cast %64 : vector<64x128xbf16> to vector<1x64x128xbf16>
    tpu.vector_store %arg8[%c0_35, %c0_36, %c0_37], %67 {strides = array<i32>} : memref<1x64x128xbf16, #tpu.memory_space<vmem>>, vector<1x64x128xbf16>,
    return
  }
  func.func @transform_0(%arg0: i32, %arg1: i32) -> (i32, i32, i32, i32) {
    %c1_i32 = arith.constant 1 : i32
    %0 = arith.muli %arg0, %c1_i32 : i32
    %1 = arith.addi %0, %arg1 : i32
    %c0_i32 = arith.constant 0 : i32
    %c0_i32_0 = arith.constant 0 : i32
    %c0_i32_1 = arith.constant 0 : i32
    %c0_i32_2 = arith.constant 0 : i32
    return %1, %c0_i32, %c0_i32_0, %c0_i32_1 : i32, i32, i32, i32
  }
  func.func @transform_1(%arg0: i32, %arg1: i32) -> (i32, i32, i32) {
    %c0_i32 = arith.constant 0 : i32
    %c0_i32_0 = arith.constant 0 : i32
    %c0_i32_1 = arith.constant 0 : i32
    %c0_i32_2 = arith.constant 0 : i32
    return %c0_i32, %c0_i32_0, %c0_i32_1 : i32, i32, i32
  }
  func.func @transform_2(%arg0: i32, %arg1: i32) -> (i32, i32) {
    %c0_i32 = arith.constant 0 : i32
    %c0_i32_0 = arith.constant 0 : i32
    %c0_i32_1 = arith.constant 0 : i32
    return %c0_i32, %c0_i32_0 : i32, i32
  }
  func.func @transform_3(%arg0: i32, %arg1: i32) -> (i32, i32) {
    %c0_i32 = arith.constant 0 : i32
    %c0_i32_0 = arith.constant 0 : i32
    %c0_i32_1 = arith.constant 0 : i32
    return %c0_i32, %c0_i32_0 : i32, i32
  }
  func.func @transform_4(%arg0: i32, %arg1: i32) -> (i32, i32) {
    %c0_i32 = arith.constant 0 : i32
    %c0_i32_0 = arith.constant 0 : i32
    %c0_i32_1 = arith.constant 0 : i32
    return %c0_i32, %c0_i32_0 : i32, i32
  }
  func.func @transform_5(%arg0: i32, %arg1: i32) -> (i32, i32) {
    %c0_i32 = arith.constant 0 : i32
    %c0_i32_0 = arith.constant 0 : i32
    %c0_i32_1 = arith.constant 0 : i32
    return %c0_i32, %c0_i32_0 : i32, i32
  }
  func.func @transform_6(%arg0: i32, %arg1: i32) -> (i32, i32, i32) {
    %c1_i32 = arith.constant 1 : i32
    %0 = arith.muli %arg0, %c1_i32 : i32
    %1 = arith.addi %0, %arg1 : i32
    %c0_i32 = arith.constant 0 : i32
    %c0_i32_0 = arith.constant 0 : i32
    %c0_i32_1 = arith.constant 0 : i32
    return %1, %c0_i32, %c0_i32_0 : i32, i32, i32
  }
  func.func @transform_7(%arg0: i32, %arg1: i32) -> (i32, i32, i32) {
    %c1_i32 = arith.constant 1 : i32
    %0 = arith.muli %arg0, %c1_i32 : i32
    %1 = arith.addi %0, %arg1 : i32
    %c0_i32 = arith.constant 0 : i32
    %c0_i32_0 = arith.constant 0 : i32
    %c0_i32_1 = arith.constant 0 : i32
    return %1, %c0_i32, %c0_i32_0 : i32, i32, i32
  }
}

module attributes {stable_mosaic.version = 11 : i64} {
  func.func @conv3x3_kernel(%arg0: i32, %arg1: i32, %arg2: memref<1x18x18x128xbf16, #tpu.memory_space<vmem>>, %arg3: memref<9x128x128xbf16, #tpu.memory_space<vmem>>, %arg4: memref<1x128xf32, #tpu.memory_space<vmem>>, %arg5: memref<1x128xf32, #tpu.memory_space<vmem>>, %arg6: memref<1x128xf32, #tpu.memory_space<vmem>>, %arg7: memref<1x128xf32, #tpu.memory_space<vmem>>, %arg8: memref<1x256x128xbf16, #tpu.memory_space<vmem>>, %arg9: memref<1x8x128xf32, #tpu.memory_space<vmem>>) attributes {dimension_semantics = [#tpu.dimension_semantics<parallel>, #tpu.dimension_semantics<parallel>], iteration_bounds = array<i64: 2, 1>, scalar_prefetch = 0 : i64, scratch_operands = 0 : i64, tpu.core_type = #tpu.core_type<tc>, window_params = [{transform_indices = @transform_0, window_bounds = array<i64: 1, 18, 18, 128>}, {pipeline_mode = #tpu.pipeline_mode<synchronous>, transform_indices = @transform_1, window_bounds = array<i64: 9, 128, 128>}, {pipeline_mode = #tpu.pipeline_mode<synchronous>, transform_indices = @transform_2, window_bounds = array<i64: 1, 128>}, {pipeline_mode = #tpu.pipeline_mode<synchronous>, transform_indices = @transform_3, window_bounds = array<i64: 1, 128>}, {pipeline_mode = #tpu.pipeline_mode<synchronous>, transform_indices = @transform_4, window_bounds = array<i64: 1, 128>}, {pipeline_mode = #tpu.pipeline_mode<synchronous>, transform_indices = @transform_5, window_bounds = array<i64: 1, 128>}, {transform_indices = @transform_6, window_bounds = array<i64: 1, 256, 128>}, {transform_indices = @transform_7, window_bounds = array<i64: 1, 8, 128>}]} {
    %c0 = arith.constant 0 : index
    %c0_0 = arith.constant 0 : index
    %c0_1 = arith.constant 0 : index
    %c0_2 = arith.constant 0 : index
    %0 = vector.load %arg2[%c0, %c0_0, %c0_1, %c0_2] : memref<1x18x18x128xbf16, #tpu.memory_space<vmem>>, vector<1x18x18x128xbf16>
    %1 = vector.shape_cast %0 : vector<1x18x18x128xbf16> to vector<18x18x128xbf16>
    %2 = vector.extract_strided_slice %1 {offsets = [0, 0, 0], sizes = [16, 16, 128], strides = [1, 1, 1]} : vector<18x18x128xbf16> to vector<16x16x128xbf16>
    %3 = vector.shape_cast %2 : vector<16x16x128xbf16> to vector<256x128xbf16>
    %c0_3 = arith.constant 0 : index
    %c0_4 = arith.constant 0 : index
    %c0_5 = arith.constant 0 : index
    %4 = vector.load %arg3[%c0_3, %c0_4, %c0_5] : memref<9x128x128xbf16, #tpu.memory_space<vmem>>, vector<1x128x128xbf16>
    %5 = vector.shape_cast %4 : vector<1x128x128xbf16> to vector<128x128xbf16>
    %cst = arith.constant dense<0.000000e+00> : vector<256x128xf32>
    %6 = tpu.matmul %3, %5, %cst {dimension_numbers = #tpu.dot_dimension_numbers<[1], [0], [0], [1], [0, 0, 1, 1], [], []>} : vector<256x128xbf16>, vector<128x128xbf16>, vector<256x128xf32> -> vector<256x128xf32>
    %7 = vector.extract_strided_slice %1 {offsets = [0, 1, 0], sizes = [16, 16, 128], strides = [1, 1, 1]} : vector<18x18x128xbf16> to vector<16x16x128xbf16>
    %8 = vector.shape_cast %7 : vector<16x16x128xbf16> to vector<256x128xbf16>
    %c1 = arith.constant 1 : index
    %c0_6 = arith.constant 0 : index
    %c0_7 = arith.constant 0 : index
    %9 = vector.load %arg3[%c1, %c0_6, %c0_7] : memref<9x128x128xbf16, #tpu.memory_space<vmem>>, vector<1x128x128xbf16>
    %10 = vector.shape_cast %9 : vector<1x128x128xbf16> to vector<128x128xbf16>
    %cst_8 = arith.constant dense<0.000000e+00> : vector<256x128xf32>
    %11 = tpu.matmul %8, %10, %cst_8 {dimension_numbers = #tpu.dot_dimension_numbers<[1], [0], [0], [1], [0, 0, 1, 1], [], []>} : vector<256x128xbf16>, vector<128x128xbf16>, vector<256x128xf32> -> vector<256x128xf32>
    %12 = arith.addf %6, %11 : vector<256x128xf32>
    %13 = vector.extract_strided_slice %1 {offsets = [0, 2, 0], sizes = [16, 16, 128], strides = [1, 1, 1]} : vector<18x18x128xbf16> to vector<16x16x128xbf16>
    %14 = vector.shape_cast %13 : vector<16x16x128xbf16> to vector<256x128xbf16>
    %c2 = arith.constant 2 : index
    %c0_9 = arith.constant 0 : index
    %c0_10 = arith.constant 0 : index
    %15 = vector.load %arg3[%c2, %c0_9, %c0_10] : memref<9x128x128xbf16, #tpu.memory_space<vmem>>, vector<1x128x128xbf16>
    %16 = vector.shape_cast %15 : vector<1x128x128xbf16> to vector<128x128xbf16>
    %cst_11 = arith.constant dense<0.000000e+00> : vector<256x128xf32>
    %17 = tpu.matmul %14, %16, %cst_11 {dimension_numbers = #tpu.dot_dimension_numbers<[1], [0], [0], [1], [0, 0, 1, 1], [], []>} : vector<256x128xbf16>, vector<128x128xbf16>, vector<256x128xf32> -> vector<256x128xf32>
    %18 = arith.addf %12, %17 : vector<256x128xf32>
    %19 = vector.extract_strided_slice %1 {offsets = [1, 0, 0], sizes = [16, 16, 128], strides = [1, 1, 1]} : vector<18x18x128xbf16> to vector<16x16x128xbf16>
    %20 = vector.shape_cast %19 : vector<16x16x128xbf16> to vector<256x128xbf16>
    %c3 = arith.constant 3 : index
    %c0_12 = arith.constant 0 : index
    %c0_13 = arith.constant 0 : index
    %21 = vector.load %arg3[%c3, %c0_12, %c0_13] : memref<9x128x128xbf16, #tpu.memory_space<vmem>>, vector<1x128x128xbf16>
    %22 = vector.shape_cast %21 : vector<1x128x128xbf16> to vector<128x128xbf16>
    %cst_14 = arith.constant dense<0.000000e+00> : vector<256x128xf32>
    %23 = tpu.matmul %20, %22, %cst_14 {dimension_numbers = #tpu.dot_dimension_numbers<[1], [0], [0], [1], [0, 0, 1, 1], [], []>} : vector<256x128xbf16>, vector<128x128xbf16>, vector<256x128xf32> -> vector<256x128xf32>
    %24 = arith.addf %18, %23 : vector<256x128xf32>
    %25 = vector.extract_strided_slice %1 {offsets = [1, 1, 0], sizes = [16, 16, 128], strides = [1, 1, 1]} : vector<18x18x128xbf16> to vector<16x16x128xbf16>
    %26 = vector.shape_cast %25 : vector<16x16x128xbf16> to vector<256x128xbf16>
    %c4 = arith.constant 4 : index
    %c0_15 = arith.constant 0 : index
    %c0_16 = arith.constant 0 : index
    %27 = vector.load %arg3[%c4, %c0_15, %c0_16] : memref<9x128x128xbf16, #tpu.memory_space<vmem>>, vector<1x128x128xbf16>
    %28 = vector.shape_cast %27 : vector<1x128x128xbf16> to vector<128x128xbf16>
    %cst_17 = arith.constant dense<0.000000e+00> : vector<256x128xf32>
    %29 = tpu.matmul %26, %28, %cst_17 {dimension_numbers = #tpu.dot_dimension_numbers<[1], [0], [0], [1], [0, 0, 1, 1], [], []>} : vector<256x128xbf16>, vector<128x128xbf16>, vector<256x128xf32> -> vector<256x128xf32>
    %30 = arith.addf %24, %29 : vector<256x128xf32>
    %31 = vector.extract_strided_slice %1 {offsets = [1, 2, 0], sizes = [16, 16, 128], strides = [1, 1, 1]} : vector<18x18x128xbf16> to vector<16x16x128xbf16>
    %32 = vector.shape_cast %31 : vector<16x16x128xbf16> to vector<256x128xbf16>
    %c5 = arith.constant 5 : index
    %c0_18 = arith.constant 0 : index
    %c0_19 = arith.constant 0 : index
    %33 = vector.load %arg3[%c5, %c0_18, %c0_19] : memref<9x128x128xbf16, #tpu.memory_space<vmem>>, vector<1x128x128xbf16>
    %34 = vector.shape_cast %33 : vector<1x128x128xbf16> to vector<128x128xbf16>
    %cst_20 = arith.constant dense<0.000000e+00> : vector<256x128xf32>
    %35 = tpu.matmul %32, %34, %cst_20 {dimension_numbers = #tpu.dot_dimension_numbers<[1], [0], [0], [1], [0, 0, 1, 1], [], []>} : vector<256x128xbf16>, vector<128x128xbf16>, vector<256x128xf32> -> vector<256x128xf32>
    %36 = arith.addf %30, %35 : vector<256x128xf32>
    %37 = vector.extract_strided_slice %1 {offsets = [2, 0, 0], sizes = [16, 16, 128], strides = [1, 1, 1]} : vector<18x18x128xbf16> to vector<16x16x128xbf16>
    %38 = vector.shape_cast %37 : vector<16x16x128xbf16> to vector<256x128xbf16>
    %c6 = arith.constant 6 : index
    %c0_21 = arith.constant 0 : index
    %c0_22 = arith.constant 0 : index
    %39 = vector.load %arg3[%c6, %c0_21, %c0_22] : memref<9x128x128xbf16, #tpu.memory_space<vmem>>, vector<1x128x128xbf16>
    %40 = vector.shape_cast %39 : vector<1x128x128xbf16> to vector<128x128xbf16>
    %cst_23 = arith.constant dense<0.000000e+00> : vector<256x128xf32>
    %41 = tpu.matmul %38, %40, %cst_23 {dimension_numbers = #tpu.dot_dimension_numbers<[1], [0], [0], [1], [0, 0, 1, 1], [], []>} : vector<256x128xbf16>, vector<128x128xbf16>, vector<256x128xf32> -> vector<256x128xf32>
    %42 = arith.addf %36, %41 : vector<256x128xf32>
    %43 = vector.extract_strided_slice %1 {offsets = [2, 1, 0], sizes = [16, 16, 128], strides = [1, 1, 1]} : vector<18x18x128xbf16> to vector<16x16x128xbf16>
    %44 = vector.shape_cast %43 : vector<16x16x128xbf16> to vector<256x128xbf16>
    %c7 = arith.constant 7 : index
    %c0_24 = arith.constant 0 : index
    %c0_25 = arith.constant 0 : index
    %45 = vector.load %arg3[%c7, %c0_24, %c0_25] : memref<9x128x128xbf16, #tpu.memory_space<vmem>>, vector<1x128x128xbf16>
    %46 = vector.shape_cast %45 : vector<1x128x128xbf16> to vector<128x128xbf16>
    %cst_26 = arith.constant dense<0.000000e+00> : vector<256x128xf32>
    %47 = tpu.matmul %44, %46, %cst_26 {dimension_numbers = #tpu.dot_dimension_numbers<[1], [0], [0], [1], [0, 0, 1, 1], [], []>} : vector<256x128xbf16>, vector<128x128xbf16>, vector<256x128xf32> -> vector<256x128xf32>
    %48 = arith.addf %42, %47 : vector<256x128xf32>
    %49 = vector.extract_strided_slice %1 {offsets = [2, 2, 0], sizes = [16, 16, 128], strides = [1, 1, 1]} : vector<18x18x128xbf16> to vector<16x16x128xbf16>
    %50 = vector.shape_cast %49 : vector<16x16x128xbf16> to vector<256x128xbf16>
    %c8 = arith.constant 8 : index
    %c0_27 = arith.constant 0 : index
    %c0_28 = arith.constant 0 : index
    %51 = vector.load %arg3[%c8, %c0_27, %c0_28] : memref<9x128x128xbf16, #tpu.memory_space<vmem>>, vector<1x128x128xbf16>
    %52 = vector.shape_cast %51 : vector<1x128x128xbf16> to vector<128x128xbf16>
    %cst_29 = arith.constant dense<0.000000e+00> : vector<256x128xf32>
    %53 = tpu.matmul %50, %52, %cst_29 {dimension_numbers = #tpu.dot_dimension_numbers<[1], [0], [0], [1], [0, 0, 1, 1], [], []>} : vector<256x128xbf16>, vector<128x128xbf16>, vector<256x128xf32> -> vector<256x128xf32>
    %54 = arith.addf %48, %53 : vector<256x128xf32>
    %c0_30 = arith.constant 0 : index
    %c0_31 = arith.constant 0 : index
    %55 = vector.load %arg4[%c0_30, %c0_31] : memref<1x128xf32, #tpu.memory_space<vmem>>, vector<1x128xf32>
    %56 = vector.broadcast %55 : vector<1x128xf32> to vector<256x128xf32>
    %57 = arith.addf %54, %56 : vector<256x128xf32>
    %cst_32 = arith.constant dense<0.000000e+00> : vector<128xf32>
    %58 = vector.multi_reduction <add>, %57, %cst_32 [0] : vector<256x128xf32> to vector<128xf32>
    %59 = vector.shape_cast %58 : vector<128xf32> to vector<1x128xf32>
    %c0_33 = arith.constant 0 : index
    %c0_34 = arith.constant 0 : index
    %c0_35 = arith.constant 0 : index
    %60 = vector.load %arg9[%c0_33, %c0_34, %c0_35] : memref<1x8x128xf32, #tpu.memory_space<vmem>>, vector<1x1x128xf32>
    %61 = vector.shape_cast %60 : vector<1x1x128xf32> to vector<1x128xf32>
    %62 = vector.shape_cast %59 : vector<1x128xf32> to vector<1x1x128xf32>
    tpu.vector_store %arg9[%c0_33, %c0_34, %c0_35], %62 {strides = array<i32>} : memref<1x8x128xf32, #tpu.memory_space<vmem>>, vector<1x1x128xf32>,
    %63 = arith.mulf %57, %57 : vector<256x128xf32>
    %cst_36 = arith.constant dense<0.000000e+00> : vector<128xf32>
    %64 = vector.multi_reduction <add>, %63, %cst_36 [0] : vector<256x128xf32> to vector<128xf32>
    %65 = vector.shape_cast %64 : vector<128xf32> to vector<1x128xf32>
    %c0_37 = arith.constant 0 : index
    %c1_38 = arith.constant 1 : index
    %c0_39 = arith.constant 0 : index
    %66 = vector.load %arg9[%c0_37, %c1_38, %c0_39] : memref<1x8x128xf32, #tpu.memory_space<vmem>>, vector<1x1x128xf32>
    %67 = vector.shape_cast %66 : vector<1x1x128xf32> to vector<1x128xf32>
    %68 = vector.shape_cast %65 : vector<1x128xf32> to vector<1x1x128xf32>
    tpu.vector_store %arg9[%c0_37, %c1_38, %c0_39], %68 {strides = array<i32>} : memref<1x8x128xf32, #tpu.memory_space<vmem>>, vector<1x1x128xf32>,
    %69 = arith.truncf %57 : vector<256x128xf32> to vector<256x128xbf16>
    %c0_40 = arith.constant 0 : index
    %c0_41 = arith.constant 0 : index
    %c0_42 = arith.constant 0 : index
    %70 = vector.load %arg8[%c0_40, %c0_41, %c0_42] : memref<1x256x128xbf16, #tpu.memory_space<vmem>>, vector<1x256x128xbf16>
    %71 = vector.shape_cast %70 : vector<1x256x128xbf16> to vector<256x128xbf16>
    %72 = vector.shape_cast %69 : vector<256x128xbf16> to vector<1x256x128xbf16>
    tpu.vector_store %arg8[%c0_40, %c0_41, %c0_42], %72 {strides = array<i32>} : memref<1x256x128xbf16, #tpu.memory_space<vmem>>, vector<1x256x128xbf16>,
    return
  }
  func.func @transform_0(%arg0: i32, %arg1: i32) -> (i32, i32, i32, i32) {
    %c1_i32 = arith.constant 1 : i32
    %0 = arith.muli %arg0, %c1_i32 : i32
    %1 = arith.addi %0, %arg1 : i32
    %c0_i32 = arith.constant 0 : i32
    %c0_i32_0 = arith.constant 0 : i32
    %c0_i32_1 = arith.constant 0 : i32
    %c0_i32_2 = arith.constant 0 : i32
    return %1, %c0_i32, %c0_i32_0, %c0_i32_1 : i32, i32, i32, i32
  }
  func.func @transform_1(%arg0: i32, %arg1: i32) -> (i32, i32, i32) {
    %c0_i32 = arith.constant 0 : i32
    %c0_i32_0 = arith.constant 0 : i32
    %c0_i32_1 = arith.constant 0 : i32
    %c0_i32_2 = arith.constant 0 : i32
    return %c0_i32, %c0_i32_0, %c0_i32_1 : i32, i32, i32
  }
  func.func @transform_2(%arg0: i32, %arg1: i32) -> (i32, i32) {
    %c0_i32 = arith.constant 0 : i32
    %c0_i32_0 = arith.constant 0 : i32
    %c0_i32_1 = arith.constant 0 : i32
    return %c0_i32, %c0_i32_0 : i32, i32
  }
  func.func @transform_3(%arg0: i32, %arg1: i32) -> (i32, i32) {
    %c0_i32 = arith.constant 0 : i32
    %c0_i32_0 = arith.constant 0 : i32
    %c0_i32_1 = arith.constant 0 : i32
    return %c0_i32, %c0_i32_0 : i32, i32
  }
  func.func @transform_4(%arg0: i32, %arg1: i32) -> (i32, i32) {
    %c0_i32 = arith.constant 0 : i32
    %c0_i32_0 = arith.constant 0 : i32
    %c0_i32_1 = arith.constant 0 : i32
    return %c0_i32, %c0_i32_0 : i32, i32
  }
  func.func @transform_5(%arg0: i32, %arg1: i32) -> (i32, i32) {
    %c0_i32 = arith.constant 0 : i32
    %c0_i32_0 = arith.constant 0 : i32
    %c0_i32_1 = arith.constant 0 : i32
    return %c0_i32, %c0_i32_0 : i32, i32
  }
  func.func @transform_6(%arg0: i32, %arg1: i32) -> (i32, i32, i32) {
    %c1_i32 = arith.constant 1 : i32
    %0 = arith.muli %arg0, %c1_i32 : i32
    %1 = arith.addi %0, %arg1 : i32
    %c0_i32 = arith.constant 0 : i32
    %c0_i32_0 = arith.constant 0 : i32
    %c0_i32_1 = arith.constant 0 : i32
    return %1, %c0_i32, %c0_i32_0 : i32, i32, i32
  }
  func.func @transform_7(%arg0: i32, %arg1: i32) -> (i32, i32, i32) {
    %c1_i32 = arith.constant 1 : i32
    %0 = arith.muli %arg0, %c1_i32 : i32
    %1 = arith.addi %0, %arg1 : i32
    %c0_i32 = arith.constant 0 : i32
    %c0_i32_0 = arith.constant 0 : i32
    %c0_i32_1 = arith.constant 0 : i32
    return %1, %c0_i32, %c0_i32_0 : i32, i32, i32
  }
}

module attributes {stable_mosaic.version = 11 : i64} {
  func.func @conv3x3_kernel(%arg0: i32, %arg1: i32, %arg2: memref<1x18x18x128xbf16, #tpu.memory_space<vmem>>, %arg3: memref<9x128x128xbf16, #tpu.memory_space<vmem>>, %arg4: memref<1x128xf32, #tpu.memory_space<vmem>>, %arg5: memref<1x128xf32, #tpu.memory_space<vmem>>, %arg6: memref<1x128xf32, #tpu.memory_space<vmem>>, %arg7: memref<1x128xf32, #tpu.memory_space<vmem>>, %arg8: memref<1x256x128xbf16, #tpu.memory_space<vmem>>, %arg9: memref<1x8x128xf32, #tpu.memory_space<vmem>>) attributes {dimension_semantics = [#tpu.dimension_semantics<parallel>, #tpu.dimension_semantics<parallel>], iteration_bounds = array<i64: 2, 1>, scalar_prefetch = 0 : i64, scratch_operands = 0 : i64, tpu.core_type = #tpu.core_type<tc>, window_params = [{transform_indices = @transform_0, window_bounds = array<i64: 1, 18, 18, 128>}, {pipeline_mode = #tpu.pipeline_mode<synchronous>, transform_indices = @transform_1, window_bounds = array<i64: 9, 128, 128>}, {pipeline_mode = #tpu.pipeline_mode<synchronous>, transform_indices = @transform_2, window_bounds = array<i64: 1, 128>}, {pipeline_mode = #tpu.pipeline_mode<synchronous>, transform_indices = @transform_3, window_bounds = array<i64: 1, 128>}, {pipeline_mode = #tpu.pipeline_mode<synchronous>, transform_indices = @transform_4, window_bounds = array<i64: 1, 128>}, {pipeline_mode = #tpu.pipeline_mode<synchronous>, transform_indices = @transform_5, window_bounds = array<i64: 1, 128>}, {transform_indices = @transform_6, window_bounds = array<i64: 1, 256, 128>}, {transform_indices = @transform_7, window_bounds = array<i64: 1, 8, 128>}]} {
    %c0 = arith.constant 0 : index
    %c0_0 = arith.constant 0 : index
    %c0_1 = arith.constant 0 : index
    %c0_2 = arith.constant 0 : index
    %0 = vector.load %arg2[%c0, %c0_0, %c0_1, %c0_2] : memref<1x18x18x128xbf16, #tpu.memory_space<vmem>>, vector<1x18x18x128xbf16>
    %1 = vector.shape_cast %0 : vector<1x18x18x128xbf16> to vector<18x18x128xbf16>
    %2 = arith.extf %1 : vector<18x18x128xbf16> to vector<18x18x128xf32>
    %c0_3 = arith.constant 0 : index
    %c0_4 = arith.constant 0 : index
    %3 = vector.load %arg5[%c0_3, %c0_4] : memref<1x128xf32, #tpu.memory_space<vmem>>, vector<1x128xf32>
    %4 = vector.shape_cast %3 : vector<1x128xf32> to vector<1x1x128xf32>
    %5 = vector.broadcast %4 : vector<1x1x128xf32> to vector<18x18x128xf32>
    %6 = arith.mulf %2, %5 : vector<18x18x128xf32>
    %c0_5 = arith.constant 0 : index
    %c0_6 = arith.constant 0 : index
    %7 = vector.load %arg6[%c0_5, %c0_6] : memref<1x128xf32, #tpu.memory_space<vmem>>, vector<1x128xf32>
    %8 = vector.shape_cast %7 : vector<1x128xf32> to vector<1x1x128xf32>
    %9 = vector.broadcast %8 : vector<1x1x128xf32> to vector<18x18x128xf32>
    %10 = arith.addf %6, %9 : vector<18x18x128xf32>
    %cst = arith.constant 0.000000e+00 : f32
    %11 = vector.broadcast %cst : f32 to vector<18x18x128xf32>
    %12 = arith.maximumf %10, %11 : vector<18x18x128xf32>
    %13 = tpu.iota {dimensions = array<i32: 0>} : vector<18x18x128xi32>
    %14 = tpu.iota {dimensions = array<i32: 1>} : vector<18x18x128xi32>
    %c0_i32 = arith.constant 0 : i32
    %15 = vector.broadcast %c0_i32 : i32 to vector<18x18x128xi32>
    %16 = arith.cmpi eq, %13, %15 : vector<18x18x128xi32>
    %c0_i32_7 = arith.constant 0 : i32
    %17 = arith.cmpi eq, %arg1, %c0_i32_7 : i32
    %18 = vector.broadcast %17 : i1 to vector<18x18x128xi1>
    %19 = arith.andi %16, %18 : vector<18x18x128xi1>
    %c17_i32 = arith.constant 17 : i32
    %20 = vector.broadcast %c17_i32 : i32 to vector<18x18x128xi32>
    %21 = arith.cmpi eq, %13, %20 : vector<18x18x128xi32>
    %c0_i32_8 = arith.constant 0 : i32
    %22 = arith.cmpi eq, %arg1, %c0_i32_8 : i32
    %23 = vector.broadcast %22 : i1 to vector<18x18x128xi1>
    %24 = arith.andi %21, %23 : vector<18x18x128xi1>
    %25 = arith.ori %19, %24 : vector<18x18x128xi1>
    %c0_i32_9 = arith.constant 0 : i32
    %26 = vector.broadcast %c0_i32_9 : i32 to vector<18x18x128xi32>
    %27 = arith.cmpi eq, %14, %26 : vector<18x18x128xi32>
    %28 = arith.ori %25, %27 : vector<18x18x128xi1>
    %c17_i32_10 = arith.constant 17 : i32
    %29 = vector.broadcast %c17_i32_10 : i32 to vector<18x18x128xi32>
    %30 = arith.cmpi eq, %14, %29 : vector<18x18x128xi32>
    %31 = arith.ori %28, %30 : vector<18x18x128xi1>
    %cst_11 = arith.constant 0.000000e+00 : f32
    %32 = vector.broadcast %cst_11 : f32 to vector<18x18x128xf32>
    %33 = arith.select %31, %32, %12 : vector<18x18x128xi1>, vector<18x18x128xf32>
    %34 = arith.truncf %33 : vector<18x18x128xf32> to vector<18x18x128xbf16>
    %35 = vector.extract_strided_slice %34 {offsets = [0, 0, 0], sizes = [16, 16, 128], strides = [1, 1, 1]} : vector<18x18x128xbf16> to vector<16x16x128xbf16>
    %36 = vector.shape_cast %35 : vector<16x16x128xbf16> to vector<256x128xbf16>
    %c0_12 = arith.constant 0 : index
    %c0_13 = arith.constant 0 : index
    %c0_14 = arith.constant 0 : index
    %37 = vector.load %arg3[%c0_12, %c0_13, %c0_14] : memref<9x128x128xbf16, #tpu.memory_space<vmem>>, vector<1x128x128xbf16>
    %38 = vector.shape_cast %37 : vector<1x128x128xbf16> to vector<128x128xbf16>
    %cst_15 = arith.constant dense<0.000000e+00> : vector<256x128xf32>
    %39 = tpu.matmul %36, %38, %cst_15 {dimension_numbers = #tpu.dot_dimension_numbers<[1], [0], [0], [1], [0, 0, 1, 1], [], []>} : vector<256x128xbf16>, vector<128x128xbf16>, vector<256x128xf32> -> vector<256x128xf32>
    %40 = vector.extract_strided_slice %34 {offsets = [0, 1, 0], sizes = [16, 16, 128], strides = [1, 1, 1]} : vector<18x18x128xbf16> to vector<16x16x128xbf16>
    %41 = vector.shape_cast %40 : vector<16x16x128xbf16> to vector<256x128xbf16>
    %c1 = arith.constant 1 : index
    %c0_16 = arith.constant 0 : index
    %c0_17 = arith.constant 0 : index
    %42 = vector.load %arg3[%c1, %c0_16, %c0_17] : memref<9x128x128xbf16, #tpu.memory_space<vmem>>, vector<1x128x128xbf16>
    %43 = vector.shape_cast %42 : vector<1x128x128xbf16> to vector<128x128xbf16>
    %cst_18 = arith.constant dense<0.000000e+00> : vector<256x128xf32>
    %44 = tpu.matmul %41, %43, %cst_18 {dimension_numbers = #tpu.dot_dimension_numbers<[1], [0], [0], [1], [0, 0, 1, 1], [], []>} : vector<256x128xbf16>, vector<128x128xbf16>, vector<256x128xf32> -> vector<256x128xf32>
    %45 = arith.addf %39, %44 : vector<256x128xf32>
    %46 = vector.extract_strided_slice %34 {offsets = [0, 2, 0], sizes = [16, 16, 128], strides = [1, 1, 1]} : vector<18x18x128xbf16> to vector<16x16x128xbf16>
    %47 = vector.shape_cast %46 : vector<16x16x128xbf16> to vector<256x128xbf16>
    %c2 = arith.constant 2 : index
    %c0_19 = arith.constant 0 : index
    %c0_20 = arith.constant 0 : index
    %48 = vector.load %arg3[%c2, %c0_19, %c0_20] : memref<9x128x128xbf16, #tpu.memory_space<vmem>>, vector<1x128x128xbf16>
    %49 = vector.shape_cast %48 : vector<1x128x128xbf16> to vector<128x128xbf16>
    %cst_21 = arith.constant dense<0.000000e+00> : vector<256x128xf32>
    %50 = tpu.matmul %47, %49, %cst_21 {dimension_numbers = #tpu.dot_dimension_numbers<[1], [0], [0], [1], [0, 0, 1, 1], [], []>} : vector<256x128xbf16>, vector<128x128xbf16>, vector<256x128xf32> -> vector<256x128xf32>
    %51 = arith.addf %45, %50 : vector<256x128xf32>
    %52 = vector.extract_strided_slice %34 {offsets = [1, 0, 0], sizes = [16, 16, 128], strides = [1, 1, 1]} : vector<18x18x128xbf16> to vector<16x16x128xbf16>
    %53 = vector.shape_cast %52 : vector<16x16x128xbf16> to vector<256x128xbf16>
    %c3 = arith.constant 3 : index
    %c0_22 = arith.constant 0 : index
    %c0_23 = arith.constant 0 : index
    %54 = vector.load %arg3[%c3, %c0_22, %c0_23] : memref<9x128x128xbf16, #tpu.memory_space<vmem>>, vector<1x128x128xbf16>
    %55 = vector.shape_cast %54 : vector<1x128x128xbf16> to vector<128x128xbf16>
    %cst_24 = arith.constant dense<0.000000e+00> : vector<256x128xf32>
    %56 = tpu.matmul %53, %55, %cst_24 {dimension_numbers = #tpu.dot_dimension_numbers<[1], [0], [0], [1], [0, 0, 1, 1], [], []>} : vector<256x128xbf16>, vector<128x128xbf16>, vector<256x128xf32> -> vector<256x128xf32>
    %57 = arith.addf %51, %56 : vector<256x128xf32>
    %58 = vector.extract_strided_slice %34 {offsets = [1, 1, 0], sizes = [16, 16, 128], strides = [1, 1, 1]} : vector<18x18x128xbf16> to vector<16x16x128xbf16>
    %59 = vector.shape_cast %58 : vector<16x16x128xbf16> to vector<256x128xbf16>
    %c4 = arith.constant 4 : index
    %c0_25 = arith.constant 0 : index
    %c0_26 = arith.constant 0 : index
    %60 = vector.load %arg3[%c4, %c0_25, %c0_26] : memref<9x128x128xbf16, #tpu.memory_space<vmem>>, vector<1x128x128xbf16>
    %61 = vector.shape_cast %60 : vector<1x128x128xbf16> to vector<128x128xbf16>
    %cst_27 = arith.constant dense<0.000000e+00> : vector<256x128xf32>
    %62 = tpu.matmul %59, %61, %cst_27 {dimension_numbers = #tpu.dot_dimension_numbers<[1], [0], [0], [1], [0, 0, 1, 1], [], []>} : vector<256x128xbf16>, vector<128x128xbf16>, vector<256x128xf32> -> vector<256x128xf32>
    %63 = arith.addf %57, %62 : vector<256x128xf32>
    %64 = vector.extract_strided_slice %34 {offsets = [1, 2, 0], sizes = [16, 16, 128], strides = [1, 1, 1]} : vector<18x18x128xbf16> to vector<16x16x128xbf16>
    %65 = vector.shape_cast %64 : vector<16x16x128xbf16> to vector<256x128xbf16>
    %c5 = arith.constant 5 : index
    %c0_28 = arith.constant 0 : index
    %c0_29 = arith.constant 0 : index
    %66 = vector.load %arg3[%c5, %c0_28, %c0_29] : memref<9x128x128xbf16, #tpu.memory_space<vmem>>, vector<1x128x128xbf16>
    %67 = vector.shape_cast %66 : vector<1x128x128xbf16> to vector<128x128xbf16>
    %cst_30 = arith.constant dense<0.000000e+00> : vector<256x128xf32>
    %68 = tpu.matmul %65, %67, %cst_30 {dimension_numbers = #tpu.dot_dimension_numbers<[1], [0], [0], [1], [0, 0, 1, 1], [], []>} : vector<256x128xbf16>, vector<128x128xbf16>, vector<256x128xf32> -> vector<256x128xf32>
    %69 = arith.addf %63, %68 : vector<256x128xf32>
    %70 = vector.extract_strided_slice %34 {offsets = [2, 0, 0], sizes = [16, 16, 128], strides = [1, 1, 1]} : vector<18x18x128xbf16> to vector<16x16x128xbf16>
    %71 = vector.shape_cast %70 : vector<16x16x128xbf16> to vector<256x128xbf16>
    %c6 = arith.constant 6 : index
    %c0_31 = arith.constant 0 : index
    %c0_32 = arith.constant 0 : index
    %72 = vector.load %arg3[%c6, %c0_31, %c0_32] : memref<9x128x128xbf16, #tpu.memory_space<vmem>>, vector<1x128x128xbf16>
    %73 = vector.shape_cast %72 : vector<1x128x128xbf16> to vector<128x128xbf16>
    %cst_33 = arith.constant dense<0.000000e+00> : vector<256x128xf32>
    %74 = tpu.matmul %71, %73, %cst_33 {dimension_numbers = #tpu.dot_dimension_numbers<[1], [0], [0], [1], [0, 0, 1, 1], [], []>} : vector<256x128xbf16>, vector<128x128xbf16>, vector<256x128xf32> -> vector<256x128xf32>
    %75 = arith.addf %69, %74 : vector<256x128xf32>
    %76 = vector.extract_strided_slice %34 {offsets = [2, 1, 0], sizes = [16, 16, 128], strides = [1, 1, 1]} : vector<18x18x128xbf16> to vector<16x16x128xbf16>
    %77 = vector.shape_cast %76 : vector<16x16x128xbf16> to vector<256x128xbf16>
    %c7 = arith.constant 7 : index
    %c0_34 = arith.constant 0 : index
    %c0_35 = arith.constant 0 : index
    %78 = vector.load %arg3[%c7, %c0_34, %c0_35] : memref<9x128x128xbf16, #tpu.memory_space<vmem>>, vector<1x128x128xbf16>
    %79 = vector.shape_cast %78 : vector<1x128x128xbf16> to vector<128x128xbf16>
    %cst_36 = arith.constant dense<0.000000e+00> : vector<256x128xf32>
    %80 = tpu.matmul %77, %79, %cst_36 {dimension_numbers = #tpu.dot_dimension_numbers<[1], [0], [0], [1], [0, 0, 1, 1], [], []>} : vector<256x128xbf16>, vector<128x128xbf16>, vector<256x128xf32> -> vector<256x128xf32>
    %81 = arith.addf %75, %80 : vector<256x128xf32>
    %82 = vector.extract_strided_slice %34 {offsets = [2, 2, 0], sizes = [16, 16, 128], strides = [1, 1, 1]} : vector<18x18x128xbf16> to vector<16x16x128xbf16>
    %83 = vector.shape_cast %82 : vector<16x16x128xbf16> to vector<256x128xbf16>
    %c8 = arith.constant 8 : index
    %c0_37 = arith.constant 0 : index
    %c0_38 = arith.constant 0 : index
    %84 = vector.load %arg3[%c8, %c0_37, %c0_38] : memref<9x128x128xbf16, #tpu.memory_space<vmem>>, vector<1x128x128xbf16>
    %85 = vector.shape_cast %84 : vector<1x128x128xbf16> to vector<128x128xbf16>
    %cst_39 = arith.constant dense<0.000000e+00> : vector<256x128xf32>
    %86 = tpu.matmul %83, %85, %cst_39 {dimension_numbers = #tpu.dot_dimension_numbers<[1], [0], [0], [1], [0, 0, 1, 1], [], []>} : vector<256x128xbf16>, vector<128x128xbf16>, vector<256x128xf32> -> vector<256x128xf32>
    %87 = arith.addf %81, %86 : vector<256x128xf32>
    %c0_40 = arith.constant 0 : index
    %c0_41 = arith.constant 0 : index
    %88 = vector.load %arg4[%c0_40, %c0_41] : memref<1x128xf32, #tpu.memory_space<vmem>>, vector<1x128xf32>
    %89 = vector.broadcast %88 : vector<1x128xf32> to vector<256x128xf32>
    %90 = arith.addf %87, %89 : vector<256x128xf32>
    %cst_42 = arith.constant dense<0.000000e+00> : vector<128xf32>
    %91 = vector.multi_reduction <add>, %90, %cst_42 [0] : vector<256x128xf32> to vector<128xf32>
    %92 = vector.shape_cast %91 : vector<128xf32> to vector<1x128xf32>
    %c0_43 = arith.constant 0 : index
    %c0_44 = arith.constant 0 : index
    %c0_45 = arith.constant 0 : index
    %93 = vector.load %arg9[%c0_43, %c0_44, %c0_45] : memref<1x8x128xf32, #tpu.memory_space<vmem>>, vector<1x1x128xf32>
    %94 = vector.shape_cast %93 : vector<1x1x128xf32> to vector<1x128xf32>
    %95 = vector.shape_cast %92 : vector<1x128xf32> to vector<1x1x128xf32>
    tpu.vector_store %arg9[%c0_43, %c0_44, %c0_45], %95 {strides = array<i32>} : memref<1x8x128xf32, #tpu.memory_space<vmem>>, vector<1x1x128xf32>,
    %96 = arith.mulf %90, %90 : vector<256x128xf32>
    %cst_46 = arith.constant dense<0.000000e+00> : vector<128xf32>
    %97 = vector.multi_reduction <add>, %96, %cst_46 [0] : vector<256x128xf32> to vector<128xf32>
    %98 = vector.shape_cast %97 : vector<128xf32> to vector<1x128xf32>
    %c0_47 = arith.constant 0 : index
    %c1_48 = arith.constant 1 : index
    %c0_49 = arith.constant 0 : index
    %99 = vector.load %arg9[%c0_47, %c1_48, %c0_49] : memref<1x8x128xf32, #tpu.memory_space<vmem>>, vector<1x1x128xf32>
    %100 = vector.shape_cast %99 : vector<1x1x128xf32> to vector<1x128xf32>
    %101 = vector.shape_cast %98 : vector<1x128xf32> to vector<1x1x128xf32>
    tpu.vector_store %arg9[%c0_47, %c1_48, %c0_49], %101 {strides = array<i32>} : memref<1x8x128xf32, #tpu.memory_space<vmem>>, vector<1x1x128xf32>,
    %102 = arith.truncf %90 : vector<256x128xf32> to vector<256x128xbf16>
    %c0_50 = arith.constant 0 : index
    %c0_51 = arith.constant 0 : index
    %c0_52 = arith.constant 0 : index
    %103 = vector.load %arg8[%c0_50, %c0_51, %c0_52] : memref<1x256x128xbf16, #tpu.memory_space<vmem>>, vector<1x256x128xbf16>
    %104 = vector.shape_cast %103 : vector<1x256x128xbf16> to vector<256x128xbf16>
    %105 = vector.shape_cast %102 : vector<256x128xbf16> to vector<1x256x128xbf16>
    tpu.vector_store %arg8[%c0_50, %c0_51, %c0_52], %105 {strides = array<i32>} : memref<1x256x128xbf16, #tpu.memory_space<vmem>>, vector<1x256x128xbf16>,
    return
  }
  func.func @transform_0(%arg0: i32, %arg1: i32) -> (i32, i32, i32, i32) {
    %c1_i32 = arith.constant 1 : i32
    %0 = arith.muli %arg0, %c1_i32 : i32
    %1 = arith.addi %0, %arg1 : i32
    %c0_i32 = arith.constant 0 : i32
    %c0_i32_0 = arith.constant 0 : i32
    %c0_i32_1 = arith.constant 0 : i32
    %c0_i32_2 = arith.constant 0 : i32
    return %1, %c0_i32, %c0_i32_0, %c0_i32_1 : i32, i32, i32, i32
  }
  func.func @transform_1(%arg0: i32, %arg1: i32) -> (i32, i32, i32) {
    %c0_i32 = arith.constant 0 : i32
    %c0_i32_0 = arith.constant 0 : i32
    %c0_i32_1 = arith.constant 0 : i32
    %c0_i32_2 = arith.constant 0 : i32
    return %c0_i32, %c0_i32_0, %c0_i32_1 : i32, i32, i32
  }
  func.func @transform_2(%arg0: i32, %arg1: i32) -> (i32, i32) {
    %c0_i32 = arith.constant 0 : i32
    %c0_i32_0 = arith.constant 0 : i32
    %c0_i32_1 = arith.constant 0 : i32
    return %c0_i32, %c0_i32_0 : i32, i32
  }
  func.func @transform_3(%arg0: i32, %arg1: i32) -> (i32, i32) {
    %c0_i32 = arith.constant 0 : i32
    %c0_i32_0 = arith.constant 0 : i32
    %c0_i32_1 = arith.constant 0 : i32
    return %c0_i32, %c0_i32_0 : i32, i32
  }
  func.func @transform_4(%arg0: i32, %arg1: i32) -> (i32, i32) {
    %c0_i32 = arith.constant 0 : i32
    %c0_i32_0 = arith.constant 0 : i32
    %c0_i32_1 = arith.constant 0 : i32
    return %c0_i32, %c0_i32_0 : i32, i32
  }
  func.func @transform_5(%arg0: i32, %arg1: i32) -> (i32, i32) {
    %c0_i32 = arith.constant 0 : i32
    %c0_i32_0 = arith.constant 0 : i32
    %c0_i32_1 = arith.constant 0 : i32
    return %c0_i32, %c0_i32_0 : i32, i32
  }
  func.func @transform_6(%arg0: i32, %arg1: i32) -> (i32, i32, i32) {
    %c1_i32 = arith.constant 1 : i32
    %0 = arith.muli %arg0, %c1_i32 : i32
    %1 = arith.addi %0, %arg1 : i32
    %c0_i32 = arith.constant 0 : i32
    %c0_i32_0 = arith.constant 0 : i32
    %c0_i32_1 = arith.constant 0 : i32
    return %1, %c0_i32, %c0_i32_0 : i32, i32, i32
  }
  func.func @transform_7(%arg0: i32, %arg1: i32) -> (i32, i32, i32) {
    %c1_i32 = arith.constant 1 : i32
    %0 = arith.muli %arg0, %c1_i32 : i32
    %1 = arith.addi %0, %arg1 : i32
    %c0_i32 = arith.constant 0 : i32
    %c0_i32_0 = arith.constant 0 : i32
    %c0_i32_1 = arith.constant 0 : i32
    return %1, %c0_i32, %c0_i32_0 : i32, i32, i32
  }
}

</mosaic_0001>

<llo_original>
// kernel: up_forward.3
$region0: #{up_forward.3}
  #allocation0 [shape = 'u32[]', space=smem, size = 0x4, offset = 0x4, fixed_abs, tag = 'smem constant byte address 0x4 - core index']
  #allocation1 [shape = 'u32[144,128]{1,0:T(1,128)}', space=vmem, size = 0x12000, scoped, tag = 'internal scratch']
  %s0 = inlined_call_operand.vmem [shape: bf16[2,10,10,128], index: 0, kind: input, shape index: {}]
  %s1 = inlined_call_operand.vmem [shape: bf16[9,128,128], index: 1, kind: input, shape index: {}]
  %s2 = inlined_call_operand.vmem [shape: f32[1,128], index: 2, kind: input, shape index: {}]
  %s3 = inlined_call_operand.vmem [shape: f32[1,128], index: 3, kind: input, shape index: {}, may-alias: {3,4}]
  %s4 = inlined_call_operand.vmem [shape: f32[1,128], index: 4, kind: input, shape index: {}, may-alias: {3,4}]
  %s5 = inlined_call_operand.vmem [shape: f32[1,128], index: 5, kind: input, shape index: {}]
  %s6 = inlined_call_operand.vmem [shape: bf16[2,64,128], index: 6, kind: output, shape index: {0}]
  %s7 = inlined_call_operand.hbm [shape: f32[2,8,128], index: 7, kind: output, shape index: {1}]
  %8 = xla_tuple %s6, %s7
  %s9 = sld [smem:[#allocation0]]
  $region65: #{up_forward.3} parent=0
    _
  %s11 = ssub.s32 1, %s9
  %s12 = scalar_select 0, %s11, %s9
  $region1: #{up_forward.3} parent=0
    #allocation2 [shape = 'u8[8192]{0}', space=vmem, size = 0x2000, scoped, tag = 'output window, operand 1']
    #allocation3 [shape = 's32[2]{0}', space=sflag, size = 0x8, scoped, tag = 'scoped memory for up_forward.3']
    %13 = vsyncpa [#allocation3], 0
    %s14 = scalar_lea.sflag [#allocation3], 1
    %15 = vsyncpa %s14, 0
    loop: start=0, step=1, limit=4
    $region2: #{up_forward.3} parent=1 // loop_pre_header
      _
    $region3: #{up_forward.3} parent=1 // loop_header
      %s17 = sphi 0, %s21
      %p18 = scmp.ge.s32.totalorder %s17, 4
      %s24 = sphi 0, %s36
      %s25 = sphi 0, %s32
      %s26 = sphi 0, %s24
      %s27 = sphi 0, %s25
      %s28 = sphi 0, %s26
      %s29 = sphi 0, %s27
      %s41 = sphi 0, %s43
      %s44 = sphi 0, %s41
      %s45 = sphi 0, %s44
      %s61 = sphi 0, %s45
      %s65 = sphi 0, %s65
      %s67 = sphi 0, %s65
      %s68 = sphi 0, %s67
      %s82 = sphi 0, %s68
      %s86 = sphi 0, %s86
      %s88 = sphi 0, %s86
      %s89 = sphi 0, %s88
      %s103 = sphi 0, %s89
      %s107 = sphi 0, %s107
      %s109 = sphi 0, %s107
      %s110 = sphi 0, %s109
      %s124 = sphi 0, %s110
      %s128 = sphi 0, %s128
      %s130 = sphi 0, %s128
      %s131 = sphi 0, %s130
      %s145 = sphi 0, %s131
      %s149 = sphi 0, %s149
      %s151 = sphi 0, %s149
      %s152 = sphi 0, %s151
      %s166 = sphi 0, %s152
      %s174 = sphi 0, %s176
      %s177 = sphi 0, %s174
      %s178 = sphi 0, %s177
      %s194 = sphi 0, %s178
      %s202 = sphi 0, %s204
      %s205 = sphi 0, %s202
      %s206 = sphi 0, %s205
      %s222 = sphi 0, %s206
    $region4: #{up_forward.3} parent=1 // loop_header_branch
      %20 = sbr.rel (%p18) target = $region8
    $region5: #{up_forward.3} parent=1 // loop_body
      %s22 = ssub.s32 %s17, 1
      %s23 = ssub.s32 %s17, 2
      %s30 = sadd.s32 1, %s25
      %p31 = scmp.ge.s32.totalorder %s30, 1
      %s32 = scalar_select %p31, 0, %s30
      %s33 = sadd.s32 1, %s24
      %s34 = scalar_select %p31, %s33, %s24
      %p35 = scmp.ge.s32.totalorder %s34, 2
      %s36 = scalar_select %p35, 0, %s34
      %s37 = sadd.s32 %s24, %s25
      %s38 = sadd.s32 %s36, %s32
      %s39 = ssub.s32 %s37, %s38
      %p40 = scmp.eq.s32.totalorder %s39, 0
      %s42 = sadd.s32 %s41, 1
      %s43 = scalar_select %p40, %s41, %s42
      %p46 = pneg %p40
      %p47 = scmp.eq.s32.totalorder %s17, 1
      %p48 = por %p46, %p47
      %p49 = scmp.ne.s32.totalorder %s41, %s44
      %p50 = scmp.eq.s32.totalorder %s17, 0
      %p51 = por %p49, %p50
      %p52 = scmp.ne.s32.totalorder %s41, %s44
      %p53 = scmp.eq.s32.totalorder %s22, 1
      %p54 = por %p52, %p53
      %p55 = scmp.ne.s32.totalorder %s44, %s45
      %p56 = scmp.eq.s32.totalorder %s22, 0
      %p57 = por %p55, %p56
      %p58 = scmp.ne.s32.totalorder %s44, %s45
      %p59 = scmp.eq.s32.totalorder %s23, 1
      %p60 = por %p58, %p59
      %p62 = scmp.ne.s32.totalorder %s45, %s61
      %p63 = scmp.eq.s32.totalorder %s23, 0
      %p64 = por %p62, %p63
      %s66 = sadd.s32 %s65, 1
      %p69 = scmp.eq.s32.totalorder %s17, 1
      %p70 = scmp.ne.s32.totalorder %s65, %s67
      %p71 = scmp.eq.s32.totalorder %s17, 0
      %p72 = por %p70, %p71
      %p73 = scmp.ne.s32.totalorder %s65, %s67
      %p74 = scmp.eq.s32.totalorder %s22, 1
      %p75 = por %p73, %p74
      %p76 = scmp.ne.s32.totalorder %s67, %s68
      %p77 = scmp.eq.s32.totalorder %s22, 0
      %p78 = por %p76, %p77
      %p79 = scmp.ne.s32.totalorder %s67, %s68
      %p80 = scmp.eq.s32.totalorder %s23, 1
      %p81 = por %p79, %p80
      %p83 = scmp.ne.s32.totalorder %s68, %s82
      %p84 = scmp.eq.s32.totalorder %s23, 0
      %p85 = por %p83, %p84
      %s87 = sadd.s32 %s86, 1
      %p90 = scmp.eq.s32.totalorder %s17, 1
      %p91 = scmp.ne.s32.totalorder %s86, %s88
      %p92 = scmp.eq.s32.totalorder %s17, 0
      %p93 = por %p91, %p92
      %p94 = scmp.ne.s32.totalorder %s86, %s88
      %p95 = scmp.eq.s32.totalorder %s22, 1
      %p96 = por %p94, %p95
      %p97 = scmp.ne.s32.totalorder %s88, %s89
      %p98 = scmp.eq.s32.totalorder %s22, 0
      %p99 = por %p97, %p98
      %p100 = scmp.ne.s32.totalorder %s88, %s89
      %p101 = scmp.eq.s32.totalorder %s23, 1
      %p102 = por %p100, %p101
      %p104 = scmp.ne.s32.totalorder %s89, %s103
      %p105 = scmp.eq.s32.totalorder %s23, 0
      %p106 = por %p104, %p105
      %s108 = sadd.s32 %s107, 1
      %p111 = scmp.eq.s32.totalorder %s17, 1
      %p112 = scmp.ne.s32.totalorder %s107, %s109
      %p113 = scmp.eq.s32.totalorder %s17, 0
      %p114 = por %p112, %p113
      %p115 = scmp.ne.s32.totalorder %s107, %s109
      %p116 = scmp.eq.s32.totalorder %s22, 1
      %p117 = por %p115, %p116
      %p118 = scmp.ne.s32.totalorder %s109, %s110
      %p119 = scmp.eq.s32.totalorder %s22, 0
      %p120 = por %p118, %p119
      %p121 = scmp.ne.s32.totalorder %s109, %s110
      %p122 = scmp.eq.s32.totalorder %s23, 1
      %p123 = por %p121, %p122
      %p125 = scmp.ne.s32.totalorder %s110, %s124
      %p126 = scmp.eq.s32.totalorder %s23, 0
      %p127 = por %p125, %p126
      %s129 = sadd.s32 %s128, 1
      %p132 = scmp.eq.s32.totalorder %s17, 1
      %p133 = scmp.ne.s32.totalorder %s128, %s130
      %p134 = scmp.eq.s32.totalorder %s17, 0
      %p135 = por %p133, %p134
      %p136 = scmp.ne.s32.totalorder %s128, %s130
      %p137 = scmp.eq.s32.totalorder %s22, 1
      %p138 = por %p136, %p137
      %p139 = scmp.ne.s32.totalorder %s130, %s131
      %p140 = scmp.eq.s32.totalorder %s22, 0
      %p141 = por %p139, %p140
      %p142 = scmp.ne.s32.totalorder %s130, %s131
      %p143 = scmp.eq.s32.totalorder %s23, 1
      %p144 = por %p142, %p143
      %p146 = scmp.ne.s32.totalorder %s131, %s145
      %p147 = scmp.eq.s32.totalorder %s23, 0
      %p148 = por %p146, %p147
      %s150 = sadd.s32 %s149, 1
      %p153 = scmp.eq.s32.totalorder %s17, 1
      %p154 = scmp.ne.s32.totalorder %s149, %s151
      %p155 = scmp.eq.s32.totalorder %s17, 0
      %p156 = por %p154, %p155
      %p157 = scmp.ne.s32.totalorder %s149, %s151
      %p158 = scmp.eq.s32.totalorder %s22, 1
      %p159 = por %p157, %p158
      %p160 = scmp.ne.s32.totalorder %s151, %s152
      %p161 = scmp.eq.s32.totalorder %s22, 0
      %p162 = por %p160, %p161
      %p163 = scmp.ne.s32.totalorder %s151, %s152
      %p164 = scmp.eq.s32.totalorder %s23, 1
      %p165 = por %p163, %p164
      %p167 = scmp.ne.s32.totalorder %s152, %s166
      %p168 = scmp.eq.s32.totalorder %s23, 0
      %p169 = por %p167, %p168
      %s170 = sadd.s32 %s24, %s25
      %s171 = sadd.s32 %s36, %s32
      %s172 = ssub.s32 %s170, %s171
      %p173 = scmp.eq.s32.totalorder %s172, 0
      %s175 = sadd.s32 %s174, 1
      %s176 = scalar_select %p173, %s174, %s175
      %p179 = pneg %p173
      %p180 = scmp.eq.s32.totalorder %s17, 1
      %p181 = por %p179, %p180
      %p182 = scmp.ne.s32.totalorder %s174, %s177
      %p183 = scmp.eq.s32.totalorder %s17, 0
      %p184 = por %p182, %p183
      %p185 = scmp.ne.s32.totalorder %s174, %s177
      %p186 = scmp.eq.s32.totalorder %s22, 1
      %p187 = por %p185, %p186
      %p188 = scmp.ne.s32.totalorder %s177, %s178
      %p189 = scmp.eq.s32.totalorder %s22, 0
      %p190 = por %p188, %p189
      %p191 = scmp.ne.s32.totalorder %s177, %s178
      %p192 = scmp.eq.s32.totalorder %s23, 1
      %p193 = por %p191, %p192
      %p195 = scmp.ne.s32.totalorder %s178, %s194
      %p196 = scmp.eq.s32.totalorder %s23, 0
      %p197 = por %p195, %p196
      %s198 = sadd.s32 %s24, %s25
      %s199 = sadd.s32 %s36, %s32
      %s200 = ssub.s32 %s198, %s199
      %p201 = scmp.eq.s32.totalorder %s200, 0
      %s203 = sadd.s32 %s202, 1
      %s204 = scalar_select %p201, %s202, %s203
      %p207 = pneg %p201
      %p208 = scmp.eq.s32.totalorder %s17, 1
      %p209 = por %p207, %p208
      %p210 = scmp.ne.s32.totalorder %s202, %s205
      %p211 = scmp.eq.s32.totalorder %s17, 0
      %p212 = por %p210, %p211
      %p213 = scmp.ne.s32.totalorder %s202, %s205
      %p214 = scmp.eq.s32.totalorder %s22, 1
      %p215 = por %p213, %p214
      %p216 = scmp.ne.s32.totalorder %s205, %s206
      %p217 = scmp.eq.s32.totalorder %s22, 0
      %p218 = por %p216, %p217
      %p219 = scmp.ne.s32.totalorder %s205, %s206
      %p220 = scmp.eq.s32.totalorder %s23, 1
      %p221 = por %p219, %p220
      %p223 = scmp.ne.s32.totalorder %s206, %s222
      %p224 = scmp.eq.s32.totalorder %s23, 0
      %p225 = por %p223, %p224
      %p226 = scmp.le.s32.totalorder 1, %s17
      %p227 = scmp.lt.s32.totalorder %s17, 3
      %p228 = pnand %p226, %p227
      %p229 = pneg %p228
      // Predicated region
      $region9: #{up_forward.3} parent=5 // pred_check
        _
      $region10: #{up_forward.3} parent=5 // pred_check_branch
        %231 = sbr.rel (%p228) target = $region12
      $region11: #{up_forward.3} parent=5 // pred_region
        %s232 = ssub.s32 %s17, 1
        // Predicated region
        $region13: #{up_forward.3} parent=11 // pred_check
          %p233 = pneg %p78
        $region14: #{up_forward.3} parent=11 // pred_check_branch
          %235 = sbr.rel (%p233) target = $region16
        $region15: #{up_forward.3} parent=11 // pred_region
          _
        $region16: #{up_forward.3} parent=11 // pred_fallthru
          _
        // Predicated region
        $region17: #{up_forward.3} parent=11 // pred_check
          %p236 = pneg %p99
        $region18: #{up_forward.3} parent=11 // pred_check_branch
          %238 = sbr.rel (%p236) target = $region20
        $region19: #{up_forward.3} parent=11 // pred_region
          _
        $region20: #{up_forward.3} parent=11 // pred_fallthru
          _
        // Predicated region
        $region21: #{up_forward.3} parent=11 // pred_check
          %p239 = pneg %p120
        $region22: #{up_forward.3} parent=11 // pred_check_branch
          %241 = sbr.rel (%p239) target = $region24
        $region23: #{up_forward.3} parent=11 // pred_region
          _
        $region24: #{up_forward.3} parent=11 // pred_fallthru
          _
        // Predicated region
        $region25: #{up_forward.3} parent=11 // pred_check
          %p242 = pneg %p141
        $region26: #{up_forward.3} parent=11 // pred_check_branch
          %244 = sbr.rel (%p242) target = $region28
        $region27: #{up_forward.3} parent=11 // pred_region
          _
        $region28: #{up_forward.3} parent=11 // pred_fallthru
          _
        // Predicated region
        $region29: #{up_forward.3} parent=11 // pred_check
          %p245 = pneg %p162
        $region30: #{up_forward.3} parent=11 // pred_check_branch
          %247 = sbr.rel (%p245) target = $region32
        $region31: #{up_forward.3} parent=11 // pred_region
          _
        $region32: #{up_forward.3} parent=11 // pred_fallthru
          _
      $region12: #{up_forward.3} parent=5 // pred_fallthru
        _
      %p248 = scmp.lt.s32.totalorder %s17, 2
      // Predicated region
      $region33: #{up_forward.3} parent=5 // pred_check
        %p249 = pneg %p248
      $region34: #{up_forward.3} parent=5 // pred_check_branch
        %251 = sbr.rel (%p249) target = $region36
      $region35: #{up_forward.3} parent=5 // pred_region
        // Predicated region
        $region37: #{up_forward.3} parent=35 // pred_check
          %p252 = pneg %p51
        $region38: #{up_forward.3} parent=35 // pred_check_branch
          %254 = sbr.rel (%p252) target = $region40
        $region39: #{up_forward.3} parent=35 // pred_region
          %s255 = sadd.s32 %s24, %s25
          %p256 = scmp.lt.s32.totalorder %s255, 1
          %s257 = scalar_select %p256, %s255, 1
          %s258 = smul.addr %s257, 20
          %s259 = smul.addr %s258, 4
          %s260 = scalar_lea.vmem %s0, %s259
          %s261 = sadd.s32 %s24, %s25
        $region40: #{up_forward.3} parent=35 // pred_fallthru
          _
      $region36: #{up_forward.3} parent=5 // pred_fallthru
        _
      %p262 = scmp.le.s32.totalorder 1, %s17
      %p263 = scmp.lt.s32.totalorder %s17, 3
      %p264 = pnand %p262, %p263
      %p265 = pneg %p264
      // Predicated region
      $region41: #{up_forward.3} parent=5 // pred_check
        _
      $region42: #{up_forward.3} parent=5 // pred_check_branch
        %267 = sbr.rel (%p264) target = $region44
      $region43: #{up_forward.3} parent=5 // pred_region
        %s268 = ssub.s32 %s17, 1
        %s269 = sadd.s32 %s26, %s27
        %p270 = scmp.lt.s32.totalorder %s269, 1
        %s271 = scalar_select %p270, %s269, 1
        %s272 = smul.addr %s271, 20
        %s273 = smul.addr %s272, 4
        %s274 = scalar_lea.vmem %s0, %s273
        %p275 = pneg %p57
        %p276 = pneg %p54
        %p277 = pneg %p78
        %p278 = pneg %p75
        %p279 = pneg %p99
        %p280 = pneg %p96
        %p281 = pneg %p120
        %p282 = pneg %p117
        %p283 = pneg %p141
        %p284 = pneg %p138
        %p285 = pneg %p162
        %p286 = pneg %p159
        %p287 = pneg %p190
        %p288 = pneg %p187
        %s289 = sadd.s32 %s26, %s27
        %p290 = scmp.lt.s32.totalorder %s289, 1
        %s291 = scalar_select %p290, %s289, 1
        %s292 = smul.addr %s291, 8
        %s293 = smul.addr %s292, 4
        %s294 = scalar_lea.vmem %s6, %s293
        %p295 = pneg %p218
        %p296 = pneg %p215
        %s297 = sand.u32 %s205, 1
        %s298 = scalar_lea.sflag [#allocation3], %s297
        %s299 = sand.u32 %s205, 1
        %s300 = smul.addr %s299, 8
        %s301 = scalar_lea.vmem [#allocation2], %s300
        %s302 = sadd.s32 %s26, %s27
        %p303 = scmp.lt.s32.totalorder %s302, 1
        %s304 = scalar_select %p303, %s302, 1
        %s305 = smul.addr %s304, 20
        %s306 = smul.addr %s305, 4
        %s307 = scalar_lea.vmem %s0, %s306
        %s308 = sadd.s32 %s26, %s27
        %s309 = sadd.s32 %s26, %s27
        %p310 = scmp.lt.s32.totalorder %s309, 1
        %s311 = scalar_select %p310, %s309, 1
        %s312 = smul.addr %s311, 8
        %s313 = smul.addr %s312, 4
        %s314 = scalar_lea.vmem %s6, %s313
        %s315 = sadd.s32 %s26, %s27
        %s316 = sadd.s32 %s26, %s27
        %v318 = vld [vmem:[%s307] sm:$0xf]
        %v319 = vld [vmem:[%s307 + $0x4] sm:$0x1]
        %v320 = vld [vmem:[%s307 + $0x8] sm:$0xf]
        %v321 = vld [vmem:[%s307 + $0xc] sm:$0x1]
        %v322 = vld [vmem:[%s307 + $0x10] sm:$0xf]
        %v323 = vld [vmem:[%s307 + $0x14] sm:$0x1]
        %v324 = vld [vmem:[%s307 + $0x18] sm:$0xf]
        %v325 = vld [vmem:[%s307 + $0x1c] sm:$0x1]
        %v326 = vld [vmem:[%s307 + $0x20] sm:$0xf]
        %v327 = vld [vmem:[%s307 + $0x24] sm:$0x1]
        %v328 = vld [vmem:[%s307 + $0x28] sm:$0xf]
        %v329 = vld [vmem:[%s307 + $0x2c] sm:$0x1]
        %v330 = vld [vmem:[%s307 + $0x30] sm:$0xf]
        %v331 = vld [vmem:[%s307 + $0x34] sm:$0x1]
        %v332 = vld [vmem:[%s307 + $0x38] sm:$0xf]
        %v333 = vld [vmem:[%s307 + $0x3c] sm:$0x1]
        %v334 = vld [vmem:[%s307 + $0x40] sm:$0xf]
        %v335 = vld [vmem:[%s307 + $0x44] sm:$0x1]
        %v336 = vld [vmem:[%s307 + $0x48] sm:$0xf]
        %v337 = vld [vmem:[%s307 + $0x4c] sm:$0x1]
        %v338 = vld [vmem:[%s1] sm:$0xf]
        %v339 = vld [vmem:[%s1 + $0x4] sm:$0xf]
        %v340 = vld [vmem:[%s1 + $0x8] sm:$0xf]
        %v341 = vld [vmem:[%s1 + $0xc] sm:$0xf]
        %v342 = vld [vmem:[%s1 + $0x10] sm:$0xf]
        %v343 = vld [vmem:[%s1 + $0x14] sm:$0xf]
        %v344 = vld [vmem:[%s1 + $0x18] sm:$0xf]
        %v345 = vld [vmem:[%s1 + $0x1c] sm:$0xf]
        %v346 = vld [vmem:[%s1 + $0x20] sm:$0xf]
        %v347 = vld [vmem:[%s1 + $0x24] sm:$0xf]
        %v348 = vld [vmem:[%s1 + $0x28] sm:$0xf]
        %v349 = vld [vmem:[%s1 + $0x2c] sm:$0xf]
        %v350 = vld [vmem:[%s1 + $0x30] sm:$0xf]
        %v351 = vld [vmem:[%s1 + $0x34] sm:$0xf]
        %v352 = vld [vmem:[%s1 + $0x38] sm:$0xf]
        %v353 = vld [vmem:[%s1 + $0x3c] sm:$0xf]
        %vm354 = vsmask.f32 3328
        %vm355 = vsmask.f32 7440
        %vm356 = vmor %vm354, %vm355
        %v358 = vshrl.u32 %v318, 16
        %v360 = vrot.slane %v358, 4
        %v361 = vshll.u32 %v318, 16
        %v363 = vrot.slane %v361, 5
        %v364 = vor.u32 %v360, %v363
        %v365 = vrot.slane %v364, 4
        %v367 = vshll.u32 %v319, 16
        %v369 = vrot.slane %v367, 5
        %v370 = vsel %vm356, %v365, %v369
        %v372 = vshrl.u32 %v320, 16
        %v374 = vrot.slane %v372, 4
        %v375 = vshll.u32 %v320, 16
        %v377 = vrot.slane %v375, 5
        %v378 = vor.u32 %v374, %v377
        %v379 = vrot.slane %v378, 4
        %v381 = vshll.u32 %v321, 16
        %v383 = vrot.slane %v381, 5
        %v384 = vsel %vm356, %v379, %v383
        %v386 = vshrl.u32 %v322, 16
        %v388 = vrot.slane %v386, 4
        %v389 = vshll.u32 %v322, 16
        %v391 = vrot.slane %v389, 5
        %v392 = vor.u32 %v388, %v391
        %v393 = vrot.slane %v392, 4
        %v395 = vshll.u32 %v323, 16
        %v397 = vrot.slane %v395, 5
        %v398 = vsel %vm356, %v393, %v397
        %v400 = vshrl.u32 %v324, 16
        %v402 = vrot.slane %v400, 4
        %v403 = vshll.u32 %v324, 16
        %v405 = vrot.slane %v403, 5
        %v406 = vor.u32 %v402, %v405
        %v407 = vrot.slane %v406, 4
        %v409 = vshll.u32 %v325, 16
        %v411 = vrot.slane %v409, 5
        %v412 = vsel %vm356, %v407, %v411
        %v414 = vshrl.u32 %v326, 16
        %v416 = vrot.slane %v414, 4
        %v417 = vshll.u32 %v326, 16
        %v419 = vrot.slane %v417, 5
        %v420 = vor.u32 %v416, %v419
        %v421 = vrot.slane %v420, 4
        %v423 = vshll.u32 %v327, 16
        %v425 = vrot.slane %v423, 5
        %v426 = vsel %vm356, %v421, %v425
        %v428 = vshrl.u32 %v328, 16
        %v430 = vrot.slane %v428, 4
        %v431 = vshll.u32 %v328, 16
        %v433 = vrot.slane %v431, 5
        %v434 = vor.u32 %v430, %v433
        %v435 = vrot.slane %v434, 4
        %v437 = vshll.u32 %v329, 16
        %v439 = vrot.slane %v437, 5
        %v440 = vsel %vm356, %v435, %v439
        %v442 = vshrl.u32 %v330, 16
        %v444 = vrot.slane %v442, 4
        %v445 = vshll.u32 %v330, 16
        %v447 = vrot.slane %v445, 5
        %v448 = vor.u32 %v444, %v447
        %v449 = vrot.slane %v448, 4
        %v451 = vshll.u32 %v331, 16
        %v453 = vrot.slane %v451, 5
        %v454 = vsel %vm356, %v449, %v453
        %v456 = vshrl.u32 %v332, 16
        %v458 = vrot.slane %v456, 4
        %v459 = vshll.u32 %v332, 16
        %v461 = vrot.slane %v459, 5
        %v462 = vor.u32 %v458, %v461
        %v463 = vrot.slane %v462, 4
        %v465 = vshll.u32 %v333, 16
        %v467 = vrot.slane %v465, 5
        %v468 = vsel %vm356, %v463, %v467
        %s469 = scalar_lea.vmem %s1, 64
        %v470 = vld [vmem:[%s469] sm:$0xf]
        %v471 = vld [vmem:[%s469 + $0x4] sm:$0xf]
        %v472 = vld [vmem:[%s469 + $0x8] sm:$0xf]
        %v473 = vld [vmem:[%s469 + $0xc] sm:$0xf]
        %v474 = vld [vmem:[%s469 + $0x10] sm:$0xf]
        %v475 = vld [vmem:[%s469 + $0x14] sm:$0xf]
        %v476 = vld [vmem:[%s469 + $0x18] sm:$0xf]
        %v477 = vld [vmem:[%s469 + $0x1c] sm:$0xf]
        %v478 = vld [vmem:[%s469 + $0x20] sm:$0xf]
        %v479 = vld [vmem:[%s469 + $0x24] sm:$0xf]
        %v480 = vld [vmem:[%s469 + $0x28] sm:$0xf]
        %v481 = vld [vmem:[%s469 + $0x2c] sm:$0xf]
        %v482 = vld [vmem:[%s469 + $0x30] sm:$0xf]
        %v483 = vld [vmem:[%s469 + $0x34] sm:$0xf]
        %v484 = vld [vmem:[%s469 + $0x38] sm:$0xf]
        %v485 = vld [vmem:[%s469 + $0x3c] sm:$0xf]
        %v486 = vunpack.c.l.b16 %v370
        %v487 = vunpack.c.l.b16 %v384
        %v488 = vunpack.c.l.b16 %v398
        %v489 = vunpack.c.l.b16 %v412
        %v490 = vunpack.c.l.b16 %v426
        %v491 = vunpack.c.l.b16 %v440
        %v492 = vunpack.c.l.b16 %v454
        %v493 = vunpack.c.l.b16 %v468
        %v494 = vpack.c.b16 %v487, %v486
        %v495 = vpack.c.b16 %v489, %v488
        %v496 = vpack.c.b16 %v491, %v490
        %v497 = vpack.c.b16 %v493, %v492
        %v518 = vunpack.c.l.b16 %v470
        %v519 = vunpack.c.l.b16 %v471
        %v520 = vunpack.c.l.b16 %v472
        %v521 = vunpack.c.l.b16 %v473
        %v522 = vunpack.c.l.b16 %v474
        %v523 = vunpack.c.l.b16 %v475
        %v524 = vunpack.c.l.b16 %v476
        %v525 = vunpack.c.l.b16 %v477
        %v526 = vunpack.c.l.b16 %v478
        %v527 = vunpack.c.l.b16 %v479
        %v528 = vunpack.c.l.b16 %v480
        %v529 = vunpack.c.l.b16 %v481
        %v530 = vunpack.c.l.b16 %v482
        %v531 = vunpack.c.l.b16 %v483
        %v532 = vunpack.c.l.b16 %v484
        %v533 = vunpack.c.l.b16 %v485
        %v534 = vpack.c.b16 %v519, %v518
        %v535 = vpack.c.b16 %v521, %v520
        %v536 = vpack.c.b16 %v523, %v522
        %v537 = vpack.c.b16 %v525, %v524
        %v538 = vpack.c.b16 %v527, %v526
        %v539 = vpack.c.b16 %v529, %v528
        %v540 = vpack.c.b16 %v531, %v530
        %v541 = vpack.c.b16 %v533, %v532
        %550 = vmatprep.subr.bf16.mxu0 0
        %551 = vmatpush1.bf16.msra.mxu0 %v534
        %552 = vmatprep.subr.bf16.mxu0 0
        %553 = vmatpush1.bf16.msra.mxu0 %v535
        %554 = vmatprep.subr.bf16.mxu0 0
        %555 = vmatpush1.bf16.msra.mxu0 %v536
        %556 = vmatprep.subr.bf16.mxu0 0
        %557 = vmatpush1.bf16.msra.mxu0 %v537
        %558 = vmatprep.subr.bf16.mxu0 0
        %559 = vmatpush1.bf16.msra.mxu0 %v538
        %560 = vmatprep.subr.bf16.mxu0 0
        %561 = vmatpush1.bf16.msra.mxu0 %v539
        %562 = vmatprep.subr.bf16.mxu0 0
        %563 = vmatpush1.bf16.msra.mxu0 %v540
        %564 = vmatprep.subr.bf16.mxu0 0
        %565 = vmatpush1.bf16.msra.mxu0 %v541
        %566 = vmatprep.subr.bf16.mxu0 0
        %567 = vmatpush1.bf16.msra.mxu0 0
        %568 = vmatprep.subr.bf16.mxu0 0
        %569 = vmatpush1.bf16.msra.mxu0 0
        %570 = vmatprep.subr.bf16.mxu0 0
        %571 = vmatpush1.bf16.msra.mxu0 0
        %572 = vmatprep.subr.bf16.mxu0 0
        %573 = vmatpush1.bf16.msra.mxu0 0
        %574 = vmatprep.subr.bf16.mxu0 0
        %575 = vmatpush1.bf16.msra.mxu0 0
        %576 = vmatprep.subr.bf16.mxu0 0
        %577 = vmatpush1.bf16.msra.mxu0 0
        %578 = vmatprep.subr.bf16.mxu0 0
        %579 = vmatpush1.bf16.msra.mxu0 0
        %580 = vmatprep.subr.bf16.mxu0 0
        %581 = vmatpush1.bf16.msra.mxu0 0
        %582 = vmatprep.mubr.bf16.mxu0 0
        %583 = vmatmul.mubr.bf16.gmra.mrb[0].mxu0 %v494
        %v584 = vpop.f32.mrb[0].mxu0
        %v585 = vadd.f32 0.0, %v584
        %v586 = vpop.f32.mrb[0].mxu0
        %v587 = vpop.f32.mrb[0].mxu0
        %v588 = vadd.f32 0.0, %v587
        %v589 = vpop.f32.mrb[0].mxu0
        %590 = vmatprep.mubr.bf16.mxu0 0
        %591 = vmatmul.mubr.bf16.gmra.mrb[0].mxu0 %v495
        %v592 = vpop.f32.mrb[0].mxu0
        %v593 = vadd.f32 0.0, %v592
        %v594 = vpop.f32.mrb[0].mxu0
        %v595 = vpop.f32.mrb[0].mxu0
        %v596 = vadd.f32 0.0, %v595
        %v597 = vpop.f32.mrb[0].mxu0
        %598 = vmatprep.mubr.bf16.mxu0 0
        %599 = vmatmul.mubr.bf16.gmra.mrb[0].mxu0 %v496
        %v600 = vpop.f32.mrb[0].mxu0
        %v601 = vadd.f32 0.0, %v600
        %v602 = vpop.f32.mrb[0].mxu0
        %v603 = vpop.f32.mrb[0].mxu0
        %v604 = vadd.f32 0.0, %v603
        %v605 = vpop.f32.mrb[0].mxu0
        %606 = vmatprep.mubr.bf16.mxu0 0
        %607 = vmatmul.mubr.bf16.gmra.mrb[0].mxu0 %v497
        %v608 = vpop.f32.mrb[0].mxu0
        %v609 = vadd.f32 0.0, %v608
        %v610 = vpop.f32.mrb[0].mxu0
        %v611 = vpop.f32.mrb[0].mxu0
        %v612 = vadd.f32 0.0, %v611
        %v613 = vpop.f32.mrb[0].mxu0
        %614 = vdwg.mxu0
        %v623 = vunpack.c.l.b16 %v318
        %v624 = vunpack.c.l.b16 %v320
        %v625 = vunpack.c.l.b16 %v322
        %v626 = vunpack.c.l.b16 %v324
        %v627 = vunpack.c.l.b16 %v326
        %v628 = vunpack.c.l.b16 %v328
        %v629 = vunpack.c.l.b16 %v330
        %v630 = vunpack.c.l.b16 %v332
        %v631 = vpack.c.b16 %v624, %v623
        %v632 = vpack.c.b16 %v626, %v625
        %v633 = vpack.c.b16 %v628, %v627
        %v634 = vpack.c.b16 %v630, %v629
        %v655 = vunpack.c.l.b16 %v338
        %v656 = vunpack.c.l.b16 %v339
        %v657 = vunpack.c.l.b16 %v340
        %v658 = vunpack.c.l.b16 %v341
        %v659 = vunpack.c.l.b16 %v342
        %v660 = vunpack.c.l.b16 %v343
        %v661 = vunpack.c.l.b16 %v344
        %v662 = vunpack.c.l.b16 %v345
        %v663 = vunpack.c.l.b16 %v346
        %v664 = vunpack.c.l.b16 %v347
        %v665 = vunpack.c.l.b16 %v348
        %v666 = vunpack.c.l.b16 %v349
        %v667 = vunpack.c.l.b16 %v350
        %v668 = vunpack.c.l.b16 %v351
        %v669 = vunpack.c.l.b16 %v352
        %v670 = vunpack.c.l.b16 %v353
        %v671 = vpack.c.b16 %v656, %v655
        %v672 = vpack.c.b16 %v658, %v657
        %v673 = vpack.c.b16 %v660, %v659
        %v674 = vpack.c.b16 %v662, %v661
        %v675 = vpack.c.b16 %v664, %v663
        %v676 = vpack.c.b16 %v666, %v665
        %v677 = vpack.c.b16 %v668, %v667
        %v678 = vpack.c.b16 %v670, %v669
        %687 = vmatprep.subr.bf16.mxu0 0
        %688 = vmatpush1.bf16.msra.mxu0 %v671
        %689 = vmatprep.subr.bf16.mxu0 0
        %690 = vmatpush1.bf16.msra.mxu0 %v672
        %691 = vmatprep.subr.bf16.mxu0 0
        %692 = vmatpush1.bf16.msra.mxu0 %v673
        %693 = vmatprep.subr.bf16.mxu0 0
        %694 = vmatpush1.bf16.msra.mxu0 %v674
        %695 = vmatprep.subr.bf16.mxu0 0
        %696 = vmatpush1.bf16.msra.mxu0 %v675
        %697 = vmatprep.subr.bf16.mxu0 0
        %698 = vmatpush1.bf16.msra.mxu0 %v676
        %699 = vmatprep.subr.bf16.mxu0 0
        %700 = vmatpush1.bf16.msra.mxu0 %v677
        %701 = vmatprep.subr.bf16.mxu0 0
        %702 = vmatpush1.bf16.msra.mxu0 %v678
        %703 = vmatprep.subr.bf16.mxu0 0
        %704 = vmatpush1.bf16.msra.mxu0 0
        %705 = vmatprep.subr.bf16.mxu0 0
        %706 = vmatpush1.bf16.msra.mxu0 0
        %707 = vmatprep.subr.bf16.mxu0 0
        %708 = vmatpush1.bf16.msra.mxu0 0
        %709 = vmatprep.subr.bf16.mxu0 0
        %710 = vmatpush1.bf16.msra.mxu0 0
        %711 = vmatprep.subr.bf16.mxu0 0
        %712 = vmatpush1.bf16.msra.mxu0 0
        %713 = vmatprep.subr.bf16.mxu0 0
        %714 = vmatpush1.bf16.msra.mxu0 0
        %715 = vmatprep.subr.bf16.mxu0 0
        %716 = vmatpush1.bf16.msra.mxu0 0
        %717 = vmatprep.subr.bf16.mxu0 0
        %718 = vmatpush1.bf16.msra.mxu0 0
        %719 = vmatprep.mubr.bf16.mxu0 0
        %720 = vmatmul.mubr.bf16.gmra.mrb[0].mxu0 %v631
        %v721 = vpop.f32.mrb[0].mxu0
        %v722 = vadd.f32 %v585, %v721
        %v723 = vpop.f32.mrb[0].mxu0
        %v724 = vpop.f32.mrb[0].mxu0
        %v725 = vadd.f32 %v588, %v724
        %v726 = vpop.f32.mrb[0].mxu0
        %727 = vmatprep.mubr.bf16.mxu0 0
        %728 = vmatmul.mubr.bf16.gmra.mrb[0].mxu0 %v632
        %v729 = vpop.f32.mrb[0].mxu0
        %v730 = vadd.f32 %v593, %v729
        %v731 = vpop.f32.mrb[0].mxu0
        %v732 = vpop.f32.mrb[0].mxu0
        %v733 = vadd.f32 %v596, %v732
        %v734 = vpop.f32.mrb[0].mxu0
        %735 = vmatprep.mubr.bf16.mxu0 0
        %736 = vmatmul.mubr.bf16.gmra.mrb[0].mxu0 %v633
        %v737 = vpop.f32.mrb[0].mxu0
        %v738 = vadd.f32 %v601, %v737
        %v739 = vpop.f32.mrb[0].mxu0
        %v740 = vpop.f32.mrb[0].mxu0
        %v741 = vadd.f32 %v604, %v740
        %v742 = vpop.f32.mrb[0].mxu0
        %743 = vmatprep.mubr.bf16.mxu0 0
        %744 = vmatmul.mubr.bf16.gmra.mrb[0].mxu0 %v634
        %v745 = vpop.f32.mrb[0].mxu0
        %v746 = vadd.f32 %v609, %v745
        %v747 = vpop.f32.mrb[0].mxu0
        %v748 = vpop.f32.mrb[0].mxu0
        %v749 = vadd.f32 %v612, %v748
        %v750 = vpop.f32.mrb[0].mxu0
        %751 = vdwg.mxu0
        %vm760 = vcmask 1042432
        %vm761 = vcmask 1046532
        %vm762 = vmor %vm760, %vm761
        %v763 = vrot.slane %v318, 5
        %v764 = vrot.slane %v763, 4
        %v765 = vrot.slane %v319, 5
        %v766 = vsel %vm762, %v764, %v765
        %v767 = vrot.slane %v320, 5
        %v768 = vrot.slane %v767, 4
        %v769 = vrot.slane %v321, 5
        %v770 = vsel %vm762, %v768, %v769
        %v771 = vrot.slane %v322, 5
        %v772 = vrot.slane %v771, 4
        %v773 = vrot.slane %v323, 5
        %v774 = vsel %vm762, %v772, %v773
        %v775 = vrot.slane %v324, 5
        %v776 = vrot.slane %v775, 4
        %v777 = vrot.slane %v325, 5
        %v778 = vsel %vm762, %v776, %v777
        %v779 = vrot.slane %v326, 5
        %v780 = vrot.slane %v779, 4
        %v781 = vrot.slane %v327, 5
        %v782 = vsel %vm762, %v780, %v781
        %v783 = vrot.slane %v328, 5
        %v784 = vrot.slane %v783, 4
        %v785 = vrot.slane %v329, 5
        %v786 = vsel %vm762, %v784, %v785
        %v787 = vrot.slane %v330, 5
        %v788 = vrot.slane %v787, 4
        %v789 = vrot.slane %v331, 5
        %v790 = vsel %vm762, %v788, %v789
        %v791 = vrot.slane %v332, 5
        %v792 = vrot.slane %v791, 4
        %v793 = vrot.slane %v333, 5
        %v794 = vsel %vm762, %v792, %v793
        %s795 = scalar_lea.vmem %s1, 128
        %v796 = vld [vmem:[%s795] sm:$0xf]
        %v797 = vld [vmem:[%s795 + $0x4] sm:$0xf]
        %v798 = vld [vmem:[%s795 + $0x8] sm:$0xf]
        %v799 = vld [vmem:[%s795 + $0xc] sm:$0xf]
        %v800 = vld [vmem:[%s795 + $0x10] sm:$0xf]
        %v801 = vld [vmem:[%s795 + $0x14] sm:$0xf]
        %v802 = vld [vmem:[%s795 + $0x18] sm:$0xf]
        %v803 = vld [vmem:[%s795 + $0x1c] sm:$0xf]
        %v804 = vld [vmem:[%s795 + $0x20] sm:$0xf]
        %v805 = vld [vmem:[%s795 + $0x24] sm:$0xf]
        %v806 = vld [vmem:[%s795 + $0x28] sm:$0xf]
        %v807 = vld [vmem:[%s795 + $0x2c] sm:$0xf]
        %v808 = vld [vmem:[%s795 + $0x30] sm:$0xf]
        %v809 = vld [vmem:[%s795 + $0x34] sm:$0xf]
        %v810 = vld [vmem:[%s795 + $0x38] sm:$0xf]
        %v811 = vld [vmem:[%s795 + $0x3c] sm:$0xf]
        %v812 = vunpack.c.l.b16 %v766
        %v813 = vunpack.c.l.b16 %v770
        %v814 = vunpack.c.l.b16 %v774
        %v815 = vunpack.c.l.b16 %v778
        %v816 = vunpack.c.l.b16 %v782
        %v817 = vunpack.c.l.b16 %v786
        %v818 = vunpack.c.l.b16 %v790
        %v819 = vunpack.c.l.b16 %v794
        %v820 = vpack.c.b16 %v813, %v812
        %v821 = vpack.c.b16 %v815, %v814
        %v822 = vpack.c.b16 %v817, %v816
        %v823 = vpack.c.b16 %v819, %v818
        %v844 = vunpack.c.l.b16 %v796
        %v845 = vunpack.c.l.b16 %v797
        %v846 = vunpack.c.l.b16 %v798
        %v847 = vunpack.c.l.b16 %v799
        %v848 = vunpack.c.l.b16 %v800
        %v849 = vunpack.c.l.b16 %v801
        %v850 = vunpack.c.l.b16 %v802
        %v851 = vunpack.c.l.b16 %v803
        %v852 = vunpack.c.l.b16 %v804
        %v853 = vunpack.c.l.b16 %v805
        %v854 = vunpack.c.l.b16 %v806
        %v855 = vunpack.c.l.b16 %v807
        %v856 = vunpack.c.l.b16 %v808
        %v857 = vunpack.c.l.b16 %v809
        %v858 = vunpack.c.l.b16 %v810
        %v859 = vunpack.c.l.b16 %v811
        %v860 = vpack.c.b16 %v845, %v844
        %v861 = vpack.c.b16 %v847, %v846
        %v862 = vpack.c.b16 %v849, %v848
        %v863 = vpack.c.b16 %v851, %v850
        %v864 = vpack.c.b16 %v853, %v852
        %v865 = vpack.c.b16 %v855, %v854
        %v866 = vpack.c.b16 %v857, %v856
        %v867 = vpack.c.b16 %v859, %v858
        %876 = vmatprep.subr.bf16.mxu0 0
        %877 = vmatpush1.bf16.msra.mxu0 %v860
        %878 = vmatprep.subr.bf16.mxu0 0
        %879 = vmatpush1.bf16.msra.mxu0 %v861
        %880 = vmatprep.subr.bf16.mxu0 0
        %881 = vmatpush1.bf16.msra.mxu0 %v862
        %882 = vmatprep.subr.bf16.mxu0 0
        %883 = vmatpush1.bf16.msra.mxu0 %v863
        %884 = vmatprep.subr.bf16.mxu0 0
        %885 = vmatpush1.bf16.msra.mxu0 %v864
        %886 = vmatprep.subr.bf16.mxu0 0
        %887 = vmatpush1.bf16.msra.mxu0 %v865
        %888 = vmatprep.subr.bf16.mxu0 0
        %889 = vmatpush1.bf16.msra.mxu0 %v866
        %890 = vmatprep.subr.bf16.mxu0 0
        %891 = vmatpush1.bf16.msra.mxu0 %v867
        %892 = vmatprep.subr.bf16.mxu0 0
        %893 = vmatpush1.bf16.msra.mxu0 0
        %894 = vmatprep.subr.bf16.mxu0 0
        %895 = vmatpush1.bf16.msra.mxu0 0
        %896 = vmatprep.subr.bf16.mxu0 0
        %897 = vmatpush1.bf16.msra.mxu0 0
        %898 = vmatprep.subr.bf16.mxu0 0
        %899 = vmatpush1.bf16.msra.mxu0 0
        %900 = vmatprep.subr.bf16.mxu0 0
        %901 = vmatpush1.bf16.msra.mxu0 0
        %902 = vmatprep.subr.bf16.mxu0 0
        %903 = vmatpush1.bf16.msra.mxu0 0
        %904 = vmatprep.subr.bf16.mxu0 0
        %905 = vmatpush1.bf16.msra.mxu0 0
        %906 = vmatprep.subr.bf16.mxu0 0
        %907 = vmatpush1.bf16.msra.mxu0 0
        %908 = vmatprep.mubr.bf16.mxu0 0
        %909 = vmatmul.mubr.bf16.gmra.mrb[0].mxu0 %v820
        %v910 = vpop.f32.mrb[0].mxu0
        %v911 = vadd.f32 0.0, %v910
        %v912 = vpop.f32.mrb[0].mxu0
        %v913 = vpop.f32.mrb[0].mxu0
        %v914 = vadd.f32 0.0, %v913
        %v915 = vpop.f32.mrb[0].mxu0
        %916 = vmatprep.mubr.bf16.mxu0 0
        %917 = vmatmul.mubr.bf16.gmra.mrb[0].mxu0 %v821
        %v918 = vpop.f32.mrb[0].mxu0
        %v919 = vadd.f32 0.0, %v918
        %v920 = vpop.f32.mrb[0].mxu0
        %v921 = vpop.f32.mrb[0].mxu0
        %v922 = vadd.f32 0.0, %v921
        %v923 = vpop.f32.mrb[0].mxu0
        %924 = vmatprep.mubr.bf16.mxu0 0
        %925 = vmatmul.mubr.bf16.gmra.mrb[0].mxu0 %v822
        %v926 = vpop.f32.mrb[0].mxu0
        %v927 = vadd.f32 0.0, %v926
        %v928 = vpop.f32.mrb[0].mxu0
        %v929 = vpop.f32.mrb[0].mxu0
        %v930 = vadd.f32 0.0, %v929
        %v931 = vpop.f32.mrb[0].mxu0
        %932 = vmatprep.mubr.bf16.mxu0 0
        %933 = vmatmul.mubr.bf16.gmra.mrb[0].mxu0 %v823
        %v934 = vpop.f32.mrb[0].mxu0
        %v935 = vadd.f32 0.0, %v934
        %v936 = vpop.f32.mrb[0].mxu0
        %v937 = vpop.f32.mrb[0].mxu0
        %v938 = vadd.f32 0.0, %v937
        %v939 = vpop.f32.mrb[0].mxu0
        %940 = vdwg.mxu0
        %v941 = vadd.f32 %v722, %v911
        %v942 = vadd.f32 %v725, %v914
        %v943 = vadd.f32 %v730, %v919
        %v944 = vadd.f32 %v733, %v922
        %v945 = vadd.f32 %v738, %v927
        %v946 = vadd.f32 %v741, %v930
        %v947 = vadd.f32 %v746, %v935
        %v948 = vadd.f32 %v749, %v938
        %s949 = scalar_lea.vmem %s1, 192
        %v950 = vld [vmem:[%s949] sm:$0xf]
        %v951 = vld [vmem:[%s949 + $0x4] sm:$0xf]
        %v952 = vld [vmem:[%s949 + $0x8] sm:$0xf]
        %v953 = vld [vmem:[%s949 + $0xc] sm:$0xf]
        %v954 = vld [vmem:[%s949 + $0x10] sm:$0xf]
        %v955 = vld [vmem:[%s949 + $0x14] sm:$0xf]
        %v956 = vld [vmem:[%s949 + $0x18] sm:$0xf]
        %v957 = vld [vmem:[%s949 + $0x1c] sm:$0xf]
        %v958 = vld [vmem:[%s949 + $0x20] sm:$0xf]
        %v959 = vld [vmem:[%s949 + $0x24] sm:$0xf]
        %v960 = vld [vmem:[%s949 + $0x28] sm:$0xf]
        %v961 = vld [vmem:[%s949 + $0x2c] sm:$0xf]
        %v962 = vld [vmem:[%s949 + $0x30] sm:$0xf]
        %v963 = vld [vmem:[%s949 + $0x34] sm:$0xf]
        %v964 = vld [vmem:[%s949 + $0x38] sm:$0xf]
        %v965 = vld [vmem:[%s949 + $0x3c] sm:$0xf]
        %v967 = vunpack.c.l.b16 %v334
        %v968 = vpack.c.b16 %v625, %v624
        %v969 = vpack.c.b16 %v627, %v626
        %v970 = vpack.c.b16 %v629, %v628
        %v971 = vpack.c.b16 %v967, %v630
        %v992 = vunpack.c.l.b16 %v950
        %v993 = vunpack.c.l.b16 %v951
        %v994 = vunpack.c.l.b16 %v952
        %v995 = vunpack.c.l.b16 %v953
        %v996 = vunpack.c.l.b16 %v954
        %v997 = vunpack.c.l.b16 %v955
        %v998 = vunpack.c.l.b16 %v956
        %v999 = vunpack.c.l.b16 %v957
        %v1000 = vunpack.c.l.b16 %v958
        %v1001 = vunpack.c.l.b16 %v959
        %v1002 = vunpack.c.l.b16 %v960
        %v1003 = vunpack.c.l.b16 %v961
        %v1004 = vunpack.c.l.b16 %v962
        %v1005 = vunpack.c.l.b16 %v963
        %v1006 = vunpack.c.l.b16 %v964
        %v1007 = vunpack.c.l.b16 %v965
        %v1008 = vpack.c.b16 %v993, %v992
        %v1009 = vpack.c.b16 %v995, %v994
        %v1010 = vpack.c.b16 %v997, %v996
        %v1011 = vpack.c.b16 %v999, %v998
        %v1012 = vpack.c.b16 %v1001, %v1000
        %v1013 = vpack.c.b16 %v1003, %v1002
        %v1014 = vpack.c.b16 %v1005, %v1004
        %v1015 = vpack.c.b16 %v1007, %v1006
        %1024 = vmatprep.subr.bf16.mxu0 0
        %1025 = vmatpush1.bf16.msra.mxu0 %v1008
        %1026 = vmatprep.subr.bf16.mxu0 0
        %1027 = vmatpush1.bf16.msra.mxu0 %v1009
        %1028 = vmatprep.subr.bf16.mxu0 0
        %1029 = vmatpush1.bf16.msra.mxu0 %v1010
        %1030 = vmatprep.subr.bf16.mxu0 0
        %1031 = vmatpush1.bf16.msra.mxu0 %v1011
        %1032 = vmatprep.subr.bf16.mxu0 0
        %1033 = vmatpush1.bf16.msra.mxu0 %v1012
        %1034 = vmatprep.subr.bf16.mxu0 0
        %1035 = vmatpush1.bf16.msra.mxu0 %v1013
        %1036 = vmatprep.subr.bf16.mxu0 0
        %1037 = vmatpush1.bf16.msra.mxu0 %v1014
        %1038 = vmatprep.subr.bf16.mxu0 0
        %1039 = vmatpush1.bf16.msra.mxu0 %v1015
        %1040 = vmatprep.subr.bf16.mxu0 0
        %1041 = vmatpush1.bf16.msra.mxu0 0
        %1042 = vmatprep.subr.bf16.mxu0 0
        %1043 = vmatpush1.bf16.msra.mxu0 0
        %1044 = vmatprep.subr.bf16.mxu0 0
        %1045 = vmatpush1.bf16.msra.mxu0 0
        %1046 = vmatprep.subr.bf16.mxu0 0
        %1047 = vmatpush1.bf16.msra.mxu0 0
        %1048 = vmatprep.subr.bf16.mxu0 0
        %1049 = vmatpush1.bf16.msra.mxu0 0
        %1050 = vmatprep.subr.bf16.mxu0 0
        %1051 = vmatpush1.bf16.msra.mxu0 0
        %1052 = vmatprep.subr.bf16.mxu0 0
        %1053 = vmatpush1.bf16.msra.mxu0 0
        %1054 = vmatprep.subr.bf16.mxu0 0
        %1055 = vmatpush1.bf16.msra.mxu0 0
        %1056 = vmatprep.mubr.bf16.mxu0 0
        %1057 = vmatmul.mubr.bf16.gmra.mrb[0].mxu0 %v968
        %v1058 = vpop.f32.mrb[0].mxu0
        %v1059 = vadd.f32 0.0, %v1058
        %v1060 = vpop.f32.mrb[0].mxu0
        %v1061 = vpop.f32.mrb[0].mxu0
        %v1062 = vadd.f32 0.0, %v1061
        %v1063 = vpop.f32.mrb[0].mxu0
        %1064 = vmatprep.mubr.bf16.mxu0 0
        %1065 = vmatmul.mubr.bf16.gmra.mrb[0].mxu0 %v969
        %v1066 = vpop.f32.mrb[0].mxu0
        %v1067 = vadd.f32 0.0, %v1066
        %v1068 = vpop.f32.mrb[0].mxu0
        %v1069 = vpop.f32.mrb[0].mxu0
        %v1070 = vadd.f32 0.0, %v1069
        %v1071 = vpop.f32.mrb[0].mxu0
        %1072 = vmatprep.mubr.bf16.mxu0 0
        %1073 = vmatmul.mubr.bf16.gmra.mrb[0].mxu0 %v970
        %v1074 = vpop.f32.mrb[0].mxu0
        %v1075 = vadd.f32 0.0, %v1074
        %v1076 = vpop.f32.mrb[0].mxu0
        %v1077 = vpop.f32.mrb[0].mxu0
        %v1078 = vadd.f32 0.0, %v1077
        %v1079 = vpop.f32.mrb[0].mxu0
        %1080 = vmatprep.mubr.bf16.mxu0 0
        %1081 = vmatmul.mubr.bf16.gmra.mrb[0].mxu0 %v971
        %v1082 = vpop.f32.mrb[0].mxu0
        %v1083 = vadd.f32 0.0, %v1082
        %v1084 = vpop.f32.mrb[0].mxu0
        %v1085 = vpop.f32.mrb[0].mxu0
        %v1086 = vadd.f32 0.0, %v1085
        %v1087 = vpop.f32.mrb[0].mxu0
        %1088 = vdwg.mxu0
        %v1089 = vadd.f32 %v941, %v1059
        %v1090 = vadd.f32 %v942, %v1062
        %v1091 = vadd.f32 %v943, %v1067
        %v1092 = vadd.f32 %v944, %v1070
        %v1093 = vadd.f32 %v945, %v1075
        %v1094 = vadd.f32 %v946, %v1078
        %v1095 = vadd.f32 %v947, %v1083
        %v1096 = vadd.f32 %v948, %v1086
        %v1098 = vshrl.u32 %v334, 16
        %v1100 = vrot.slane %v1098, 4
        %v1101 = vshll.u32 %v334, 16
        %v1103 = vrot.slane %v1101, 5
        %v1104 = vor.u32 %v1100, %v1103
        %v1105 = vrot.slane %v1104, 4
        %v1107 = vshll.u32 %v335, 16
        %v1109 = vrot.slane %v1107, 5
        %v1110 = vsel %vm356, %v1105, %v1109
        %s1111 = scalar_lea.vmem %s1, 256
        %v1112 = vld [vmem:[%s1111] sm:$0xf]
        %v1113 = vld [vmem:[%s1111 + $0x4] sm:$0xf]
        %v1114 = vld [vmem:[%s1111 + $0x8] sm:$0xf]
        %v1115 = vld [vmem:[%s1111 + $0xc] sm:$0xf]
        %v1116 = vld [vmem:[%s1111 + $0x10] sm:$0xf]
        %v1117 = vld [vmem:[%s1111 + $0x14] sm:$0xf]
        %v1118 = vld [vmem:[%s1111 + $0x18] sm:$0xf]
        %v1119 = vld [vmem:[%s1111 + $0x1c] sm:$0xf]
        %v1120 = vld [vmem:[%s1111 + $0x20] sm:$0xf]
        %v1121 = vld [vmem:[%s1111 + $0x24] sm:$0xf]
        %v1122 = vld [vmem:[%s1111 + $0x28] sm:$0xf]
        %v1123 = vld [vmem:[%s1111 + $0x2c] sm:$0xf]
        %v1124 = vld [vmem:[%s1111 + $0x30] sm:$0xf]
        %v1125 = vld [vmem:[%s1111 + $0x34] sm:$0xf]
        %v1126 = vld [vmem:[%s1111 + $0x38] sm:$0xf]
        %v1127 = vld [vmem:[%s1111 + $0x3c] sm:$0xf]
        %v1128 = vunpack.c.l.b16 %v1110
        %v1129 = vpack.c.b16 %v488, %v487
        %v1130 = vpack.c.b16 %v490, %v489
        %v1131 = vpack.c.b16 %v492, %v491
        %v1132 = vpack.c.b16 %v1128, %v493
        %v1153 = vunpack.c.l.b16 %v1112
        %v1154 = vunpack.c.l.b16 %v1113
        %v1155 = vunpack.c.l.b16 %v1114
        %v1156 = vunpack.c.l.b16 %v1115
        %v1157 = vunpack.c.l.b16 %v1116
        %v1158 = vunpack.c.l.b16 %v1117
        %v1159 = vunpack.c.l.b16 %v1118
        %v1160 = vunpack.c.l.b16 %v1119
        %v1161 = vunpack.c.l.b16 %v1120
        %v1162 = vunpack.c.l.b16 %v1121
        %v1163 = vunpack.c.l.b16 %v1122
        %v1164 = vunpack.c.l.b16 %v1123
        %v1165 = vunpack.c.l.b16 %v1124
        %v1166 = vunpack.c.l.b16 %v1125
        %v1167 = vunpack.c.l.b16 %v1126
        %v1168 = vunpack.c.l.b16 %v1127
        %v1169 = vpack.c.b16 %v1154, %v1153
        %v1170 = vpack.c.b16 %v1156, %v1155
        %v1171 = vpack.c.b16 %v1158, %v1157
        %v1172 = vpack.c.b16 %v1160, %v1159
        %v1173 = vpack.c.b16 %v1162, %v1161
        %v1174 = vpack.c.b16 %v1164, %v1163
        %v1175 = vpack.c.b16 %v1166, %v1165
        %v1176 = vpack.c.b16 %v1168, %v1167
        %1185 = vmatprep.subr.bf16.mxu0 0
        %1186 = vmatpush1.bf16.msra.mxu0 %v1169
        %1187 = vmatprep.subr.bf16.mxu0 0
        %1188 = vmatpush1.bf16.msra.mxu0 %v1170
        %1189 = vmatprep.subr.bf16.mxu0 0
        %1190 = vmatpush1.bf16.msra.mxu0 %v1171
        %1191 = vmatprep.subr.bf16.mxu0 0
        %1192 = vmatpush1.bf16.msra.mxu0 %v1172
        %1193 = vmatprep.subr.bf16.mxu0 0
        %1194 = vmatpush1.bf16.msra.mxu0 %v1173
        %1195 = vmatprep.subr.bf16.mxu0 0
        %1196 = vmatpush1.bf16.msra.mxu0 %v1174
        %1197 = vmatprep.subr.bf16.mxu0 0
        %1198 = vmatpush1.bf16.msra.mxu0 %v1175
        %1199 = vmatprep.subr.bf16.mxu0 0
        %1200 = vmatpush1.bf16.msra.mxu0 %v1176
        %1201 = vmatprep.subr.bf16.mxu0 0
        %1202 = vmatpush1.bf16.msra.mxu0 0
        %1203 = vmatprep.subr.bf16.mxu0 0
        %1204 = vmatpush1.bf16.msra.mxu0 0
        %1205 = vmatprep.subr.bf16.mxu0 0
        %1206 = vmatpush1.bf16.msra.mxu0 0
        %1207 = vmatprep.subr.bf16.mxu0 0
        %1208 = vmatpush1.bf16.msra.mxu0 0
        %1209 = vmatprep.subr.bf16.mxu0 0
        %1210 = vmatpush1.bf16.msra.mxu0 0
        %1211 = vmatprep.subr.bf16.mxu0 0
        %1212 = vmatpush1.bf16.msra.mxu0 0
        %1213 = vmatprep.subr.bf16.mxu0 0
        %1214 = vmatpush1.bf16.msra.mxu0 0
        %1215 = vmatprep.subr.bf16.mxu0 0
        %1216 = vmatpush1.bf16.msra.mxu0 0
        %1217 = vmatprep.mubr.bf16.mxu0 0
        %1218 = vmatmul.mubr.bf16.gmra.mrb[0].mxu0 %v1129
        %v1219 = vpop.f32.mrb[0].mxu0
        %v1220 = vadd.f32 0.0, %v1219
        %v1221 = vpop.f32.mrb[0].mxu0
        %v1222 = vpop.f32.mrb[0].mxu0
        %v1223 = vadd.f32 0.0, %v1222
        %v1224 = vpop.f32.mrb[0].mxu0
        %1225 = vmatprep.mubr.bf16.mxu0 0
        %1226 = vmatmul.mubr.bf16.gmra.mrb[0].mxu0 %v1130
        %v1227 = vpop.f32.mrb[0].mxu0
        %v1228 = vadd.f32 0.0, %v1227
        %v1229 = vpop.f32.mrb[0].mxu0
        %v1230 = vpop.f32.mrb[0].mxu0
        %v1231 = vadd.f32 0.0, %v1230
        %v1232 = vpop.f32.mrb[0].mxu0
        %1233 = vmatprep.mubr.bf16.mxu0 0
        %1234 = vmatmul.mubr.bf16.gmra.mrb[0].mxu0 %v1131
        %v1235 = vpop.f32.mrb[0].mxu0
        %v1236 = vadd.f32 0.0, %v1235
        %v1237 = vpop.f32.mrb[0].mxu0
        %v1238 = vpop.f32.mrb[0].mxu0
        %v1239 = vadd.f32 0.0, %v1238
        %v1240 = vpop.f32.mrb[0].mxu0
        %1241 = vmatprep.mubr.bf16.mxu0 0
        %1242 = vmatmul.mubr.bf16.gmra.mrb[0].mxu0 %v1132
        %v1243 = vpop.f32.mrb[0].mxu0
        %v1244 = vadd.f32 0.0, %v1243
        %v1245 = vpop.f32.mrb[0].mxu0
        %v1246 = vpop.f32.mrb[0].mxu0
        %v1247 = vadd.f32 0.0, %v1246
        %v1248 = vpop.f32.mrb[0].mxu0
        %1249 = vdwg.mxu0
        %v1250 = vadd.f32 %v1089, %v1220
        %v1251 = vadd.f32 %v1090, %v1223
        %v1252 = vadd.f32 %v1091, %v1228
        %v1253 = vadd.f32 %v1092, %v1231
        %v1254 = vadd.f32 %v1093, %v1236
        %v1255 = vadd.f32 %v1094, %v1239
        %v1256 = vadd.f32 %v1095, %v1244
        %v1257 = vadd.f32 %v1096, %v1247
        %v1259 = vrot.slane %v334, 5
        %v1260 = vrot.slane %v1259, 4
        %v1261 = vrot.slane %v335, 5
        %v1262 = vsel %vm762, %v1260, %v1261
        %s1263 = scalar_lea.vmem %s1, 320
        %v1264 = vld [vmem:[%s1263] sm:$0xf]
        %v1265 = vld [vmem:[%s1263 + $0x4] sm:$0xf]
        %v1266 = vld [vmem:[%s1263 + $0x8] sm:$0xf]
        %v1267 = vld [vmem:[%s1263 + $0xc] sm:$0xf]
        %v1268 = vld [vmem:[%s1263 + $0x10] sm:$0xf]
        %v1269 = vld [vmem:[%s1263 + $0x14] sm:$0xf]
        %v1270 = vld [vmem:[%s1263 + $0x18] sm:$0xf]
        %v1271 = vld [vmem:[%s1263 + $0x1c] sm:$0xf]
        %v1272 = vld [vmem:[%s1263 + $0x20] sm:$0xf]
        %v1273 = vld [vmem:[%s1263 + $0x24] sm:$0xf]
        %v1274 = vld [vmem:[%s1263 + $0x28] sm:$0xf]
        %v1275 = vld [vmem:[%s1263 + $0x2c] sm:$0xf]
        %v1276 = vld [vmem:[%s1263 + $0x30] sm:$0xf]
        %v1277 = vld [vmem:[%s1263 + $0x34] sm:$0xf]
        %v1278 = vld [vmem:[%s1263 + $0x38] sm:$0xf]
        %v1279 = vld [vmem:[%s1263 + $0x3c] sm:$0xf]
        %v1280 = vunpack.c.l.b16 %v1262
        %v1281 = vpack.c.b16 %v814, %v813
        %v1282 = vpack.c.b16 %v816, %v815
        %v1283 = vpack.c.b16 %v818, %v817
        %v1284 = vpack.c.b16 %v1280, %v819
        %v1305 = vunpack.c.l.b16 %v1264
        %v1306 = vunpack.c.l.b16 %v1265
        %v1307 = vunpack.c.l.b16 %v1266
        %v1308 = vunpack.c.l.b16 %v1267
        %v1309 = vunpack.c.l.b16 %v1268
        %v1310 = vunpack.c.l.b16 %v1269
        %v1311 = vunpack.c.l.b16 %v1270
        %v1312 = vunpack.c.l.b16 %v1271
        %v1313 = vunpack.c.l.b16 %v1272
        %v1314 = vunpack.c.l.b16 %v1273
        %v1315 = vunpack.c.l.b16 %v1274
        %v1316 = vunpack.c.l.b16 %v1275
        %v1317 = vunpack.c.l.b16 %v1276
        %v1318 = vunpack.c.l.b16 %v1277
        %v1319 = vunpack.c.l.b16 %v1278
        %v1320 = vunpack.c.l.b16 %v1279
        %v1321 = vpack.c.b16 %v1306, %v1305
        %v1322 = vpack.c.b16 %v1308, %v1307
        %v1323 = vpack.c.b16 %v1310, %v1309
        %v1324 = vpack.c.b16 %v1312, %v1311
        %v1325 = vpack.c.b16 %v1314, %v1313
        %v1326 = vpack.c.b16 %v1316, %v1315
        %v1327 = vpack.c.b16 %v1318, %v1317
        %v1328 = vpack.c.b16 %v1320, %v1319
        %1337 = vmatprep.subr.bf16.mxu0 0
        %1338 = vmatpush1.bf16.msra.mxu0 %v1321
        %1339 = vmatprep.subr.bf16.mxu0 0
        %1340 = vmatpush1.bf16.msra.mxu0 %v1322
        %1341 = vmatprep.subr.bf16.mxu0 0
        %1342 = vmatpush1.bf16.msra.mxu0 %v1323
        %1343 = vmatprep.subr.bf16.mxu0 0
        %1344 = vmatpush1.bf16.msra.mxu0 %v1324
        %1345 = vmatprep.subr.bf16.mxu0 0
        %1346 = vmatpush1.bf16.msra.mxu0 %v1325
        %1347 = vmatprep.subr.bf16.mxu0 0
        %1348 = vmatpush1.bf16.msra.mxu0 %v1326
        %1349 = vmatprep.subr.bf16.mxu0 0
        %1350 = vmatpush1.bf16.msra.mxu0 %v1327
        %1351 = vmatprep.subr.bf16.mxu0 0
        %1352 = vmatpush1.bf16.msra.mxu0 %v1328
        %1353 = vmatprep.subr.bf16.mxu0 0
        %1354 = vmatpush1.bf16.msra.mxu0 0
        %1355 = vmatprep.subr.bf16.mxu0 0
        %1356 = vmatpush1.bf16.msra.mxu0 0
        %1357 = vmatprep.subr.bf16.mxu0 0
        %1358 = vmatpush1.bf16.msra.mxu0 0
        %1359 = vmatprep.subr.bf16.mxu0 0
        %1360 = vmatpush1.bf16.msra.mxu0 0
        %1361 = vmatprep.subr.bf16.mxu0 0
        %1362 = vmatpush1.bf16.msra.mxu0 0
        %1363 = vmatprep.subr.bf16.mxu0 0
        %1364 = vmatpush1.bf16.msra.mxu0 0
        %1365 = vmatprep.subr.bf16.mxu0 0
        %1366 = vmatpush1.bf16.msra.mxu0 0
        %1367 = vmatprep.subr.bf16.mxu0 0
        %1368 = vmatpush1.bf16.msra.mxu0 0
        %1369 = vmatprep.mubr.bf16.mxu0 0
        %1370 = vmatmul.mubr.bf16.gmra.mrb[0].mxu0 %v1281
        %v1371 = vpop.f32.mrb[0].mxu0
        %v1372 = vadd.f32 0.0, %v1371
        %v1373 = vpop.f32.mrb[0].mxu0
        %v1374 = vpop.f32.mrb[0].mxu0
        %v1375 = vadd.f32 0.0, %v1374
        %v1376 = vpop.f32.mrb[0].mxu0
        %1377 = vmatprep.mubr.bf16.mxu0 0
        %1378 = vmatmul.mubr.bf16.gmra.mrb[0].mxu0 %v1282
        %v1379 = vpop.f32.mrb[0].mxu0
        %v1380 = vadd.f32 0.0, %v1379
        %v1381 = vpop.f32.mrb[0].mxu0
        %v1382 = vpop.f32.mrb[0].mxu0
        %v1383 = vadd.f32 0.0, %v1382
        %v1384 = vpop.f32.mrb[0].mxu0
        %1385 = vmatprep.mubr.bf16.mxu0 0
        %1386 = vmatmul.mubr.bf16.gmra.mrb[0].mxu0 %v1283
        %v1387 = vpop.f32.mrb[0].mxu0
        %v1388 = vadd.f32 0.0, %v1387
        %v1389 = vpop.f32.mrb[0].mxu0
        %v1390 = vpop.f32.mrb[0].mxu0
        %v1391 = vadd.f32 0.0, %v1390
        %v1392 = vpop.f32.mrb[0].mxu0
        %1393 = vmatprep.mubr.bf16.mxu0 0
        %1394 = vmatmul.mubr.bf16.gmra.mrb[0].mxu0 %v1284
        %v1395 = vpop.f32.mrb[0].mxu0
        %v1396 = vadd.f32 0.0, %v1395
        %v1397 = vpop.f32.mrb[0].mxu0
        %v1398 = vpop.f32.mrb[0].mxu0
        %v1399 = vadd.f32 0.0, %v1398
        %v1400 = vpop.f32.mrb[0].mxu0
        %1401 = vdwg.mxu0
        %v1402 = vadd.f32 %v1250, %v1372
        %v1403 = vadd.f32 %v1251, %v1375
        %v1404 = vadd.f32 %v1252, %v1380
        %v1405 = vadd.f32 %v1253, %v1383
        %v1406 = vadd.f32 %v1254, %v1388
        %v1407 = vadd.f32 %v1255, %v1391
        %v1408 = vadd.f32 %v1256, %v1396
        %v1409 = vadd.f32 %v1257, %v1399
        %s1410 = scalar_lea.vmem %s1, 384
        %v1411 = vld [vmem:[%s1410] sm:$0xf]
        %v1412 = vld [vmem:[%s1410 + $0x4] sm:$0xf]
        %v1413 = vld [vmem:[%s1410 + $0x8] sm:$0xf]
        %v1414 = vld [vmem:[%s1410 + $0xc] sm:$0xf]
        %v1415 = vld [vmem:[%s1410 + $0x10] sm:$0xf]
        %v1416 = vld [vmem:[%s1410 + $0x14] sm:$0xf]
        %v1417 = vld [vmem:[%s1410 + $0x18] sm:$0xf]
        %v1418 = vld [vmem:[%s1410 + $0x1c] sm:$0xf]
        %v1419 = vld [vmem:[%s1410 + $0x20] sm:$0xf]
        %v1420 = vld [vmem:[%s1410 + $0x24] sm:$0xf]
        %v1421 = vld [vmem:[%s1410 + $0x28] sm:$0xf]
        %v1422 = vld [vmem:[%s1410 + $0x2c] sm:$0xf]
        %v1423 = vld [vmem:[%s1410 + $0x30] sm:$0xf]
        %v1424 = vld [vmem:[%s1410 + $0x34] sm:$0xf]
        %v1425 = vld [vmem:[%s1410 + $0x38] sm:$0xf]
        %v1426 = vld [vmem:[%s1410 + $0x3c] sm:$0xf]
        %v1428 = vunpack.c.l.b16 %v336
        %v1429 = vpack.c.b16 %v1428, %v967
        %v1447 = vunpack.c.l.b16 %v1411
        %v1448 = vunpack.c.l.b16 %v1412
        %v1449 = vunpack.c.l.b16 %v1413
        %v1450 = vunpack.c.l.b16 %v1414
        %v1451 = vunpack.c.l.b16 %v1415
        %v1452 = vunpack.c.l.b16 %v1416
        %v1453 = vunpack.c.l.b16 %v1417
        %v1454 = vunpack.c.l.b16 %v1418
        %v1455 = vunpack.c.l.b16 %v1419
        %v1456 = vunpack.c.l.b16 %v1420
        %v1457 = vunpack.c.l.b16 %v1421
        %v1458 = vunpack.c.l.b16 %v1422
        %v1459 = vunpack.c.l.b16 %v1423
        %v1460 = vunpack.c.l.b16 %v1424
        %v1461 = vunpack.c.l.b16 %v1425
        %v1462 = vunpack.c.l.b16 %v1426
        %v1463 = vpack.c.b16 %v1448, %v1447
        %v1464 = vpack.c.b16 %v1450, %v1449
        %v1465 = vpack.c.b16 %v1452, %v1451
        %v1466 = vpack.c.b16 %v1454, %v1453
        %v1467 = vpack.c.b16 %v1456, %v1455
        %v1468 = vpack.c.b16 %v1458, %v1457
        %v1469 = vpack.c.b16 %v1460, %v1459
        %v1470 = vpack.c.b16 %v1462, %v1461
        %1479 = vmatprep.subr.bf16.mxu0 0
        %1480 = vmatpush1.bf16.msra.mxu0 %v1463
        %1481 = vmatprep.subr.bf16.mxu0 0
        %1482 = vmatpush1.bf16.msra.mxu0 %v1464
        %1483 = vmatprep.subr.bf16.mxu0 0
        %1484 = vmatpush1.bf16.msra.mxu0 %v1465
        %1485 = vmatprep.subr.bf16.mxu0 0
        %1486 = vmatpush1.bf16.msra.mxu0 %v1466
        %1487 = vmatprep.subr.bf16.mxu0 0
        %1488 = vmatpush1.bf16.msra.mxu0 %v1467
        %1489 = vmatprep.subr.bf16.mxu0 0
        %1490 = vmatpush1.bf16.msra.mxu0 %v1468
        %1491 = vmatprep.subr.bf16.mxu0 0
        %1492 = vmatpush1.bf16.msra.mxu0 %v1469
        %1493 = vmatprep.subr.bf16.mxu0 0
        %1494 = vmatpush1.bf16.msra.mxu0 %v1470
        %1495 = vmatprep.subr.bf16.mxu0 0
        %1496 = vmatpush1.bf16.msra.mxu0 0
        %1497 = vmatprep.subr.bf16.mxu0 0
        %1498 = vmatpush1.bf16.msra.mxu0 0
        %1499 = vmatprep.subr.bf16.mxu0 0
        %1500 = vmatpush1.bf16.msra.mxu0 0
        %1501 = vmatprep.subr.bf16.mxu0 0
        %1502 = vmatpush1.bf16.msra.mxu0 0
        %1503 = vmatprep.subr.bf16.mxu0 0
        %1504 = vmatpush1.bf16.msra.mxu0 0
        %1505 = vmatprep.subr.bf16.mxu0 0
        %1506 = vmatpush1.bf16.msra.mxu0 0
        %1507 = vmatprep.subr.bf16.mxu0 0
        %1508 = vmatpush1.bf16.msra.mxu0 0
        %1509 = vmatprep.subr.bf16.mxu0 0
        %1510 = vmatpush1.bf16.msra.mxu0 0
        %1511 = vmatprep.mubr.bf16.mxu0 0
        %1512 = vmatmul.mubr.bf16.gmra.mrb[0].mxu0 %v632
        %v1513 = vpop.f32.mrb[0].mxu0
        %v1514 = vadd.f32 0.0, %v1513
        %v1515 = vpop.f32.mrb[0].mxu0
        %v1516 = vpop.f32.mrb[0].mxu0
        %v1517 = vadd.f32 0.0, %v1516
        %v1518 = vpop.f32.mrb[0].mxu0
        %1519 = vmatprep.mubr.bf16.mxu0 0
        %1520 = vmatmul.mubr.bf16.gmra.mrb[0].mxu0 %v633
        %v1521 = vpop.f32.mrb[0].mxu0
        %v1522 = vadd.f32 0.0, %v1521
        %v1523 = vpop.f32.mrb[0].mxu0
        %v1524 = vpop.f32.mrb[0].mxu0
        %v1525 = vadd.f32 0.0, %v1524
        %v1526 = vpop.f32.mrb[0].mxu0
        %1527 = vmatprep.mubr.bf16.mxu0 0
        %1528 = vmatmul.mubr.bf16.gmra.mrb[0].mxu0 %v634
        %v1529 = vpop.f32.mrb[0].mxu0
        %v1530 = vadd.f32 0.0, %v1529
        %v1531 = vpop.f32.mrb[0].mxu0
        %v1532 = vpop.f32.mrb[0].mxu0
        %v1533 = vadd.f32 0.0, %v1532
        %v1534 = vpop.f32.mrb[0].mxu0
        %1535 = vmatprep.mubr.bf16.mxu0 0
        %1536 = vmatmul.mubr.bf16.gmra.mrb[0].mxu0 %v1429
        %v1537 = vpop.f32.mrb[0].mxu0
        %v1538 = vadd.f32 0.0, %v1537
        %v1539 = vpop.f32.mrb[0].mxu0
        %v1540 = vpop.f32.mrb[0].mxu0
        %v1541 = vadd.f32 0.0, %v1540
        %v1542 = vpop.f32.mrb[0].mxu0
        %1543 = vdwg.mxu0
        %v1544 = vadd.f32 %v1402, %v1514
        %v1545 = vadd.f32 %v1403, %v1517
        %v1546 = vadd.f32 %v1404, %v1522
        %v1547 = vadd.f32 %v1405, %v1525
        %v1548 = vadd.f32 %v1406, %v1530
        %v1549 = vadd.f32 %v1407, %v1533
        %v1550 = vadd.f32 %v1408, %v1538
        %v1551 = vadd.f32 %v1409, %v1541
        %v1553 = vshrl.u32 %v336, 16
        %v1555 = vrot.slane %v1553, 4
        %v1556 = vshll.u32 %v336, 16
        %v1558 = vrot.slane %v1556, 5
        %v1559 = vor.u32 %v1555, %v1558
        %v1560 = vrot.slane %v1559, 4
        %v1562 = vshll.u32 %v337, 16
        %v1564 = vrot.slane %v1562, 5
        %v1565 = vsel %vm356, %v1560, %v1564
        %s1566 = scalar_lea.vmem %s1, 448
        %v1567 = vld [vmem:[%s1566] sm:$0xf]
        %v1568 = vld [vmem:[%s1566 + $0x4] sm:$0xf]
        %v1569 = vld [vmem:[%s1566 + $0x8] sm:$0xf]
        %v1570 = vld [vmem:[%s1566 + $0xc] sm:$0xf]
        %v1571 = vld [vmem:[%s1566 + $0x10] sm:$0xf]
        %v1572 = vld [vmem:[%s1566 + $0x14] sm:$0xf]
        %v1573 = vld [vmem:[%s1566 + $0x18] sm:$0xf]
        %v1574 = vld [vmem:[%s1566 + $0x1c] sm:$0xf]
        %v1575 = vld [vmem:[%s1566 + $0x20] sm:$0xf]
        %v1576 = vld [vmem:[%s1566 + $0x24] sm:$0xf]
        %v1577 = vld [vmem:[%s1566 + $0x28] sm:$0xf]
        %v1578 = vld [vmem:[%s1566 + $0x2c] sm:$0xf]
        %v1579 = vld [vmem:[%s1566 + $0x30] sm:$0xf]
        %v1580 = vld [vmem:[%s1566 + $0x34] sm:$0xf]
        %v1581 = vld [vmem:[%s1566 + $0x38] sm:$0xf]
        %v1582 = vld [vmem:[%s1566 + $0x3c] sm:$0xf]
        %v1583 = vunpack.c.l.b16 %v1565
        %v1584 = vpack.c.b16 %v1583, %v1128
        %v1602 = vunpack.c.l.b16 %v1567
        %v1603 = vunpack.c.l.b16 %v1568
        %v1604 = vunpack.c.l.b16 %v1569
        %v1605 = vunpack.c.l.b16 %v1570
        %v1606 = vunpack.c.l.b16 %v1571
        %v1607 = vunpack.c.l.b16 %v1572
        %v1608 = vunpack.c.l.b16 %v1573
        %v1609 = vunpack.c.l.b16 %v1574
        %v1610 = vunpack.c.l.b16 %v1575
        %v1611 = vunpack.c.l.b16 %v1576
        %v1612 = vunpack.c.l.b16 %v1577
        %v1613 = vunpack.c.l.b16 %v1578
        %v1614 = vunpack.c.l.b16 %v1579
        %v1615 = vunpack.c.l.b16 %v1580
        %v1616 = vunpack.c.l.b16 %v1581
        %v1617 = vunpack.c.l.b16 %v1582
        %v1618 = vpack.c.b16 %v1603, %v1602
        %v1619 = vpack.c.b16 %v1605, %v1604
        %v1620 = vpack.c.b16 %v1607, %v1606
        %v1621 = vpack.c.b16 %v1609, %v1608
        %v1622 = vpack.c.b16 %v1611, %v1610
        %v1623 = vpack.c.b16 %v1613, %v1612
        %v1624 = vpack.c.b16 %v1615, %v1614
        %v1625 = vpack.c.b16 %v1617, %v1616
        %1634 = vmatprep.subr.bf16.mxu0 0
        %1635 = vmatpush1.bf16.msra.mxu0 %v1618
        %1636 = vmatprep.subr.bf16.mxu0 0
        %1637 = vmatpush1.bf16.msra.mxu0 %v1619
        %1638 = vmatprep.subr.bf16.mxu0 0
        %1639 = vmatpush1.bf16.msra.mxu0 %v1620
        %1640 = vmatprep.subr.bf16.mxu0 0
        %1641 = vmatpush1.bf16.msra.mxu0 %v1621
        %1642 = vmatprep.subr.bf16.mxu0 0
        %1643 = vmatpush1.bf16.msra.mxu0 %v1622
        %1644 = vmatprep.subr.bf16.mxu0 0
        %1645 = vmatpush1.bf16.msra.mxu0 %v1623
        %1646 = vmatprep.subr.bf16.mxu0 0
        %1647 = vmatpush1.bf16.msra.mxu0 %v1624
        %1648 = vmatprep.subr.bf16.mxu0 0
        %1649 = vmatpush1.bf16.msra.mxu0 %v1625
        %1650 = vmatprep.subr.bf16.mxu0 0
        %1651 = vmatpush1.bf16.msra.mxu0 0
        %1652 = vmatprep.subr.bf16.mxu0 0
        %1653 = vmatpush1.bf16.msra.mxu0 0
        %1654 = vmatprep.subr.bf16.mxu0 0
        %1655 = vmatpush1.bf16.msra.mxu0 0
        %1656 = vmatprep.subr.bf16.mxu0 0
        %1657 = vmatpush1.bf16.msra.mxu0 0
        %1658 = vmatprep.subr.bf16.mxu0 0
        %1659 = vmatpush1.bf16.msra.mxu0 0
        %1660 = vmatprep.subr.bf16.mxu0 0
        %1661 = vmatpush1.bf16.msra.mxu0 0
        %1662 = vmatprep.subr.bf16.mxu0 0
        %1663 = vmatpush1.bf16.msra.mxu0 0
        %1664 = vmatprep.subr.bf16.mxu0 0
        %1665 = vmatpush1.bf16.msra.mxu0 0
        %1666 = vmatprep.mubr.bf16.mxu0 0
        %1667 = vmatmul.mubr.bf16.gmra.mrb[0].mxu0 %v495
        %v1668 = vpop.f32.mrb[0].mxu0
        %v1669 = vadd.f32 0.0, %v1668
        %v1670 = vpop.f32.mrb[0].mxu0
        %v1671 = vpop.f32.mrb[0].mxu0
        %v1672 = vadd.f32 0.0, %v1671
        %v1673 = vpop.f32.mrb[0].mxu0
        %1674 = vmatprep.mubr.bf16.mxu0 0
        %1675 = vmatmul.mubr.bf16.gmra.mrb[0].mxu0 %v496
        %v1676 = vpop.f32.mrb[0].mxu0
        %v1677 = vadd.f32 0.0, %v1676
        %v1678 = vpop.f32.mrb[0].mxu0
        %v1679 = vpop.f32.mrb[0].mxu0
        %v1680 = vadd.f32 0.0, %v1679
        %v1681 = vpop.f32.mrb[0].mxu0
        %1682 = vmatprep.mubr.bf16.mxu0 0
        %1683 = vmatmul.mubr.bf16.gmra.mrb[0].mxu0 %v497
        %v1684 = vpop.f32.mrb[0].mxu0
        %v1685 = vadd.f32 0.0, %v1684
        %v1686 = vpop.f32.mrb[0].mxu0
        %v1687 = vpop.f32.mrb[0].mxu0
        %v1688 = vadd.f32 0.0, %v1687
        %v1689 = vpop.f32.mrb[0].mxu0
        %1690 = vmatprep.mubr.bf16.mxu0 0
        %1691 = vmatmul.mubr.bf16.gmra.mrb[0].mxu0 %v1584
        %v1692 = vpop.f32.mrb[0].mxu0
        %v1693 = vadd.f32 0.0, %v1692
        %v1694 = vpop.f32.mrb[0].mxu0
        %v1695 = vpop.f32.mrb[0].mxu0
        %v1696 = vadd.f32 0.0, %v1695
        %v1697 = vpop.f32.mrb[0].mxu0
        %1698 = vdwg.mxu0
        %v1699 = vadd.f32 %v1544, %v1669
        %v1700 = vadd.f32 %v1545, %v1672
        %v1701 = vadd.f32 %v1546, %v1677
        %v1702 = vadd.f32 %v1547, %v1680
        %v1703 = vadd.f32 %v1548, %v1685
        %v1704 = vadd.f32 %v1549, %v1688
        %v1705 = vadd.f32 %v1550, %v1693
        %v1706 = vadd.f32 %v1551, %v1696
        %v1708 = vrot.slane %v336, 5
        %v1709 = vrot.slane %v1708, 4
        %v1710 = vrot.slane %v337, 5
        %v1711 = vsel %vm762, %v1709, %v1710
        %s1712 = scalar_lea.vmem %s1, 512
        %v1713 = vld [vmem:[%s1712] sm:$0xf]
        %v1714 = vld [vmem:[%s1712 + $0x4] sm:$0xf]
        %v1715 = vld [vmem:[%s1712 + $0x8] sm:$0xf]
        %v1716 = vld [vmem:[%s1712 + $0xc] sm:$0xf]
        %v1717 = vld [vmem:[%s1712 + $0x10] sm:$0xf]
        %v1718 = vld [vmem:[%s1712 + $0x14] sm:$0xf]
        %v1719 = vld [vmem:[%s1712 + $0x18] sm:$0xf]
        %v1720 = vld [vmem:[%s1712 + $0x1c] sm:$0xf]
        %v1721 = vld [vmem:[%s1712 + $0x20] sm:$0xf]
        %v1722 = vld [vmem:[%s1712 + $0x24] sm:$0xf]
        %v1723 = vld [vmem:[%s1712 + $0x28] sm:$0xf]
        %v1724 = vld [vmem:[%s1712 + $0x2c] sm:$0xf]
        %v1725 = vld [vmem:[%s1712 + $0x30] sm:$0xf]
        %v1726 = vld [vmem:[%s1712 + $0x34] sm:$0xf]
        %v1727 = vld [vmem:[%s1712 + $0x38] sm:$0xf]
        %v1728 = vld [vmem:[%s1712 + $0x3c] sm:$0xf]
        %v1729 = vunpack.c.l.b16 %v1711
        %v1730 = vpack.c.b16 %v1729, %v1280
        %v1748 = vunpack.c.l.b16 %v1713
        %v1749 = vunpack.c.l.b16 %v1714
        %v1750 = vunpack.c.l.b16 %v1715
        %v1751 = vunpack.c.l.b16 %v1716
        %v1752 = vunpack.c.l.b16 %v1717
        %v1753 = vunpack.c.l.b16 %v1718
        %v1754 = vunpack.c.l.b16 %v1719
        %v1755 = vunpack.c.l.b16 %v1720
        %v1756 = vunpack.c.l.b16 %v1721
        %v1757 = vunpack.c.l.b16 %v1722
        %v1758 = vunpack.c.l.b16 %v1723
        %v1759 = vunpack.c.l.b16 %v1724
        %v1760 = vunpack.c.l.b16 %v1725
        %v1761 = vunpack.c.l.b16 %v1726
        %v1762 = vunpack.c.l.b16 %v1727
        %v1763 = vunpack.c.l.b16 %v1728
        %v1764 = vpack.c.b16 %v1749, %v1748
        %v1765 = vpack.c.b16 %v1751, %v1750
        %v1766 = vpack.c.b16 %v1753, %v1752
        %v1767 = vpack.c.b16 %v1755, %v1754
        %v1768 = vpack.c.b16 %v1757, %v1756
        %v1769 = vpack.c.b16 %v1759, %v1758
        %v1770 = vpack.c.b16 %v1761, %v1760
        %v1771 = vpack.c.b16 %v1763, %v1762
        %1780 = vmatprep.subr.bf16.mxu0 0
        %1781 = vmatpush1.bf16.msra.mxu0 %v1764
        %1782 = vmatprep.subr.bf16.mxu0 0
        %1783 = vmatpush1.bf16.msra.mxu0 %v1765
        %1784 = vmatprep.subr.bf16.mxu0 0
        %1785 = vmatpush1.bf16.msra.mxu0 %v1766
        %1786 = vmatprep.subr.bf16.mxu0 0
        %1787 = vmatpush1.bf16.msra.mxu0 %v1767
        %1788 = vmatprep.subr.bf16.mxu0 0
        %1789 = vmatpush1.bf16.msra.mxu0 %v1768
        %1790 = vmatprep.subr.bf16.mxu0 0
        %1791 = vmatpush1.bf16.msra.mxu0 %v1769
        %1792 = vmatprep.subr.bf16.mxu0 0
        %1793 = vmatpush1.bf16.msra.mxu0 %v1770
        %1794 = vmatprep.subr.bf16.mxu0 0
        %1795 = vmatpush1.bf16.msra.mxu0 %v1771
        %1796 = vmatprep.subr.bf16.mxu0 0
        %1797 = vmatpush1.bf16.msra.mxu0 0
        %1798 = vmatprep.subr.bf16.mxu0 0
        %1799 = vmatpush1.bf16.msra.mxu0 0
        %1800 = vmatprep.subr.bf16.mxu0 0
        %1801 = vmatpush1.bf16.msra.mxu0 0
        %1802 = vmatprep.subr.bf16.mxu0 0
        %1803 = vmatpush1.bf16.msra.mxu0 0
        %1804 = vmatprep.subr.bf16.mxu0 0
        %1805 = vmatpush1.bf16.msra.mxu0 0
        %1806 = vmatprep.subr.bf16.mxu0 0
        %1807 = vmatpush1.bf16.msra.mxu0 0
        %1808 = vmatprep.subr.bf16.mxu0 0
        %1809 = vmatpush1.bf16.msra.mxu0 0
        %1810 = vmatprep.subr.bf16.mxu0 0
        %1811 = vmatpush1.bf16.msra.mxu0 0
        %1812 = vmatprep.mubr.bf16.mxu0 0
        %1813 = vmatmul.mubr.bf16.gmra.mrb[0].mxu0 %v821
        %v1814 = vpop.f32.mrb[0].mxu0
        %v1815 = vadd.f32 0.0, %v1814
        %v1816 = vpop.f32.mrb[0].mxu0
        %v1817 = vpop.f32.mrb[0].mxu0
        %v1818 = vadd.f32 0.0, %v1817
        %v1819 = vpop.f32.mrb[0].mxu0
        %1820 = vmatprep.mubr.bf16.mxu0 0
        %1821 = vmatmul.mubr.bf16.gmra.mrb[0].mxu0 %v822
        %v1822 = vpop.f32.mrb[0].mxu0
        %v1823 = vadd.f32 0.0, %v1822
        %v1824 = vpop.f32.mrb[0].mxu0
        %v1825 = vpop.f32.mrb[0].mxu0
        %v1826 = vadd.f32 0.0, %v1825
        %v1827 = vpop.f32.mrb[0].mxu0
        %1828 = vmatprep.mubr.bf16.mxu0 0
        %1829 = vmatmul.mubr.bf16.gmra.mrb[0].mxu0 %v823
        %v1830 = vpop.f32.mrb[0].mxu0
        %v1831 = vadd.f32 0.0, %v1830
        %v1832 = vpop.f32.mrb[0].mxu0
        %v1833 = vpop.f32.mrb[0].mxu0
        %v1834 = vadd.f32 0.0, %v1833
        %v1835 = vpop.f32.mrb[0].mxu0
        %1836 = vmatprep.mubr.bf16.mxu0 0
        %1837 = vmatmul.mubr.bf16.gmra.mrb[0].mxu0 %v1730
        %v1838 = vpop.f32.mrb[0].mxu0
        %v1839 = vadd.f32 0.0, %v1838
        %v1840 = vpop.f32.mrb[0].mxu0
        %v1841 = vpop.f32.mrb[0].mxu0
        %v1842 = vadd.f32 0.0, %v1841
        %v1843 = vpop.f32.mrb[0].mxu0
        %1844 = vdwg.mxu0
        %v1845 = vadd.f32 %v1699, %v1815
        %v1846 = vadd.f32 %v1700, %v1818
        %v1847 = vadd.f32 %v1701, %v1823
        %v1848 = vadd.f32 %v1702, %v1826
        %v1849 = vadd.f32 %v1703, %v1831
        %v1850 = vadd.f32 %v1704, %v1834
        %v1851 = vadd.f32 %v1705, %v1839
        %v1852 = vadd.f32 %v1706, %v1842
        %v1853 = vld [vmem:[%s2] sm:$0x1]
        %v1855 = vlaneseq
        %v1856 = vshrl.u32 %v1855, 7
        %v1857 = vsub.s32 0, %v1856
        %v1858 = vrot.slane %v1853, %v1857
        %v1860 = vadd.f32 %v1845, %v1858
        %v1861 = vadd.f32 %v1846, %v1858
        %v1862 = vadd.f32 %v1847, %v1858
        %v1863 = vadd.f32 %v1848, %v1858
        %v1864 = vadd.f32 %v1849, %v1858
        %v1865 = vadd.f32 %v1850, %v1858
        %v1866 = vadd.f32 %v1851, %v1858
        %v1867 = vadd.f32 %v1852, %v1858
        %vm1868 = vcmp.gt.f32.partialorder %v1860, 0.0
        %vm1869 = vcmp.gt.f32.partialorder %v1861, 0.0
        %vm1870 = vcmp.gt.f32.partialorder %v1862, 0.0
        %vm1871 = vcmp.gt.f32.partialorder %v1863, 0.0
        %vm1872 = vcmp.gt.f32.partialorder %v1864, 0.0
        %vm1873 = vcmp.gt.f32.partialorder %v1865, 0.0
        %vm1874 = vcmp.gt.f32.partialorder %v1866, 0.0
        %vm1875 = vcmp.gt.f32.partialorder %v1867, 0.0
        %v1876 = vld [vmem:[%s5] sm:$0x1]
        %v1878 = vlaneseq
        %v1879 = vshrl.u32 %v1878, 7
        %v1880 = vsub.s32 0, %v1879
        %v1881 = vrot.slane %v1876, %v1880
        %v1883 = vmul.f32 %v1860, %v1881
        %v1884 = vmul.f32 %v1861, %v1881
        %v1885 = vmul.f32 %v1862, %v1881
        %v1886 = vmul.f32 %v1863, %v1881
        %v1887 = vmul.f32 %v1864, %v1881
        %v1888 = vmul.f32 %v1865, %v1881
        %v1889 = vmul.f32 %v1866, %v1881
        %v1890 = vmul.f32 %v1867, %v1881
        %v1891 = vsel %vm1868, %v1860, %v1883
        %v1892 = vsel %vm1869, %v1861, %v1884
        %v1893 = vsel %vm1870, %v1862, %v1885
        %v1894 = vsel %vm1871, %v1863, %v1886
        %v1895 = vsel %vm1872, %v1864, %v1887
        %v1896 = vsel %vm1873, %v1865, %v1888
        %v1897 = vsel %vm1874, %v1866, %v1889
        %v1898 = vsel %vm1875, %v1867, %v1890
        %v1899 = vpack.c.bf16 %v1892, %v1891
        %v1900 = vpack.c.bf16 %v1894, %v1893
        %v1901 = vpack.c.bf16 %v1896, %v1895
        %v1902 = vpack.c.bf16 %v1898, %v1897
        %v1907 = vunpack.c.l.b16 %v1899
        %v1908 = vunpack.c.h.b16 %v1899
        %v1909 = vunpack.c.l.b16 %v1900
        %v1910 = vunpack.c.h.b16 %v1900
        %v1911 = vunpack.c.l.b16 %v1901
        %v1912 = vunpack.c.h.b16 %v1901
        %v1913 = vunpack.c.l.b16 %v1902
        %v1914 = vunpack.c.h.b16 %v1902
        %v1915 = vpack.c.b16 %v1907, %v1907
        %v1916 = vpack.c.b16 %v1908, %v1908
        %v1917 = vpack.c.b16 %v1909, %v1909
        %v1918 = vpack.c.b16 %v1910, %v1910
        %v1919 = vpack.c.b16 %v1911, %v1911
        %v1920 = vpack.c.b16 %v1912, %v1912
        %v1921 = vpack.c.b16 %v1913, %v1913
        %v1922 = vpack.c.b16 %v1914, %v1914
        %1931 = vst [vmem:[%s314] sm:$0xf] %v1915
        %1932 = vst [vmem:[%s314 + $0x4] sm:$0xf] %v1916
        %1933 = vst [vmem:[%s314 + $0x8] sm:$0xf] %v1917
        %1934 = vst [vmem:[%s314 + $0xc] sm:$0xf] %v1918
        %1935 = vst [vmem:[%s314 + $0x10] sm:$0xf] %v1919
        %1936 = vst [vmem:[%s314 + $0x14] sm:$0xf] %v1920
        %1937 = vst [vmem:[%s314 + $0x18] sm:$0xf] %v1921
        %1938 = vst [vmem:[%s314 + $0x1c] sm:$0xf] %v1922
        %s1939 = sadd.s32 %s26, %s27
        %p1940 = scmp.lt.s32.totalorder %s1939, 1
        %s1941 = scalar_select %p1940, %s1939, 1
        %s1942 = smul.addr %s1941, 8
        %s1943 = smul.addr %s1942, 4
        %s1944 = scalar_lea.vmem %s6, %s1943
        %s1945 = sand.u32 %s205, 1
        %s1946 = scalar_lea.sflag [#allocation3], %s1945
        %s1947 = sand.u32 %s205, 1
        %s1948 = smul.addr %s1947, 8
        %s1949 = scalar_lea.vmem [#allocation2], %s1948
        // Predicated region
        $region45: #{up_forward.3} parent=43 // pred_check
          %p1950 = pneg %p187
        $region46: #{up_forward.3} parent=43 // pred_check_branch
          %1952 = sbr.rel (%p1950) target = $region48
        $region47: #{up_forward.3} parent=43 // pred_region
          %s1953 = sadd.s32 %s26, %s27
        $region48: #{up_forward.3} parent=43 // pred_fallthru
          _
        // Predicated region
        $region49: #{up_forward.3} parent=43 // pred_check
          %p1954 = pneg %p215
        $region50: #{up_forward.3} parent=43 // pred_check_branch
          %1956 = sbr.rel (%p1954) target = $region52
        $region51: #{up_forward.3} parent=43 // pred_region
          %s1957 = sadd.s32 %s26, %s27
          %s1959 = ssub.s32 128, 128
          %1960 = vsyncadd %s1946, %s1959
          %s1961 = smul.addr %s1957, 128
          %s1962 = scalar_lea.hbm %s7, %s1961
          %s1964 = sshll.u32 %s1949, 4
          %s1965 = int_to_ptr.vmem [resolvable:$true] %s1964
          %1967 = dma.vmem_to_hbm [thread:$0]  %s1965, 128, %s1962, %s1946
        $region52: #{up_forward.3} parent=43 // pred_fallthru
          _
      $region44: #{up_forward.3} parent=5 // pred_fallthru
        _
      %p1968 = scmp.le.s32.totalorder 2, %s17
      // Predicated region
      $region53: #{up_forward.3} parent=5 // pred_check
        %p1969 = pneg %p1968
      $region54: #{up_forward.3} parent=5 // pred_check_branch
        %1971 = sbr.rel (%p1969) target = $region56
      $region55: #{up_forward.3} parent=5 // pred_region
        %s1972 = ssub.s32 %s17, 2
        // Predicated region
        $region57: #{up_forward.3} parent=55 // pred_check
          %p1973 = pneg %p193
        $region58: #{up_forward.3} parent=55 // pred_check_branch
          %1975 = sbr.rel (%p1973) target = $region60
        $region59: #{up_forward.3} parent=55 // pred_region
          %s1976 = sadd.s32 %s28, %s29
          %p1977 = scmp.lt.s32.totalorder %s1976, 1
          %s1978 = scalar_select %p1977, %s1976, 1
          %s1979 = smul.addr %s1978, 8
          %s1980 = smul.addr %s1979, 4
          %s1981 = scalar_lea.vmem %s6, %s1980
        $region60: #{up_forward.3} parent=55 // pred_fallthru
          _
        // Predicated region
        $region61: #{up_forward.3} parent=55 // pred_check
          %p1982 = pneg %p221
        $region62: #{up_forward.3} parent=55 // pred_check_branch
          %1984 = sbr.rel (%p1982) target = $region64
        $region63: #{up_forward.3} parent=55 // pred_region
          %s1985 = sand.u32 %s206, 1
          %s1986 = scalar_lea.sflag [#allocation3], %s1985
          %s1987 = sand.u32 %s206, 1
          %s1988 = smul.addr %s1987, 8
          %s1989 = scalar_lea.vmem [#allocation2], %s1988
          %1990 = dma.done %s1986, 128
        $region64: #{up_forward.3} parent=55 // pred_fallthru
          _
      $region56: #{up_forward.3} parent=5 // pred_fallthru
        _
    $region6: #{up_forward.3} parent=1 // loop_footer
      %s21 = sadd.s32 1, %s17
    $region7: #{up_forward.3} parent=1 // loop_footer_branch
      %16 = sbr.rel target = $region3
    $region8: #{up_forward.3} parent=1 // loop_exit
      _
    %1991 = vsyncpa [#allocation3], 1
    %s1992 = scalar_lea.sflag [#allocation3], 1
    %1993 = vsyncpa %s1992, 1

// kernel: up_forward.4
$region0: #{up_forward.4}
  #allocation0 [shape = 'u32[]', space=smem, size = 0x4, offset = 0x4, fixed_abs, tag = 'smem constant byte address 0x4 - core index']
  #allocation1 [shape = 'u32[144,128]{1,0:T(1,128)}', space=vmem, size = 0x12000, scoped, tag = 'internal scratch']
  %s0 = inlined_call_operand.vmem [shape: bf16[2,18,18,128], index: 0, kind: input, shape index: {}]
  %s1 = inlined_call_operand.vmem [shape: bf16[9,128,128], index: 1, kind: input, shape index: {}]
  %s2 = inlined_call_operand.vmem [shape: f32[1,128], index: 2, kind: input, shape index: {}]
  %s3 = inlined_call_operand.vmem [shape: f32[1,128], index: 3, kind: input, shape index: {}, may-alias: {3,4,5}]
  %s4 = inlined_call_operand.vmem [shape: f32[1,128], index: 4, kind: input, shape index: {}, may-alias: {3,4,5}]
  %s5 = inlined_call_operand.vmem [shape: f32[1,128], index: 5, kind: input, shape index: {}, may-alias: {3,4,5}]
  %s6 = inlined_call_operand.vmem [shape: bf16[2,256,128], index: 6, kind: output, shape index: {0}]
  %s7 = inlined_call_operand.vmem [shape: f32[2,8,128], index: 7, kind: output, shape index: {1}]
  %8 = xla_tuple %s6, %s7
  %s9 = sld [smem:[#allocation0]]
  $region65: #{up_forward.4} parent=0
    _
  %s11 = ssub.s32 1, %s9
  %s12 = scalar_select 0, %s11, %s9
  loop: start=0, step=1, limit=4
  $region2: #{up_forward.4} parent=0 // loop_pre_header
    _
  $region3: #{up_forward.4} parent=0 // loop_header
    %s14 = sphi 0, %s18
    %p15 = scmp.ge.s32.totalorder %s14, 4
    %s21 = sphi 0, %s33
    %s22 = sphi 0, %s29
    %s23 = sphi 0, %s21
    %s24 = sphi 0, %s22
    %s25 = sphi 0, %s23
    %s26 = sphi 0, %s24
    %s38 = sphi 0, %s40
    %s41 = sphi 0, %s38
    %s42 = sphi 0, %s41
    %s58 = sphi 0, %s42
    %s62 = sphi 0, %s62
    %s64 = sphi 0, %s62
    %s65 = sphi 0, %s64
    %s79 = sphi 0, %s65
    %s83 = sphi 0, %s83
    %s85 = sphi 0, %s83
    %s86 = sphi 0, %s85
    %s100 = sphi 0, %s86
    %s104 = sphi 0, %s104
    %s106 = sphi 0, %s104
    %s107 = sphi 0, %s106
    %s121 = sphi 0, %s107
    %s125 = sphi 0, %s125
    %s127 = sphi 0, %s125
    %s128 = sphi 0, %s127
    %s142 = sphi 0, %s128
    %s146 = sphi 0, %s146
    %s148 = sphi 0, %s146
    %s149 = sphi 0, %s148
    %s163 = sphi 0, %s149
    %s171 = sphi 0, %s173
    %s174 = sphi 0, %s171
    %s175 = sphi 0, %s174
    %s191 = sphi 0, %s175
    %s199 = sphi 0, %s201
    %s202 = sphi 0, %s199
    %s203 = sphi 0, %s202
    %s219 = sphi 0, %s203
  $region4: #{up_forward.4} parent=0 // loop_header_branch
    %17 = sbr.rel (%p15) target = $region8
  $region5: #{up_forward.4} parent=0 // loop_body
    %s19 = ssub.s32 %s14, 1
    %s20 = ssub.s32 %s14, 2
    %s27 = sadd.s32 1, %s22
    %p28 = scmp.ge.s32.totalorder %s27, 1
    %s29 = scalar_select %p28, 0, %s27
    %s30 = sadd.s32 1, %s21
    %s31 = scalar_select %p28, %s30, %s21
    %p32 = scmp.ge.s32.totalorder %s31, 2
    %s33 = scalar_select %p32, 0, %s31
    %s34 = sadd.s32 %s21, %s22
    %s35 = sadd.s32 %s33, %s29
    %s36 = ssub.s32 %s34, %s35
    %p37 = scmp.eq.s32.totalorder %s36, 0
    %s39 = sadd.s32 %s38, 1
    %s40 = scalar_select %p37, %s38, %s39
    %p43 = pneg %p37
    %p44 = scmp.eq.s32.totalorder %s14, 1
    %p45 = por %p43, %p44
    %p46 = scmp.ne.s32.totalorder %s38, %s41
    %p47 = scmp.eq.s32.totalorder %s14, 0
    %p48 = por %p46, %p47
    %p49 = scmp.ne.s32.totalorder %s38, %s41
    %p50 = scmp.eq.s32.totalorder %s19, 1
    %p51 = por %p49, %p50
    %p52 = scmp.ne.s32.totalorder %s41, %s42
    %p53 = scmp.eq.s32.totalorder %s19, 0
    %p54 = por %p52, %p53
    %p55 = scmp.ne.s32.totalorder %s41, %s42
    %p56 = scmp.eq.s32.totalorder %s20, 1
    %p57 = por %p55, %p56
    %p59 = scmp.ne.s32.totalorder %s42, %s58
    %p60 = scmp.eq.s32.totalorder %s20, 0
    %p61 = por %p59, %p60
    %s63 = sadd.s32 %s62, 1
    %p66 = scmp.eq.s32.totalorder %s14, 1
    %p67 = scmp.ne.s32.totalorder %s62, %s64
    %p68 = scmp.eq.s32.totalorder %s14, 0
    %p69 = por %p67, %p68
    %p70 = scmp.ne.s32.totalorder %s62, %s64
    %p71 = scmp.eq.s32.totalorder %s19, 1
    %p72 = por %p70, %p71
    %p73 = scmp.ne.s32.totalorder %s64, %s65
    %p74 = scmp.eq.s32.totalorder %s19, 0
    %p75 = por %p73, %p74
    %p76 = scmp.ne.s32.totalorder %s64, %s65
    %p77 = scmp.eq.s32.totalorder %s20, 1
    %p78 = por %p76, %p77
    %p80 = scmp.ne.s32.totalorder %s65, %s79
    %p81 = scmp.eq.s32.totalorder %s20, 0
    %p82 = por %p80, %p81
    %s84 = sadd.s32 %s83, 1
    %p87 = scmp.eq.s32.totalorder %s14, 1
    %p88 = scmp.ne.s32.totalorder %s83, %s85
    %p89 = scmp.eq.s32.totalorder %s14, 0
    %p90 = por %p88, %p89
    %p91 = scmp.ne.s32.totalorder %s83, %s85
    %p92 = scmp.eq.s32.totalorder %s19, 1
    %p93 = por %p91, %p92
    %p94 = scmp.ne.s32.totalorder %s85, %s86
    %p95 = scmp.eq.s32.totalorder %s19, 0
    %p96 = por %p94, %p95
    %p97 = scmp.ne.s32.totalorder %s85, %s86
    %p98 = scmp.eq.s32.totalorder %s20, 1
    %p99 = por %p97, %p98
    %p101 = scmp.ne.s32.totalorder %s86, %s100
    %p102 = scmp.eq.s32.totalorder %s20, 0
    %p103 = por %p101, %p102
    %s105 = sadd.s32 %s104, 1
    %p108 = scmp.eq.s32.totalorder %s14, 1
    %p109 = scmp.ne.s32.totalorder %s104, %s106
    %p110 = scmp.eq.s32.totalorder %s14, 0
    %p111 = por %p109, %p110
    %p112 = scmp.ne.s32.totalorder %s104, %s106
    %p113 = scmp.eq.s32.totalorder %s19, 1
    %p114 = por %p112, %p113
    %p115 = scmp.ne.s32.totalorder %s106, %s107
    %p116 = scmp.eq.s32.totalorder %s19, 0
    %p117 = por %p115, %p116
    %p118 = scmp.ne.s32.totalorder %s106, %s107
    %p119 = scmp.eq.s32.totalorder %s20, 1
    %p120 = por %p118, %p119
    %p122 = scmp.ne.s32.totalorder %s107, %s121
    %p123 = scmp.eq.s32.totalorder %s20, 0
    %p124 = por %p122, %p123
    %s126 = sadd.s32 %s125, 1
    %p129 = scmp.eq.s32.totalorder %s14, 1
    %p130 = scmp.ne.s32.totalorder %s125, %s127
    %p131 = scmp.eq.s32.totalorder %s14, 0
    %p132 = por %p130, %p131
    %p133 = scmp.ne.s32.totalorder %s125, %s127
    %p134 = scmp.eq.s32.totalorder %s19, 1
    %p135 = por %p133, %p134
    %p136 = scmp.ne.s32.totalorder %s127, %s128
    %p137 = scmp.eq.s32.totalorder %s19, 0
    %p138 = por %p136, %p137
    %p139 = scmp.ne.s32.totalorder %s127, %s128
    %p140 = scmp.eq.s32.totalorder %s20, 1
    %p141 = por %p139, %p140
    %p143 = scmp.ne.s32.totalorder %s128, %s142
    %p144 = scmp.eq.s32.totalorder %s20, 0
    %p145 = por %p143, %p144
    %s147 = sadd.s32 %s146, 1
    %p150 = scmp.eq.s32.totalorder %s14, 1
    %p151 = scmp.ne.s32.totalorder %s146, %s148
    %p152 = scmp.eq.s32.totalorder %s14, 0
    %p153 = por %p151, %p152
    %p154 = scmp.ne.s32.totalorder %s146, %s148
    %p155 = scmp.eq.s32.totalorder %s19, 1
    %p156 = por %p154, %p155
    %p157 = scmp.ne.s32.totalorder %s148, %s149
    %p158 = scmp.eq.s32.totalorder %s19, 0
    %p159 = por %p157, %p158
    %p160 = scmp.ne.s32.totalorder %s148, %s149
    %p161 = scmp.eq.s32.totalorder %s20, 1
    %p162 = por %p160, %p161
    %p164 = scmp.ne.s32.totalorder %s149, %s163
    %p165 = scmp.eq.s32.totalorder %s20, 0
    %p166 = por %p164, %p165
    %s167 = sadd.s32 %s21, %s22
    %s168 = sadd.s32 %s33, %s29
    %s169 = ssub.s32 %s167, %s168
    %p170 = scmp.eq.s32.totalorder %s169, 0
    %s172 = sadd.s32 %s171, 1
    %s173 = scalar_select %p170, %s171, %s172
    %p176 = pneg %p170
    %p177 = scmp.eq.s32.totalorder %s14, 1
    %p178 = por %p176, %p177
    %p179 = scmp.ne.s32.totalorder %s171, %s174
    %p180 = scmp.eq.s32.totalorder %s14, 0
    %p181 = por %p179, %p180
    %p182 = scmp.ne.s32.totalorder %s171, %s174
    %p183 = scmp.eq.s32.totalorder %s19, 1
    %p184 = por %p182, %p183
    %p185 = scmp.ne.s32.totalorder %s174, %s175
    %p186 = scmp.eq.s32.totalorder %s19, 0
    %p187 = por %p185, %p186
    %p188 = scmp.ne.s32.totalorder %s174, %s175
    %p189 = scmp.eq.s32.totalorder %s20, 1
    %p190 = por %p188, %p189
    %p192 = scmp.ne.s32.totalorder %s175, %s191
    %p193 = scmp.eq.s32.totalorder %s20, 0
    %p194 = por %p192, %p193
    %s195 = sadd.s32 %s21, %s22
    %s196 = sadd.s32 %s33, %s29
    %s197 = ssub.s32 %s195, %s196
    %p198 = scmp.eq.s32.totalorder %s197, 0
    %s200 = sadd.s32 %s199, 1
    %s201 = scalar_select %p198, %s199, %s200
    %p204 = pneg %p198
    %p205 = scmp.eq.s32.totalorder %s14, 1
    %p206 = por %p204, %p205
    %p207 = scmp.ne.s32.totalorder %s199, %s202
    %p208 = scmp.eq.s32.totalorder %s14, 0
    %p209 = por %p207, %p208
    %p210 = scmp.ne.s32.totalorder %s199, %s202
    %p211 = scmp.eq.s32.totalorder %s19, 1
    %p212 = por %p210, %p211
    %p213 = scmp.ne.s32.totalorder %s202, %s203
    %p214 = scmp.eq.s32.totalorder %s19, 0
    %p215 = por %p213, %p214
    %p216 = scmp.ne.s32.totalorder %s202, %s203
    %p217 = scmp.eq.s32.totalorder %s20, 1
    %p218 = por %p216, %p217
    %p220 = scmp.ne.s32.totalorder %s203, %s219
    %p221 = scmp.eq.s32.totalorder %s20, 0
    %p222 = por %p220, %p221
    %p223 = scmp.le.s32.totalorder 1, %s14
    %p224 = scmp.lt.s32.totalorder %s14, 3
    %p225 = pnand %p223, %p224
    %p226 = pneg %p225
    // Predicated region
    $region9: #{up_forward.4} parent=5 // pred_check
      _
    $region10: #{up_forward.4} parent=5 // pred_check_branch
      %228 = sbr.rel (%p225) target = $region12
    $region11: #{up_forward.4} parent=5 // pred_region
      %s229 = ssub.s32 %s14, 1
      // Predicated region
      $region13: #{up_forward.4} parent=11 // pred_check
        %p230 = pneg %p75
      $region14: #{up_forward.4} parent=11 // pred_check_branch
        %232 = sbr.rel (%p230) target = $region16
      $region15: #{up_forward.4} parent=11 // pred_region
        _
      $region16: #{up_forward.4} parent=11 // pred_fallthru
        _
      // Predicated region
      $region17: #{up_forward.4} parent=11 // pred_check
        %p233 = pneg %p96
      $region18: #{up_forward.4} parent=11 // pred_check_branch
        %235 = sbr.rel (%p233) target = $region20
      $region19: #{up_forward.4} parent=11 // pred_region
        _
      $region20: #{up_forward.4} parent=11 // pred_fallthru
        _
      // Predicated region
      $region21: #{up_forward.4} parent=11 // pred_check
        %p236 = pneg %p117
      $region22: #{up_forward.4} parent=11 // pred_check_branch
        %238 = sbr.rel (%p236) target = $region24
      $region23: #{up_forward.4} parent=11 // pred_region
        _
      $region24: #{up_forward.4} parent=11 // pred_fallthru
        _
      // Predicated region
      $region25: #{up_forward.4} parent=11 // pred_check
        %p239 = pneg %p138
      $region26: #{up_forward.4} parent=11 // pred_check_branch
        %241 = sbr.rel (%p239) target = $region28
      $region27: #{up_forward.4} parent=11 // pred_region
        _
      $region28: #{up_forward.4} parent=11 // pred_fallthru
        _
      // Predicated region
      $region29: #{up_forward.4} parent=11 // pred_check
        %p242 = pneg %p159
      $region30: #{up_forward.4} parent=11 // pred_check_branch
        %244 = sbr.rel (%p242) target = $region32
      $region31: #{up_forward.4} parent=11 // pred_region
        _
      $region32: #{up_forward.4} parent=11 // pred_fallthru
        _
    $region12: #{up_forward.4} parent=5 // pred_fallthru
      _
    %p245 = scmp.lt.s32.totalorder %s14, 2
    // Predicated region
    $region33: #{up_forward.4} parent=5 // pred_check
      %p246 = pneg %p245
    $region34: #{up_forward.4} parent=5 // pred_check_branch
      %248 = sbr.rel (%p246) target = $region36
    $region35: #{up_forward.4} parent=5 // pred_region
      // Predicated region
      $region37: #{up_forward.4} parent=35 // pred_check
        %p249 = pneg %p48
      $region38: #{up_forward.4} parent=35 // pred_check_branch
        %251 = sbr.rel (%p249) target = $region40
      $region39: #{up_forward.4} parent=35 // pred_region
        %s252 = sadd.s32 %s21, %s22
        %p253 = scmp.lt.s32.totalorder %s252, 1
        %s254 = scalar_select %p253, %s252, 1
        %s255 = smul.addr %s254, 54
        %s256 = smul.addr %s255, 4
        %s257 = scalar_lea.vmem %s0, %s256
        %s258 = sadd.s32 %s21, %s22
      $region40: #{up_forward.4} parent=35 // pred_fallthru
        _
    $region36: #{up_forward.4} parent=5 // pred_fallthru
      _
    %p259 = scmp.le.s32.totalorder 1, %s14
    %p260 = scmp.lt.s32.totalorder %s14, 3
    %p261 = pnand %p259, %p260
    %p262 = pneg %p261
    // Predicated region
    $region41: #{up_forward.4} parent=5 // pred_check
      _
    $region42: #{up_forward.4} parent=5 // pred_check_branch
      %264 = sbr.rel (%p261) target = $region44
    $region43: #{up_forward.4} parent=5 // pred_region
      %s265 = ssub.s32 %s14, 1
      %s266 = sadd.s32 %s23, %s24
      %p267 = scmp.lt.s32.totalorder %s266, 1
      %s268 = scalar_select %p267, %s266, 1
      %s269 = smul.addr %s268, 54
      %s270 = smul.addr %s269, 4
      %s271 = scalar_lea.vmem %s0, %s270
      %p272 = pneg %p54
      %p273 = pneg %p51
      %p274 = pneg %p75
      %p275 = pneg %p72
      %p276 = pneg %p96
      %p277 = pneg %p93
      %p278 = pneg %p117
      %p279 = pneg %p114
      %p280 = pneg %p138
      %p281 = pneg %p135
      %p282 = pneg %p159
      %p283 = pneg %p156
      %p284 = pneg %p187
      %p285 = pneg %p184
      %s286 = sadd.s32 %s23, %s24
      %p287 = scmp.lt.s32.totalorder %s286, 1
      %s288 = scalar_select %p287, %s286, 1
      %s289 = smul.addr %s288, 32
      %s290 = smul.addr %s289, 4
      %s291 = scalar_lea.vmem %s6, %s290
      %p292 = pneg %p215
      %p293 = pneg %p212
      %s294 = sadd.s32 %s23, %s24
      %p295 = scmp.lt.s32.totalorder %s294, 1
      %s296 = scalar_select %p295, %s294, 1
      %s297 = smul.addr %s296, 8
      %s298 = scalar_lea.vmem %s7, %s297
      %s299 = sadd.s32 %s23, %s24
      %p300 = scmp.lt.s32.totalorder %s299, 1
      %s301 = scalar_select %p300, %s299, 1
      %s302 = smul.addr %s301, 54
      %s303 = smul.addr %s302, 4
      %s304 = scalar_lea.vmem %s0, %s303
      %s305 = sadd.s32 %s23, %s24
      %s306 = sadd.s32 %s23, %s24
      %p307 = scmp.lt.s32.totalorder %s306, 1
      %s308 = scalar_select %p307, %s306, 1
      %s309 = smul.addr %s308, 32
      %s310 = smul.addr %s309, 4
      %s311 = scalar_lea.vmem %s6, %s310
      %s312 = sadd.s32 %s23, %s24
      %s313 = sadd.s32 %s23, %s24
      %p314 = scmp.lt.s32.totalorder %s313, 1
      %s315 = scalar_select %p314, %s313, 1
      %s316 = smul.addr %s315, 8
      %s317 = scalar_lea.vmem %s7, %s316
      %s318 = sadd.s32 %s23, %s24
      %v320 = vld [vmem:[%s304] sm:$0xf]
      %v321 = vld [vmem:[%s304 + $0x4] sm:$0xf]
      %v322 = vld [vmem:[%s304 + $0x8] sm:$0x1]
      %v323 = vld [vmem:[%s304 + $0xc] sm:$0xf]
      %v324 = vld [vmem:[%s304 + $0x10] sm:$0xf]
      %v325 = vld [vmem:[%s304 + $0x14] sm:$0x1]
      %v326 = vld [vmem:[%s304 + $0x18] sm:$0xf]
      %v327 = vld [vmem:[%s304 + $0x1c] sm:$0xf]
      %v328 = vld [vmem:[%s304 + $0x20] sm:$0x1]
      %v329 = vld [vmem:[%s304 + $0x24] sm:$0xf]
      %v330 = vld [vmem:[%s304 + $0x28] sm:$0xf]
      %v331 = vld [vmem:[%s304 + $0x2c] sm:$0x1]
      %v332 = vld [vmem:[%s304 + $0x30] sm:$0xf]
      %v333 = vld [vmem:[%s304 + $0x34] sm:$0xf]
      %v334 = vld [vmem:[%s304 + $0x38] sm:$0x1]
      %v335 = vld [vmem:[%s304 + $0x3c] sm:$0xf]
      %v336 = vld [vmem:[%s304 + $0x40] sm:$0xf]
      %v337 = vld [vmem:[%s304 + $0x44] sm:$0x1]
      %v338 = vld [vmem:[%s304 + $0x48] sm:$0xf]
      %v339 = vld [vmem:[%s304 + $0x4c] sm:$0xf]
      %v340 = vld [vmem:[%s304 + $0x50] sm:$0x1]
      %v341 = vld [vmem:[%s304 + $0x54] sm:$0xf]
      %v342 = vld [vmem:[%s304 + $0x58] sm:$0xf]
      %v343 = vld [vmem:[%s304 + $0x5c] sm:$0x1]
      %v344 = vld [vmem:[%s304 + $0x60] sm:$0xf]
      %v345 = vld [vmem:[%s304 + $0x64] sm:$0xf]
      %v346 = vld [vmem:[%s304 + $0x68] sm:$0x1]
      %v347 = vld [vmem:[%s304 + $0x6c] sm:$0xf]
      %v348 = vld [vmem:[%s304 + $0x70] sm:$0xf]
      %v349 = vld [vmem:[%s304 + $0x74] sm:$0x1]
      %v350 = vld [vmem:[%s304 + $0x78] sm:$0xf]
      %v351 = vld [vmem:[%s304 + $0x7c] sm:$0xf]
      %v352 = vld [vmem:[%s304 + $0x80] sm:$0x1]
      %v353 = vld [vmem:[%s304 + $0x84] sm:$0xf]
      %v354 = vld [vmem:[%s304 + $0x88] sm:$0xf]
      %v355 = vld [vmem:[%s304 + $0x8c] sm:$0x1]
      %v356 = vld [vmem:[%s304 + $0x90] sm:$0xf]
      %v357 = vld [vmem:[%s304 + $0x94] sm:$0xf]
      %v358 = vld [vmem:[%s304 + $0x98] sm:$0x1]
      %v359 = vld [vmem:[%s304 + $0x9c] sm:$0xf]
      %v360 = vld [vmem:[%s304 + $0xa0] sm:$0xf]
      %v361 = vld [vmem:[%s304 + $0xa4] sm:$0x1]
      %v362 = vld [vmem:[%s304 + $0xa8] sm:$0xf]
      %v363 = vld [vmem:[%s304 + $0xac] sm:$0xf]
      %v364 = vld [vmem:[%s304 + $0xb0] sm:$0x1]
      %v365 = vld [vmem:[%s304 + $0xb4] sm:$0xf]
      %v366 = vld [vmem:[%s304 + $0xb8] sm:$0xf]
      %v367 = vld [vmem:[%s304 + $0xbc] sm:$0x1]
      %v368 = vld [vmem:[%s304 + $0xc0] sm:$0xf]
      %v369 = vld [vmem:[%s304 + $0xc4] sm:$0xf]
      %v370 = vld [vmem:[%s304 + $0xc8] sm:$0x1]
      %v371 = vld [vmem:[%s304 + $0xcc] sm:$0xf]
      %v372 = vld [vmem:[%s304 + $0xd0] sm:$0xf]
      %v373 = vld [vmem:[%s304 + $0xd4] sm:$0x1]
      %v374 = vld [vmem:[%s1] sm:$0xf]
      %v375 = vld [vmem:[%s1 + $0x4] sm:$0xf]
      %v376 = vld [vmem:[%s1 + $0x8] sm:$0xf]
      %v377 = vld [vmem:[%s1 + $0xc] sm:$0xf]
      %v378 = vld [vmem:[%s1 + $0x10] sm:$0xf]
      %v379 = vld [vmem:[%s1 + $0x14] sm:$0xf]
      %v380 = vld [vmem:[%s1 + $0x18] sm:$0xf]
      %v381 = vld [vmem:[%s1 + $0x1c] sm:$0xf]
      %v382 = vld [vmem:[%s1 + $0x20] sm:$0xf]
      %v383 = vld [vmem:[%s1 + $0x24] sm:$0xf]
      %v384 = vld [vmem:[%s1 + $0x28] sm:$0xf]
      %v385 = vld [vmem:[%s1 + $0x2c] sm:$0xf]
      %v386 = vld [vmem:[%s1 + $0x30] sm:$0xf]
      %v387 = vld [vmem:[%s1 + $0x34] sm:$0xf]
      %v388 = vld [vmem:[%s1 + $0x38] sm:$0xf]
      %v389 = vld [vmem:[%s1 + $0x3c] sm:$0xf]
      %vm390 = vsmask.f32 3328
      %vm391 = vsmask.f32 7440
      %vm392 = vmor %vm390, %vm391
      %v394 = vshrl.u32 %v320, 16
      %v396 = vrot.slane %v394, 4
      %v397 = vshll.u32 %v320, 16
      %v399 = vrot.slane %v397, 5
      %v400 = vor.u32 %v396, %v399
      %v401 = vrot.slane %v400, 4
      %v403 = vshll.u32 %v321, 16
      %v405 = vrot.slane %v403, 5
      %v406 = vsel %vm392, %v401, %v405
      %v407 = vshrl.u32 %v321, 16
      %v409 = vrot.slane %v407, 4
      %v410 = vor.u32 %v409, %v405
      %v411 = vrot.slane %v410, 4
      %v413 = vshll.u32 %v322, 16
      %v415 = vrot.slane %v413, 5
      %v416 = vsel %vm392, %v411, %v415
      %v418 = vshrl.u32 %v323, 16
      %v420 = vrot.slane %v418, 4
      %v421 = vshll.u32 %v323, 16
      %v423 = vrot.slane %v421, 5
      %v424 = vor.u32 %v420, %v423
      %v425 = vrot.slane %v424, 4
      %v427 = vshll.u32 %v324, 16
      %v429 = vrot.slane %v427, 5
      %v430 = vsel %vm392, %v425, %v429
      %v431 = vshrl.u32 %v324, 16
      %v433 = vrot.slane %v431, 4
      %v434 = vor.u32 %v433, %v429
      %v435 = vrot.slane %v434, 4
      %v437 = vshll.u32 %v325, 16
      %v439 = vrot.slane %v437, 5
      %v440 = vsel %vm392, %v435, %v439
      %v442 = vshrl.u32 %v326, 16
      %v444 = vrot.slane %v442, 4
      %v445 = vshll.u32 %v326, 16
      %v447 = vrot.slane %v445, 5
      %v448 = vor.u32 %v444, %v447
      %v449 = vrot.slane %v448, 4
      %v451 = vshll.u32 %v327, 16
      %v453 = vrot.slane %v451, 5
      %v454 = vsel %vm392, %v449, %v453
      %v455 = vshrl.u32 %v327, 16
      %v457 = vrot.slane %v455, 4
      %v458 = vor.u32 %v457, %v453
      %v459 = vrot.slane %v458, 4
      %v461 = vshll.u32 %v328, 16
      %v463 = vrot.slane %v461, 5
      %v464 = vsel %vm392, %v459, %v463
      %v466 = vshrl.u32 %v329, 16
      %v468 = vrot.slane %v466, 4
      %v469 = vshll.u32 %v329, 16
      %v471 = vrot.slane %v469, 5
      %v472 = vor.u32 %v468, %v471
      %v473 = vrot.slane %v472, 4
      %v475 = vshll.u32 %v330, 16
      %v477 = vrot.slane %v475, 5
      %v478 = vsel %vm392, %v473, %v477
      %v479 = vshrl.u32 %v330, 16
      %v481 = vrot.slane %v479, 4
      %v482 = vor.u32 %v481, %v477
      %v483 = vrot.slane %v482, 4
      %v485 = vshll.u32 %v331, 16
      %v487 = vrot.slane %v485, 5
      %v488 = vsel %vm392, %v483, %v487
      %v490 = vshrl.u32 %v332, 16
      %v492 = vrot.slane %v490, 4
      %v493 = vshll.u32 %v332, 16
      %v495 = vrot.slane %v493, 5
      %v496 = vor.u32 %v492, %v495
      %v497 = vrot.slane %v496, 4
      %v499 = vshll.u32 %v333, 16
      %v501 = vrot.slane %v499, 5
      %v502 = vsel %vm392, %v497, %v501
      %v503 = vshrl.u32 %v333, 16
      %v505 = vrot.slane %v503, 4
      %v506 = vor.u32 %v505, %v501
      %v507 = vrot.slane %v506, 4
      %v509 = vshll.u32 %v334, 16
      %v511 = vrot.slane %v509, 5
      %v512 = vsel %vm392, %v507, %v511
      %v514 = vshrl.u32 %v335, 16
      %v516 = vrot.slane %v514, 4
      %v517 = vshll.u32 %v335, 16
      %v519 = vrot.slane %v517, 5
      %v520 = vor.u32 %v516, %v519
      %v521 = vrot.slane %v520, 4
      %v523 = vshll.u32 %v336, 16
      %v525 = vrot.slane %v523, 5
      %v526 = vsel %vm392, %v521, %v525
      %v527 = vshrl.u32 %v336, 16
      %v529 = vrot.slane %v527, 4
      %v530 = vor.u32 %v529, %v525
      %v531 = vrot.slane %v530, 4
      %v533 = vshll.u32 %v337, 16
      %v535 = vrot.slane %v533, 5
      %v536 = vsel %vm392, %v531, %v535
      %v538 = vshrl.u32 %v338, 16
      %v540 = vrot.slane %v538, 4
      %v541 = vshll.u32 %v338, 16
      %v543 = vrot.slane %v541, 5
      %v544 = vor.u32 %v540, %v543
      %v545 = vrot.slane %v544, 4
      %v547 = vshll.u32 %v339, 16
      %v549 = vrot.slane %v547, 5
      %v550 = vsel %vm392, %v545, %v549
      %v551 = vshrl.u32 %v339, 16
      %v553 = vrot.slane %v551, 4
      %v554 = vor.u32 %v553, %v549
      %v555 = vrot.slane %v554, 4
      %v557 = vshll.u32 %v340, 16
      %v559 = vrot.slane %v557, 5
      %v560 = vsel %vm392, %v555, %v559
      %v562 = vshrl.u32 %v341, 16
      %v564 = vrot.slane %v562, 4
      %v565 = vshll.u32 %v341, 16
      %v567 = vrot.slane %v565, 5
      %v568 = vor.u32 %v564, %v567
      %v569 = vrot.slane %v568, 4
      %v571 = vshll.u32 %v342, 16
      %v573 = vrot.slane %v571, 5
      %v574 = vsel %vm392, %v569, %v573
      %v575 = vshrl.u32 %v342, 16
      %v577 = vrot.slane %v575, 4
      %v578 = vor.u32 %v577, %v573
      %v579 = vrot.slane %v578, 4
      %v581 = vshll.u32 %v343, 16
      %v583 = vrot.slane %v581, 5
      %v584 = vsel %vm392, %v579, %v583
      %v586 = vshrl.u32 %v344, 16
      %v588 = vrot.slane %v586, 4
      %v589 = vshll.u32 %v344, 16
      %v591 = vrot.slane %v589, 5
      %v592 = vor.u32 %v588, %v591
      %v593 = vrot.slane %v592, 4
      %v595 = vshll.u32 %v345, 16
      %v597 = vrot.slane %v595, 5
      %v598 = vsel %vm392, %v593, %v597
      %v599 = vshrl.u32 %v345, 16
      %v601 = vrot.slane %v599, 4
      %v602 = vor.u32 %v601, %v597
      %v603 = vrot.slane %v602, 4
      %v605 = vshll.u32 %v346, 16
      %v607 = vrot.slane %v605, 5
      %v608 = vsel %vm392, %v603, %v607
      %v610 = vshrl.u32 %v347, 16
      %v612 = vrot.slane %v610, 4
      %v613 = vshll.u32 %v347, 16
      %v615 = vrot.slane %v613, 5
      %v616 = vor.u32 %v612, %v615
      %v617 = vrot.slane %v616, 4
      %v619 = vshll.u32 %v348, 16
      %v621 = vrot.slane %v619, 5
      %v622 = vsel %vm392, %v617, %v621
      %v623 = vshrl.u32 %v348, 16
      %v625 = vrot.slane %v623, 4
      %v626 = vor.u32 %v625, %v621
      %v627 = vrot.slane %v626, 4
      %v629 = vshll.u32 %v349, 16
      %v631 = vrot.slane %v629, 5
      %v632 = vsel %vm392, %v627, %v631
      %v634 = vshrl.u32 %v350, 16
      %v636 = vrot.slane %v634, 4
      %v637 = vshll.u32 %v350, 16
      %v639 = vrot.slane %v637, 5
      %v640 = vor.u32 %v636, %v639
      %v641 = vrot.slane %v640, 4
      %v643 = vshll.u32 %v351, 16
      %v645 = vrot.slane %v643, 5
      %v646 = vsel %vm392, %v641, %v645
      %v647 = vshrl.u32 %v351, 16
      %v649 = vrot.slane %v647, 4
      %v650 = vor.u32 %v649, %v645
      %v651 = vrot.slane %v650, 4
      %v653 = vshll.u32 %v352, 16
      %v655 = vrot.slane %v653, 5
      %v656 = vsel %vm392, %v651, %v655
      %v658 = vshrl.u32 %v353, 16
      %v660 = vrot.slane %v658, 4
      %v661 = vshll.u32 %v353, 16
      %v663 = vrot.slane %v661, 5
      %v664 = vor.u32 %v660, %v663
      %v665 = vrot.slane %v664, 4
      %v667 = vshll.u32 %v354, 16
      %v669 = vrot.slane %v667, 5
      %v670 = vsel %vm392, %v665, %v669
      %v671 = vshrl.u32 %v354, 16
      %v673 = vrot.slane %v671, 4
      %v674 = vor.u32 %v673, %v669
      %v675 = vrot.slane %v674, 4
      %v677 = vshll.u32 %v355, 16
      %v679 = vrot.slane %v677, 5
      %v680 = vsel %vm392, %v675, %v679
      %v682 = vshrl.u32 %v356, 16
      %v684 = vrot.slane %v682, 4
      %v685 = vshll.u32 %v356, 16
      %v687 = vrot.slane %v685, 5
      %v688 = vor.u32 %v684, %v687
      %v689 = vrot.slane %v688, 4
      %v691 = vshll.u32 %v357, 16
      %v693 = vrot.slane %v691, 5
      %v694 = vsel %vm392, %v689, %v693
      %v695 = vshrl.u32 %v357, 16
      %v697 = vrot.slane %v695, 4
      %v698 = vor.u32 %v697, %v693
      %v699 = vrot.slane %v698, 4
      %v701 = vshll.u32 %v358, 16
      %v703 = vrot.slane %v701, 5
      %v704 = vsel %vm392, %v699, %v703
      %v706 = vshrl.u32 %v359, 16
      %v708 = vrot.slane %v706, 4
      %v709 = vshll.u32 %v359, 16
      %v711 = vrot.slane %v709, 5
      %v712 = vor.u32 %v708, %v711
      %v713 = vrot.slane %v712, 4
      %v715 = vshll.u32 %v360, 16
      %v717 = vrot.slane %v715, 5
      %v718 = vsel %vm392, %v713, %v717
      %v719 = vshrl.u32 %v360, 16
      %v721 = vrot.slane %v719, 4
      %v722 = vor.u32 %v721, %v717
      %v723 = vrot.slane %v722, 4
      %v725 = vshll.u32 %v361, 16
      %v727 = vrot.slane %v725, 5
      %v728 = vsel %vm392, %v723, %v727
      %v730 = vshrl.u32 %v362, 16
      %v732 = vrot.slane %v730, 4
      %v733 = vshll.u32 %v362, 16
      %v735 = vrot.slane %v733, 5
      %v736 = vor.u32 %v732, %v735
      %v737 = vrot.slane %v736, 4
      %v739 = vshll.u32 %v363, 16
      %v741 = vrot.slane %v739, 5
      %v742 = vsel %vm392, %v737, %v741
      %v743 = vshrl.u32 %v363, 16
      %v745 = vrot.slane %v743, 4
      %v746 = vor.u32 %v745, %v741
      %v747 = vrot.slane %v746, 4
      %v749 = vshll.u32 %v364, 16
      %v751 = vrot.slane %v749, 5
      %v752 = vsel %vm392, %v747, %v751
      %v754 = vshrl.u32 %v365, 16
      %v756 = vrot.slane %v754, 4
      %v757 = vshll.u32 %v365, 16
      %v759 = vrot.slane %v757, 5
      %v760 = vor.u32 %v756, %v759
      %v761 = vrot.slane %v760, 4
      %v763 = vshll.u32 %v366, 16
      %v765 = vrot.slane %v763, 5
      %v766 = vsel %vm392, %v761, %v765
      %v767 = vshrl.u32 %v366, 16
      %v769 = vrot.slane %v767, 4
      %v770 = vor.u32 %v769, %v765
      %v771 = vrot.slane %v770, 4
      %v773 = vshll.u32 %v367, 16
      %v775 = vrot.slane %v773, 5
      %v776 = vsel %vm392, %v771, %v775
      %s777 = scalar_lea.vmem %s1, 64
      %v778 = vld [vmem:[%s777] sm:$0xf]
      %v779 = vld [vmem:[%s777 + $0x4] sm:$0xf]
      %v780 = vld [vmem:[%s777 + $0x8] sm:$0xf]
      %v781 = vld [vmem:[%s777 + $0xc] sm:$0xf]
      %v782 = vld [vmem:[%s777 + $0x10] sm:$0xf]
      %v783 = vld [vmem:[%s777 + $0x14] sm:$0xf]
      %v784 = vld [vmem:[%s777 + $0x18] sm:$0xf]
      %v785 = vld [vmem:[%s777 + $0x1c] sm:$0xf]
      %v786 = vld [vmem:[%s777 + $0x20] sm:$0xf]
      %v787 = vld [vmem:[%s777 + $0x24] sm:$0xf]
      %v788 = vld [vmem:[%s777 + $0x28] sm:$0xf]
      %v789 = vld [vmem:[%s777 + $0x2c] sm:$0xf]
      %v790 = vld [vmem:[%s777 + $0x30] sm:$0xf]
      %v791 = vld [vmem:[%s777 + $0x34] sm:$0xf]
      %v792 = vld [vmem:[%s777 + $0x38] sm:$0xf]
      %v793 = vld [vmem:[%s777 + $0x3c] sm:$0xf]
      %v794 = vunpack.c.l.b16 %v406
      %v795 = vunpack.c.l.b16 %v416
      %v796 = vunpack.c.l.b16 %v430
      %v797 = vunpack.c.l.b16 %v440
      %v798 = vunpack.c.l.b16 %v454
      %v799 = vunpack.c.l.b16 %v464
      %v800 = vunpack.c.l.b16 %v478
      %v801 = vunpack.c.l.b16 %v488
      %v802 = vunpack.c.l.b16 %v502
      %v803 = vunpack.c.l.b16 %v512
      %v804 = vunpack.c.l.b16 %v526
      %v805 = vunpack.c.l.b16 %v536
      %v806 = vunpack.c.l.b16 %v550
      %v807 = vunpack.c.l.b16 %v560
      %v808 = vunpack.c.l.b16 %v574
      %v809 = vunpack.c.l.b16 %v584
      %v810 = vunpack.c.l.b16 %v598
      %v811 = vunpack.c.l.b16 %v608
      %v812 = vunpack.c.l.b16 %v622
      %v813 = vunpack.c.l.b16 %v632
      %v814 = vunpack.c.l.b16 %v646
      %v815 = vunpack.c.l.b16 %v656
      %v816 = vunpack.c.l.b16 %v670
      %v817 = vunpack.c.l.b16 %v680
      %v818 = vunpack.c.l.b16 %v694
      %v819 = vunpack.c.l.b16 %v704
      %v820 = vunpack.c.l.b16 %v718
      %v821 = vunpack.c.l.b16 %v728
      %v822 = vunpack.c.l.b16 %v742
      %v823 = vunpack.c.l.b16 %v752
      %v824 = vunpack.c.l.b16 %v766
      %v825 = vunpack.c.l.b16 %v776
      %v826 = vpack.c.b16 %v795, %v794
      %v827 = vpack.c.b16 %v797, %v796
      %v828 = vpack.c.b16 %v799, %v798
      %v829 = vpack.c.b16 %v801, %v800
      %v830 = vpack.c.b16 %v803, %v802
      %v831 = vpack.c.b16 %v805, %v804
      %v832 = vpack.c.b16 %v807, %v806
      %v833 = vpack.c.b16 %v809, %v808
      %v834 = vpack.c.b16 %v811, %v810
      %v835 = vpack.c.b16 %v813, %v812
      %v836 = vpack.c.b16 %v815, %v814
      %v837 = vpack.c.b16 %v817, %v816
      %v838 = vpack.c.b16 %v819, %v818
      %v839 = vpack.c.b16 %v821, %v820
      %v840 = vpack.c.b16 %v823, %v822
      %v841 = vpack.c.b16 %v825, %v824
      %v874 = vunpack.c.l.b16 %v778
      %v875 = vunpack.c.l.b16 %v779
      %v876 = vunpack.c.l.b16 %v780
      %v877 = vunpack.c.l.b16 %v781
      %v878 = vunpack.c.l.b16 %v782
      %v879 = vunpack.c.l.b16 %v783
      %v880 = vunpack.c.l.b16 %v784
      %v881 = vunpack.c.l.b16 %v785
      %v882 = vunpack.c.l.b16 %v786
      %v883 = vunpack.c.l.b16 %v787
      %v884 = vunpack.c.l.b16 %v788
      %v885 = vunpack.c.l.b16 %v789
      %v886 = vunpack.c.l.b16 %v790
      %v887 = vunpack.c.l.b16 %v791
      %v888 = vunpack.c.l.b16 %v792
      %v889 = vunpack.c.l.b16 %v793
      %v890 = vpack.c.b16 %v875, %v874
      %v891 = vpack.c.b16 %v877, %v876
      %v892 = vpack.c.b16 %v879, %v878
      %v893 = vpack.c.b16 %v881, %v880
      %v894 = vpack.c.b16 %v883, %v882
      %v895 = vpack.c.b16 %v885, %v884
      %v896 = vpack.c.b16 %v887, %v886
      %v897 = vpack.c.b16 %v889, %v888
      %906 = vmatprep.subr.bf16.mxu0 0
      %907 = vmatpush1.bf16.msra.mxu0 %v890
      %908 = vmatprep.subr.bf16.mxu0 0
      %909 = vmatpush1.bf16.msra.mxu0 %v891
      %910 = vmatprep.subr.bf16.mxu0 0
      %911 = vmatpush1.bf16.msra.mxu0 %v892
      %912 = vmatprep.subr.bf16.mxu0 0
      %913 = vmatpush1.bf16.msra.mxu0 %v893
      %914 = vmatprep.subr.bf16.mxu0 0
      %915 = vmatpush1.bf16.msra.mxu0 %v894
      %916 = vmatprep.subr.bf16.mxu0 0
      %917 = vmatpush1.bf16.msra.mxu0 %v895
      %918 = vmatprep.subr.bf16.mxu0 0
      %919 = vmatpush1.bf16.msra.mxu0 %v896
      %920 = vmatprep.subr.bf16.mxu0 0
      %921 = vmatpush1.bf16.msra.mxu0 %v897
      %922 = vmatprep.subr.bf16.mxu0 0
      %923 = vmatpush1.bf16.msra.mxu0 0
      %924 = vmatprep.subr.bf16.mxu0 0
      %925 = vmatpush1.bf16.msra.mxu0 0
      %926 = vmatprep.subr.bf16.mxu0 0
      %927 = vmatpush1.bf16.msra.mxu0 0
      %928 = vmatprep.subr.bf16.mxu0 0
      %929 = vmatpush1.bf16.msra.mxu0 0
      %930 = vmatprep.subr.bf16.mxu0 0
      %931 = vmatpush1.bf16.msra.mxu0 0
      %932 = vmatprep.subr.bf16.mxu0 0
      %933 = vmatpush1.bf16.msra.mxu0 0
      %934 = vmatprep.subr.bf16.mxu0 0
      %935 = vmatpush1.bf16.msra.mxu0 0
      %936 = vmatprep.subr.bf16.mxu0 0
      %937 = vmatpush1.bf16.msra.mxu0 0
      %938 = vmatprep.mubr.bf16.mxu0 0
      %939 = vmatmul.mubr.bf16.gmra.mrb[0].mxu0 %v826
      %v940 = vpop.f32.mrb[0].mxu0
      %v941 = vadd.f32 0.0, %v940
      %v942 = vpop.f32.mrb[0].mxu0
      %v943 = vpop.f32.mrb[0].mxu0
      %v944 = vadd.f32 0.0, %v943
      %v945 = vpop.f32.mrb[0].mxu0
      %946 = vmatprep.mubr.bf16.mxu0 0
      %947 = vmatmul.mubr.bf16.gmra.mrb[0].mxu0 %v827
      %v948 = vpop.f32.mrb[0].mxu0
      %v949 = vadd.f32 0.0, %v948
      %v950 = vpop.f32.mrb[0].mxu0
      %v951 = vpop.f32.mrb[0].mxu0
      %v952 = vadd.f32 0.0, %v951
      %v953 = vpop.f32.mrb[0].mxu0
      %954 = vmatprep.mubr.bf16.mxu0 0
      %955 = vmatmul.mubr.bf16.gmra.mrb[0].mxu0 %v828
      %v956 = vpop.f32.mrb[0].mxu0
      %v957 = vadd.f32 0.0, %v956
      %v958 = vpop.f32.mrb[0].mxu0
      %v959 = vpop.f32.mrb[0].mxu0
      %v960 = vadd.f32 0.0, %v959
      %v961 = vpop.f32.mrb[0].mxu0
      %962 = vmatprep.mubr.bf16.mxu0 0
      %963 = vmatmul.mubr.bf16.gmra.mrb[0].mxu0 %v829
      %v964 = vpop.f32.mrb[0].mxu0
      %v965 = vadd.f32 0.0, %v964
      %v966 = vpop.f32.mrb[0].mxu0
      %v967 = vpop.f32.mrb[0].mxu0
      %v968 = vadd.f32 0.0, %v967
      %v969 = vpop.f32.mrb[0].mxu0
      %970 = vmatprep.mubr.bf16.mxu0 0
      %971 = vmatmul.mubr.bf16.gmra.mrb[0].mxu0 %v830
      %v972 = vpop.f32.mrb[0].mxu0
      %v973 = vadd.f32 0.0, %v972
      %v974 = vpop.f32.mrb[0].mxu0
      %v975 = vpop.f32.mrb[0].mxu0
      %v976 = vadd.f32 0.0, %v975
      %v977 = vpop.f32.mrb[0].mxu0
      %978 = vmatprep.mubr.bf16.mxu0 0
      %979 = vmatmul.mubr.bf16.gmra.mrb[0].mxu0 %v831
      %v980 = vpop.f32.mrb[0].mxu0
      %v981 = vadd.f32 0.0, %v980
      %v982 = vpop.f32.mrb[0].mxu0
      %v983 = vpop.f32.mrb[0].mxu0
      %v984 = vadd.f32 0.0, %v983
      %v985 = vpop.f32.mrb[0].mxu0
      %986 = vmatprep.mubr.bf16.mxu0 0
      %987 = vmatmul.mubr.bf16.gmra.mrb[0].mxu0 %v832
      %v988 = vpop.f32.mrb[0].mxu0
      %v989 = vadd.f32 0.0, %v988
      %v990 = vpop.f32.mrb[0].mxu0
      %v991 = vpop.f32.mrb[0].mxu0
      %v992 = vadd.f32 0.0, %v991
      %v993 = vpop.f32.mrb[0].mxu0
      %994 = vmatprep.mubr.bf16.mxu0 0
      %995 = vmatmul.mubr.bf16.gmra.mrb[0].mxu0 %v833
      %v996 = vpop.f32.mrb[0].mxu0
      %v997 = vadd.f32 0.0, %v996
      %v998 = vpop.f32.mrb[0].mxu0
      %v999 = vpop.f32.mrb[0].mxu0
      %v1000 = vadd.f32 0.0, %v999
      %v1001 = vpop.f32.mrb[0].mxu0
      %1002 = vmatprep.mubr.bf16.mxu0 0
      %1003 = vmatmul.mubr.bf16.gmra.mrb[0].mxu0 %v834
      %v1004 = vpop.f32.mrb[0].mxu0
      %v1005 = vadd.f32 0.0, %v1004
      %v1006 = vpop.f32.mrb[0].mxu0
      %v1007 = vpop.f32.mrb[0].mxu0
      %v1008 = vadd.f32 0.0, %v1007
      %v1009 = vpop.f32.mrb[0].mxu0
      %1010 = vmatprep.mubr.bf16.mxu0 0
      %1011 = vmatmul.mubr.bf16.gmra.mrb[0].mxu0 %v835
      %v1012 = vpop.f32.mrb[0].mxu0
      %v1013 = vadd.f32 0.0, %v1012
      %v1014 = vpop.f32.mrb[0].mxu0
      %v1015 = vpop.f32.mrb[0].mxu0
      %v1016 = vadd.f32 0.0, %v1015
      %v1017 = vpop.f32.mrb[0].mxu0
      %1018 = vmatprep.mubr.bf16.mxu0 0
      %1019 = vmatmul.mubr.bf16.gmra.mrb[0].mxu0 %v836
      %v1020 = vpop.f32.mrb[0].mxu0
      %v1021 = vadd.f32 0.0, %v1020
      %v1022 = vpop.f32.mrb[0].mxu0
      %v1023 = vpop.f32.mrb[0].mxu0
      %v1024 = vadd.f32 0.0, %v1023
      %v1025 = vpop.f32.mrb[0].mxu0
      %1026 = vmatprep.mubr.bf16.mxu0 0
      %1027 = vmatmul.mubr.bf16.gmra.mrb[0].mxu0 %v837
      %v1028 = vpop.f32.mrb[0].mxu0
      %v1029 = vadd.f32 0.0, %v1028
      %v1030 = vpop.f32.mrb[0].mxu0
      %v1031 = vpop.f32.mrb[0].mxu0
      %v1032 = vadd.f32 0.0, %v1031
      %v1033 = vpop.f32.mrb[0].mxu0
      %1034 = vmatprep.mubr.bf16.mxu0 0
      %1035 = vmatmul.mubr.bf16.gmra.mrb[0].mxu0 %v838
      %v1036 = vpop.f32.mrb[0].mxu0
      %v1037 = vadd.f32 0.0, %v1036
      %v1038 = vpop.f32.mrb[0].mxu0
      %v1039 = vpop.f32.mrb[0].mxu0
      %v1040 = vadd.f32 0.0, %v1039
      %v1041 = vpop.f32.mrb[0].mxu0
      %1042 = vmatprep.mubr.bf16.mxu0 0
      %1043 = vmatmul.mubr.bf16.gmra.mrb[0].mxu0 %v839
      %v1044 = vpop.f32.mrb[0].mxu0
      %v1045 = vadd.f32 0.0, %v1044
      %v1046 = vpop.f32.mrb[0].mxu0
      %v1047 = vpop.f32.mrb[0].mxu0
      %v1048 = vadd.f32 0.0, %v1047
      %v1049 = vpop.f32.mrb[0].mxu0
      %1050 = vmatprep.mubr.bf16.mxu0 0
      %1051 = vmatmul.mubr.bf16.gmra.mrb[0].mxu0 %v840
      %v1052 = vpop.f32.mrb[0].mxu0
      %v1053 = vadd.f32 0.0, %v1052
      %v1054 = vpop.f32.mrb[0].mxu0
      %v1055 = vpop.f32.mrb[0].mxu0
      %v1056 = vadd.f32 0.0, %v1055
      %v1057 = vpop.f32.mrb[0].mxu0
      %1058 = vmatprep.mubr.bf16.mxu0 0
      %1059 = vmatmul.mubr.bf16.gmra.mrb[0].mxu0 %v841
      %v1060 = vpop.f32.mrb[0].mxu0
      %v1061 = vadd.f32 0.0, %v1060
      %v1062 = vpop.f32.mrb[0].mxu0
      %v1063 = vpop.f32.mrb[0].mxu0
      %v1064 = vadd.f32 0.0, %v1063
      %v1065 = vpop.f32.mrb[0].mxu0
      %1066 = vdwg.mxu0
      %v1099 = vunpack.c.l.b16 %v320
      %v1100 = vunpack.c.l.b16 %v321
      %v1101 = vunpack.c.l.b16 %v323
      %v1102 = vunpack.c.l.b16 %v324
      %v1103 = vunpack.c.l.b16 %v326
      %v1104 = vunpack.c.l.b16 %v327
      %v1105 = vunpack.c.l.b16 %v329
      %v1106 = vunpack.c.l.b16 %v330
      %v1107 = vunpack.c.l.b16 %v332
      %v1108 = vunpack.c.l.b16 %v333
      %v1109 = vunpack.c.l.b16 %v335
      %v1110 = vunpack.c.l.b16 %v336
      %v1111 = vunpack.c.l.b16 %v338
      %v1112 = vunpack.c.l.b16 %v339
      %v1113 = vunpack.c.l.b16 %v341
      %v1114 = vunpack.c.l.b16 %v342
      %v1115 = vunpack.c.l.b16 %v344
      %v1116 = vunpack.c.l.b16 %v345
      %v1117 = vunpack.c.l.b16 %v347
      %v1118 = vunpack.c.l.b16 %v348
      %v1119 = vunpack.c.l.b16 %v350
      %v1120 = vunpack.c.l.b16 %v351
      %v1121 = vunpack.c.l.b16 %v353
      %v1122 = vunpack.c.l.b16 %v354
      %v1123 = vunpack.c.l.b16 %v356
      %v1124 = vunpack.c.l.b16 %v357
      %v1125 = vunpack.c.l.b16 %v359
      %v1126 = vunpack.c.l.b16 %v360
      %v1127 = vunpack.c.l.b16 %v362
      %v1128 = vunpack.c.l.b16 %v363
      %v1129 = vunpack.c.l.b16 %v365
      %v1130 = vunpack.c.l.b16 %v366
      %v1131 = vpack.c.b16 %v1100, %v1099
      %v1132 = vpack.c.b16 %v1102, %v1101
      %v1133 = vpack.c.b16 %v1104, %v1103
      %v1134 = vpack.c.b16 %v1106, %v1105
      %v1135 = vpack.c.b16 %v1108, %v1107
      %v1136 = vpack.c.b16 %v1110, %v1109
      %v1137 = vpack.c.b16 %v1112, %v1111
      %v1138 = vpack.c.b16 %v1114, %v1113
      %v1139 = vpack.c.b16 %v1116, %v1115
      %v1140 = vpack.c.b16 %v1118, %v1117
      %v1141 = vpack.c.b16 %v1120, %v1119
      %v1142 = vpack.c.b16 %v1122, %v1121
      %v1143 = vpack.c.b16 %v1124, %v1123
      %v1144 = vpack.c.b16 %v1126, %v1125
      %v1145 = vpack.c.b16 %v1128, %v1127
      %v1146 = vpack.c.b16 %v1130, %v1129
      %v1179 = vunpack.c.l.b16 %v374
      %v1180 = vunpack.c.l.b16 %v375
      %v1181 = vunpack.c.l.b16 %v376
      %v1182 = vunpack.c.l.b16 %v377
      %v1183 = vunpack.c.l.b16 %v378
      %v1184 = vunpack.c.l.b16 %v379
      %v1185 = vunpack.c.l.b16 %v380
      %v1186 = vunpack.c.l.b16 %v381
      %v1187 = vunpack.c.l.b16 %v382
      %v1188 = vunpack.c.l.b16 %v383
      %v1189 = vunpack.c.l.b16 %v384
      %v1190 = vunpack.c.l.b16 %v385
      %v1191 = vunpack.c.l.b16 %v386
      %v1192 = vunpack.c.l.b16 %v387
      %v1193 = vunpack.c.l.b16 %v388
      %v1194 = vunpack.c.l.b16 %v389
      %v1195 = vpack.c.b16 %v1180, %v1179
      %v1196 = vpack.c.b16 %v1182, %v1181
      %v1197 = vpack.c.b16 %v1184, %v1183
      %v1198 = vpack.c.b16 %v1186, %v1185
      %v1199 = vpack.c.b16 %v1188, %v1187
      %v1200 = vpack.c.b16 %v1190, %v1189
      %v1201 = vpack.c.b16 %v1192, %v1191
      %v1202 = vpack.c.b16 %v1194, %v1193
      %1211 = vmatprep.subr.bf16.mxu0 0
      %1212 = vmatpush1.bf16.msra.mxu0 %v1195
      %1213 = vmatprep.subr.bf16.mxu0 0
      %1214 = vmatpush1.bf16.msra.mxu0 %v1196
      %1215 = vmatprep.subr.bf16.mxu0 0
      %1216 = vmatpush1.bf16.msra.mxu0 %v1197
      %1217 = vmatprep.subr.bf16.mxu0 0
      %1218 = vmatpush1.bf16.msra.mxu0 %v1198
      %1219 = vmatprep.subr.bf16.mxu0 0
      %1220 = vmatpush1.bf16.msra.mxu0 %v1199
      %1221 = vmatprep.subr.bf16.mxu0 0
      %1222 = vmatpush1.bf16.msra.mxu0 %v1200
      %1223 = vmatprep.subr.bf16.mxu0 0
      %1224 = vmatpush1.bf16.msra.mxu0 %v1201
      %1225 = vmatprep.subr.bf16.mxu0 0
      %1226 = vmatpush1.bf16.msra.mxu0 %v1202
      %1227 = vmatprep.subr.bf16.mxu0 0
      %1228 = vmatpush1.bf16.msra.mxu0 0
      %1229 = vmatprep.subr.bf16.mxu0 0
      %1230 = vmatpush1.bf16.msra.mxu0 0
      %1231 = vmatprep.subr.bf16.mxu0 0
      %1232 = vmatpush1.bf16.msra.mxu0 0
      %1233 = vmatprep.subr.bf16.mxu0 0
      %1234 = vmatpush1.bf16.msra.mxu0 0
      %1235 = vmatprep.subr.bf16.mxu0 0
      %1236 = vmatpush1.bf16.msra.mxu0 0
      %1237 = vmatprep.subr.bf16.mxu0 0
      %1238 = vmatpush1.bf16.msra.mxu0 0
      %1239 = vmatprep.subr.bf16.mxu0 0
      %1240 = vmatpush1.bf16.msra.mxu0 0
      %1241 = vmatprep.subr.bf16.mxu0 0
      %1242 = vmatpush1.bf16.msra.mxu0 0
      %1243 = vmatprep.mubr.bf16.mxu0 0
      %1244 = vmatmul.mubr.bf16.gmra.mrb[0].mxu0 %v1131
      %v1245 = vpop.f32.mrb[0].mxu0
      %v1246 = vadd.f32 %v941, %v1245
      %v1247 = vpop.f32.mrb[0].mxu0
      %v1248 = vpop.f32.mrb[0].mxu0
      %v1249 = vadd.f32 %v944, %v1248
      %v1250 = vpop.f32.mrb[0].mxu0
      %1251 = vmatprep.mubr.bf16.mxu0 0
      %1252 = vmatmul.mubr.bf16.gmra.mrb[0].mxu0 %v1132
      %v1253 = vpop.f32.mrb[0].mxu0
      %v1254 = vadd.f32 %v949, %v1253
      %v1255 = vpop.f32.mrb[0].mxu0
      %v1256 = vpop.f32.mrb[0].mxu0
      %v1257 = vadd.f32 %v952, %v1256
      %v1258 = vpop.f32.mrb[0].mxu0
      %1259 = vmatprep.mubr.bf16.mxu0 0
      %1260 = vmatmul.mubr.bf16.gmra.mrb[0].mxu0 %v1133
      %v1261 = vpop.f32.mrb[0].mxu0
      %v1262 = vadd.f32 %v957, %v1261
      %v1263 = vpop.f32.mrb[0].mxu0
      %v1264 = vpop.f32.mrb[0].mxu0
      %v1265 = vadd.f32 %v960, %v1264
      %v1266 = vpop.f32.mrb[0].mxu0
      %1267 = vmatprep.mubr.bf16.mxu0 0
      %1268 = vmatmul.mubr.bf16.gmra.mrb[0].mxu0 %v1134
      %v1269 = vpop.f32.mrb[0].mxu0
      %v1270 = vadd.f32 %v965, %v1269
      %v1271 = vpop.f32.mrb[0].mxu0
      %v1272 = vpop.f32.mrb[0].mxu0
      %v1273 = vadd.f32 %v968, %v1272
      %v1274 = vpop.f32.mrb[0].mxu0
      %1275 = vmatprep.mubr.bf16.mxu0 0
      %1276 = vmatmul.mubr.bf16.gmra.mrb[0].mxu0 %v1135
      %v1277 = vpop.f32.mrb[0].mxu0
      %v1278 = vadd.f32 %v973, %v1277
      %v1279 = vpop.f32.mrb[0].mxu0
      %v1280 = vpop.f32.mrb[0].mxu0
      %v1281 = vadd.f32 %v976, %v1280
      %v1282 = vpop.f32.mrb[0].mxu0
      %1283 = vmatprep.mubr.bf16.mxu0 0
      %1284 = vmatmul.mubr.bf16.gmra.mrb[0].mxu0 %v1136
      %v1285 = vpop.f32.mrb[0].mxu0
      %v1286 = vadd.f32 %v981, %v1285
      %v1287 = vpop.f32.mrb[0].mxu0
      %v1288 = vpop.f32.mrb[0].mxu0
      %v1289 = vadd.f32 %v984, %v1288
      %v1290 = vpop.f32.mrb[0].mxu0
      %1291 = vmatprep.mubr.bf16.mxu0 0
      %1292 = vmatmul.mubr.bf16.gmra.mrb[0].mxu0 %v1137
      %v1293 = vpop.f32.mrb[0].mxu0
      %v1294 = vadd.f32 %v989, %v1293
      %v1295 = vpop.f32.mrb[0].mxu0
      %v1296 = vpop.f32.mrb[0].mxu0
      %v1297 = vadd.f32 %v992, %v1296
      %v1298 = vpop.f32.mrb[0].mxu0
      %1299 = vmatprep.mubr.bf16.mxu0 0
      %1300 = vmatmul.mubr.bf16.gmra.mrb[0].mxu0 %v1138
      %v1301 = vpop.f32.mrb[0].mxu0
      %v1302 = vadd.f32 %v997, %v1301
      %v1303 = vpop.f32.mrb[0].mxu0
      %v1304 = vpop.f32.mrb[0].mxu0
      %v1305 = vadd.f32 %v1000, %v1304
      %v1306 = vpop.f32.mrb[0].mxu0
      %1307 = vmatprep.mubr.bf16.mxu0 0
      %1308 = vmatmul.mubr.bf16.gmra.mrb[0].mxu0 %v1139
      %v1309 = vpop.f32.mrb[0].mxu0
      %v1310 = vadd.f32 %v1005, %v1309
      %v1311 = vpop.f32.mrb[0].mxu0
      %v1312 = vpop.f32.mrb[0].mxu0
      %v1313 = vadd.f32 %v1008, %v1312
      %v1314 = vpop.f32.mrb[0].mxu0
      %1315 = vmatprep.mubr.bf16.mxu0 0
      %1316 = vmatmul.mubr.bf16.gmra.mrb[0].mxu0 %v1140
      %v1317 = vpop.f32.mrb[0].mxu0
      %v1318 = vadd.f32 %v1013, %v1317
      %v1319 = vpop.f32.mrb[0].mxu0
      %v1320 = vpop.f32.mrb[0].mxu0
      %v1321 = vadd.f32 %v1016, %v1320
      %v1322 = vpop.f32.mrb[0].mxu0
      %1323 = vmatprep.mubr.bf16.mxu0 0
      %1324 = vmatmul.mubr.bf16.gmra.mrb[0].mxu0 %v1141
      %v1325 = vpop.f32.mrb[0].mxu0
      %v1326 = vadd.f32 %v1021, %v1325
      %v1327 = vpop.f32.mrb[0].mxu0
      %v1328 = vpop.f32.mrb[0].mxu0
      %v1329 = vadd.f32 %v1024, %v1328
      %v1330 = vpop.f32.mrb[0].mxu0
      %1331 = vmatprep.mubr.bf16.mxu0 0
      %1332 = vmatmul.mubr.bf16.gmra.mrb[0].mxu0 %v1142
      %v1333 = vpop.f32.mrb[0].mxu0
      %v1334 = vadd.f32 %v1029, %v1333
      %v1335 = vpop.f32.mrb[0].mxu0
      %v1336 = vpop.f32.mrb[0].mxu0
      %v1337 = vadd.f32 %v1032, %v1336
      %v1338 = vpop.f32.mrb[0].mxu0
      %1339 = vmatprep.mubr.bf16.mxu0 0
      %1340 = vmatmul.mubr.bf16.gmra.mrb[0].mxu0 %v1143
      %v1341 = vpop.f32.mrb[0].mxu0
      %v1342 = vadd.f32 %v1037, %v1341
      %v1343 = vpop.f32.mrb[0].mxu0
      %v1344 = vpop.f32.mrb[0].mxu0
      %v1345 = vadd.f32 %v1040, %v1344
      %v1346 = vpop.f32.mrb[0].mxu0
      %1347 = vmatprep.mubr.bf16.mxu0 0
      %1348 = vmatmul.mubr.bf16.gmra.mrb[0].mxu0 %v1144
      %v1349 = vpop.f32.mrb[0].mxu0
      %v1350 = vadd.f32 %v1045, %v1349
      %v1351 = vpop.f32.mrb[0].mxu0
      %v1352 = vpop.f32.mrb[0].mxu0
      %v1353 = vadd.f32 %v1048, %v1352
      %v1354 = vpop.f32.mrb[0].mxu0
      %1355 = vmatprep.mubr.bf16.mxu0 0
      %1356 = vmatmul.mubr.bf16.gmra.mrb[0].mxu0 %v1145
      %v1357 = vpop.f32.mrb[0].mxu0
      %v1358 = vadd.f32 %v1053, %v1357
      %v1359 = vpop.f32.mrb[0].mxu0
      %v1360 = vpop.f32.mrb[0].mxu0
      %v1361 = vadd.f32 %v1056, %v1360
      %v1362 = vpop.f32.mrb[0].mxu0
      %1363 = vmatprep.mubr.bf16.mxu0 0
      %1364 = vmatmul.mubr.bf16.gmra.mrb[0].mxu0 %v1146
      %v1365 = vpop.f32.mrb[0].mxu0
      %v1366 = vadd.f32 %v1061, %v1365
      %v1367 = vpop.f32.mrb[0].mxu0
      %v1368 = vpop.f32.mrb[0].mxu0
      %v1369 = vadd.f32 %v1064, %v1368
      %v1370 = vpop.f32.mrb[0].mxu0
      %1371 = vdwg.mxu0
      %vm1388 = vcmask 1042432
      %vm1389 = vcmask 1046532
      %vm1390 = vmor %vm1388, %vm1389
      %v1391 = vrot.slane %v320, 5
      %v1392 = vrot.slane %v1391, 4
      %v1393 = vrot.slane %v321, 5
      %v1394 = vsel %vm1390, %v1392, %v1393
      %v1395 = vrot.slane %v1393, 4
      %v1396 = vrot.slane %v322, 5
      %v1397 = vsel %vm1390, %v1395, %v1396
      %v1398 = vrot.slane %v323, 5
      %v1399 = vrot.slane %v1398, 4
      %v1400 = vrot.slane %v324, 5
      %v1401 = vsel %vm1390, %v1399, %v1400
      %v1402 = vrot.slane %v1400, 4
      %v1403 = vrot.slane %v325, 5
      %v1404 = vsel %vm1390, %v1402, %v1403
      %v1405 = vrot.slane %v326, 5
      %v1406 = vrot.slane %v1405, 4
      %v1407 = vrot.slane %v327, 5
      %v1408 = vsel %vm1390, %v1406, %v1407
      %v1409 = vrot.slane %v1407, 4
      %v1410 = vrot.slane %v328, 5
      %v1411 = vsel %vm1390, %v1409, %v1410
      %v1412 = vrot.slane %v329, 5
      %v1413 = vrot.slane %v1412, 4
      %v1414 = vrot.slane %v330, 5
      %v1415 = vsel %vm1390, %v1413, %v1414
      %v1416 = vrot.slane %v1414, 4
      %v1417 = vrot.slane %v331, 5
      %v1418 = vsel %vm1390, %v1416, %v1417
      %v1419 = vrot.slane %v332, 5
      %v1420 = vrot.slane %v1419, 4
      %v1421 = vrot.slane %v333, 5
      %v1422 = vsel %vm1390, %v1420, %v1421
      %v1423 = vrot.slane %v1421, 4
      %v1424 = vrot.slane %v334, 5
      %v1425 = vsel %vm1390, %v1423, %v1424
      %v1426 = vrot.slane %v335, 5
      %v1427 = vrot.slane %v1426, 4
      %v1428 = vrot.slane %v336, 5
      %v1429 = vsel %vm1390, %v1427, %v1428
      %v1430 = vrot.slane %v1428, 4
      %v1431 = vrot.slane %v337, 5
      %v1432 = vsel %vm1390, %v1430, %v1431
      %v1433 = vrot.slane %v338, 5
      %v1434 = vrot.slane %v1433, 4
      %v1435 = vrot.slane %v339, 5
      %v1436 = vsel %vm1390, %v1434, %v1435
      %v1437 = vrot.slane %v1435, 4
      %v1438 = vrot.slane %v340, 5
      %v1439 = vsel %vm1390, %v1437, %v1438
      %v1440 = vrot.slane %v341, 5
      %v1441 = vrot.slane %v1440, 4
      %v1442 = vrot.slane %v342, 5
      %v1443 = vsel %vm1390, %v1441, %v1442
      %v1444 = vrot.slane %v1442, 4
      %v1445 = vrot.slane %v343, 5
      %v1446 = vsel %vm1390, %v1444, %v1445
      %v1447 = vrot.slane %v344, 5
      %v1448 = vrot.slane %v1447, 4
      %v1449 = vrot.slane %v345, 5
      %v1450 = vsel %vm1390, %v1448, %v1449
      %v1451 = vrot.slane %v1449, 4
      %v1452 = vrot.slane %v346, 5
      %v1453 = vsel %vm1390, %v1451, %v1452
      %v1454 = vrot.slane %v347, 5
      %v1455 = vrot.slane %v1454, 4
      %v1456 = vrot.slane %v348, 5
      %v1457 = vsel %vm1390, %v1455, %v1456
      %v1458 = vrot.slane %v1456, 4
      %v1459 = vrot.slane %v349, 5
      %v1460 = vsel %vm1390, %v1458, %v1459
      %v1461 = vrot.slane %v350, 5
      %v1462 = vrot.slane %v1461, 4
      %v1463 = vrot.slane %v351, 5
      %v1464 = vsel %vm1390, %v1462, %v1463
      %v1465 = vrot.slane %v1463, 4
      %v1466 = vrot.slane %v352, 5
      %v1467 = vsel %vm1390, %v1465, %v1466
      %v1468 = vrot.slane %v353, 5
      %v1469 = vrot.slane %v1468, 4
      %v1470 = vrot.slane %v354, 5
      %v1471 = vsel %vm1390, %v1469, %v1470
      %v1472 = vrot.slane %v1470, 4
      %v1473 = vrot.slane %v355, 5
      %v1474 = vsel %vm1390, %v1472, %v1473
      %v1475 = vrot.slane %v356, 5
      %v1476 = vrot.slane %v1475, 4
      %v1477 = vrot.slane %v357, 5
      %v1478 = vsel %vm1390, %v1476, %v1477
      %v1479 = vrot.slane %v1477, 4
      %v1480 = vrot.slane %v358, 5
      %v1481 = vsel %vm1390, %v1479, %v1480
      %v1482 = vrot.slane %v359, 5
      %v1483 = vrot.slane %v1482, 4
      %v1484 = vrot.slane %v360, 5
      %v1485 = vsel %vm1390, %v1483, %v1484
      %v1486 = vrot.slane %v1484, 4
      %v1487 = vrot.slane %v361, 5
      %v1488 = vsel %vm1390, %v1486, %v1487
      %v1489 = vrot.slane %v362, 5
      %v1490 = vrot.slane %v1489, 4
      %v1491 = vrot.slane %v363, 5
      %v1492 = vsel %vm1390, %v1490, %v1491
      %v1493 = vrot.slane %v1491, 4
      %v1494 = vrot.slane %v364, 5
      %v1495 = vsel %vm1390, %v1493, %v1494
      %v1496 = vrot.slane %v365, 5
      %v1497 = vrot.slane %v1496, 4
      %v1498 = vrot.slane %v366, 5
      %v1499 = vsel %vm1390, %v1497, %v1498
      %v1500 = vrot.slane %v1498, 4
      %v1501 = vrot.slane %v367, 5
      %v1502 = vsel %vm1390, %v1500, %v1501
      %s1503 = scalar_lea.vmem %s1, 128
      %v1504 = vld [vmem:[%s1503] sm:$0xf]
      %v1505 = vld [vmem:[%s1503 + $0x4] sm:$0xf]
      %v1506 = vld [vmem:[%s1503 + $0x8] sm:$0xf]
      %v1507 = vld [vmem:[%s1503 + $0xc] sm:$0xf]
      %v1508 = vld [vmem:[%s1503 + $0x10] sm:$0xf]
      %v1509 = vld [vmem:[%s1503 + $0x14] sm:$0xf]
      %v1510 = vld [vmem:[%s1503 + $0x18] sm:$0xf]
      %v1511 = vld [vmem:[%s1503 + $0x1c] sm:$0xf]
      %v1512 = vld [vmem:[%s1503 + $0x20] sm:$0xf]
      %v1513 = vld [vmem:[%s1503 + $0x24] sm:$0xf]
      %v1514 = vld [vmem:[%s1503 + $0x28] sm:$0xf]
      %v1515 = vld [vmem:[%s1503 + $0x2c] sm:$0xf]
      %v1516 = vld [vmem:[%s1503 + $0x30] sm:$0xf]
      %v1517 = vld [vmem:[%s1503 + $0x34] sm:$0xf]
      %v1518 = vld [vmem:[%s1503 + $0x38] sm:$0xf]
      %v1519 = vld [vmem:[%s1503 + $0x3c] sm:$0xf]
      %v1520 = vunpack.c.l.b16 %v1394
      %v1521 = vunpack.c.l.b16 %v1397
      %v1522 = vunpack.c.l.b16 %v1401
      %v1523 = vunpack.c.l.b16 %v1404
      %v1524 = vunpack.c.l.b16 %v1408
      %v1525 = vunpack.c.l.b16 %v1411
      %v1526 = vunpack.c.l.b16 %v1415
      %v1527 = vunpack.c.l.b16 %v1418
      %v1528 = vunpack.c.l.b16 %v1422
      %v1529 = vunpack.c.l.b16 %v1425
      %v1530 = vunpack.c.l.b16 %v1429
      %v1531 = vunpack.c.l.b16 %v1432
      %v1532 = vunpack.c.l.b16 %v1436
      %v1533 = vunpack.c.l.b16 %v1439
      %v1534 = vunpack.c.l.b16 %v1443
      %v1535 = vunpack.c.l.b16 %v1446
      %v1536 = vunpack.c.l.b16 %v1450
      %v1537 = vunpack.c.l.b16 %v1453
      %v1538 = vunpack.c.l.b16 %v1457
      %v1539 = vunpack.c.l.b16 %v1460
      %v1540 = vunpack.c.l.b16 %v1464
      %v1541 = vunpack.c.l.b16 %v1467
      %v1542 = vunpack.c.l.b16 %v1471
      %v1543 = vunpack.c.l.b16 %v1474
      %v1544 = vunpack.c.l.b16 %v1478
      %v1545 = vunpack.c.l.b16 %v1481
      %v1546 = vunpack.c.l.b16 %v1485
      %v1547 = vunpack.c.l.b16 %v1488
      %v1548 = vunpack.c.l.b16 %v1492
      %v1549 = vunpack.c.l.b16 %v1495
      %v1550 = vunpack.c.l.b16 %v1499
      %v1551 = vunpack.c.l.b16 %v1502
      %v1552 = vpack.c.b16 %v1521, %v1520
      %v1553 = vpack.c.b16 %v1523, %v1522
      %v1554 = vpack.c.b16 %v1525, %v1524
      %v1555 = vpack.c.b16 %v1527, %v1526
      %v1556 = vpack.c.b16 %v1529, %v1528
      %v1557 = vpack.c.b16 %v1531, %v1530
      %v1558 = vpack.c.b16 %v1533, %v1532
      %v1559 = vpack.c.b16 %v1535, %v1534
      %v1560 = vpack.c.b16 %v1537, %v1536
      %v1561 = vpack.c.b16 %v1539, %v1538
      %v1562 = vpack.c.b16 %v1541, %v1540
      %v1563 = vpack.c.b16 %v1543, %v1542
      %v1564 = vpack.c.b16 %v1545, %v1544
      %v1565 = vpack.c.b16 %v1547, %v1546
      %v1566 = vpack.c.b16 %v1549, %v1548
      %v1567 = vpack.c.b16 %v1551, %v1550
      %v1600 = vunpack.c.l.b16 %v1504
      %v1601 = vunpack.c.l.b16 %v1505
      %v1602 = vunpack.c.l.b16 %v1506
      %v1603 = vunpack.c.l.b16 %v1507
      %v1604 = vunpack.c.l.b16 %v1508
      %v1605 = vunpack.c.l.b16 %v1509
      %v1606 = vunpack.c.l.b16 %v1510
      %v1607 = vunpack.c.l.b16 %v1511
      %v1608 = vunpack.c.l.b16 %v1512
      %v1609 = vunpack.c.l.b16 %v1513
      %v1610 = vunpack.c.l.b16 %v1514
      %v1611 = vunpack.c.l.b16 %v1515
      %v1612 = vunpack.c.l.b16 %v1516
      %v1613 = vunpack.c.l.b16 %v1517
      %v1614 = vunpack.c.l.b16 %v1518
      %v1615 = vunpack.c.l.b16 %v1519
      %v1616 = vpack.c.b16 %v1601, %v1600
      %v1617 = vpack.c.b16 %v1603, %v1602
      %v1618 = vpack.c.b16 %v1605, %v1604
      %v1619 = vpack.c.b16 %v1607, %v1606
      %v1620 = vpack.c.b16 %v1609, %v1608
      %v1621 = vpack.c.b16 %v1611, %v1610
      %v1622 = vpack.c.b16 %v1613, %v1612
      %v1623 = vpack.c.b16 %v1615, %v1614
      %1632 = vmatprep.subr.bf16.mxu0 0
      %1633 = vmatpush1.bf16.msra.mxu0 %v1616
      %1634 = vmatprep.subr.bf16.mxu0 0
      %1635 = vmatpush1.bf16.msra.mxu0 %v1617
      %1636 = vmatprep.subr.bf16.mxu0 0
      %1637 = vmatpush1.bf16.msra.mxu0 %v1618
      %1638 = vmatprep.subr.bf16.mxu0 0
      %1639 = vmatpush1.bf16.msra.mxu0 %v1619
      %1640 = vmatprep.subr.bf16.mxu0 0
      %1641 = vmatpush1.bf16.msra.mxu0 %v1620
      %1642 = vmatprep.subr.bf16.mxu0 0
      %1643 = vmatpush1.bf16.msra.mxu0 %v1621
      %1644 = vmatprep.subr.bf16.mxu0 0
      %1645 = vmatpush1.bf16.msra.mxu0 %v1622
      %1646 = vmatprep.subr.bf16.mxu0 0
      %1647 = vmatpush1.bf16.msra.mxu0 %v1623
      %1648 = vmatprep.subr.bf16.mxu0 0
      %1649 = vmatpush1.bf16.msra.mxu0 0
      %1650 = vmatprep.subr.bf16.mxu0 0
      %1651 = vmatpush1.bf16.msra.mxu0 0
      %1652 = vmatprep.subr.bf16.mxu0 0
      %1653 = vmatpush1.bf16.msra.mxu0 0
      %1654 = vmatprep.subr.bf16.mxu0 0
      %1655 = vmatpush1.bf16.msra.mxu0 0
      %1656 = vmatprep.subr.bf16.mxu0 0
      %1657 = vmatpush1.bf16.msra.mxu0 0
      %1658 = vmatprep.subr.bf16.mxu0 0
      %1659 = vmatpush1.bf16.msra.mxu0 0
      %1660 = vmatprep.subr.bf16.mxu0 0
      %1661 = vmatpush1.bf16.msra.mxu0 0
      %1662 = vmatprep.subr.bf16.mxu0 0
      %1663 = vmatpush1.bf16.msra.mxu0 0
      %1664 = vmatprep.mubr.bf16.mxu0 0
      %1665 = vmatmul.mubr.bf16.gmra.mrb[0].mxu0 %v1552
      %v1666 = vpop.f32.mrb[0].mxu0
      %v1667 = vadd.f32 0.0, %v1666
      %v1668 = vpop.f32.mrb[0].mxu0
      %v1669 = vpop.f32.mrb[0].mxu0
      %v1670 = vadd.f32 0.0, %v1669
      %v1671 = vpop.f32.mrb[0].mxu0
      %1672 = vmatprep.mubr.bf16.mxu0 0
      %1673 = vmatmul.mubr.bf16.gmra.mrb[0].mxu0 %v1553
      %v1674 = vpop.f32.mrb[0].mxu0
      %v1675 = vadd.f32 0.0, %v1674
      %v1676 = vpop.f32.mrb[0].mxu0
      %v1677 = vpop.f32.mrb[0].mxu0
      %v1678 = vadd.f32 0.0, %v1677
      %v1679 = vpop.f32.mrb[0].mxu0
      %1680 = vmatprep.mubr.bf16.mxu0 0
      %1681 = vmatmul.mubr.bf16.gmra.mrb[0].mxu0 %v1554
      %v1682 = vpop.f32.mrb[0].mxu0
      %v1683 = vadd.f32 0.0, %v1682
      %v1684 = vpop.f32.mrb[0].mxu0
      %v1685 = vpop.f32.mrb[0].mxu0
      %v1686 = vadd.f32 0.0, %v1685
      %v1687 = vpop.f32.mrb[0].mxu0
      %1688 = vmatprep.mubr.bf16.mxu0 0
      %1689 = vmatmul.mubr.bf16.gmra.mrb[0].mxu0 %v1555
      %v1690 = vpop.f32.mrb[0].mxu0
      %v1691 = vadd.f32 0.0, %v1690
      %v1692 = vpop.f32.mrb[0].mxu0
      %v1693 = vpop.f32.mrb[0].mxu0
      %v1694 = vadd.f32 0.0, %v1693
      %v1695 = vpop.f32.mrb[0].mxu0
      %1696 = vmatprep.mubr.bf16.mxu0 0
      %1697 = vmatmul.mubr.bf16.gmra.mrb[0].mxu0 %v1556
      %v1698 = vpop.f32.mrb[0].mxu0
      %v1699 = vadd.f32 0.0, %v1698
      %v1700 = vpop.f32.mrb[0].mxu0
      %v1701 = vpop.f32.mrb[0].mxu0
      %v1702 = vadd.f32 0.0, %v1701
      %v1703 = vpop.f32.mrb[0].mxu0
      %1704 = vmatprep.mubr.bf16.mxu0 0
      %1705 = vmatmul.mubr.bf16.gmra.mrb[0].mxu0 %v1557
      %v1706 = vpop.f32.mrb[0].mxu0
      %v1707 = vadd.f32 0.0, %v1706
      %v1708 = vpop.f32.mrb[0].mxu0
      %v1709 = vpop.f32.mrb[0].mxu0
      %v1710 = vadd.f32 0.0, %v1709
      %v1711 = vpop.f32.mrb[0].mxu0
      %1712 = vmatprep.mubr.bf16.mxu0 0
      %1713 = vmatmul.mubr.bf16.gmra.mrb[0].mxu0 %v1558
      %v1714 = vpop.f32.mrb[0].mxu0
      %v1715 = vadd.f32 0.0, %v1714
      %v1716 = vpop.f32.mrb[0].mxu0
      %v1717 = vpop.f32.mrb[0].mxu0
      %v1718 = vadd.f32 0.0, %v1717
      %v1719 = vpop.f32.mrb[0].mxu0
      %1720 = vmatprep.mubr.bf16.mxu0 0
      %1721 = vmatmul.mubr.bf16.gmra.mrb[0].mxu0 %v1559
      %v1722 = vpop.f32.mrb[0].mxu0
      %v1723 = vadd.f32 0.0, %v1722
      %v1724 = vpop.f32.mrb[0].mxu0
      %v1725 = vpop.f32.mrb[0].mxu0
      %v1726 = vadd.f32 0.0, %v1725
      %v1727 = vpop.f32.mrb[0].mxu0
      %1728 = vmatprep.mubr.bf16.mxu0 0
      %1729 = vmatmul.mubr.bf16.gmra.mrb[0].mxu0 %v1560
      %v1730 = vpop.f32.mrb[0].mxu0
      %v1731 = vadd.f32 0.0, %v1730
      %v1732 = vpop.f32.mrb[0].mxu0
      %v1733 = vpop.f32.mrb[0].mxu0
      %v1734 = vadd.f32 0.0, %v1733
      %v1735 = vpop.f32.mrb[0].mxu0
      %1736 = vmatprep.mubr.bf16.mxu0 0
      %1737 = vmatmul.mubr.bf16.gmra.mrb[0].mxu0 %v1561
      %v1738 = vpop.f32.mrb[0].mxu0
      %v1739 = vadd.f32 0.0, %v1738
      %v1740 = vpop.f32.mrb[0].mxu0
      %v1741 = vpop.f32.mrb[0].mxu0
      %v1742 = vadd.f32 0.0, %v1741
      %v1743 = vpop.f32.mrb[0].mxu0
      %1744 = vmatprep.mubr.bf16.mxu0 0
      %1745 = vmatmul.mubr.bf16.gmra.mrb[0].mxu0 %v1562
      %v1746 = vpop.f32.mrb[0].mxu0
      %v1747 = vadd.f32 0.0, %v1746
      %v1748 = vpop.f32.mrb[0].mxu0
      %v1749 = vpop.f32.mrb[0].mxu0
      %v1750 = vadd.f32 0.0, %v1749
      %v1751 = vpop.f32.mrb[0].mxu0
      %1752 = vmatprep.mubr.bf16.mxu0 0
      %1753 = vmatmul.mubr.bf16.gmra.mrb[0].mxu0 %v1563
      %v1754 = vpop.f32.mrb[0].mxu0
      %v1755 = vadd.f32 0.0, %v1754
      %v1756 = vpop.f32.mrb[0].mxu0
      %v1757 = vpop.f32.mrb[0].mxu0
      %v1758 = vadd.f32 0.0, %v1757
      %v1759 = vpop.f32.mrb[0].mxu0
      %1760 = vmatprep.mubr.bf16.mxu0 0
      %1761 = vmatmul.mubr.bf16.gmra.mrb[0].mxu0 %v1564
      %v1762 = vpop.f32.mrb[0].mxu0
      %v1763 = vadd.f32 0.0, %v1762
      %v1764 = vpop.f32.mrb[0].mxu0
      %v1765 = vpop.f32.mrb[0].mxu0
      %v1766 = vadd.f32 0.0, %v1765
      %v1767 = vpop.f32.mrb[0].mxu0
      %1768 = vmatprep.mubr.bf16.mxu0 0
      %1769 = vmatmul.mubr.bf16.gmra.mrb[0].mxu0 %v1565
      %v1770 = vpop.f32.mrb[0].mxu0
      %v1771 = vadd.f32 0.0, %v1770
      %v1772 = vpop.f32.mrb[0].mxu0
      %v1773 = vpop.f32.mrb[0].mxu0
      %v1774 = vadd.f32 0.0, %v1773
      %v1775 = vpop.f32.mrb[0].mxu0
      %1776 = vmatprep.mubr.bf16.mxu0 0
      %1777 = vmatmul.mubr.bf16.gmra.mrb[0].mxu0 %v1566
      %v1778 = vpop.f32.mrb[0].mxu0
      %v1779 = vadd.f32 0.0, %v1778
      %v1780 = vpop.f32.mrb[0].mxu0
      %v1781 = vpop.f32.mrb[0].mxu0
      %v1782 = vadd.f32 0.0, %v1781
      %v1783 = vpop.f32.mrb[0].mxu0
      %1784 = vmatprep.mubr.bf16.mxu0 0
      %1785 = vmatmul.mubr.bf16.gmra.mrb[0].mxu0 %v1567
      %v1786 = vpop.f32.mrb[0].mxu0
      %v1787 = vadd.f32 0.0, %v1786
      %v1788 = vpop.f32.mrb[0].mxu0
      %v1789 = vpop.f32.mrb[0].mxu0
      %v1790 = vadd.f32 0.0, %v1789
      %v1791 = vpop.f32.mrb[0].mxu0
      %1792 = vdwg.mxu0
      %v1793 = vadd.f32 %v1246, %v1667
      %v1794 = vadd.f32 %v1249, %v1670
      %v1795 = vadd.f32 %v1254, %v1675
      %v1796 = vadd.f32 %v1257, %v1678
      %v1797 = vadd.f32 %v1262, %v1683
      %v1798 = vadd.f32 %v1265, %v1686
      %v1799 = vadd.f32 %v1270, %v1691
      %v1800 = vadd.f32 %v1273, %v1694
      %v1801 = vadd.f32 %v1278, %v1699
      %v1802 = vadd.f32 %v1281, %v1702
      %v1803 = vadd.f32 %v1286, %v1707
      %v1804 = vadd.f32 %v1289, %v1710
      %v1805 = vadd.f32 %v1294, %v1715
      %v1806 = vadd.f32 %v1297, %v1718
      %v1807 = vadd.f32 %v1302, %v1723
      %v1808 = vadd.f32 %v1305, %v1726
      %v1809 = vadd.f32 %v1310, %v1731
      %v1810 = vadd.f32 %v1313, %v1734
      %v1811 = vadd.f32 %v1318, %v1739
      %v1812 = vadd.f32 %v1321, %v1742
      %v1813 = vadd.f32 %v1326, %v1747
      %v1814 = vadd.f32 %v1329, %v1750
      %v1815 = vadd.f32 %v1334, %v1755
      %v1816 = vadd.f32 %v1337, %v1758
      %v1817 = vadd.f32 %v1342, %v1763
      %v1818 = vadd.f32 %v1345, %v1766
      %v1819 = vadd.f32 %v1350, %v1771
      %v1820 = vadd.f32 %v1353, %v1774
      %v1821 = vadd.f32 %v1358, %v1779
      %v1822 = vadd.f32 %v1361, %v1782
      %v1823 = vadd.f32 %v1366, %v1787
      %v1824 = vadd.f32 %v1369, %v1790
      %s1825 = scalar_lea.vmem %s1, 192
      %v1826 = vld [vmem:[%s1825] sm:$0xf]
      %v1827 = vld [vmem:[%s1825 + $0x4] sm:$0xf]
      %v1828 = vld [vmem:[%s1825 + $0x8] sm:$0xf]
      %v1829 = vld [vmem:[%s1825 + $0xc] sm:$0xf]
      %v1830 = vld [vmem:[%s1825 + $0x10] sm:$0xf]
      %v1831 = vld [vmem:[%s1825 + $0x14] sm:$0xf]
      %v1832 = vld [vmem:[%s1825 + $0x18] sm:$0xf]
      %v1833 = vld [vmem:[%s1825 + $0x1c] sm:$0xf]
      %v1834 = vld [vmem:[%s1825 + $0x20] sm:$0xf]
      %v1835 = vld [vmem:[%s1825 + $0x24] sm:$0xf]
      %v1836 = vld [vmem:[%s1825 + $0x28] sm:$0xf]
      %v1837 = vld [vmem:[%s1825 + $0x2c] sm:$0xf]
      %v1838 = vld [vmem:[%s1825 + $0x30] sm:$0xf]
      %v1839 = vld [vmem:[%s1825 + $0x34] sm:$0xf]
      %v1840 = vld [vmem:[%s1825 + $0x38] sm:$0xf]
      %v1841 = vld [vmem:[%s1825 + $0x3c] sm:$0xf]
      %v1844 = vunpack.c.l.b16 %v368
      %v1845 = vunpack.c.l.b16 %v369
      %v1846 = vpack.c.b16 %v1845, %v1844
      %v1864 = vunpack.c.l.b16 %v1826
      %v1865 = vunpack.c.l.b16 %v1827
      %v1866 = vunpack.c.l.b16 %v1828
      %v1867 = vunpack.c.l.b16 %v1829
      %v1868 = vunpack.c.l.b16 %v1830
      %v1869 = vunpack.c.l.b16 %v1831
      %v1870 = vunpack.c.l.b16 %v1832
      %v1871 = vunpack.c.l.b16 %v1833
      %v1872 = vunpack.c.l.b16 %v1834
      %v1873 = vunpack.c.l.b16 %v1835
      %v1874 = vunpack.c.l.b16 %v1836
      %v1875 = vunpack.c.l.b16 %v1837
      %v1876 = vunpack.c.l.b16 %v1838
      %v1877 = vunpack.c.l.b16 %v1839
      %v1878 = vunpack.c.l.b16 %v1840
      %v1879 = vunpack.c.l.b16 %v1841
      %v1880 = vpack.c.b16 %v1865, %v1864
      %v1881 = vpack.c.b16 %v1867, %v1866
      %v1882 = vpack.c.b16 %v1869, %v1868
      %v1883 = vpack.c.b16 %v1871, %v1870
      %v1884 = vpack.c.b16 %v1873, %v1872
      %v1885 = vpack.c.b16 %v1875, %v1874
      %v1886 = vpack.c.b16 %v1877, %v1876
      %v1887 = vpack.c.b16 %v1879, %v1878
      %1896 = vmatprep.subr.bf16.mxu0 0
      %1897 = vmatpush1.bf16.msra.mxu0 %v1880
      %1898 = vmatprep.subr.bf16.mxu0 0
      %1899 = vmatpush1.bf16.msra.mxu0 %v1881
      %1900 = vmatprep.subr.bf16.mxu0 0
      %1901 = vmatpush1.bf16.msra.mxu0 %v1882
      %1902 = vmatprep.subr.bf16.mxu0 0
      %1903 = vmatpush1.bf16.msra.mxu0 %v1883
      %1904 = vmatprep.subr.bf16.mxu0 0
      %1905 = vmatpush1.bf16.msra.mxu0 %v1884
      %1906 = vmatprep.subr.bf16.mxu0 0
      %1907 = vmatpush1.bf16.msra.mxu0 %v1885
      %1908 = vmatprep.subr.bf16.mxu0 0
      %1909 = vmatpush1.bf16.msra.mxu0 %v1886
      %1910 = vmatprep.subr.bf16.mxu0 0
      %1911 = vmatpush1.bf16.msra.mxu0 %v1887
      %1912 = vmatprep.subr.bf16.mxu0 0
      %1913 = vmatpush1.bf16.msra.mxu0 0
      %1914 = vmatprep.subr.bf16.mxu0 0
      %1915 = vmatpush1.bf16.msra.mxu0 0
      %1916 = vmatprep.subr.bf16.mxu0 0
      %1917 = vmatpush1.bf16.msra.mxu0 0
      %1918 = vmatprep.subr.bf16.mxu0 0
      %1919 = vmatpush1.bf16.msra.mxu0 0
      %1920 = vmatprep.subr.bf16.mxu0 0
      %1921 = vmatpush1.bf16.msra.mxu0 0
      %1922 = vmatprep.subr.bf16.mxu0 0
      %1923 = vmatpush1.bf16.msra.mxu0 0
      %1924 = vmatprep.subr.bf16.mxu0 0
      %1925 = vmatpush1.bf16.msra.mxu0 0
      %1926 = vmatprep.subr.bf16.mxu0 0
      %1927 = vmatpush1.bf16.msra.mxu0 0
      %1928 = vmatprep.mubr.bf16.mxu0 0
      %1929 = vmatmul.mubr.bf16.gmra.mrb[0].mxu0 %v1132
      %v1930 = vpop.f32.mrb[0].mxu0
      %v1931 = vadd.f32 0.0, %v1930
      %v1932 = vpop.f32.mrb[0].mxu0
      %v1933 = vpop.f32.mrb[0].mxu0
      %v1934 = vadd.f32 0.0, %v1933
      %v1935 = vpop.f32.mrb[0].mxu0
      %1936 = vmatprep.mubr.bf16.mxu0 0
      %1937 = vmatmul.mubr.bf16.gmra.mrb[0].mxu0 %v1133
      %v1938 = vpop.f32.mrb[0].mxu0
      %v1939 = vadd.f32 0.0, %v1938
      %v1940 = vpop.f32.mrb[0].mxu0
      %v1941 = vpop.f32.mrb[0].mxu0
      %v1942 = vadd.f32 0.0, %v1941
      %v1943 = vpop.f32.mrb[0].mxu0
      %1944 = vmatprep.mubr.bf16.mxu0 0
      %1945 = vmatmul.mubr.bf16.gmra.mrb[0].mxu0 %v1134
      %v1946 = vpop.f32.mrb[0].mxu0
      %v1947 = vadd.f32 0.0, %v1946
      %v1948 = vpop.f32.mrb[0].mxu0
      %v1949 = vpop.f32.mrb[0].mxu0
      %v1950 = vadd.f32 0.0, %v1949
      %v1951 = vpop.f32.mrb[0].mxu0
      %1952 = vmatprep.mubr.bf16.mxu0 0
      %1953 = vmatmul.mubr.bf16.gmra.mrb[0].mxu0 %v1135
      %v1954 = vpop.f32.mrb[0].mxu0
      %v1955 = vadd.f32 0.0, %v1954
      %v1956 = vpop.f32.mrb[0].mxu0
      %v1957 = vpop.f32.mrb[0].mxu0
      %v1958 = vadd.f32 0.0, %v1957
      %v1959 = vpop.f32.mrb[0].mxu0
      %1960 = vmatprep.mubr.bf16.mxu0 0
      %1961 = vmatmul.mubr.bf16.gmra.mrb[0].mxu0 %v1136
      %v1962 = vpop.f32.mrb[0].mxu0
      %v1963 = vadd.f32 0.0, %v1962
      %v1964 = vpop.f32.mrb[0].mxu0
      %v1965 = vpop.f32.mrb[0].mxu0
      %v1966 = vadd.f32 0.0, %v1965
      %v1967 = vpop.f32.mrb[0].mxu0
      %1968 = vmatprep.mubr.bf16.mxu0 0
      %1969 = vmatmul.mubr.bf16.gmra.mrb[0].mxu0 %v1137
      %v1970 = vpop.f32.mrb[0].mxu0
      %v1971 = vadd.f32 0.0, %v1970
      %v1972 = vpop.f32.mrb[0].mxu0
      %v1973 = vpop.f32.mrb[0].mxu0
      %v1974 = vadd.f32 0.0, %v1973
      %v1975 = vpop.f32.mrb[0].mxu0
      %1976 = vmatprep.mubr.bf16.mxu0 0
      %1977 = vmatmul.mubr.bf16.gmra.mrb[0].mxu0 %v1138
      %v1978 = vpop.f32.mrb[0].mxu0
      %v1979 = vadd.f32 0.0, %v1978
      %v1980 = vpop.f32.mrb[0].mxu0
      %v1981 = vpop.f32.mrb[0].mxu0
      %v1982 = vadd.f32 0.0, %v1981
      %v1983 = vpop.f32.mrb[0].mxu0
      %1984 = vmatprep.mubr.bf16.mxu0 0
      %1985 = vmatmul.mubr.bf16.gmra.mrb[0].mxu0 %v1139
      %v1986 = vpop.f32.mrb[0].mxu0
      %v1987 = vadd.f32 0.0, %v1986
      %v1988 = vpop.f32.mrb[0].mxu0
      %v1989 = vpop.f32.mrb[0].mxu0
      %v1990 = vadd.f32 0.0, %v1989
      %v1991 = vpop.f32.mrb[0].mxu0
      %1992 = vmatprep.mubr.bf16.mxu0 0
      %1993 = vmatmul.mubr.bf16.gmra.mrb[0].mxu0 %v1140
      %v1994 = vpop.f32.mrb[0].mxu0
      %v1995 = vadd.f32 0.0, %v1994
      %v1996 = vpop.f32.mrb[0].mxu0
      %v1997 = vpop.f32.mrb[0].mxu0
      %v1998 = vadd.f32 0.0, %v1997
      %v1999 = vpop.f32.mrb[0].mxu0
      %2000 = vmatprep.mubr.bf16.mxu0 0
      %2001 = vmatmul.mubr.bf16.gmra.mrb[0].mxu0 %v1141
      %v2002 = vpop.f32.mrb[0].mxu0
      %v2003 = vadd.f32 0.0, %v2002
      %v2004 = vpop.f32.mrb[0].mxu0
      %v2005 = vpop.f32.mrb[0].mxu0
      %v2006 = vadd.f32 0.0, %v2005
      %v2007 = vpop.f32.mrb[0].mxu0
      %2008 = vmatprep.mubr.bf16.mxu0 0
      %2009 = vmatmul.mubr.bf16.gmra.mrb[0].mxu0 %v1142
      %v2010 = vpop.f32.mrb[0].mxu0
      %v2011 = vadd.f32 0.0, %v2010
      %v2012 = vpop.f32.mrb[0].mxu0
      %v2013 = vpop.f32.mrb[0].mxu0
      %v2014 = vadd.f32 0.0, %v2013
      %v2015 = vpop.f32.mrb[0].mxu0
      %2016 = vmatprep.mubr.bf16.mxu0 0
      %2017 = vmatmul.mubr.bf16.gmra.mrb[0].mxu0 %v1143
      %v2018 = vpop.f32.mrb[0].mxu0
      %v2019 = vadd.f32 0.0, %v2018
      %v2020 = vpop.f32.mrb[0].mxu0
      %v2021 = vpop.f32.mrb[0].mxu0
      %v2022 = vadd.f32 0.0, %v2021
      %v2023 = vpop.f32.mrb[0].mxu0
      %2024 = vmatprep.mubr.bf16.mxu0 0
      %2025 = vmatmul.mubr.bf16.gmra.mrb[0].mxu0 %v1144
      %v2026 = vpop.f32.mrb[0].mxu0
      %v2027 = vadd.f32 0.0, %v2026
      %v2028 = vpop.f32.mrb[0].mxu0
      %v2029 = vpop.f32.mrb[0].mxu0
      %v2030 = vadd.f32 0.0, %v2029
      %v2031 = vpop.f32.mrb[0].mxu0
      %2032 = vmatprep.mubr.bf16.mxu0 0
      %2033 = vmatmul.mubr.bf16.gmra.mrb[0].mxu0 %v1145
      %v2034 = vpop.f32.mrb[0].mxu0
      %v2035 = vadd.f32 0.0, %v2034
      %v2036 = vpop.f32.mrb[0].mxu0
      %v2037 = vpop.f32.mrb[0].mxu0
      %v2038 = vadd.f32 0.0, %v2037
      %v2039 = vpop.f32.mrb[0].mxu0
      %2040 = vmatprep.mubr.bf16.mxu0 0
      %2041 = vmatmul.mubr.bf16.gmra.mrb[0].mxu0 %v1146
      %v2042 = vpop.f32.mrb[0].mxu0
      %v2043 = vadd.f32 0.0, %v2042
      %v2044 = vpop.f32.mrb[0].mxu0
      %v2045 = vpop.f32.mrb[0].mxu0
      %v2046 = vadd.f32 0.0, %v2045
      %v2047 = vpop.f32.mrb[0].mxu0
      %2048 = vmatprep.mubr.bf16.mxu0 0
      %2049 = vmatmul.mubr.bf16.gmra.mrb[0].mxu0 %v1846
      %v2050 = vpop.f32.mrb[0].mxu0
      %v2051 = vadd.f32 0.0, %v2050
      %v2052 = vpop.f32.mrb[0].mxu0
      %v2053 = vpop.f32.mrb[0].mxu0
      %v2054 = vadd.f32 0.0, %v2053
      %v2055 = vpop.f32.mrb[0].mxu0
      %2056 = vdwg.mxu0
      %v2057 = vadd.f32 %v1793, %v1931
      %v2058 = vadd.f32 %v1794, %v1934
      %v2059 = vadd.f32 %v1795, %v1939
      %v2060 = vadd.f32 %v1796, %v1942
      %v2061 = vadd.f32 %v1797, %v1947
      %v2062 = vadd.f32 %v1798, %v1950
      %v2063 = vadd.f32 %v1799, %v1955
      %v2064 = vadd.f32 %v1800, %v1958
      %v2065 = vadd.f32 %v1801, %v1963
      %v2066 = vadd.f32 %v1802, %v1966
      %v2067 = vadd.f32 %v1803, %v1971
      %v2068 = vadd.f32 %v1804, %v1974
      %v2069 = vadd.f32 %v1805, %v1979
      %v2070 = vadd.f32 %v1806, %v1982
      %v2071 = vadd.f32 %v1807, %v1987
      %v2072 = vadd.f32 %v1808, %v1990
      %v2073 = vadd.f32 %v1809, %v1995
      %v2074 = vadd.f32 %v1810, %v1998
      %v2075 = vadd.f32 %v1811, %v2003
      %v2076 = vadd.f32 %v1812, %v2006
      %v2077 = vadd.f32 %v1813, %v2011
      %v2078 = vadd.f32 %v1814, %v2014
      %v2079 = vadd.f32 %v1815, %v2019
      %v2080 = vadd.f32 %v1816, %v2022
      %v2081 = vadd.f32 %v1817, %v2027
      %v2082 = vadd.f32 %v1818, %v2030
      %v2083 = vadd.f32 %v1819, %v2035
      %v2084 = vadd.f32 %v1820, %v2038
      %v2085 = vadd.f32 %v1821, %v2043
      %v2086 = vadd.f32 %v1822, %v2046
      %v2087 = vadd.f32 %v1823, %v2051
      %v2088 = vadd.f32 %v1824, %v2054
      %v2090 = vshrl.u32 %v368, 16
      %v2092 = vrot.slane %v2090, 4
      %v2093 = vshll.u32 %v368, 16
      %v2095 = vrot.slane %v2093, 5
      %v2096 = vor.u32 %v2092, %v2095
      %v2097 = vrot.slane %v2096, 4
      %v2099 = vshll.u32 %v369, 16
      %v2101 = vrot.slane %v2099, 5
      %v2102 = vsel %vm392, %v2097, %v2101
      %v2103 = vshrl.u32 %v369, 16
      %v2105 = vrot.slane %v2103, 4
      %v2106 = vor.u32 %v2105, %v2101
      %v2107 = vrot.slane %v2106, 4
      %v2109 = vshll.u32 %v370, 16
      %v2111 = vrot.slane %v2109, 5
      %v2112 = vsel %vm392, %v2107, %v2111
      %s2113 = scalar_lea.vmem %s1, 256
      %v2114 = vld [vmem:[%s2113] sm:$0xf]
      %v2115 = vld [vmem:[%s2113 + $0x4] sm:$0xf]
      %v2116 = vld [vmem:[%s2113 + $0x8] sm:$0xf]
      %v2117 = vld [vmem:[%s2113 + $0xc] sm:$0xf]
      %v2118 = vld [vmem:[%s2113 + $0x10] sm:$0xf]
      %v2119 = vld [vmem:[%s2113 + $0x14] sm:$0xf]
      %v2120 = vld [vmem:[%s2113 + $0x18] sm:$0xf]
      %v2121 = vld [vmem:[%s2113 + $0x1c] sm:$0xf]
      %v2122 = vld [vmem:[%s2113 + $0x20] sm:$0xf]
      %v2123 = vld [vmem:[%s2113 + $0x24] sm:$0xf]
      %v2124 = vld [vmem:[%s2113 + $0x28] sm:$0xf]
      %v2125 = vld [vmem:[%s2113 + $0x2c] sm:$0xf]
      %v2126 = vld [vmem:[%s2113 + $0x30] sm:$0xf]
      %v2127 = vld [vmem:[%s2113 + $0x34] sm:$0xf]
      %v2128 = vld [vmem:[%s2113 + $0x38] sm:$0xf]
      %v2129 = vld [vmem:[%s2113 + $0x3c] sm:$0xf]
      %v2130 = vunpack.c.l.b16 %v2102
      %v2131 = vunpack.c.l.b16 %v2112
      %v2132 = vpack.c.b16 %v2131, %v2130
      %v2150 = vunpack.c.l.b16 %v2114
      %v2151 = vunpack.c.l.b16 %v2115
      %v2152 = vunpack.c.l.b16 %v2116
      %v2153 = vunpack.c.l.b16 %v2117
      %v2154 = vunpack.c.l.b16 %v2118
      %v2155 = vunpack.c.l.b16 %v2119
      %v2156 = vunpack.c.l.b16 %v2120
      %v2157 = vunpack.c.l.b16 %v2121
      %v2158 = vunpack.c.l.b16 %v2122
      %v2159 = vunpack.c.l.b16 %v2123
      %v2160 = vunpack.c.l.b16 %v2124
      %v2161 = vunpack.c.l.b16 %v2125
      %v2162 = vunpack.c.l.b16 %v2126
      %v2163 = vunpack.c.l.b16 %v2127
      %v2164 = vunpack.c.l.b16 %v2128
      %v2165 = vunpack.c.l.b16 %v2129
      %v2166 = vpack.c.b16 %v2151, %v2150
      %v2167 = vpack.c.b16 %v2153, %v2152
      %v2168 = vpack.c.b16 %v2155, %v2154
      %v2169 = vpack.c.b16 %v2157, %v2156
      %v2170 = vpack.c.b16 %v2159, %v2158
      %v2171 = vpack.c.b16 %v2161, %v2160
      %v2172 = vpack.c.b16 %v2163, %v2162
      %v2173 = vpack.c.b16 %v2165, %v2164
      %2182 = vmatprep.subr.bf16.mxu0 0
      %2183 = vmatpush1.bf16.msra.mxu0 %v2166
      %2184 = vmatprep.subr.bf16.mxu0 0
      %2185 = vmatpush1.bf16.msra.mxu0 %v2167
      %2186 = vmatprep.subr.bf16.mxu0 0
      %2187 = vmatpush1.bf16.msra.mxu0 %v2168
      %2188 = vmatprep.subr.bf16.mxu0 0
      %2189 = vmatpush1.bf16.msra.mxu0 %v2169
      %2190 = vmatprep.subr.bf16.mxu0 0
      %2191 = vmatpush1.bf16.msra.mxu0 %v2170
      %2192 = vmatprep.subr.bf16.mxu0 0
      %2193 = vmatpush1.bf16.msra.mxu0 %v2171
      %2194 = vmatprep.subr.bf16.mxu0 0
      %2195 = vmatpush1.bf16.msra.mxu0 %v2172
      %2196 = vmatprep.subr.bf16.mxu0 0
      %2197 = vmatpush1.bf16.msra.mxu0 %v2173
      %2198 = vmatprep.subr.bf16.mxu0 0
      %2199 = vmatpush1.bf16.msra.mxu0 0
      %2200 = vmatprep.subr.bf16.mxu0 0
      %2201 = vmatpush1.bf16.msra.mxu0 0
      %2202 = vmatprep.subr.bf16.mxu0 0
      %2203 = vmatpush1.bf16.msra.mxu0 0
      %2204 = vmatprep.subr.bf16.mxu0 0
      %2205 = vmatpush1.bf16.msra.mxu0 0
      %2206 = vmatprep.subr.bf16.mxu0 0
      %2207 = vmatpush1.bf16.msra.mxu0 0
      %2208 = vmatprep.subr.bf16.mxu0 0
      %2209 = vmatpush1.bf16.msra.mxu0 0
      %2210 = vmatprep.subr.bf16.mxu0 0
      %2211 = vmatpush1.bf16.msra.mxu0 0
      %2212 = vmatprep.subr.bf16.mxu0 0
      %2213 = vmatpush1.bf16.msra.mxu0 0
      %2214 = vmatprep.mubr.bf16.mxu0 0
      %2215 = vmatmul.mubr.bf16.gmra.mrb[0].mxu0 %v827
      %v2216 = vpop.f32.mrb[0].mxu0
      %v2217 = vadd.f32 0.0, %v2216
      %v2218 = vpop.f32.mrb[0].mxu0
      %v2219 = vpop.f32.mrb[0].mxu0
      %v2220 = vadd.f32 0.0, %v2219
      %v2221 = vpop.f32.mrb[0].mxu0
      %2222 = vmatprep.mubr.bf16.mxu0 0
      %2223 = vmatmul.mubr.bf16.gmra.mrb[0].mxu0 %v828
      %v2224 = vpop.f32.mrb[0].mxu0
      %v2225 = vadd.f32 0.0, %v2224
      %v2226 = vpop.f32.mrb[0].mxu0
      %v2227 = vpop.f32.mrb[0].mxu0
      %v2228 = vadd.f32 0.0, %v2227
      %v2229 = vpop.f32.mrb[0].mxu0
      %2230 = vmatprep.mubr.bf16.mxu0 0
      %2231 = vmatmul.mubr.bf16.gmra.mrb[0].mxu0 %v829
      %v2232 = vpop.f32.mrb[0].mxu0
      %v2233 = vadd.f32 0.0, %v2232
      %v2234 = vpop.f32.mrb[0].mxu0
      %v2235 = vpop.f32.mrb[0].mxu0
      %v2236 = vadd.f32 0.0, %v2235
      %v2237 = vpop.f32.mrb[0].mxu0
      %2238 = vmatprep.mubr.bf16.mxu0 0
      %2239 = vmatmul.mubr.bf16.gmra.mrb[0].mxu0 %v830
      %v2240 = vpop.f32.mrb[0].mxu0
      %v2241 = vadd.f32 0.0, %v2240
      %v2242 = vpop.f32.mrb[0].mxu0
      %v2243 = vpop.f32.mrb[0].mxu0
      %v2244 = vadd.f32 0.0, %v2243
      %v2245 = vpop.f32.mrb[0].mxu0
      %2246 = vmatprep.mubr.bf16.mxu0 0
      %2247 = vmatmul.mubr.bf16.gmra.mrb[0].mxu0 %v831
      %v2248 = vpop.f32.mrb[0].mxu0
      %v2249 = vadd.f32 0.0, %v2248
      %v2250 = vpop.f32.mrb[0].mxu0
      %v2251 = vpop.f32.mrb[0].mxu0
      %v2252 = vadd.f32 0.0, %v2251
      %v2253 = vpop.f32.mrb[0].mxu0
      %2254 = vmatprep.mubr.bf16.mxu0 0
      %2255 = vmatmul.mubr.bf16.gmra.mrb[0].mxu0 %v832
      %v2256 = vpop.f32.mrb[0].mxu0
      %v2257 = vadd.f32 0.0, %v2256
      %v2258 = vpop.f32.mrb[0].mxu0
      %v2259 = vpop.f32.mrb[0].mxu0
      %v2260 = vadd.f32 0.0, %v2259
      %v2261 = vpop.f32.mrb[0].mxu0
      %2262 = vmatprep.mubr.bf16.mxu0 0
      %2263 = vmatmul.mubr.bf16.gmra.mrb[0].mxu0 %v833
      %v2264 = vpop.f32.mrb[0].mxu0
      %v2265 = vadd.f32 0.0, %v2264
      %v2266 = vpop.f32.mrb[0].mxu0
      %v2267 = vpop.f32.mrb[0].mxu0
      %v2268 = vadd.f32 0.0, %v2267
      %v2269 = vpop.f32.mrb[0].mxu0
      %2270 = vmatprep.mubr.bf16.mxu0 0
      %2271 = vmatmul.mubr.bf16.gmra.mrb[0].mxu0 %v834
      %v2272 = vpop.f32.mrb[0].mxu0
      %v2273 = vadd.f32 0.0, %v2272
      %v2274 = vpop.f32.mrb[0].mxu0
      %v2275 = vpop.f32.mrb[0].mxu0
      %v2276 = vadd.f32 0.0, %v2275
      %v2277 = vpop.f32.mrb[0].mxu0
      %2278 = vmatprep.mubr.bf16.mxu0 0
      %2279 = vmatmul.mubr.bf16.gmra.mrb[0].mxu0 %v835
      %v2280 = vpop.f32.mrb[0].mxu0
      %v2281 = vadd.f32 0.0, %v2280
      %v2282 = vpop.f32.mrb[0].mxu0
      %v2283 = vpop.f32.mrb[0].mxu0
      %v2284 = vadd.f32 0.0, %v2283
      %v2285 = vpop.f32.mrb[0].mxu0
      %2286 = vmatprep.mubr.bf16.mxu0 0
      %2287 = vmatmul.mubr.bf16.gmra.mrb[0].mxu0 %v836
      %v2288 = vpop.f32.mrb[0].mxu0
      %v2289 = vadd.f32 0.0, %v2288
      %v2290 = vpop.f32.mrb[0].mxu0
      %v2291 = vpop.f32.mrb[0].mxu0
      %v2292 = vadd.f32 0.0, %v2291
      %v2293 = vpop.f32.mrb[0].mxu0
      %2294 = vmatprep.mubr.bf16.mxu0 0
      %2295 = vmatmul.mubr.bf16.gmra.mrb[0].mxu0 %v837
      %v2296 = vpop.f32.mrb[0].mxu0
      %v2297 = vadd.f32 0.0, %v2296
      %v2298 = vpop.f32.mrb[0].mxu0
      %v2299 = vpop.f32.mrb[0].mxu0
      %v2300 = vadd.f32 0.0, %v2299
      %v2301 = vpop.f32.mrb[0].mxu0
      %2302 = vmatprep.mubr.bf16.mxu0 0
      %2303 = vmatmul.mubr.bf16.gmra.mrb[0].mxu0 %v838
      %v2304 = vpop.f32.mrb[0].mxu0
      %v2305 = vadd.f32 0.0, %v2304
      %v2306 = vpop.f32.mrb[0].mxu0
      %v2307 = vpop.f32.mrb[0].mxu0
      %v2308 = vadd.f32 0.0, %v2307
      %v2309 = vpop.f32.mrb[0].mxu0
      %2310 = vmatprep.mubr.bf16.mxu0 0
      %2311 = vmatmul.mubr.bf16.gmra.mrb[0].mxu0 %v839
      %v2312 = vpop.f32.mrb[0].mxu0
      %v2313 = vadd.f32 0.0, %v2312
      %v2314 = vpop.f32.mrb[0].mxu0
      %v2315 = vpop.f32.mrb[0].mxu0
      %v2316 = vadd.f32 0.0, %v2315
      %v2317 = vpop.f32.mrb[0].mxu0
      %2318 = vmatprep.mubr.bf16.mxu0 0
      %2319 = vmatmul.mubr.bf16.gmra.mrb[0].mxu0 %v840
      %v2320 = vpop.f32.mrb[0].mxu0
      %v2321 = vadd.f32 0.0, %v2320
      %v2322 = vpop.f32.mrb[0].mxu0
      %v2323 = vpop.f32.mrb[0].mxu0
      %v2324 = vadd.f32 0.0, %v2323
      %v2325 = vpop.f32.mrb[0].mxu0
      %2326 = vmatprep.mubr.bf16.mxu0 0
      %2327 = vmatmul.mubr.bf16.gmra.mrb[0].mxu0 %v841
      %v2328 = vpop.f32.mrb[0].mxu0
      %v2329 = vadd.f32 0.0, %v2328
      %v2330 = vpop.f32.mrb[0].mxu0
      %v2331 = vpop.f32.mrb[0].mxu0
      %v2332 = vadd.f32 0.0, %v2331
      %v2333 = vpop.f32.mrb[0].mxu0
      %2334 = vmatprep.mubr.bf16.mxu0 0
      %2335 = vmatmul.mubr.bf16.gmra.mrb[0].mxu0 %v2132
      %v2336 = vpop.f32.mrb[0].mxu0
      %v2337 = vadd.f32 0.0, %v2336
      %v2338 = vpop.f32.mrb[0].mxu0
      %v2339 = vpop.f32.mrb[0].mxu0
      %v2340 = vadd.f32 0.0, %v2339
      %v2341 = vpop.f32.mrb[0].mxu0
      %2342 = vdwg.mxu0
      %v2343 = vadd.f32 %v2057, %v2217
      %v2344 = vadd.f32 %v2058, %v2220
      %v2345 = vadd.f32 %v2059, %v2225
      %v2346 = vadd.f32 %v2060, %v2228
      %v2347 = vadd.f32 %v2061, %v2233
      %v2348 = vadd.f32 %v2062, %v2236
      %v2349 = vadd.f32 %v2063, %v2241
      %v2350 = vadd.f32 %v2064, %v2244
      %v2351 = vadd.f32 %v2065, %v2249
      %v2352 = vadd.f32 %v2066, %v2252
      %v2353 = vadd.f32 %v2067, %v2257
      %v2354 = vadd.f32 %v2068, %v2260
      %v2355 = vadd.f32 %v2069, %v2265
      %v2356 = vadd.f32 %v2070, %v2268
      %v2357 = vadd.f32 %v2071, %v2273
      %v2358 = vadd.f32 %v2072, %v2276
      %v2359 = vadd.f32 %v2073, %v2281
      %v2360 = vadd.f32 %v2074, %v2284
      %v2361 = vadd.f32 %v2075, %v2289
      %v2362 = vadd.f32 %v2076, %v2292
      %v2363 = vadd.f32 %v2077, %v2297
      %v2364 = vadd.f32 %v2078, %v2300
      %v2365 = vadd.f32 %v2079, %v2305
      %v2366 = vadd.f32 %v2080, %v2308
      %v2367 = vadd.f32 %v2081, %v2313
      %v2368 = vadd.f32 %v2082, %v2316
      %v2369 = vadd.f32 %v2083, %v2321
      %v2370 = vadd.f32 %v2084, %v2324
      %v2371 = vadd.f32 %v2085, %v2329
      %v2372 = vadd.f32 %v2086, %v2332
      %v2373 = vadd.f32 %v2087, %v2337
      %v2374 = vadd.f32 %v2088, %v2340
      %v2376 = vrot.slane %v368, 5
      %v2377 = vrot.slane %v2376, 4
      %v2378 = vrot.slane %v369, 5
      %v2379 = vsel %vm1390, %v2377, %v2378
      %v2380 = vrot.slane %v2378, 4
      %v2381 = vrot.slane %v370, 5
      %v2382 = vsel %vm1390, %v2380, %v2381
      %s2383 = scalar_lea.vmem %s1, 320
      %v2384 = vld [vmem:[%s2383] sm:$0xf]
      %v2385 = vld [vmem:[%s2383 + $0x4] sm:$0xf]
      %v2386 = vld [vmem:[%s2383 + $0x8] sm:$0xf]
      %v2387 = vld [vmem:[%s2383 + $0xc] sm:$0xf]
      %v2388 = vld [vmem:[%s2383 + $0x10] sm:$0xf]
      %v2389 = vld [vmem:[%s2383 + $0x14] sm:$0xf]
      %v2390 = vld [vmem:[%s2383 + $0x18] sm:$0xf]
      %v2391 = vld [vmem:[%s2383 + $0x1c] sm:$0xf]
      %v2392 = vld [vmem:[%s2383 + $0x20] sm:$0xf]
      %v2393 = vld [vmem:[%s2383 + $0x24] sm:$0xf]
      %v2394 = vld [vmem:[%s2383 + $0x28] sm:$0xf]
      %v2395 = vld [vmem:[%s2383 + $0x2c] sm:$0xf]
      %v2396 = vld [vmem:[%s2383 + $0x30] sm:$0xf]
      %v2397 = vld [vmem:[%s2383 + $0x34] sm:$0xf]
      %v2398 = vld [vmem:[%s2383 + $0x38] sm:$0xf]
      %v2399 = vld [vmem:[%s2383 + $0x3c] sm:$0xf]
      %v2400 = vunpack.c.l.b16 %v2379
      %v2401 = vunpack.c.l.b16 %v2382
      %v2402 = vpack.c.b16 %v2401, %v2400
      %v2420 = vunpack.c.l.b16 %v2384
      %v2421 = vunpack.c.l.b16 %v2385
      %v2422 = vunpack.c.l.b16 %v2386
      %v2423 = vunpack.c.l.b16 %v2387
      %v2424 = vunpack.c.l.b16 %v2388
      %v2425 = vunpack.c.l.b16 %v2389
      %v2426 = vunpack.c.l.b16 %v2390
      %v2427 = vunpack.c.l.b16 %v2391
      %v2428 = vunpack.c.l.b16 %v2392
      %v2429 = vunpack.c.l.b16 %v2393
      %v2430 = vunpack.c.l.b16 %v2394
      %v2431 = vunpack.c.l.b16 %v2395
      %v2432 = vunpack.c.l.b16 %v2396
      %v2433 = vunpack.c.l.b16 %v2397
      %v2434 = vunpack.c.l.b16 %v2398
      %v2435 = vunpack.c.l.b16 %v2399
      %v2436 = vpack.c.b16 %v2421, %v2420
      %v2437 = vpack.c.b16 %v2423, %v2422
      %v2438 = vpack.c.b16 %v2425, %v2424
      %v2439 = vpack.c.b16 %v2427, %v2426
      %v2440 = vpack.c.b16 %v2429, %v2428
      %v2441 = vpack.c.b16 %v2431, %v2430
      %v2442 = vpack.c.b16 %v2433, %v2432
      %v2443 = vpack.c.b16 %v2435, %v2434
      %2452 = vmatprep.subr.bf16.mxu0 0
      %2453 = vmatpush1.bf16.msra.mxu0 %v2436
      %2454 = vmatprep.subr.bf16.mxu0 0
      %2455 = vmatpush1.bf16.msra.mxu0 %v2437
      %2456 = vmatprep.subr.bf16.mxu0 0
      %2457 = vmatpush1.bf16.msra.mxu0 %v2438
      %2458 = vmatprep.subr.bf16.mxu0 0
      %2459 = vmatpush1.bf16.msra.mxu0 %v2439
      %2460 = vmatprep.subr.bf16.mxu0 0
      %2461 = vmatpush1.bf16.msra.mxu0 %v2440
      %2462 = vmatprep.subr.bf16.mxu0 0
      %2463 = vmatpush1.bf16.msra.mxu0 %v2441
      %2464 = vmatprep.subr.bf16.mxu0 0
      %2465 = vmatpush1.bf16.msra.mxu0 %v2442
      %2466 = vmatprep.subr.bf16.mxu0 0
      %2467 = vmatpush1.bf16.msra.mxu0 %v2443
      %2468 = vmatprep.subr.bf16.mxu0 0
      %2469 = vmatpush1.bf16.msra.mxu0 0
      %2470 = vmatprep.subr.bf16.mxu0 0
      %2471 = vmatpush1.bf16.msra.mxu0 0
      %2472 = vmatprep.subr.bf16.mxu0 0
      %2473 = vmatpush1.bf16.msra.mxu0 0
      %2474 = vmatprep.subr.bf16.mxu0 0
      %2475 = vmatpush1.bf16.msra.mxu0 0
      %2476 = vmatprep.subr.bf16.mxu0 0
      %2477 = vmatpush1.bf16.msra.mxu0 0
      %2478 = vmatprep.subr.bf16.mxu0 0
      %2479 = vmatpush1.bf16.msra.mxu0 0
      %2480 = vmatprep.subr.bf16.mxu0 0
      %2481 = vmatpush1.bf16.msra.mxu0 0
      %2482 = vmatprep.subr.bf16.mxu0 0
      %2483 = vmatpush1.bf16.msra.mxu0 0
      %2484 = vmatprep.mubr.bf16.mxu0 0
      %2485 = vmatmul.mubr.bf16.gmra.mrb[0].mxu0 %v1553
      %v2486 = vpop.f32.mrb[0].mxu0
      %v2487 = vadd.f32 0.0, %v2486
      %v2488 = vpop.f32.mrb[0].mxu0
      %v2489 = vpop.f32.mrb[0].mxu0
      %v2490 = vadd.f32 0.0, %v2489
      %v2491 = vpop.f32.mrb[0].mxu0
      %2492 = vmatprep.mubr.bf16.mxu0 0
      %2493 = vmatmul.mubr.bf16.gmra.mrb[0].mxu0 %v1554
      %v2494 = vpop.f32.mrb[0].mxu0
      %v2495 = vadd.f32 0.0, %v2494
      %v2496 = vpop.f32.mrb[0].mxu0
      %v2497 = vpop.f32.mrb[0].mxu0
      %v2498 = vadd.f32 0.0, %v2497
      %v2499 = vpop.f32.mrb[0].mxu0
      %2500 = vmatprep.mubr.bf16.mxu0 0
      %2501 = vmatmul.mubr.bf16.gmra.mrb[0].mxu0 %v1555
      %v2502 = vpop.f32.mrb[0].mxu0
      %v2503 = vadd.f32 0.0, %v2502
      %v2504 = vpop.f32.mrb[0].mxu0
      %v2505 = vpop.f32.mrb[0].mxu0
      %v2506 = vadd.f32 0.0, %v2505
      %v2507 = vpop.f32.mrb[0].mxu0
      %2508 = vmatprep.mubr.bf16.mxu0 0
      %2509 = vmatmul.mubr.bf16.gmra.mrb[0].mxu0 %v1556
      %v2510 = vpop.f32.mrb[0].mxu0
      %v2511 = vadd.f32 0.0, %v2510
      %v2512 = vpop.f32.mrb[0].mxu0
      %v2513 = vpop.f32.mrb[0].mxu0
      %v2514 = vadd.f32 0.0, %v2513
      %v2515 = vpop.f32.mrb[0].mxu0
      %2516 = vmatprep.mubr.bf16.mxu0 0
      %2517 = vmatmul.mubr.bf16.gmra.mrb[0].mxu0 %v1557
      %v2518 = vpop.f32.mrb[0].mxu0
      %v2519 = vadd.f32 0.0, %v2518
      %v2520 = vpop.f32.mrb[0].mxu0
      %v2521 = vpop.f32.mrb[0].mxu0
      %v2522 = vadd.f32 0.0, %v2521
      %v2523 = vpop.f32.mrb[0].mxu0
      %2524 = vmatprep.mubr.bf16.mxu0 0
      %2525 = vmatmul.mubr.bf16.gmra.mrb[0].mxu0 %v1558
      %v2526 = vpop.f32.mrb[0].mxu0
      %v2527 = vadd.f32 0.0, %v2526
      %v2528 = vpop.f32.mrb[0].mxu0
      %v2529 = vpop.f32.mrb[0].mxu0
      %v2530 = vadd.f32 0.0, %v2529
      %v2531 = vpop.f32.mrb[0].mxu0
      %2532 = vmatprep.mubr.bf16.mxu0 0
      %2533 = vmatmul.mubr.bf16.gmra.mrb[0].mxu0 %v1559
      %v2534 = vpop.f32.mrb[0].mxu0
      %v2535 = vadd.f32 0.0, %v2534
      %v2536 = vpop.f32.mrb[0].mxu0
      %v2537 = vpop.f32.mrb[0].mxu0
      %v2538 = vadd.f32 0.0, %v2537
      %v2539 = vpop.f32.mrb[0].mxu0
      %2540 = vmatprep.mubr.bf16.mxu0 0
      %2541 = vmatmul.mubr.bf16.gmra.mrb[0].mxu0 %v1560
      %v2542 = vpop.f32.mrb[0].mxu0
      %v2543 = vadd.f32 0.0, %v2542
      %v2544 = vpop.f32.mrb[0].mxu0
      %v2545 = vpop.f32.mrb[0].mxu0
      %v2546 = vadd.f32 0.0, %v2545
      %v2547 = vpop.f32.mrb[0].mxu0
      %2548 = vmatprep.mubr.bf16.mxu0 0
      %2549 = vmatmul.mubr.bf16.gmra.mrb[0].mxu0 %v1561
      %v2550 = vpop.f32.mrb[0].mxu0
      %v2551 = vadd.f32 0.0, %v2550
      %v2552 = vpop.f32.mrb[0].mxu0
      %v2553 = vpop.f32.mrb[0].mxu0
      %v2554 = vadd.f32 0.0, %v2553
      %v2555 = vpop.f32.mrb[0].mxu0
      %2556 = vmatprep.mubr.bf16.mxu0 0
      %2557 = vmatmul.mubr.bf16.gmra.mrb[0].mxu0 %v1562
      %v2558 = vpop.f32.mrb[0].mxu0
      %v2559 = vadd.f32 0.0, %v2558
      %v2560 = vpop.f32.mrb[0].mxu0
      %v2561 = vpop.f32.mrb[0].mxu0
      %v2562 = vadd.f32 0.0, %v2561
      %v2563 = vpop.f32.mrb[0].mxu0
      %2564 = vmatprep.mubr.bf16.mxu0 0
      %2565 = vmatmul.mubr.bf16.gmra.mrb[0].mxu0 %v1563
      %v2566 = vpop.f32.mrb[0].mxu0
      %v2567 = vadd.f32 0.0, %v2566
      %v2568 = vpop.f32.mrb[0].mxu0
      %v2569 = vpop.f32.mrb[0].mxu0
      %v2570 = vadd.f32 0.0, %v2569
      %v2571 = vpop.f32.mrb[0].mxu0
      %2572 = vmatprep.mubr.bf16.mxu0 0
      %2573 = vmatmul.mubr.bf16.gmra.mrb[0].mxu0 %v1564
      %v2574 = vpop.f32.mrb[0].mxu0
      %v2575 = vadd.f32 0.0, %v2574
      %v2576 = vpop.f32.mrb[0].mxu0
      %v2577 = vpop.f32.mrb[0].mxu0
      %v2578 = vadd.f32 0.0, %v2577
      %v2579 = vpop.f32.mrb[0].mxu0
      %2580 = vmatprep.mubr.bf16.mxu0 0
      %2581 = vmatmul.mubr.bf16.gmra.mrb[0].mxu0 %v1565
      %v2582 = vpop.f32.mrb[0].mxu0
      %v2583 = vadd.f32 0.0, %v2582
      %v2584 = vpop.f32.mrb[0].mxu0
      %v2585 = vpop.f32.mrb[0].mxu0
      %v2586 = vadd.f32 0.0, %v2585
      %v2587 = vpop.f32.mrb[0].mxu0
      %2588 = vmatprep.mubr.bf16.mxu0 0
      %2589 = vmatmul.mubr.bf16.gmra.mrb[0].mxu0 %v1566
      %v2590 = vpop.f32.mrb[0].mxu0
      %v2591 = vadd.f32 0.0, %v2590
      %v2592 = vpop.f32.mrb[0].mxu0
      %v2593 = vpop.f32.mrb[0].mxu0
      %v2594 = vadd.f32 0.0, %v2593
      %v2595 = vpop.f32.mrb[0].mxu0
      %2596 = vmatprep.mubr.bf16.mxu0 0
      %2597 = vmatmul.mubr.bf16.gmra.mrb[0].mxu0 %v1567
      %v2598 = vpop.f32.mrb[0].mxu0
      %v2599 = vadd.f32 0.0, %v2598
      %v2600 = vpop.f32.mrb[0].mxu0
      %v2601 = vpop.f32.mrb[0].mxu0
      %v2602 = vadd.f32 0.0, %v2601
      %v2603 = vpop.f32.mrb[0].mxu0
      %2604 = vmatprep.mubr.bf16.mxu0 0
      %2605 = vmatmul.mubr.bf16.gmra.mrb[0].mxu0 %v2402
      %v2606 = vpop.f32.mrb[0].mxu0
      %v2607 = vadd.f32 0.0, %v2606
      %v2608 = vpop.f32.mrb[0].mxu0
      %v2609 = vpop.f32.mrb[0].mxu0
      %v2610 = vadd.f32 0.0, %v2609
      %v2611 = vpop.f32.mrb[0].mxu0
      %2612 = vdwg.mxu0
      %v2613 = vadd.f32 %v2343, %v2487
      %v2614 = vadd.f32 %v2344, %v2490
      %v2615 = vadd.f32 %v2345, %v2495
      %v2616 = vadd.f32 %v2346, %v2498
      %v2617 = vadd.f32 %v2347, %v2503
      %v2618 = vadd.f32 %v2348, %v2506
      %v2619 = vadd.f32 %v2349, %v2511
      %v2620 = vadd.f32 %v2350, %v2514
      %v2621 = vadd.f32 %v2351, %v2519
      %v2622 = vadd.f32 %v2352, %v2522
      %v2623 = vadd.f32 %v2353, %v2527
      %v2624 = vadd.f32 %v2354, %v2530
      %v2625 = vadd.f32 %v2355, %v2535
      %v2626 = vadd.f32 %v2356, %v2538
      %v2627 = vadd.f32 %v2357, %v2543
      %v2628 = vadd.f32 %v2358, %v2546
      %v2629 = vadd.f32 %v2359, %v2551
      %v2630 = vadd.f32 %v2360, %v2554
      %v2631 = vadd.f32 %v2361, %v2559
      %v2632 = vadd.f32 %v2362, %v2562
      %v2633 = vadd.f32 %v2363, %v2567
      %v2634 = vadd.f32 %v2364, %v2570
      %v2635 = vadd.f32 %v2365, %v2575
      %v2636 = vadd.f32 %v2366, %v2578
      %v2637 = vadd.f32 %v2367, %v2583
      %v2638 = vadd.f32 %v2368, %v2586
      %v2639 = vadd.f32 %v2369, %v2591
      %v2640 = vadd.f32 %v2370, %v2594
      %v2641 = vadd.f32 %v2371, %v2599
      %v2642 = vadd.f32 %v2372, %v2602
      %v2643 = vadd.f32 %v2373, %v2607
      %v2644 = vadd.f32 %v2374, %v2610
      %s2645 = scalar_lea.vmem %s1, 384
      %v2646 = vld [vmem:[%s2645] sm:$0xf]
      %v2647 = vld [vmem:[%s2645 + $0x4] sm:$0xf]
      %v2648 = vld [vmem:[%s2645 + $0x8] sm:$0xf]
      %v2649 = vld [vmem:[%s2645 + $0xc] sm:$0xf]
      %v2650 = vld [vmem:[%s2645 + $0x10] sm:$0xf]
      %v2651 = vld [vmem:[%s2645 + $0x14] sm:$0xf]
      %v2652 = vld [vmem:[%s2645 + $0x18] sm:$0xf]
      %v2653 = vld [vmem:[%s2645 + $0x1c] sm:$0xf]
      %v2654 = vld [vmem:[%s2645 + $0x20] sm:$0xf]
      %v2655 = vld [vmem:[%s2645 + $0x24] sm:$0xf]
      %v2656 = vld [vmem:[%s2645 + $0x28] sm:$0xf]
      %v2657 = vld [vmem:[%s2645 + $0x2c] sm:$0xf]
      %v2658 = vld [vmem:[%s2645 + $0x30] sm:$0xf]
      %v2659 = vld [vmem:[%s2645 + $0x34] sm:$0xf]
      %v2660 = vld [vmem:[%s2645 + $0x38] sm:$0xf]
      %v2661 = vld [vmem:[%s2645 + $0x3c] sm:$0xf]
      %v2664 = vunpack.c.l.b16 %v371
      %v2665 = vunpack.c.l.b16 %v372
      %v2666 = vpack.c.b16 %v2665, %v2664
      %v2684 = vunpack.c.l.b16 %v2646
      %v2685 = vunpack.c.l.b16 %v2647
      %v2686 = vunpack.c.l.b16 %v2648
      %v2687 = vunpack.c.l.b16 %v2649
      %v2688 = vunpack.c.l.b16 %v2650
      %v2689 = vunpack.c.l.b16 %v2651
      %v2690 = vunpack.c.l.b16 %v2652
      %v2691 = vunpack.c.l.b16 %v2653
      %v2692 = vunpack.c.l.b16 %v2654
      %v2693 = vunpack.c.l.b16 %v2655
      %v2694 = vunpack.c.l.b16 %v2656
      %v2695 = vunpack.c.l.b16 %v2657
      %v2696 = vunpack.c.l.b16 %v2658
      %v2697 = vunpack.c.l.b16 %v2659
      %v2698 = vunpack.c.l.b16 %v2660
      %v2699 = vunpack.c.l.b16 %v2661
      %v2700 = vpack.c.b16 %v2685, %v2684
      %v2701 = vpack.c.b16 %v2687, %v2686
      %v2702 = vpack.c.b16 %v2689, %v2688
      %v2703 = vpack.c.b16 %v2691, %v2690
      %v2704 = vpack.c.b16 %v2693, %v2692
      %v2705 = vpack.c.b16 %v2695, %v2694
      %v2706 = vpack.c.b16 %v2697, %v2696
      %v2707 = vpack.c.b16 %v2699, %v2698
      %2716 = vmatprep.subr.bf16.mxu0 0
      %2717 = vmatpush1.bf16.msra.mxu0 %v2700
      %2718 = vmatprep.subr.bf16.mxu0 0
      %2719 = vmatpush1.bf16.msra.mxu0 %v2701
      %2720 = vmatprep.subr.bf16.mxu0 0
      %2721 = vmatpush1.bf16.msra.mxu0 %v2702
      %2722 = vmatprep.subr.bf16.mxu0 0
      %2723 = vmatpush1.bf16.msra.mxu0 %v2703
      %2724 = vmatprep.subr.bf16.mxu0 0
      %2725 = vmatpush1.bf16.msra.mxu0 %v2704
      %2726 = vmatprep.subr.bf16.mxu0 0
      %2727 = vmatpush1.bf16.msra.mxu0 %v2705
      %2728 = vmatprep.subr.bf16.mxu0 0
      %2729 = vmatpush1.bf16.msra.mxu0 %v2706
      %2730 = vmatprep.subr.bf16.mxu0 0
      %2731 = vmatpush1.bf16.msra.mxu0 %v2707
      %2732 = vmatprep.subr.bf16.mxu0 0
      %2733 = vmatpush1.bf16.msra.mxu0 0
      %2734 = vmatprep.subr.bf16.mxu0 0
      %2735 = vmatpush1.bf16.msra.mxu0 0
      %2736 = vmatprep.subr.bf16.mxu0 0
      %2737 = vmatpush1.bf16.msra.mxu0 0
      %2738 = vmatprep.subr.bf16.mxu0 0
      %2739 = vmatpush1.bf16.msra.mxu0 0
      %2740 = vmatprep.subr.bf16.mxu0 0
      %2741 = vmatpush1.bf16.msra.mxu0 0
      %2742 = vmatprep.subr.bf16.mxu0 0
      %2743 = vmatpush1.bf16.msra.mxu0 0
      %2744 = vmatprep.subr.bf16.mxu0 0
      %2745 = vmatpush1.bf16.msra.mxu0 0
      %2746 = vmatprep.subr.bf16.mxu0 0
      %2747 = vmatpush1.bf16.msra.mxu0 0
      %2748 = vmatprep.mubr.bf16.mxu0 0
      %2749 = vmatmul.mubr.bf16.gmra.mrb[0].mxu0 %v1133
      %v2750 = vpop.f32.mrb[0].mxu0
      %v2751 = vadd.f32 0.0, %v2750
      %v2752 = vpop.f32.mrb[0].mxu0
      %v2753 = vpop.f32.mrb[0].mxu0
      %v2754 = vadd.f32 0.0, %v2753
      %v2755 = vpop.f32.mrb[0].mxu0
      %2756 = vmatprep.mubr.bf16.mxu0 0
      %2757 = vmatmul.mubr.bf16.gmra.mrb[0].mxu0 %v1134
      %v2758 = vpop.f32.mrb[0].mxu0
      %v2759 = vadd.f32 0.0, %v2758
      %v2760 = vpop.f32.mrb[0].mxu0
      %v2761 = vpop.f32.mrb[0].mxu0
      %v2762 = vadd.f32 0.0, %v2761
      %v2763 = vpop.f32.mrb[0].mxu0
      %2764 = vmatprep.mubr.bf16.mxu0 0
      %2765 = vmatmul.mubr.bf16.gmra.mrb[0].mxu0 %v1135
      %v2766 = vpop.f32.mrb[0].mxu0
      %v2767 = vadd.f32 0.0, %v2766
      %v2768 = vpop.f32.mrb[0].mxu0
      %v2769 = vpop.f32.mrb[0].mxu0
      %v2770 = vadd.f32 0.0, %v2769
      %v2771 = vpop.f32.mrb[0].mxu0
      %2772 = vmatprep.mubr.bf16.mxu0 0
      %2773 = vmatmul.mubr.bf16.gmra.mrb[0].mxu0 %v1136
      %v2774 = vpop.f32.mrb[0].mxu0
      %v2775 = vadd.f32 0.0, %v2774
      %v2776 = vpop.f32.mrb[0].mxu0
      %v2777 = vpop.f32.mrb[0].mxu0
      %v2778 = vadd.f32 0.0, %v2777
      %v2779 = vpop.f32.mrb[0].mxu0
      %2780 = vmatprep.mubr.bf16.mxu0 0
      %2781 = vmatmul.mubr.bf16.gmra.mrb[0].mxu0 %v1137
      %v2782 = vpop.f32.mrb[0].mxu0
      %v2783 = vadd.f32 0.0, %v2782
      %v2784 = vpop.f32.mrb[0].mxu0
      %v2785 = vpop.f32.mrb[0].mxu0
      %v2786 = vadd.f32 0.0, %v2785
      %v2787 = vpop.f32.mrb[0].mxu0
      %2788 = vmatprep.mubr.bf16.mxu0 0
      %2789 = vmatmul.mubr.bf16.gmra.mrb[0].mxu0 %v1138
      %v2790 = vpop.f32.mrb[0].mxu0
      %v2791 = vadd.f32 0.0, %v2790
      %v2792 = vpop.f32.mrb[0].mxu0
      %v2793 = vpop.f32.mrb[0].mxu0
      %v2794 = vadd.f32 0.0, %v2793
      %v2795 = vpop.f32.mrb[0].mxu0
      %2796 = vmatprep.mubr.bf16.mxu0 0
      %2797 = vmatmul.mubr.bf16.gmra.mrb[0].mxu0 %v1139
      %v2798 = vpop.f32.mrb[0].mxu0
      %v2799 = vadd.f32 0.0, %v2798
      %v2800 = vpop.f32.mrb[0].mxu0
      %v2801 = vpop.f32.mrb[0].mxu0
      %v2802 = vadd.f32 0.0, %v2801
      %v2803 = vpop.f32.mrb[0].mxu0
      %2804 = vmatprep.mubr.bf16.mxu0 0
      %2805 = vmatmul.mubr.bf16.gmra.mrb[0].mxu0 %v1140
      %v2806 = vpop.f32.mrb[0].mxu0
      %v2807 = vadd.f32 0.0, %v2806
      %v2808 = vpop.f32.mrb[0].mxu0
      %v2809 = vpop.f32.mrb[0].mxu0
      %v2810 = vadd.f32 0.0, %v2809
      %v2811 = vpop.f32.mrb[0].mxu0
      %2812 = vmatprep.mubr.bf16.mxu0 0
      %2813 = vmatmul.mubr.bf16.gmra.mrb[0].mxu0 %v1141
      %v2814 = vpop.f32.mrb[0].mxu0
      %v2815 = vadd.f32 0.0, %v2814
      %v2816 = vpop.f32.mrb[0].mxu0
      %v2817 = vpop.f32.mrb[0].mxu0
      %v2818 = vadd.f32 0.0, %v2817
      %v2819 = vpop.f32.mrb[0].mxu0
      %2820 = vmatprep.mubr.bf16.mxu0 0
      %2821 = vmatmul.mubr.bf16.gmra.mrb[0].mxu0 %v1142
      %v2822 = vpop.f32.mrb[0].mxu0
      %v2823 = vadd.f32 0.0, %v2822
      %v2824 = vpop.f32.mrb[0].mxu0
      %v2825 = vpop.f32.mrb[0].mxu0
      %v2826 = vadd.f32 0.0, %v2825
      %v2827 = vpop.f32.mrb[0].mxu0
      %2828 = vmatprep.mubr.bf16.mxu0 0
      %2829 = vmatmul.mubr.bf16.gmra.mrb[0].mxu0 %v1143
      %v2830 = vpop.f32.mrb[0].mxu0
      %v2831 = vadd.f32 0.0, %v2830
      %v2832 = vpop.f32.mrb[0].mxu0
      %v2833 = vpop.f32.mrb[0].mxu0
      %v2834 = vadd.f32 0.0, %v2833
      %v2835 = vpop.f32.mrb[0].mxu0
      %2836 = vmatprep.mubr.bf16.mxu0 0
      %2837 = vmatmul.mubr.bf16.gmra.mrb[0].mxu0 %v1144
      %v2838 = vpop.f32.mrb[0].mxu0
      %v2839 = vadd.f32 0.0, %v2838
      %v2840 = vpop.f32.mrb[0].mxu0
      %v2841 = vpop.f32.mrb[0].mxu0
      %v2842 = vadd.f32 0.0, %v2841
      %v2843 = vpop.f32.mrb[0].mxu0
      %2844 = vmatprep.mubr.bf16.mxu0 0
      %2845 = vmatmul.mubr.bf16.gmra.mrb[0].mxu0 %v1145
      %v2846 = vpop.f32.mrb[0].mxu0
      %v2847 = vadd.f32 0.0, %v2846
      %v2848 = vpop.f32.mrb[0].mxu0
      %v2849 = vpop.f32.mrb[0].mxu0
      %v2850 = vadd.f32 0.0, %v2849
      %v2851 = vpop.f32.mrb[0].mxu0
      %2852 = vmatprep.mubr.bf16.mxu0 0
      %2853 = vmatmul.mubr.bf16.gmra.mrb[0].mxu0 %v1146
      %v2854 = vpop.f32.mrb[0].mxu0
      %v2855 = vadd.f32 0.0, %v2854
      %v2856 = vpop.f32.mrb[0].mxu0
      %v2857 = vpop.f32.mrb[0].mxu0
      %v2858 = vadd.f32 0.0, %v2857
      %v2859 = vpop.f32.mrb[0].mxu0
      %2860 = vmatprep.mubr.bf16.mxu0 0
      %2861 = vmatmul.mubr.bf16.gmra.mrb[0].mxu0 %v1846
      %v2862 = vpop.f32.mrb[0].mxu0
      %v2863 = vadd.f32 0.0, %v2862
      %v2864 = vpop.f32.mrb[0].mxu0
      %v2865 = vpop.f32.mrb[0].mxu0
      %v2866 = vadd.f32 0.0, %v2865
      %v2867 = vpop.f32.mrb[0].mxu0
      %2868 = vmatprep.mubr.bf16.mxu0 0
      %2869 = vmatmul.mubr.bf16.gmra.mrb[0].mxu0 %v2666
      %v2870 = vpop.f32.mrb[0].mxu0
      %v2871 = vadd.f32 0.0, %v2870
      %v2872 = vpop.f32.mrb[0].mxu0
      %v2873 = vpop.f32.mrb[0].mxu0
      %v2874 = vadd.f32 0.0, %v2873
      %v2875 = vpop.f32.mrb[0].mxu0
      %2876 = vdwg.mxu0
      %v2877 = vadd.f32 %v2613, %v2751
      %v2878 = vadd.f32 %v2614, %v2754
      %v2879 = vadd.f32 %v2615, %v2759
      %v2880 = vadd.f32 %v2616, %v2762
      %v2881 = vadd.f32 %v2617, %v2767
      %v2882 = vadd.f32 %v2618, %v2770
      %v2883 = vadd.f32 %v2619, %v2775
      %v2884 = vadd.f32 %v2620, %v2778
      %v2885 = vadd.f32 %v2621, %v2783
      %v2886 = vadd.f32 %v2622, %v2786
      %v2887 = vadd.f32 %v2623, %v2791
      %v2888 = vadd.f32 %v2624, %v2794
      %v2889 = vadd.f32 %v2625, %v2799
      %v2890 = vadd.f32 %v2626, %v2802
      %v2891 = vadd.f32 %v2627, %v2807
      %v2892 = vadd.f32 %v2628, %v2810
      %v2893 = vadd.f32 %v2629, %v2815
      %v2894 = vadd.f32 %v2630, %v2818
      %v2895 = vadd.f32 %v2631, %v2823
      %v2896 = vadd.f32 %v2632, %v2826
      %v2897 = vadd.f32 %v2633, %v2831
      %v2898 = vadd.f32 %v2634, %v2834
      %v2899 = vadd.f32 %v2635, %v2839
      %v2900 = vadd.f32 %v2636, %v2842
      %v2901 = vadd.f32 %v2637, %v2847
      %v2902 = vadd.f32 %v2638, %v2850
      %v2903 = vadd.f32 %v2639, %v2855
      %v2904 = vadd.f32 %v2640, %v2858
      %v2905 = vadd.f32 %v2641, %v2863
      %v2906 = vadd.f32 %v2642, %v2866
      %v2907 = vadd.f32 %v2643, %v2871
      %v2908 = vadd.f32 %v2644, %v2874
      %v2910 = vshrl.u32 %v371, 16
      %v2912 = vrot.slane %v2910, 4
      %v2913 = vshll.u32 %v371, 16
      %v2915 = vrot.slane %v2913, 5
      %v2916 = vor.u32 %v2912, %v2915
      %v2917 = vrot.slane %v2916, 4
      %v2919 = vshll.u32 %v372, 16
      %v2921 = vrot.slane %v2919, 5
      %v2922 = vsel %vm392, %v2917, %v2921
      %v2923 = vshrl.u32 %v372, 16
      %v2925 = vrot.slane %v2923, 4
      %v2926 = vor.u32 %v2925, %v2921
      %v2927 = vrot.slane %v2926, 4
      %v2929 = vshll.u32 %v373, 16
      %v2931 = vrot.slane %v2929, 5
      %v2932 = vsel %vm392, %v2927, %v2931
      %s2933 = scalar_lea.vmem %s1, 448
      %v2934 = vld [vmem:[%s2933] sm:$0xf]
      %v2935 = vld [vmem:[%s2933 + $0x4] sm:$0xf]
      %v2936 = vld [vmem:[%s2933 + $0x8] sm:$0xf]
      %v2937 = vld [vmem:[%s2933 + $0xc] sm:$0xf]
      %v2938 = vld [vmem:[%s2933 + $0x10] sm:$0xf]
      %v2939 = vld [vmem:[%s2933 + $0x14] sm:$0xf]
      %v2940 = vld [vmem:[%s2933 + $0x18] sm:$0xf]
      %v2941 = vld [vmem:[%s2933 + $0x1c] sm:$0xf]
      %v2942 = vld [vmem:[%s2933 + $0x20] sm:$0xf]
      %v2943 = vld [vmem:[%s2933 + $0x24] sm:$0xf]
      %v2944 = vld [vmem:[%s2933 + $0x28] sm:$0xf]
      %v2945 = vld [vmem:[%s2933 + $0x2c] sm:$0xf]
      %v2946 = vld [vmem:[%s2933 + $0x30] sm:$0xf]
      %v2947 = vld [vmem:[%s2933 + $0x34] sm:$0xf]
      %v2948 = vld [vmem:[%s2933 + $0x38] sm:$0xf]
      %v2949 = vld [vmem:[%s2933 + $0x3c] sm:$0xf]
      %v2950 = vunpack.c.l.b16 %v2922
      %v2951 = vunpack.c.l.b16 %v2932
      %v2952 = vpack.c.b16 %v2951, %v2950
      %v2970 = vunpack.c.l.b16 %v2934
      %v2971 = vunpack.c.l.b16 %v2935
      %v2972 = vunpack.c.l.b16 %v2936
      %v2973 = vunpack.c.l.b16 %v2937
      %v2974 = vunpack.c.l.b16 %v2938
      %v2975 = vunpack.c.l.b16 %v2939
      %v2976 = vunpack.c.l.b16 %v2940
      %v2977 = vunpack.c.l.b16 %v2941
      %v2978 = vunpack.c.l.b16 %v2942
      %v2979 = vunpack.c.l.b16 %v2943
      %v2980 = vunpack.c.l.b16 %v2944
      %v2981 = vunpack.c.l.b16 %v2945
      %v2982 = vunpack.c.l.b16 %v2946
      %v2983 = vunpack.c.l.b16 %v2947
      %v2984 = vunpack.c.l.b16 %v2948
      %v2985 = vunpack.c.l.b16 %v2949
      %v2986 = vpack.c.b16 %v2971, %v2970
      %v2987 = vpack.c.b16 %v2973, %v2972
      %v2988 = vpack.c.b16 %v2975, %v2974
      %v2989 = vpack.c.b16 %v2977, %v2976
      %v2990 = vpack.c.b16 %v2979, %v2978
      %v2991 = vpack.c.b16 %v2981, %v2980
      %v2992 = vpack.c.b16 %v2983, %v2982
      %v2993 = vpack.c.b16 %v2985, %v2984
      %3002 = vmatprep.subr.bf16.mxu0 0
      %3003 = vmatpush1.bf16.msra.mxu0 %v2986
      %3004 = vmatprep.subr.bf16.mxu0 0
      %3005 = vmatpush1.bf16.msra.mxu0 %v2987
      %3006 = vmatprep.subr.bf16.mxu0 0
      %3007 = vmatpush1.bf16.msra.mxu0 %v2988
      %3008 = vmatprep.subr.bf16.mxu0 0
      %3009 = vmatpush1.bf16.msra.mxu0 %v2989
      %3010 = vmatprep.subr.bf16.mxu0 0
      %3011 = vmatpush1.bf16.msra.mxu0 %v2990
      %3012 = vmatprep.subr.bf16.mxu0 0
      %3013 = vmatpush1.bf16.msra.mxu0 %v2991
      %3014 = vmatprep.subr.bf16.mxu0 0
      %3015 = vmatpush1.bf16.msra.mxu0 %v2992
      %3016 = vmatprep.subr.bf16.mxu0 0
      %3017 = vmatpush1.bf16.msra.mxu0 %v2993
      %3018 = vmatprep.subr.bf16.mxu0 0
      %3019 = vmatpush1.bf16.msra.mxu0 0
      %3020 = vmatprep.subr.bf16.mxu0 0
      %3021 = vmatpush1.bf16.msra.mxu0 0
      %3022 = vmatprep.subr.bf16.mxu0 0
      %3023 = vmatpush1.bf16.msra.mxu0 0
      %3024 = vmatprep.subr.bf16.mxu0 0
      %3025 = vmatpush1.bf16.msra.mxu0 0
      %3026 = vmatprep.subr.bf16.mxu0 0
      %3027 = vmatpush1.bf16.msra.mxu0 0
      %3028 = vmatprep.subr.bf16.mxu0 0
      %3029 = vmatpush1.bf16.msra.mxu0 0
      %3030 = vmatprep.subr.bf16.mxu0 0
      %3031 = vmatpush1.bf16.msra.mxu0 0
      %3032 = vmatprep.subr.bf16.mxu0 0
      %3033 = vmatpush1.bf16.msra.mxu0 0
      %3034 = vmatprep.mubr.bf16.mxu0 0
      %3035 = vmatmul.mubr.bf16.gmra.mrb[0].mxu0 %v828
      %v3036 = vpop.f32.mrb[0].mxu0
      %v3037 = vadd.f32 0.0, %v3036
      %v3038 = vpop.f32.mrb[0].mxu0
      %v3039 = vpop.f32.mrb[0].mxu0
      %v3040 = vadd.f32 0.0, %v3039
      %v3041 = vpop.f32.mrb[0].mxu0
      %3042 = vmatprep.mubr.bf16.mxu0 0
      %3043 = vmatmul.mubr.bf16.gmra.mrb[0].mxu0 %v829
      %v3044 = vpop.f32.mrb[0].mxu0
      %v3045 = vadd.f32 0.0, %v3044
      %v3046 = vpop.f32.mrb[0].mxu0
      %v3047 = vpop.f32.mrb[0].mxu0
      %v3048 = vadd.f32 0.0, %v3047
      %v3049 = vpop.f32.mrb[0].mxu0
      %3050 = vmatprep.mubr.bf16.mxu0 0
      %3051 = vmatmul.mubr.bf16.gmra.mrb[0].mxu0 %v830
      %v3052 = vpop.f32.mrb[0].mxu0
      %v3053 = vadd.f32 0.0, %v3052
      %v3054 = vpop.f32.mrb[0].mxu0
      %v3055 = vpop.f32.mrb[0].mxu0
      %v3056 = vadd.f32 0.0, %v3055
      %v3057 = vpop.f32.mrb[0].mxu0
      %3058 = vmatprep.mubr.bf16.mxu0 0
      %3059 = vmatmul.mubr.bf16.gmra.mrb[0].mxu0 %v831
      %v3060 = vpop.f32.mrb[0].mxu0
      %v3061 = vadd.f32 0.0, %v3060
      %v3062 = vpop.f32.mrb[0].mxu0
      %v3063 = vpop.f32.mrb[0].mxu0
      %v3064 = vadd.f32 0.0, %v3063
      %v3065 = vpop.f32.mrb[0].mxu0
      %3066 = vmatprep.mubr.bf16.mxu0 0
      %3067 = vmatmul.mubr.bf16.gmra.mrb[0].mxu0 %v832
      %v3068 = vpop.f32.mrb[0].mxu0
      %v3069 = vadd.f32 0.0, %v3068
      %v3070 = vpop.f32.mrb[0].mxu0
      %v3071 = vpop.f32.mrb[0].mxu0
      %v3072 = vadd.f32 0.0, %v3071
      %v3073 = vpop.f32.mrb[0].mxu0
      %3074 = vmatprep.mubr.bf16.mxu0 0
      %3075 = vmatmul.mubr.bf16.gmra.mrb[0].mxu0 %v833
      %v3076 = vpop.f32.mrb[0].mxu0
      %v3077 = vadd.f32 0.0, %v3076
      %v3078 = vpop.f32.mrb[0].mxu0
      %v3079 = vpop.f32.mrb[0].mxu0
      %v3080 = vadd.f32 0.0, %v3079
      %v3081 = vpop.f32.mrb[0].mxu0
      %3082 = vmatprep.mubr.bf16.mxu0 0
      %3083 = vmatmul.mubr.bf16.gmra.mrb[0].mxu0 %v834
      %v3084 = vpop.f32.mrb[0].mxu0
      %v3085 = vadd.f32 0.0, %v3084
      %v3086 = vpop.f32.mrb[0].mxu0
      %v3087 = vpop.f32.mrb[0].mxu0
      %v3088 = vadd.f32 0.0, %v3087
      %v3089 = vpop.f32.mrb[0].mxu0
      %3090 = vmatprep.mubr.bf16.mxu0 0
      %3091 = vmatmul.mubr.bf16.gmra.mrb[0].mxu0 %v835
      %v3092 = vpop.f32.mrb[0].mxu0
      %v3093 = vadd.f32 0.0, %v3092
      %v3094 = vpop.f32.mrb[0].mxu0
      %v3095 = vpop.f32.mrb[0].mxu0
      %v3096 = vadd.f32 0.0, %v3095
      %v3097 = vpop.f32.mrb[0].mxu0
      %3098 = vmatprep.mubr.bf16.mxu0 0
      %3099 = vmatmul.mubr.bf16.gmra.mrb[0].mxu0 %v836
      %v3100 = vpop.f32.mrb[0].mxu0
      %v3101 = vadd.f32 0.0, %v3100
      %v3102 = vpop.f32.mrb[0].mxu0
      %v3103 = vpop.f32.mrb[0].mxu0
      %v3104 = vadd.f32 0.0, %v3103
      %v3105 = vpop.f32.mrb[0].mxu0
      %3106 = vmatprep.mubr.bf16.mxu0 0
      %3107 = vmatmul.mubr.bf16.gmra.mrb[0].mxu0 %v837
      %v3108 = vpop.f32.mrb[0].mxu0
      %v3109 = vadd.f32 0.0, %v3108
      %v3110 = vpop.f32.mrb[0].mxu0
      %v3111 = vpop.f32.mrb[0].mxu0
      %v3112 = vadd.f32 0.0, %v3111
      %v3113 = vpop.f32.mrb[0].mxu0
      %3114 = vmatprep.mubr.bf16.mxu0 0
      %3115 = vmatmul.mubr.bf16.gmra.mrb[0].mxu0 %v838
      %v3116 = vpop.f32.mrb[0].mxu0
      %v3117 = vadd.f32 0.0, %v3116
      %v3118 = vpop.f32.mrb[0].mxu0
      %v3119 = vpop.f32.mrb[0].mxu0
      %v3120 = vadd.f32 0.0, %v3119
      %v3121 = vpop.f32.mrb[0].mxu0
      %3122 = vmatprep.mubr.bf16.mxu0 0
      %3123 = vmatmul.mubr.bf16.gmra.mrb[0].mxu0 %v839
      %v3124 = vpop.f32.mrb[0].mxu0
      %v3125 = vadd.f32 0.0, %v3124
      %v3126 = vpop.f32.mrb[0].mxu0
      %v3127 = vpop.f32.mrb[0].mxu0
      %v3128 = vadd.f32 0.0, %v3127
      %v3129 = vpop.f32.mrb[0].mxu0
      %3130 = vmatprep.mubr.bf16.mxu0 0
      %3131 = vmatmul.mubr.bf16.gmra.mrb[0].mxu0 %v840
      %v3132 = vpop.f32.mrb[0].mxu0
      %v3133 = vadd.f32 0.0, %v3132
      %v3134 = vpop.f32.mrb[0].mxu0
      %v3135 = vpop.f32.mrb[0].mxu0
      %v3136 = vadd.f32 0.0, %v3135
      %v3137 = vpop.f32.mrb[0].mxu0
      %3138 = vmatprep.mubr.bf16.mxu0 0
      %3139 = vmatmul.mubr.bf16.gmra.mrb[0].mxu0 %v841
      %v3140 = vpop.f32.mrb[0].mxu0
      %v3141 = vadd.f32 0.0, %v3140
      %v3142 = vpop.f32.mrb[0].mxu0
      %v3143 = vpop.f32.mrb[0].mxu0
      %v3144 = vadd.f32 0.0, %v3143
      %v3145 = vpop.f32.mrb[0].mxu0
      %3146 = vmatprep.mubr.bf16.mxu0 0
      %3147 = vmatmul.mubr.bf16.gmra.mrb[0].mxu0 %v2132
      %v3148 = vpop.f32.mrb[0].mxu0
      %v3149 = vadd.f32 0.0, %v3148
      %v3150 = vpop.f32.mrb[0].mxu0
      %v3151 = vpop.f32.mrb[0].mxu0
      %v3152 = vadd.f32 0.0, %v3151
      %v3153 = vpop.f32.mrb[0].mxu0
      %3154 = vmatprep.mubr.bf16.mxu0 0
      %3155 = vmatmul.mubr.bf16.gmra.mrb[0].mxu0 %v2952
      %v3156 = vpop.f32.mrb[0].mxu0
      %v3157 = vadd.f32 0.0, %v3156
      %v3158 = vpop.f32.mrb[0].mxu0
      %v3159 = vpop.f32.mrb[0].mxu0
      %v3160 = vadd.f32 0.0, %v3159
      %v3161 = vpop.f32.mrb[0].mxu0
      %3162 = vdwg.mxu0
      %v3163 = vadd.f32 %v2877, %v3037
      %v3164 = vadd.f32 %v2878, %v3040
      %v3165 = vadd.f32 %v2879, %v3045
      %v3166 = vadd.f32 %v2880, %v3048
      %v3167 = vadd.f32 %v2881, %v3053
      %v3168 = vadd.f32 %v2882, %v3056
      %v3169 = vadd.f32 %v2883, %v3061
      %v3170 = vadd.f32 %v2884, %v3064
      %v3171 = vadd.f32 %v2885, %v3069
      %v3172 = vadd.f32 %v2886, %v3072
      %v3173 = vadd.f32 %v2887, %v3077
      %v3174 = vadd.f32 %v2888, %v3080
      %v3175 = vadd.f32 %v2889, %v3085
      %v3176 = vadd.f32 %v2890, %v3088
      %v3177 = vadd.f32 %v2891, %v3093
      %v3178 = vadd.f32 %v2892, %v3096
      %v3179 = vadd.f32 %v2893, %v3101
      %v3180 = vadd.f32 %v2894, %v3104
      %v3181 = vadd.f32 %v2895, %v3109
      %v3182 = vadd.f32 %v2896, %v3112
      %v3183 = vadd.f32 %v2897, %v3117
      %v3184 = vadd.f32 %v2898, %v3120
      %v3185 = vadd.f32 %v2899, %v3125
      %v3186 = vadd.f32 %v2900, %v3128
      %v3187 = vadd.f32 %v2901, %v3133
      %v3188 = vadd.f32 %v2902, %v3136
      %v3189 = vadd.f32 %v2903, %v3141
      %v3190 = vadd.f32 %v2904, %v3144
      %v3191 = vadd.f32 %v2905, %v3149
      %v3192 = vadd.f32 %v2906, %v3152
      %v3193 = vadd.f32 %v2907, %v3157
      %v3194 = vadd.f32 %v2908, %v3160
      %v3196 = vrot.slane %v371, 5
      %v3197 = vrot.slane %v3196, 4
      %v3198 = vrot.slane %v372, 5
      %v3199 = vsel %vm1390, %v3197, %v3198
      %v3200 = vrot.slane %v3198, 4
      %v3201 = vrot.slane %v373, 5
      %v3202 = vsel %vm1390, %v3200, %v3201
      %s3203 = scalar_lea.vmem %s1, 512
      %v3204 = vld [vmem:[%s3203] sm:$0xf]
      %v3205 = vld [vmem:[%s3203 + $0x4] sm:$0xf]
      %v3206 = vld [vmem:[%s3203 + $0x8] sm:$0xf]
      %v3207 = vld [vmem:[%s3203 + $0xc] sm:$0xf]
      %v3208 = vld [vmem:[%s3203 + $0x10] sm:$0xf]
      %v3209 = vld [vmem:[%s3203 + $0x14] sm:$0xf]
      %v3210 = vld [vmem:[%s3203 + $0x18] sm:$0xf]
      %v3211 = vld [vmem:[%s3203 + $0x1c] sm:$0xf]
      %v3212 = vld [vmem:[%s3203 + $0x20] sm:$0xf]
      %v3213 = vld [vmem:[%s3203 + $0x24] sm:$0xf]
      %v3214 = vld [vmem:[%s3203 + $0x28] sm:$0xf]
      %v3215 = vld [vmem:[%s3203 + $0x2c] sm:$0xf]
      %v3216 = vld [vmem:[%s3203 + $0x30] sm:$0xf]
      %v3217 = vld [vmem:[%s3203 + $0x34] sm:$0xf]
      %v3218 = vld [vmem:[%s3203 + $0x38] sm:$0xf]
      %v3219 = vld [vmem:[%s3203 + $0x3c] sm:$0xf]
      %v3220 = vunpack.c.l.b16 %v3199
      %v3221 = vunpack.c.l.b16 %v3202
      %v3222 = vpack.c.b16 %v3221, %v3220
      %v3240 = vunpack.c.l.b16 %v3204
      %v3241 = vunpack.c.l.b16 %v3205
      %v3242 = vunpack.c.l.b16 %v3206
      %v3243 = vunpack.c.l.b16 %v3207
      %v3244 = vunpack.c.l.b16 %v3208
      %v3245 = vunpack.c.l.b16 %v3209
      %v3246 = vunpack.c.l.b16 %v3210
      %v3247 = vunpack.c.l.b16 %v3211
      %v3248 = vunpack.c.l.b16 %v3212
      %v3249 = vunpack.c.l.b16 %v3213
      %v3250 = vunpack.c.l.b16 %v3214
      %v3251 = vunpack.c.l.b16 %v3215
      %v3252 = vunpack.c.l.b16 %v3216
      %v3253 = vunpack.c.l.b16 %v3217
      %v3254 = vunpack.c.l.b16 %v3218
      %v3255 = vunpack.c.l.b16 %v3219
      %v3256 = vpack.c.b16 %v3241, %v3240
      %v3257 = vpack.c.b16 %v3243, %v3242
      %v3258 = vpack.c.b16 %v3245, %v3244
      %v3259 = vpack.c.b16 %v3247, %v3246
      %v3260 = vpack.c.b16 %v3249, %v3248
      %v3261 = vpack.c.b16 %v3251, %v3250
      %v3262 = vpack.c.b16 %v3253, %v3252
      %v3263 = vpack.c.b16 %v3255, %v3254
      %3272 = vmatprep.subr.bf16.mxu0 0
      %3273 = vmatpush1.bf16.msra.mxu0 %v3256
      %3274 = vmatprep.subr.bf16.mxu0 0
      %3275 = vmatpush1.bf16.msra.mxu0 %v3257
      %3276 = vmatprep.subr.bf16.mxu0 0
      %3277 = vmatpush1.bf16.msra.mxu0 %v3258
      %3278 = vmatprep.subr.bf16.mxu0 0
      %3279 = vmatpush1.bf16.msra.mxu0 %v3259
      %3280 = vmatprep.subr.bf16.mxu0 0
      %3281 = vmatpush1.bf16.msra.mxu0 %v3260
      %3282 = vmatprep.subr.bf16.mxu0 0
      %3283 = vmatpush1.bf16.msra.mxu0 %v3261
      %3284 = vmatprep.subr.bf16.mxu0 0
      %3285 = vmatpush1.bf16.msra.mxu0 %v3262
      %3286 = vmatprep.subr.bf16.mxu0 0
      %3287 = vmatpush1.bf16.msra.mxu0 %v3263
      %3288 = vmatprep.subr.bf16.mxu0 0
      %3289 = vmatpush1.bf16.msra.mxu0 0
      %3290 = vmatprep.subr.bf16.mxu0 0
      %3291 = vmatpush1.bf16.msra.mxu0 0
      %3292 = vmatprep.subr.bf16.mxu0 0
      %3293 = vmatpush1.bf16.msra.mxu0 0
      %3294 = vmatprep.subr.bf16.mxu0 0
      %3295 = vmatpush1.bf16.msra.mxu0 0
      %3296 = vmatprep.subr.bf16.mxu0 0
      %3297 = vmatpush1.bf16.msra.mxu0 0
      %3298 = vmatprep.subr.bf16.mxu0 0
      %3299 = vmatpush1.bf16.msra.mxu0 0
      %3300 = vmatprep.subr.bf16.mxu0 0
      %3301 = vmatpush1.bf16.msra.mxu0 0
      %3302 = vmatprep.subr.bf16.mxu0 0
      %3303 = vmatpush1.bf16.msra.mxu0 0
      %3304 = vmatprep.mubr.bf16.mxu0 0
      %3305 = vmatmul.mubr.bf16.gmra.mrb[0].mxu0 %v1554
      %v3306 = vpop.f32.mrb[0].mxu0
      %v3307 = vadd.f32 0.0, %v3306
      %v3308 = vpop.f32.mrb[0].mxu0
      %v3309 = vpop.f32.mrb[0].mxu0
      %v3310 = vadd.f32 0.0, %v3309
      %v3311 = vpop.f32.mrb[0].mxu0
      %3312 = vmatprep.mubr.bf16.mxu0 0
      %3313 = vmatmul.mubr.bf16.gmra.mrb[0].mxu0 %v1555
      %v3314 = vpop.f32.mrb[0].mxu0
      %v3315 = vadd.f32 0.0, %v3314
      %v3316 = vpop.f32.mrb[0].mxu0
      %v3317 = vpop.f32.mrb[0].mxu0
      %v3318 = vadd.f32 0.0, %v3317
      %v3319 = vpop.f32.mrb[0].mxu0
      %3320 = vmatprep.mubr.bf16.mxu0 0
      %3321 = vmatmul.mubr.bf16.gmra.mrb[0].mxu0 %v1556
      %v3322 = vpop.f32.mrb[0].mxu0
      %v3323 = vadd.f32 0.0, %v3322
      %v3324 = vpop.f32.mrb[0].mxu0
      %v3325 = vpop.f32.mrb[0].mxu0
      %v3326 = vadd.f32 0.0, %v3325
      %v3327 = vpop.f32.mrb[0].mxu0
      %3328 = vmatprep.mubr.bf16.mxu0 0
      %3329 = vmatmul.mubr.bf16.gmra.mrb[0].mxu0 %v1557
      %v3330 = vpop.f32.mrb[0].mxu0
      %v3331 = vadd.f32 0.0, %v3330
      %v3332 = vpop.f32.mrb[0].mxu0
      %v3333 = vpop.f32.mrb[0].mxu0
      %v3334 = vadd.f32 0.0, %v3333
      %v3335 = vpop.f32.mrb[0].mxu0
      %3336 = vmatprep.mubr.bf16.mxu0 0
      %3337 = vmatmul.mubr.bf16.gmra.mrb[0].mxu0 %v1558
      %v3338 = vpop.f32.mrb[0].mxu0
      %v3339 = vadd.f32 0.0, %v3338
      %v3340 = vpop.f32.mrb[0].mxu0
      %v3341 = vpop.f32.mrb[0].mxu0
      %v3342 = vadd.f32 0.0, %v3341
      %v3343 = vpop.f32.mrb[0].mxu0
      %3344 = vmatprep.mubr.bf16.mxu0 0
      %3345 = vmatmul.mubr.bf16.gmra.mrb[0].mxu0 %v1559
      %v3346 = vpop.f32.mrb[0].mxu0
      %v3347 = vadd.f32 0.0, %v3346
      %v3348 = vpop.f32.mrb[0].mxu0
      %v3349 = vpop.f32.mrb[0].mxu0
      %v3350 = vadd.f32 0.0, %v3349
      %v3351 = vpop.f32.mrb[0].mxu0
      %3352 = vmatprep.mubr.bf16.mxu0 0
      %3353 = vmatmul.mubr.bf16.gmra.mrb[0].mxu0 %v1560
      %v3354 = vpop.f32.mrb[0].mxu0
      %v3355 = vadd.f32 0.0, %v3354
      %v3356 = vpop.f32.mrb[0].mxu0
      %v3357 = vpop.f32.mrb[0].mxu0
      %v3358 = vadd.f32 0.0, %v3357
      %v3359 = vpop.f32.mrb[0].mxu0
      %3360 = vmatprep.mubr.bf16.mxu0 0
      %3361 = vmatmul.mubr.bf16.gmra.mrb[0].mxu0 %v1561
      %v3362 = vpop.f32.mrb[0].mxu0
      %v3363 = vadd.f32 0.0, %v3362
      %v3364 = vpop.f32.mrb[0].mxu0
      %v3365 = vpop.f32.mrb[0].mxu0
      %v3366 = vadd.f32 0.0, %v3365
      %v3367 = vpop.f32.mrb[0].mxu0
      %3368 = vmatprep.mubr.bf16.mxu0 0
      %3369 = vmatmul.mubr.bf16.gmra.mrb[0].mxu0 %v1562
      %v3370 = vpop.f32.mrb[0].mxu0
      %v3371 = vadd.f32 0.0, %v3370
      %v3372 = vpop.f32.mrb[0].mxu0
      %v3373 = vpop.f32.mrb[0].mxu0
      %v3374 = vadd.f32 0.0, %v3373
      %v3375 = vpop.f32.mrb[0].mxu0
      %3376 = vmatprep.mubr.bf16.mxu0 0
      %3377 = vmatmul.mubr.bf16.gmra.mrb[0].mxu0 %v1563
      %v3378 = vpop.f32.mrb[0].mxu0
      %v3379 = vadd.f32 0.0, %v3378
      %v3380 = vpop.f32.mrb[0].mxu0
      %v3381 = vpop.f32.mrb[0].mxu0
      %v3382 = vadd.f32 0.0, %v3381
      %v3383 = vpop.f32.mrb[0].mxu0
      %3384 = vmatprep.mubr.bf16.mxu0 0
      %3385 = vmatmul.mubr.bf16.gmra.mrb[0].mxu0 %v1564
      %v3386 = vpop.f32.mrb[0].mxu0
      %v3387 = vadd.f32 0.0, %v3386
      %v3388 = vpop.f32.mrb[0].mxu0
      %v3389 = vpop.f32.mrb[0].mxu0
      %v3390 = vadd.f32 0.0, %v3389
      %v3391 = vpop.f32.mrb[0].mxu0
      %3392 = vmatprep.mubr.bf16.mxu0 0
      %3393 = vmatmul.mubr.bf16.gmra.mrb[0].mxu0 %v1565
      %v3394 = vpop.f32.mrb[0].mxu0
      %v3395 = vadd.f32 0.0, %v3394
      %v3396 = vpop.f32.mrb[0].mxu0
      %v3397 = vpop.f32.mrb[0].mxu0
      %v3398 = vadd.f32 0.0, %v3397
      %v3399 = vpop.f32.mrb[0].mxu0
      %3400 = vmatprep.mubr.bf16.mxu0 0
      %3401 = vmatmul.mubr.bf16.gmra.mrb[0].mxu0 %v1566
      %v3402 = vpop.f32.mrb[0].mxu0
      %v3403 = vadd.f32 0.0, %v3402
      %v3404 = vpop.f32.mrb[0].mxu0
      %v3405 = vpop.f32.mrb[0].mxu0
      %v3406 = vadd.f32 0.0, %v3405
      %v3407 = vpop.f32.mrb[0].mxu0
      %3408 = vmatprep.mubr.bf16.mxu0 0
      %3409 = vmatmul.mubr.bf16.gmra.mrb[0].mxu0 %v1567
      %v3410 = vpop.f32.mrb[0].mxu0
      %v3411 = vadd.f32 0.0, %v3410
      %v3412 = vpop.f32.mrb[0].mxu0
      %v3413 = vpop.f32.mrb[0].mxu0
      %v3414 = vadd.f32 0.0, %v3413
      %v3415 = vpop.f32.mrb[0].mxu0
      %3416 = vmatprep.mubr.bf16.mxu0 0
      %3417 = vmatmul.mubr.bf16.gmra.mrb[0].mxu0 %v2402
      %v3418 = vpop.f32.mrb[0].mxu0
      %v3419 = vadd.f32 0.0, %v3418
      %v3420 = vpop.f32.mrb[0].mxu0
      %v3421 = vpop.f32.mrb[0].mxu0
      %v3422 = vadd.f32 0.0, %v3421
      %v3423 = vpop.f32.mrb[0].mxu0
      %3424 = vmatprep.mubr.bf16.mxu0 0
      %3425 = vmatmul.mubr.bf16.gmra.mrb[0].mxu0 %v3222
      %v3426 = vpop.f32.mrb[0].mxu0
      %v3427 = vadd.f32 0.0, %v3426
      %v3428 = vpop.f32.mrb[0].mxu0
      %v3429 = vpop.f32.mrb[0].mxu0
      %v3430 = vadd.f32 0.0, %v3429
      %v3431 = vpop.f32.mrb[0].mxu0
      %3432 = vdwg.mxu0
      %v3433 = vadd.f32 %v3163, %v3307
      %v3434 = vadd.f32 %v3164, %v3310
      %v3435 = vadd.f32 %v3165, %v3315
      %v3436 = vadd.f32 %v3166, %v3318
      %v3437 = vadd.f32 %v3167, %v3323
      %v3438 = vadd.f32 %v3168, %v3326
      %v3439 = vadd.f32 %v3169, %v3331
      %v3440 = vadd.f32 %v3170, %v3334
      %v3441 = vadd.f32 %v3171, %v3339
      %v3442 = vadd.f32 %v3172, %v3342
      %v3443 = vadd.f32 %v3173, %v3347
      %v3444 = vadd.f32 %v3174, %v3350
      %v3445 = vadd.f32 %v3175, %v3355
      %v3446 = vadd.f32 %v3176, %v3358
      %v3447 = vadd.f32 %v3177, %v3363
      %v3448 = vadd.f32 %v3178, %v3366
      %v3449 = vadd.f32 %v3179, %v3371
      %v3450 = vadd.f32 %v3180, %v3374
      %v3451 = vadd.f32 %v3181, %v3379
      %v3452 = vadd.f32 %v3182, %v3382
      %v3453 = vadd.f32 %v3183, %v3387
      %v3454 = vadd.f32 %v3184, %v3390
      %v3455 = vadd.f32 %v3185, %v3395
      %v3456 = vadd.f32 %v3186, %v3398
      %v3457 = vadd.f32 %v3187, %v3403
      %v3458 = vadd.f32 %v3188, %v3406
      %v3459 = vadd.f32 %v3189, %v3411
      %v3460 = vadd.f32 %v3190, %v3414
      %v3461 = vadd.f32 %v3191, %v3419
      %v3462 = vadd.f32 %v3192, %v3422
      %v3463 = vadd.f32 %v3193, %v3427
      %v3464 = vadd.f32 %v3194, %v3430
      %v3465 = vld [vmem:[%s2] sm:$0x1]
      %v3467 = vlaneseq
      %v3468 = vshrl.u32 %v3467, 7
      %v3469 = vsub.s32 0, %v3468
      %v3470 = vrot.slane %v3465, %v3469
      %v3472 = vadd.f32 %v3433, %v3470
      %v3473 = vadd.f32 %v3434, %v3470
      %v3474 = vadd.f32 %v3435, %v3470
      %v3475 = vadd.f32 %v3436, %v3470
      %v3476 = vadd.f32 %v3437, %v3470
      %v3477 = vadd.f32 %v3438, %v3470
      %v3478 = vadd.f32 %v3439, %v3470
      %v3479 = vadd.f32 %v3440, %v3470
      %v3480 = vadd.f32 %v3441, %v3470
      %v3481 = vadd.f32 %v3442, %v3470
      %v3482 = vadd.f32 %v3443, %v3470
      %v3483 = vadd.f32 %v3444, %v3470
      %v3484 = vadd.f32 %v3445, %v3470
      %v3485 = vadd.f32 %v3446, %v3470
      %v3486 = vadd.f32 %v3447, %v3470
      %v3487 = vadd.f32 %v3448, %v3470
      %v3488 = vadd.f32 %v3449, %v3470
      %v3489 = vadd.f32 %v3450, %v3470
      %v3490 = vadd.f32 %v3451, %v3470
      %v3491 = vadd.f32 %v3452, %v3470
      %v3492 = vadd.f32 %v3453, %v3470
      %v3493 = vadd.f32 %v3454, %v3470
      %v3494 = vadd.f32 %v3455, %v3470
      %v3495 = vadd.f32 %v3456, %v3470
      %v3496 = vadd.f32 %v3457, %v3470
      %v3497 = vadd.f32 %v3458, %v3470
      %v3498 = vadd.f32 %v3459, %v3470
      %v3499 = vadd.f32 %v3460, %v3470
      %v3500 = vadd.f32 %v3461, %v3470
      %v3501 = vadd.f32 %v3462, %v3470
      %v3502 = vadd.f32 %v3463, %v3470
      %v3503 = vadd.f32 %v3464, %v3470
      %v3504 = vadd.f32 %v3472, %v3473
      %v3505 = vadd.f32 %v3504, %v3474
      %v3506 = vadd.f32 %v3505, %v3475
      %v3507 = vadd.f32 %v3506, %v3476
      %v3508 = vadd.f32 %v3507, %v3477
      %v3509 = vadd.f32 %v3508, %v3478
      %v3510 = vadd.f32 %v3509, %v3479
      %v3511 = vadd.f32 %v3510, %v3480
      %v3512 = vadd.f32 %v3511, %v3481
      %v3513 = vadd.f32 %v3512, %v3482
      %v3514 = vadd.f32 %v3513, %v3483
      %v3515 = vadd.f32 %v3514, %v3484
      %v3516 = vadd.f32 %v3515, %v3485
      %v3517 = vadd.f32 %v3516, %v3486
      %v3518 = vadd.f32 %v3517, %v3487
      %v3519 = vadd.f32 %v3518, %v3488
      %v3520 = vadd.f32 %v3519, %v3489
      %v3521 = vadd.f32 %v3520, %v3490
      %v3522 = vadd.f32 %v3521, %v3491
      %v3523 = vadd.f32 %v3522, %v3492
      %v3524 = vadd.f32 %v3523, %v3493
      %v3525 = vadd.f32 %v3524, %v3494
      %v3526 = vadd.f32 %v3525, %v3495
      %v3527 = vadd.f32 %v3526, %v3496
      %v3528 = vadd.f32 %v3527, %v3497
      %v3529 = vadd.f32 %v3528, %v3498
      %v3530 = vadd.f32 %v3529, %v3499
      %v3531 = vadd.f32 %v3530, %v3500
      %v3532 = vadd.f32 %v3531, %v3501
      %v3533 = vadd.f32 %v3532, %v3502
      %v3534 = vadd.f32 %v3533, %v3503
      %v3535 = vrot.slane %v3534, 4
      %v3536 = vadd.f32 %v3534, %v3535
      %v3537 = vrot.slane %v3536, 2
      %v3538 = vadd.f32 %v3536, %v3537
      %v3539 = vrot.slane %v3538, 1
      %v3540 = vadd.f32 %v3538, %v3539
      %3541 = vst [vmem:[%s317] sm:$0x1] %v3540
      %v3542 = vmul.f32 %v3472, %v3472
      %v3543 = vmul.f32 %v3473, %v3473
      %v3544 = vmul.f32 %v3474, %v3474
      %v3545 = vmul.f32 %v3475, %v3475
      %v3546 = vmul.f32 %v3476, %v3476
      %v3547 = vmul.f32 %v3477, %v3477
      %v3548 = vmul.f32 %v3478, %v3478
      %v3549 = vmul.f32 %v3479, %v3479
      %v3550 = vmul.f32 %v3480, %v3480
      %v3551 = vmul.f32 %v3481, %v3481
      %v3552 = vmul.f32 %v3482, %v3482
      %v3553 = vmul.f32 %v3483, %v3483
      %v3554 = vmul.f32 %v3484, %v3484
      %v3555 = vmul.f32 %v3485, %v3485
      %v3556 = vmul.f32 %v3486, %v3486
      %v3557 = vmul.f32 %v3487, %v3487
      %v3558 = vmul.f32 %v3488, %v3488
      %v3559 = vmul.f32 %v3489, %v3489
      %v3560 = vmul.f32 %v3490, %v3490
      %v3561 = vmul.f32 %v3491, %v3491
      %v3562 = vmul.f32 %v3492, %v3492
      %v3563 = vmul.f32 %v3493, %v3493
      %v3564 = vmul.f32 %v3494, %v3494
      %v3565 = vmul.f32 %v3495, %v3495
      %v3566 = vmul.f32 %v3496, %v3496
      %v3567 = vmul.f32 %v3497, %v3497
      %v3568 = vmul.f32 %v3498, %v3498
      %v3569 = vmul.f32 %v3499, %v3499
      %v3570 = vmul.f32 %v3500, %v3500
      %v3571 = vmul.f32 %v3501, %v3501
      %v3572 = vmul.f32 %v3502, %v3502
      %v3573 = vmul.f32 %v3503, %v3503
      %v3574 = vadd.f32 %v3542, %v3543
      %v3575 = vadd.f32 %v3574, %v3544
      %v3576 = vadd.f32 %v3575, %v3545
      %v3577 = vadd.f32 %v3576, %v3546
      %v3578 = vadd.f32 %v3577, %v3547
      %v3579 = vadd.f32 %v3578, %v3548
      %v3580 = vadd.f32 %v3579, %v3549
      %v3581 = vadd.f32 %v3580, %v3550
      %v3582 = vadd.f32 %v3581, %v3551
      %v3583 = vadd.f32 %v3582, %v3552
      %v3584 = vadd.f32 %v3583, %v3553
      %v3585 = vadd.f32 %v3584, %v3554
      %v3586 = vadd.f32 %v3585, %v3555
      %v3587 = vadd.f32 %v3586, %v3556
      %v3588 = vadd.f32 %v3587, %v3557
      %v3589 = vadd.f32 %v3588, %v3558
      %v3590 = vadd.f32 %v3589, %v3559
      %v3591 = vadd.f32 %v3590, %v3560
      %v3592 = vadd.f32 %v3591, %v3561
      %v3593 = vadd.f32 %v3592, %v3562
      %v3594 = vadd.f32 %v3593, %v3563
      %v3595 = vadd.f32 %v3594, %v3564
      %v3596 = vadd.f32 %v3595, %v3565
      %v3597 = vadd.f32 %v3596, %v3566
      %v3598 = vadd.f32 %v3597, %v3567
      %v3599 = vadd.f32 %v3598, %v3568
      %v3600 = vadd.f32 %v3599, %v3569
      %v3601 = vadd.f32 %v3600, %v3570
      %v3602 = vadd.f32 %v3601, %v3571
      %v3603 = vadd.f32 %v3602, %v3572
      %v3604 = vadd.f32 %v3603, %v3573
      %v3605 = vrot.slane %v3604, 4
      %v3606 = vadd.f32 %v3604, %v3605
      %v3607 = vrot.slane %v3606, 2
      %v3608 = vadd.f32 %v3606, %v3607
      %v3609 = vrot.slane %v3608, 1
      %v3610 = vadd.f32 %v3608, %v3609
      %3611 = vst [vmem:[%s317 + $0x1] sm:$0x1] %v3610
      %v3612 = vpack.c.bf16 %v3473, %v3472
      %v3613 = vpack.c.bf16 %v3475, %v3474
      %v3614 = vpack.c.bf16 %v3477, %v3476
      %v3615 = vpack.c.bf16 %v3479, %v3478
      %v3616 = vpack.c.bf16 %v3481, %v3480
      %v3617 = vpack.c.bf16 %v3483, %v3482
      %v3618 = vpack.c.bf16 %v3485, %v3484
      %v3619 = vpack.c.bf16 %v3487, %v3486
      %v3620 = vpack.c.bf16 %v3489, %v3488
      %v3621 = vpack.c.bf16 %v3491, %v3490
      %v3622 = vpack.c.bf16 %v3493, %v3492
      %v3623 = vpack.c.bf16 %v3495, %v3494
      %v3624 = vpack.c.bf16 %v3497, %v3496
      %v3625 = vpack.c.bf16 %v3499, %v3498
      %v3626 = vpack.c.bf16 %v3501, %v3500
      %v3627 = vpack.c.bf16 %v3503, %v3502
      %v3644 = vunpack.c.l.b16 %v3612
      %v3645 = vunpack.c.h.b16 %v3612
      %v3646 = vunpack.c.l.b16 %v3613
      %v3647 = vunpack.c.h.b16 %v3613
      %v3648 = vunpack.c.l.b16 %v3614
      %v3649 = vunpack.c.h.b16 %v3614
      %v3650 = vunpack.c.l.b16 %v3615
      %v3651 = vunpack.c.h.b16 %v3615
      %v3652 = vunpack.c.l.b16 %v3616
      %v3653 = vunpack.c.h.b16 %v3616
      %v3654 = vunpack.c.l.b16 %v3617
      %v3655 = vunpack.c.h.b16 %v3617
      %v3656 = vunpack.c.l.b16 %v3618
      %v3657 = vunpack.c.h.b16 %v3618
      %v3658 = vunpack.c.l.b16 %v3619
      %v3659 = vunpack.c.h.b16 %v3619
      %v3660 = vunpack.c.l.b16 %v3620
      %v3661 = vunpack.c.h.b16 %v3620
      %v3662 = vunpack.c.l.b16 %v3621
      %v3663 = vunpack.c.h.b16 %v3621
      %v3664 = vunpack.c.l.b16 %v3622
      %v3665 = vunpack.c.h.b16 %v3622
      %v3666 = vunpack.c.l.b16 %v3623
      %v3667 = vunpack.c.h.b16 %v3623
      %v3668 = vunpack.c.l.b16 %v3624
      %v3669 = vunpack.c.h.b16 %v3624
      %v3670 = vunpack.c.l.b16 %v3625
      %v3671 = vunpack.c.h.b16 %v3625
      %v3672 = vunpack.c.l.b16 %v3626
      %v3673 = vunpack.c.h.b16 %v3626
      %v3674 = vunpack.c.l.b16 %v3627
      %v3675 = vunpack.c.h.b16 %v3627
      %v3676 = vpack.c.b16 %v3644, %v3644
      %v3677 = vpack.c.b16 %v3645, %v3645
      %v3678 = vpack.c.b16 %v3646, %v3646
      %v3679 = vpack.c.b16 %v3647, %v3647
      %v3680 = vpack.c.b16 %v3648, %v3648
      %v3681 = vpack.c.b16 %v3649, %v3649
      %v3682 = vpack.c.b16 %v3650, %v3650
      %v3683 = vpack.c.b16 %v3651, %v3651
      %v3684 = vpack.c.b16 %v3652, %v3652
      %v3685 = vpack.c.b16 %v3653, %v3653
      %v3686 = vpack.c.b16 %v3654, %v3654
      %v3687 = vpack.c.b16 %v3655, %v3655
      %v3688 = vpack.c.b16 %v3656, %v3656
      %v3689 = vpack.c.b16 %v3657, %v3657
      %v3690 = vpack.c.b16 %v3658, %v3658
      %v3691 = vpack.c.b16 %v3659, %v3659
      %v3692 = vpack.c.b16 %v3660, %v3660
      %v3693 = vpack.c.b16 %v3661, %v3661
      %v3694 = vpack.c.b16 %v3662, %v3662
      %v3695 = vpack.c.b16 %v3663, %v3663
      %v3696 = vpack.c.b16 %v3664, %v3664
      %v3697 = vpack.c.b16 %v3665, %v3665
      %v3698 = vpack.c.b16 %v3666, %v3666
      %v3699 = vpack.c.b16 %v3667, %v3667
      %v3700 = vpack.c.b16 %v3668, %v3668
      %v3701 = vpack.c.b16 %v3669, %v3669
      %v3702 = vpack.c.b16 %v3670, %v3670
      %v3703 = vpack.c.b16 %v3671, %v3671
      %v3704 = vpack.c.b16 %v3672, %v3672
      %v3705 = vpack.c.b16 %v3673, %v3673
      %v3706 = vpack.c.b16 %v3674, %v3674
      %v3707 = vpack.c.b16 %v3675, %v3675
      %3740 = vst [vmem:[%s311] sm:$0xf] %v3676
      %3741 = vst [vmem:[%s311 + $0x4] sm:$0xf] %v3677
      %3742 = vst [vmem:[%s311 + $0x8] sm:$0xf] %v3678
      %3743 = vst [vmem:[%s311 + $0xc] sm:$0xf] %v3679
      %3744 = vst [vmem:[%s311 + $0x10] sm:$0xf] %v3680
      %3745 = vst [vmem:[%s311 + $0x14] sm:$0xf] %v3681
      %3746 = vst [vmem:[%s311 + $0x18] sm:$0xf] %v3682
      %3747 = vst [vmem:[%s311 + $0x1c] sm:$0xf] %v3683
      %3748 = vst [vmem:[%s311 + $0x20] sm:$0xf] %v3684
      %3749 = vst [vmem:[%s311 + $0x24] sm:$0xf] %v3685
      %3750 = vst [vmem:[%s311 + $0x28] sm:$0xf] %v3686
      %3751 = vst [vmem:[%s311 + $0x2c] sm:$0xf] %v3687
      %3752 = vst [vmem:[%s311 + $0x30] sm:$0xf] %v3688
      %3753 = vst [vmem:[%s311 + $0x34] sm:$0xf] %v3689
      %3754 = vst [vmem:[%s311 + $0x38] sm:$0xf] %v3690
      %3755 = vst [vmem:[%s311 + $0x3c] sm:$0xf] %v3691
      %3756 = vst [vmem:[%s311 + $0x40] sm:$0xf] %v3692
      %3757 = vst [vmem:[%s311 + $0x44] sm:$0xf] %v3693
      %3758 = vst [vmem:[%s311 + $0x48] sm:$0xf] %v3694
      %3759 = vst [vmem:[%s311 + $0x4c] sm:$0xf] %v3695
      %3760 = vst [vmem:[%s311 + $0x50] sm:$0xf] %v3696
      %3761 = vst [vmem:[%s311 + $0x54] sm:$0xf] %v3697
      %3762 = vst [vmem:[%s311 + $0x58] sm:$0xf] %v3698
      %3763 = vst [vmem:[%s311 + $0x5c] sm:$0xf] %v3699
      %3764 = vst [vmem:[%s311 + $0x60] sm:$0xf] %v3700
      %3765 = vst [vmem:[%s311 + $0x64] sm:$0xf] %v3701
      %3766 = vst [vmem:[%s311 + $0x68] sm:$0xf] %v3702
      %3767 = vst [vmem:[%s311 + $0x6c] sm:$0xf] %v3703
      %3768 = vst [vmem:[%s311 + $0x70] sm:$0xf] %v3704
      %3769 = vst [vmem:[%s311 + $0x74] sm:$0xf] %v3705
      %3770 = vst [vmem:[%s311 + $0x78] sm:$0xf] %v3706
      %3771 = vst [vmem:[%s311 + $0x7c] sm:$0xf] %v3707
      %s3772 = sadd.s32 %s23, %s24
      %p3773 = scmp.lt.s32.totalorder %s3772, 1
      %s3774 = scalar_select %p3773, %s3772, 1
      %s3775 = smul.addr %s3774, 32
      %s3776 = smul.addr %s3775, 4
      %s3777 = scalar_lea.vmem %s6, %s3776
      %s3778 = sadd.s32 %s23, %s24
      %p3779 = scmp.lt.s32.totalorder %s3778, 1
      %s3780 = scalar_select %p3779, %s3778, 1
      %s3781 = smul.addr %s3780, 8
      %s3782 = scalar_lea.vmem %s7, %s3781
      // Predicated region
      $region45: #{up_forward.4} parent=43 // pred_check
        %p3783 = pneg %p184
      $region46: #{up_forward.4} parent=43 // pred_check_branch
        %3785 = sbr.rel (%p3783) target = $region48
      $region47: #{up_forward.4} parent=43 // pred_region
        %s3786 = sadd.s32 %s23, %s24
      $region48: #{up_forward.4} parent=43 // pred_fallthru
        _
      // Predicated region
      $region49: #{up_forward.4} parent=43 // pred_check
        %p3787 = pneg %p212
      $region50: #{up_forward.4} parent=43 // pred_check_branch
        %3789 = sbr.rel (%p3787) target = $region52
      $region51: #{up_forward.4} parent=43 // pred_region
        %s3790 = sadd.s32 %s23, %s24
      $region52: #{up_forward.4} parent=43 // pred_fallthru
        _
    $region44: #{up_forward.4} parent=5 // pred_fallthru
      _
    %p3791 = scmp.le.s32.totalorder 2, %s14
    // Predicated region
    $region53: #{up_forward.4} parent=5 // pred_check
      %p3792 = pneg %p3791
    $region54: #{up_forward.4} parent=5 // pred_check_branch
      %3794 = sbr.rel (%p3792) target = $region56
    $region55: #{up_forward.4} parent=5 // pred_region
      %s3795 = ssub.s32 %s14, 2
      // Predicated region
      $region57: #{up_forward.4} parent=55 // pred_check
        %p3796 = pneg %p190
      $region58: #{up_forward.4} parent=55 // pred_check_branch
        %3798 = sbr.rel (%p3796) target = $region60
      $region59: #{up_forward.4} parent=55 // pred_region
        %s3799 = sadd.s32 %s25, %s26
        %p3800 = scmp.lt.s32.totalorder %s3799, 1
        %s3801 = scalar_select %p3800, %s3799, 1
        %s3802 = smul.addr %s3801, 32
        %s3803 = smul.addr %s3802, 4
        %s3804 = scalar_lea.vmem %s6, %s3803
      $region60: #{up_forward.4} parent=55 // pred_fallthru
        _
      // Predicated region
      $region61: #{up_forward.4} parent=55 // pred_check
        %p3805 = pneg %p218
      $region62: #{up_forward.4} parent=55 // pred_check_branch
        %3807 = sbr.rel (%p3805) target = $region64
      $region63: #{up_forward.4} parent=55 // pred_region
        %s3808 = sadd.s32 %s25, %s26
        %p3809 = scmp.lt.s32.totalorder %s3808, 1
        %s3810 = scalar_select %p3809, %s3808, 1
        %s3811 = smul.addr %s3810, 8
        %s3812 = scalar_lea.vmem %s7, %s3811
      $region64: #{up_forward.4} parent=55 // pred_fallthru
        _
    $region56: #{up_forward.4} parent=5 // pred_fallthru
      _
  $region6: #{up_forward.4} parent=0 // loop_footer
    %s18 = sadd.s32 1, %s14
  $region7: #{up_forward.4} parent=0 // loop_footer_branch
    %13 = sbr.rel target = $region3
  $region8: #{up_forward.4} parent=0 // loop_exit
    _

// kernel: up_forward.5
$region0: #{up_forward.5}
  #allocation0 [shape = 'u32[]', space=smem, size = 0x4, offset = 0x4, fixed_abs, tag = 'smem constant byte address 0x4 - core index']
  #allocation1 [shape = 'u32[144,128]{1,0:T(1,128)}', space=vmem, size = 0x12000, scoped, tag = 'internal scratch']
  %s0 = inlined_call_operand.vmem [shape: bf16[2,18,18,128], index: 0, kind: input, shape index: {}]
  %s1 = inlined_call_operand.vmem [shape: bf16[9,128,128], index: 1, kind: input, shape index: {}]
  %s2 = inlined_call_operand.vmem [shape: f32[1,128], index: 2, kind: input, shape index: {}]
  %s3 = inlined_call_operand.vmem [shape: f32[1,128], index: 3, kind: input, shape index: {}]
  %s4 = inlined_call_operand.vmem [shape: f32[1,128], index: 4, kind: input, shape index: {}]
  %s5 = inlined_call_operand.vmem [shape: f32[1,128], index: 5, kind: input, shape index: {}]
  %s6 = inlined_call_operand.vmem [shape: bf16[2,256,128], index: 6, kind: output, shape index: {0}]
  %s7 = inlined_call_operand.vmem [shape: f32[2,8,128], index: 7, kind: output, shape index: {1}]
  %8 = xla_tuple %s6, %s7
  %s9 = sld [smem:[#allocation0]]
  $region65: #{up_forward.5} parent=0
    _
  %s11 = ssub.s32 1, %s9
  %s12 = scalar_select 0, %s11, %s9
  loop: start=0, step=1, limit=4
  $region2: #{up_forward.5} parent=0 // loop_pre_header
    _
  $region3: #{up_forward.5} parent=0 // loop_header
    %s14 = sphi 0, %s18
    %p15 = scmp.ge.s32.totalorder %s14, 4
    %s21 = sphi 0, %s33
    %s22 = sphi 0, %s29
    %s23 = sphi 0, %s21
    %s24 = sphi 0, %s22
    %s25 = sphi 0, %s23
    %s26 = sphi 0, %s24
    %s38 = sphi 0, %s40
    %s41 = sphi 0, %s38
    %s42 = sphi 0, %s41
    %s58 = sphi 0, %s42
    %s62 = sphi 0, %s62
    %s64 = sphi 0, %s62
    %s65 = sphi 0, %s64
    %s79 = sphi 0, %s65
    %s83 = sphi 0, %s83
    %s85 = sphi 0, %s83
    %s86 = sphi 0, %s85
    %s100 = sphi 0, %s86
    %s104 = sphi 0, %s104
    %s106 = sphi 0, %s104
    %s107 = sphi 0, %s106
    %s121 = sphi 0, %s107
    %s125 = sphi 0, %s125
    %s127 = sphi 0, %s125
    %s128 = sphi 0, %s127
    %s142 = sphi 0, %s128
    %s146 = sphi 0, %s146
    %s148 = sphi 0, %s146
    %s149 = sphi 0, %s148
    %s163 = sphi 0, %s149
    %s171 = sphi 0, %s173
    %s174 = sphi 0, %s171
    %s175 = sphi 0, %s174
    %s191 = sphi 0, %s175
    %s199 = sphi 0, %s201
    %s202 = sphi 0, %s199
    %s203 = sphi 0, %s202
    %s219 = sphi 0, %s203
  $region4: #{up_forward.5} parent=0 // loop_header_branch
    %17 = sbr.rel (%p15) target = $region8
  $region5: #{up_forward.5} parent=0 // loop_body
    %s19 = ssub.s32 %s14, 1
    %s20 = ssub.s32 %s14, 2
    %s27 = sadd.s32 1, %s22
    %p28 = scmp.ge.s32.totalorder %s27, 1
    %s29 = scalar_select %p28, 0, %s27
    %s30 = sadd.s32 1, %s21
    %s31 = scalar_select %p28, %s30, %s21
    %p32 = scmp.ge.s32.totalorder %s31, 2
    %s33 = scalar_select %p32, 0, %s31
    %s34 = sadd.s32 %s21, %s22
    %s35 = sadd.s32 %s33, %s29
    %s36 = ssub.s32 %s34, %s35
    %p37 = scmp.eq.s32.totalorder %s36, 0
    %s39 = sadd.s32 %s38, 1
    %s40 = scalar_select %p37, %s38, %s39
    %p43 = pneg %p37
    %p44 = scmp.eq.s32.totalorder %s14, 1
    %p45 = por %p43, %p44
    %p46 = scmp.ne.s32.totalorder %s38, %s41
    %p47 = scmp.eq.s32.totalorder %s14, 0
    %p48 = por %p46, %p47
    %p49 = scmp.ne.s32.totalorder %s38, %s41
    %p50 = scmp.eq.s32.totalorder %s19, 1
    %p51 = por %p49, %p50
    %p52 = scmp.ne.s32.totalorder %s41, %s42
    %p53 = scmp.eq.s32.totalorder %s19, 0
    %p54 = por %p52, %p53
    %p55 = scmp.ne.s32.totalorder %s41, %s42
    %p56 = scmp.eq.s32.totalorder %s20, 1
    %p57 = por %p55, %p56
    %p59 = scmp.ne.s32.totalorder %s42, %s58
    %p60 = scmp.eq.s32.totalorder %s20, 0
    %p61 = por %p59, %p60
    %s63 = sadd.s32 %s62, 1
    %p66 = scmp.eq.s32.totalorder %s14, 1
    %p67 = scmp.ne.s32.totalorder %s62, %s64
    %p68 = scmp.eq.s32.totalorder %s14, 0
    %p69 = por %p67, %p68
    %p70 = scmp.ne.s32.totalorder %s62, %s64
    %p71 = scmp.eq.s32.totalorder %s19, 1
    %p72 = por %p70, %p71
    %p73 = scmp.ne.s32.totalorder %s64, %s65
    %p74 = scmp.eq.s32.totalorder %s19, 0
    %p75 = por %p73, %p74
    %p76 = scmp.ne.s32.totalorder %s64, %s65
    %p77 = scmp.eq.s32.totalorder %s20, 1
    %p78 = por %p76, %p77
    %p80 = scmp.ne.s32.totalorder %s65, %s79
    %p81 = scmp.eq.s32.totalorder %s20, 0
    %p82 = por %p80, %p81
    %s84 = sadd.s32 %s83, 1
    %p87 = scmp.eq.s32.totalorder %s14, 1
    %p88 = scmp.ne.s32.totalorder %s83, %s85
    %p89 = scmp.eq.s32.totalorder %s14, 0
    %p90 = por %p88, %p89
    %p91 = scmp.ne.s32.totalorder %s83, %s85
    %p92 = scmp.eq.s32.totalorder %s19, 1
    %p93 = por %p91, %p92
    %p94 = scmp.ne.s32.totalorder %s85, %s86
    %p95 = scmp.eq.s32.totalorder %s19, 0
    %p96 = por %p94, %p95
    %p97 = scmp.ne.s32.totalorder %s85, %s86
    %p98 = scmp.eq.s32.totalorder %s20, 1
    %p99 = por %p97, %p98
    %p101 = scmp.ne.s32.totalorder %s86, %s100
    %p102 = scmp.eq.s32.totalorder %s20, 0
    %p103 = por %p101, %p102
    %s105 = sadd.s32 %s104, 1
    %p108 = scmp.eq.s32.totalorder %s14, 1
    %p109 = scmp.ne.s32.totalorder %s104, %s106
    %p110 = scmp.eq.s32.totalorder %s14, 0
    %p111 = por %p109, %p110
    %p112 = scmp.ne.s32.totalorder %s104, %s106
    %p113 = scmp.eq.s32.totalorder %s19, 1
    %p114 = por %p112, %p113
    %p115 = scmp.ne.s32.totalorder %s106, %s107
    %p116 = scmp.eq.s32.totalorder %s19, 0
    %p117 = por %p115, %p116
    %p118 = scmp.ne.s32.totalorder %s106, %s107
    %p119 = scmp.eq.s32.totalorder %s20, 1
    %p120 = por %p118, %p119
    %p122 = scmp.ne.s32.totalorder %s107, %s121
    %p123 = scmp.eq.s32.totalorder %s20, 0
    %p124 = por %p122, %p123
    %s126 = sadd.s32 %s125, 1
    %p129 = scmp.eq.s32.totalorder %s14, 1
    %p130 = scmp.ne.s32.totalorder %s125, %s127
    %p131 = scmp.eq.s32.totalorder %s14, 0
    %p132 = por %p130, %p131
    %p133 = scmp.ne.s32.totalorder %s125, %s127
    %p134 = scmp.eq.s32.totalorder %s19, 1
    %p135 = por %p133, %p134
    %p136 = scmp.ne.s32.totalorder %s127, %s128
    %p137 = scmp.eq.s32.totalorder %s19, 0
    %p138 = por %p136, %p137
    %p139 = scmp.ne.s32.totalorder %s127, %s128
    %p140 = scmp.eq.s32.totalorder %s20, 1
    %p141 = por %p139, %p140
    %p143 = scmp.ne.s32.totalorder %s128, %s142
    %p144 = scmp.eq.s32.totalorder %s20, 0
    %p145 = por %p143, %p144
    %s147 = sadd.s32 %s146, 1
    %p150 = scmp.eq.s32.totalorder %s14, 1
    %p151 = scmp.ne.s32.totalorder %s146, %s148
    %p152 = scmp.eq.s32.totalorder %s14, 0
    %p153 = por %p151, %p152
    %p154 = scmp.ne.s32.totalorder %s146, %s148
    %p155 = scmp.eq.s32.totalorder %s19, 1
    %p156 = por %p154, %p155
    %p157 = scmp.ne.s32.totalorder %s148, %s149
    %p158 = scmp.eq.s32.totalorder %s19, 0
    %p159 = por %p157, %p158
    %p160 = scmp.ne.s32.totalorder %s148, %s149
    %p161 = scmp.eq.s32.totalorder %s20, 1
    %p162 = por %p160, %p161
    %p164 = scmp.ne.s32.totalorder %s149, %s163
    %p165 = scmp.eq.s32.totalorder %s20, 0
    %p166 = por %p164, %p165
    %s167 = sadd.s32 %s21, %s22
    %s168 = sadd.s32 %s33, %s29
    %s169 = ssub.s32 %s167, %s168
    %p170 = scmp.eq.s32.totalorder %s169, 0
    %s172 = sadd.s32 %s171, 1
    %s173 = scalar_select %p170, %s171, %s172
    %p176 = pneg %p170
    %p177 = scmp.eq.s32.totalorder %s14, 1
    %p178 = por %p176, %p177
    %p179 = scmp.ne.s32.totalorder %s171, %s174
    %p180 = scmp.eq.s32.totalorder %s14, 0
    %p181 = por %p179, %p180
    %p182 = scmp.ne.s32.totalorder %s171, %s174
    %p183 = scmp.eq.s32.totalorder %s19, 1
    %p184 = por %p182, %p183
    %p185 = scmp.ne.s32.totalorder %s174, %s175
    %p186 = scmp.eq.s32.totalorder %s19, 0
    %p187 = por %p185, %p186
    %p188 = scmp.ne.s32.totalorder %s174, %s175
    %p189 = scmp.eq.s32.totalorder %s20, 1
    %p190 = por %p188, %p189
    %p192 = scmp.ne.s32.totalorder %s175, %s191
    %p193 = scmp.eq.s32.totalorder %s20, 0
    %p194 = por %p192, %p193
    %s195 = sadd.s32 %s21, %s22
    %s196 = sadd.s32 %s33, %s29
    %s197 = ssub.s32 %s195, %s196
    %p198 = scmp.eq.s32.totalorder %s197, 0
    %s200 = sadd.s32 %s199, 1
    %s201 = scalar_select %p198, %s199, %s200
    %p204 = pneg %p198
    %p205 = scmp.eq.s32.totalorder %s14, 1
    %p206 = por %p204, %p205
    %p207 = scmp.ne.s32.totalorder %s199, %s202
    %p208 = scmp.eq.s32.totalorder %s14, 0
    %p209 = por %p207, %p208
    %p210 = scmp.ne.s32.totalorder %s199, %s202
    %p211 = scmp.eq.s32.totalorder %s19, 1
    %p212 = por %p210, %p211
    %p213 = scmp.ne.s32.totalorder %s202, %s203
    %p214 = scmp.eq.s32.totalorder %s19, 0
    %p215 = por %p213, %p214
    %p216 = scmp.ne.s32.totalorder %s202, %s203
    %p217 = scmp.eq.s32.totalorder %s20, 1
    %p218 = por %p216, %p217
    %p220 = scmp.ne.s32.totalorder %s203, %s219
    %p221 = scmp.eq.s32.totalorder %s20, 0
    %p222 = por %p220, %p221
    %p223 = scmp.le.s32.totalorder 1, %s14
    %p224 = scmp.lt.s32.totalorder %s14, 3
    %p225 = pnand %p223, %p224
    %p226 = pneg %p225
    // Predicated region
    $region9: #{up_forward.5} parent=5 // pred_check
      _
    $region10: #{up_forward.5} parent=5 // pred_check_branch
      %228 = sbr.rel (%p225) target = $region12
    $region11: #{up_forward.5} parent=5 // pred_region
      %s229 = ssub.s32 %s14, 1
      // Predicated region
      $region13: #{up_forward.5} parent=11 // pred_check
        %p230 = pneg %p75
      $region14: #{up_forward.5} parent=11 // pred_check_branch
        %232 = sbr.rel (%p230) target = $region16
      $region15: #{up_forward.5} parent=11 // pred_region
        _
      $region16: #{up_forward.5} parent=11 // pred_fallthru
        _
      // Predicated region
      $region17: #{up_forward.5} parent=11 // pred_check
        %p233 = pneg %p96
      $region18: #{up_forward.5} parent=11 // pred_check_branch
        %235 = sbr.rel (%p233) target = $region20
      $region19: #{up_forward.5} parent=11 // pred_region
        _
      $region20: #{up_forward.5} parent=11 // pred_fallthru
        _
      // Predicated region
      $region21: #{up_forward.5} parent=11 // pred_check
        %p236 = pneg %p117
      $region22: #{up_forward.5} parent=11 // pred_check_branch
        %238 = sbr.rel (%p236) target = $region24
      $region23: #{up_forward.5} parent=11 // pred_region
        _
      $region24: #{up_forward.5} parent=11 // pred_fallthru
        _
      // Predicated region
      $region25: #{up_forward.5} parent=11 // pred_check
        %p239 = pneg %p138
      $region26: #{up_forward.5} parent=11 // pred_check_branch
        %241 = sbr.rel (%p239) target = $region28
      $region27: #{up_forward.5} parent=11 // pred_region
        _
      $region28: #{up_forward.5} parent=11 // pred_fallthru
        _
      // Predicated region
      $region29: #{up_forward.5} parent=11 // pred_check
        %p242 = pneg %p159
      $region30: #{up_forward.5} parent=11 // pred_check_branch
        %244 = sbr.rel (%p242) target = $region32
      $region31: #{up_forward.5} parent=11 // pred_region
        _
      $region32: #{up_forward.5} parent=11 // pred_fallthru
        _
    $region12: #{up_forward.5} parent=5 // pred_fallthru
      _
    %p245 = scmp.lt.s32.totalorder %s14, 2
    // Predicated region
    $region33: #{up_forward.5} parent=5 // pred_check
      %p246 = pneg %p245
    $region34: #{up_forward.5} parent=5 // pred_check_branch
      %248 = sbr.rel (%p246) target = $region36
    $region35: #{up_forward.5} parent=5 // pred_region
      // Predicated region
      $region37: #{up_forward.5} parent=35 // pred_check
        %p249 = pneg %p48
      $region38: #{up_forward.5} parent=35 // pred_check_branch
        %251 = sbr.rel (%p249) target = $region40
      $region39: #{up_forward.5} parent=35 // pred_region
        %s252 = sadd.s32 %s21, %s22
        %p253 = scmp.lt.s32.totalorder %s252, 1
        %s254 = scalar_select %p253, %s252, 1
        %s255 = smul.addr %s254, 54
        %s256 = smul.addr %s255, 4
        %s257 = scalar_lea.vmem %s0, %s256
        %s258 = sadd.s32 %s21, %s22
      $region40: #{up_forward.5} parent=35 // pred_fallthru
        _
    $region36: #{up_forward.5} parent=5 // pred_fallthru
      _
    %p259 = scmp.le.s32.totalorder 1, %s14
    %p260 = scmp.lt.s32.totalorder %s14, 3
    %p261 = pnand %p259, %p260
    %p262 = pneg %p261
    // Predicated region
    $region41: #{up_forward.5} parent=5 // pred_check
      _
    $region42: #{up_forward.5} parent=5 // pred_check_branch
      %264 = sbr.rel (%p261) target = $region44
    $region43: #{up_forward.5} parent=5 // pred_region
      %s265 = ssub.s32 %s14, 1
      %s266 = sadd.s32 %s23, %s24
      %p267 = scmp.lt.s32.totalorder %s266, 1
      %s268 = scalar_select %p267, %s266, 1
      %s269 = smul.addr %s268, 54
      %s270 = smul.addr %s269, 4
      %s271 = scalar_lea.vmem %s0, %s270
      %p272 = pneg %p54
      %p273 = pneg %p51
      %p274 = pneg %p75
      %p275 = pneg %p72
      %p276 = pneg %p96
      %p277 = pneg %p93
      %p278 = pneg %p117
      %p279 = pneg %p114
      %p280 = pneg %p138
      %p281 = pneg %p135
      %p282 = pneg %p159
      %p283 = pneg %p156
      %p284 = pneg %p187
      %p285 = pneg %p184
      %s286 = sadd.s32 %s23, %s24
      %p287 = scmp.lt.s32.totalorder %s286, 1
      %s288 = scalar_select %p287, %s286, 1
      %s289 = smul.addr %s288, 32
      %s290 = smul.addr %s289, 4
      %s291 = scalar_lea.vmem %s6, %s290
      %p292 = pneg %p215
      %p293 = pneg %p212
      %s294 = sadd.s32 %s23, %s24
      %p295 = scmp.lt.s32.totalorder %s294, 1
      %s296 = scalar_select %p295, %s294, 1
      %s297 = smul.addr %s296, 8
      %s298 = scalar_lea.vmem %s7, %s297
      %s299 = sadd.s32 %s23, %s24
      %p300 = scmp.lt.s32.totalorder %s299, 1
      %s301 = scalar_select %p300, %s299, 1
      %s302 = smul.addr %s301, 54
      %s303 = smul.addr %s302, 4
      %s304 = scalar_lea.vmem %s0, %s303
      %s305 = sadd.s32 %s23, %s24
      %s306 = sadd.s32 %s23, %s24
      %p307 = scmp.lt.s32.totalorder %s306, 1
      %s308 = scalar_select %p307, %s306, 1
      %s309 = smul.addr %s308, 32
      %s310 = smul.addr %s309, 4
      %s311 = scalar_lea.vmem %s6, %s310
      %s312 = sadd.s32 %s23, %s24
      %s313 = sadd.s32 %s23, %s24
      %p314 = scmp.lt.s32.totalorder %s313, 1
      %s315 = scalar_select %p314, %s313, 1
      %s316 = smul.addr %s315, 8
      %s317 = scalar_lea.vmem %s7, %s316
      %s318 = sadd.s32 %s23, %s24
      %v320 = vld [vmem:[%s304] sm:$0xf]
      %v321 = vld [vmem:[%s304 + $0x4] sm:$0xf]
      %v322 = vld [vmem:[%s304 + $0x8] sm:$0x1]
      %v323 = vld [vmem:[%s304 + $0xc] sm:$0xf]
      %v324 = vld [vmem:[%s304 + $0x10] sm:$0xf]
      %v325 = vld [vmem:[%s304 + $0x14] sm:$0x1]
      %v326 = vld [vmem:[%s304 + $0x18] sm:$0xf]
      %v327 = vld [vmem:[%s304 + $0x1c] sm:$0xf]
      %v328 = vld [vmem:[%s304 + $0x20] sm:$0x1]
      %v329 = vld [vmem:[%s304 + $0x24] sm:$0xf]
      %v330 = vld [vmem:[%s304 + $0x28] sm:$0xf]
      %v331 = vld [vmem:[%s304 + $0x2c] sm:$0x1]
      %v332 = vld [vmem:[%s304 + $0x30] sm:$0xf]
      %v333 = vld [vmem:[%s304 + $0x34] sm:$0xf]
      %v334 = vld [vmem:[%s304 + $0x38] sm:$0x1]
      %v335 = vld [vmem:[%s304 + $0x3c] sm:$0xf]
      %v336 = vld [vmem:[%s304 + $0x40] sm:$0xf]
      %v337 = vld [vmem:[%s304 + $0x44] sm:$0x1]
      %v338 = vld [vmem:[%s304 + $0x48] sm:$0xf]
      %v339 = vld [vmem:[%s304 + $0x4c] sm:$0xf]
      %v340 = vld [vmem:[%s304 + $0x50] sm:$0x1]
      %v341 = vld [vmem:[%s304 + $0x54] sm:$0xf]
      %v342 = vld [vmem:[%s304 + $0x58] sm:$0xf]
      %v343 = vld [vmem:[%s304 + $0x5c] sm:$0x1]
      %v344 = vld [vmem:[%s304 + $0x60] sm:$0xf]
      %v345 = vld [vmem:[%s304 + $0x64] sm:$0xf]
      %v346 = vld [vmem:[%s304 + $0x68] sm:$0x1]
      %v347 = vld [vmem:[%s304 + $0x6c] sm:$0xf]
      %v348 = vld [vmem:[%s304 + $0x70] sm:$0xf]
      %v349 = vld [vmem:[%s304 + $0x74] sm:$0x1]
      %v350 = vld [vmem:[%s304 + $0x78] sm:$0xf]
      %v351 = vld [vmem:[%s304 + $0x7c] sm:$0xf]
      %v352 = vld [vmem:[%s304 + $0x80] sm:$0x1]
      %v353 = vld [vmem:[%s304 + $0x84] sm:$0xf]
      %v354 = vld [vmem:[%s304 + $0x88] sm:$0xf]
      %v355 = vld [vmem:[%s304 + $0x8c] sm:$0x1]
      %v356 = vld [vmem:[%s304 + $0x90] sm:$0xf]
      %v357 = vld [vmem:[%s304 + $0x94] sm:$0xf]
      %v358 = vld [vmem:[%s304 + $0x98] sm:$0x1]
      %v359 = vld [vmem:[%s304 + $0x9c] sm:$0xf]
      %v360 = vld [vmem:[%s304 + $0xa0] sm:$0xf]
      %v361 = vld [vmem:[%s304 + $0xa4] sm:$0x1]
      %v362 = vld [vmem:[%s304 + $0xa8] sm:$0xf]
      %v363 = vld [vmem:[%s304 + $0xac] sm:$0xf]
      %v364 = vld [vmem:[%s304 + $0xb0] sm:$0x1]
      %v365 = vld [vmem:[%s304 + $0xb4] sm:$0xf]
      %v366 = vld [vmem:[%s304 + $0xb8] sm:$0xf]
      %v367 = vld [vmem:[%s304 + $0xbc] sm:$0x1]
      %v368 = vld [vmem:[%s304 + $0xc0] sm:$0xf]
      %v369 = vld [vmem:[%s304 + $0xc4] sm:$0xf]
      %v370 = vld [vmem:[%s304 + $0xc8] sm:$0x1]
      %v371 = vld [vmem:[%s304 + $0xcc] sm:$0xf]
      %v372 = vld [vmem:[%s304 + $0xd0] sm:$0xf]
      %v373 = vld [vmem:[%s304 + $0xd4] sm:$0x1]
      %v374 = vunpack.c.l.bf16 %v320
      %v375 = vunpack.c.l.bf16 %v321
      %v376 = vunpack.c.l.bf16 %v322
      %v377 = vunpack.c.l.bf16 %v323
      %v378 = vunpack.c.l.bf16 %v324
      %v379 = vunpack.c.l.bf16 %v325
      %v380 = vunpack.c.l.bf16 %v326
      %v381 = vunpack.c.l.bf16 %v327
      %v382 = vunpack.c.l.bf16 %v328
      %v383 = vunpack.c.l.bf16 %v329
      %v384 = vunpack.c.l.bf16 %v330
      %v385 = vunpack.c.l.bf16 %v331
      %v386 = vunpack.c.l.bf16 %v332
      %v387 = vunpack.c.l.bf16 %v333
      %v388 = vunpack.c.l.bf16 %v334
      %v389 = vunpack.c.l.bf16 %v335
      %v390 = vunpack.c.l.bf16 %v336
      %v391 = vunpack.c.l.bf16 %v337
      %v392 = vunpack.c.l.bf16 %v338
      %v393 = vunpack.c.l.bf16 %v339
      %v394 = vunpack.c.l.bf16 %v340
      %v395 = vunpack.c.l.bf16 %v341
      %v396 = vunpack.c.l.bf16 %v342
      %v397 = vunpack.c.l.bf16 %v343
      %v398 = vunpack.c.l.bf16 %v344
      %v399 = vunpack.c.l.bf16 %v345
      %v400 = vunpack.c.l.bf16 %v346
      %v401 = vunpack.c.l.bf16 %v347
      %v402 = vunpack.c.l.bf16 %v348
      %v403 = vunpack.c.l.bf16 %v349
      %v404 = vunpack.c.l.bf16 %v350
      %v405 = vunpack.c.l.bf16 %v351
      %v406 = vunpack.c.l.bf16 %v352
      %v407 = vunpack.c.l.bf16 %v353
      %v408 = vunpack.c.l.bf16 %v354
      %v409 = vunpack.c.l.bf16 %v355
      %v410 = vunpack.c.l.bf16 %v356
      %v411 = vunpack.c.l.bf16 %v357
      %v412 = vunpack.c.l.bf16 %v358
      %v413 = vunpack.c.l.bf16 %v359
      %v414 = vunpack.c.l.bf16 %v360
      %v415 = vunpack.c.l.bf16 %v361
      %v416 = vunpack.c.l.bf16 %v362
      %v417 = vunpack.c.l.bf16 %v363
      %v418 = vunpack.c.l.bf16 %v364
      %v419 = vunpack.c.l.bf16 %v365
      %v420 = vunpack.c.l.bf16 %v366
      %v421 = vunpack.c.l.bf16 %v367
      %v422 = vunpack.c.l.bf16 %v368
      %v423 = vunpack.c.l.bf16 %v369
      %v424 = vunpack.c.l.bf16 %v370
      %v425 = vunpack.c.l.bf16 %v371
      %v426 = vunpack.c.l.bf16 %v372
      %v427 = vunpack.c.l.bf16 %v373
      %v428 = vld [vmem:[%s3] sm:$0x1]
      %v430 = vlaneseq
      %v431 = vshrl.u32 %v430, 7
      %v432 = vsub.s32 0, %v431
      %v433 = vrot.slane %v428, %v432
      %v435 = vmul.f32 %v374, %v433
      %v436 = vmul.f32 %v375, %v433
      %v437 = vmul.f32 %v376, %v433
      %v438 = vmul.f32 %v377, %v433
      %v439 = vmul.f32 %v378, %v433
      %v440 = vmul.f32 %v379, %v433
      %v441 = vmul.f32 %v380, %v433
      %v442 = vmul.f32 %v381, %v433
      %v443 = vmul.f32 %v382, %v433
      %v444 = vmul.f32 %v383, %v433
      %v445 = vmul.f32 %v384, %v433
      %v446 = vmul.f32 %v385, %v433
      %v447 = vmul.f32 %v386, %v433
      %v448 = vmul.f32 %v387, %v433
      %v449 = vmul.f32 %v388, %v433
      %v450 = vmul.f32 %v389, %v433
      %v451 = vmul.f32 %v390, %v433
      %v452 = vmul.f32 %v391, %v433
      %v453 = vmul.f32 %v392, %v433
      %v454 = vmul.f32 %v393, %v433
      %v455 = vmul.f32 %v394, %v433
      %v456 = vmul.f32 %v395, %v433
      %v457 = vmul.f32 %v396, %v433
      %v458 = vmul.f32 %v397, %v433
      %v459 = vmul.f32 %v398, %v433
      %v460 = vmul.f32 %v399, %v433
      %v461 = vmul.f32 %v400, %v433
      %v462 = vmul.f32 %v401, %v433
      %v463 = vmul.f32 %v402, %v433
      %v464 = vmul.f32 %v403, %v433
      %v465 = vmul.f32 %v404, %v433
      %v466 = vmul.f32 %v405, %v433
      %v467 = vmul.f32 %v406, %v433
      %v468 = vmul.f32 %v407, %v433
      %v469 = vmul.f32 %v408, %v433
      %v470 = vmul.f32 %v409, %v433
      %v471 = vmul.f32 %v410, %v433
      %v472 = vmul.f32 %v411, %v433
      %v473 = vmul.f32 %v412, %v433
      %v474 = vmul.f32 %v413, %v433
      %v475 = vmul.f32 %v414, %v433
      %v476 = vmul.f32 %v415, %v433
      %v477 = vmul.f32 %v416, %v433
      %v478 = vmul.f32 %v417, %v433
      %v479 = vmul.f32 %v418, %v433
      %v480 = vmul.f32 %v419, %v433
      %v481 = vmul.f32 %v420, %v433
      %v482 = vmul.f32 %v421, %v433
      %v483 = vmul.f32 %v422, %v433
      %v484 = vmul.f32 %v423, %v433
      %v485 = vmul.f32 %v424, %v433
      %v486 = vmul.f32 %v425, %v433
      %v487 = vmul.f32 %v426, %v433
      %v488 = vmul.f32 %v427, %v433
      %v489 = vld [vmem:[%s4] sm:$0x1]
      %v491 = vlaneseq
      %v492 = vshrl.u32 %v491, 7
      %v493 = vsub.s32 0, %v492
      %v494 = vrot.slane %v489, %v493
      %v496 = vadd.f32 %v435, %v494
      %v497 = vadd.f32 %v436, %v494
      %v498 = vadd.f32 %v437, %v494
      %v499 = vadd.f32 %v438, %v494
      %v500 = vadd.f32 %v439, %v494
      %v501 = vadd.f32 %v440, %v494
      %v502 = vadd.f32 %v441, %v494
      %v503 = vadd.f32 %v442, %v494
      %v504 = vadd.f32 %v443, %v494
      %v505 = vadd.f32 %v444, %v494
      %v506 = vadd.f32 %v445, %v494
      %v507 = vadd.f32 %v446, %v494
      %v508 = vadd.f32 %v447, %v494
      %v509 = vadd.f32 %v448, %v494
      %v510 = vadd.f32 %v449, %v494
      %v511 = vadd.f32 %v450, %v494
      %v512 = vadd.f32 %v451, %v494
      %v513 = vadd.f32 %v452, %v494
      %v514 = vadd.f32 %v453, %v494
      %v515 = vadd.f32 %v454, %v494
      %v516 = vadd.f32 %v455, %v494
      %v517 = vadd.f32 %v456, %v494
      %v518 = vadd.f32 %v457, %v494
      %v519 = vadd.f32 %v458, %v494
      %v520 = vadd.f32 %v459, %v494
      %v521 = vadd.f32 %v460, %v494
      %v522 = vadd.f32 %v461, %v494
      %v523 = vadd.f32 %v462, %v494
      %v524 = vadd.f32 %v463, %v494
      %v525 = vadd.f32 %v464, %v494
      %v526 = vadd.f32 %v465, %v494
      %v527 = vadd.f32 %v466, %v494
      %v528 = vadd.f32 %v467, %v494
      %v529 = vadd.f32 %v468, %v494
      %v530 = vadd.f32 %v469, %v494
      %v531 = vadd.f32 %v470, %v494
      %v532 = vadd.f32 %v471, %v494
      %v533 = vadd.f32 %v472, %v494
      %v534 = vadd.f32 %v473, %v494
      %v535 = vadd.f32 %v474, %v494
      %v536 = vadd.f32 %v475, %v494
      %v537 = vadd.f32 %v476, %v494
      %v538 = vadd.f32 %v477, %v494
      %v539 = vadd.f32 %v478, %v494
      %v540 = vadd.f32 %v479, %v494
      %v541 = vadd.f32 %v480, %v494
      %v542 = vadd.f32 %v481, %v494
      %v543 = vadd.f32 %v482, %v494
      %v544 = vadd.f32 %v483, %v494
      %v545 = vadd.f32 %v484, %v494
      %v546 = vadd.f32 %v485, %v494
      %v547 = vadd.f32 %v486, %v494
      %v548 = vadd.f32 %v487, %v494
      %v549 = vadd.f32 %v488, %v494
      %v550 = vmax.f32 %v496, 0.0
      %v551 = vmax.f32 %v497, 0.0
      %v552 = vmax.f32 %v498, 0.0
      %v553 = vmax.f32 %v499, 0.0
      %v554 = vmax.f32 %v500, 0.0
      %v555 = vmax.f32 %v501, 0.0
      %v556 = vmax.f32 %v502, 0.0
      %v557 = vmax.f32 %v503, 0.0
      %v558 = vmax.f32 %v504, 0.0
      %v559 = vmax.f32 %v505, 0.0
      %v560 = vmax.f32 %v506, 0.0
      %v561 = vmax.f32 %v507, 0.0
      %v562 = vmax.f32 %v508, 0.0
      %v563 = vmax.f32 %v509, 0.0
      %v564 = vmax.f32 %v510, 0.0
      %v565 = vmax.f32 %v511, 0.0
      %v566 = vmax.f32 %v512, 0.0
      %v567 = vmax.f32 %v513, 0.0
      %v568 = vmax.f32 %v514, 0.0
      %v569 = vmax.f32 %v515, 0.0
      %v570 = vmax.f32 %v516, 0.0
      %v571 = vmax.f32 %v517, 0.0
      %v572 = vmax.f32 %v518, 0.0
      %v573 = vmax.f32 %v519, 0.0
      %v574 = vmax.f32 %v520, 0.0
      %v575 = vmax.f32 %v521, 0.0
      %v576 = vmax.f32 %v522, 0.0
      %v577 = vmax.f32 %v523, 0.0
      %v578 = vmax.f32 %v524, 0.0
      %v579 = vmax.f32 %v525, 0.0
      %v580 = vmax.f32 %v526, 0.0
      %v581 = vmax.f32 %v527, 0.0
      %v582 = vmax.f32 %v528, 0.0
      %v583 = vmax.f32 %v529, 0.0
      %v584 = vmax.f32 %v530, 0.0
      %v585 = vmax.f32 %v531, 0.0
      %v586 = vmax.f32 %v532, 0.0
      %v587 = vmax.f32 %v533, 0.0
      %v588 = vmax.f32 %v534, 0.0
      %v589 = vmax.f32 %v535, 0.0
      %v590 = vmax.f32 %v536, 0.0
      %v591 = vmax.f32 %v537, 0.0
      %v592 = vmax.f32 %v538, 0.0
      %v593 = vmax.f32 %v539, 0.0
      %v594 = vmax.f32 %v540, 0.0
      %v595 = vmax.f32 %v541, 0.0
      %v596 = vmax.f32 %v542, 0.0
      %v597 = vmax.f32 %v543, 0.0
      %v598 = vmax.f32 %v544, 0.0
      %v599 = vmax.f32 %v545, 0.0
      %v600 = vmax.f32 %v546, 0.0
      %v601 = vmax.f32 %v547, 0.0
      %v602 = vmax.f32 %v548, 0.0
      %v603 = vmax.f32 %v549, 0.0
      %v604 = vlaneseq
      %v605 = vshrl.u32 %v604, 7
      %v606 = vadd.s32 %v605, 8
      %v607 = vadd.s32 %v605, 16
      %p608 = scmp.eq.s32.totalorder %s24, 0
      %s609 = scalar_select %p608, 1, 0
      %v610 = vstv %s609
      %vm611 = vcmp.eq.s32.totalorder %v610, 1
      %vm612 = vcmp.eq.s32.totalorder %v605, 0
      %vm613 = vcmp.eq.s32.totalorder %v606, 0
      %vm614 = vcmp.eq.s32.totalorder %v607, 0
      %vm615 = vmor %vm611, %vm612
      %vm616 = vmor %vm611, %vm613
      %vm617 = vmor %vm611, %vm614
      %vm618 = vmor 0, %vm612
      %vm619 = vmor 0, %vm613
      %vm620 = vmor 0, %vm614
      %vm621 = vcmp.eq.s32.totalorder %v605, 17
      %vm622 = vcmp.eq.s32.totalorder %v606, 17
      %vm623 = vcmp.eq.s32.totalorder %v607, 17
      %vm624 = vmor %vm615, %vm621
      %vm625 = vmor %vm616, %vm622
      %vm626 = vmor %vm617, %vm623
      %vm627 = vmor %vm618, %vm621
      %vm628 = vmor %vm619, %vm622
      %vm629 = vmor %vm620, %vm623
      %v630 = vsel %vm624, 0.0, %v550
      %v631 = vsel %vm625, 0.0, %v551
      %v632 = vsel %vm626, 0.0, %v552
      %v633 = vsel %vm627, 0.0, %v553
      %v634 = vsel %vm628, 0.0, %v554
      %v635 = vsel %vm629, 0.0, %v555
      %v636 = vsel %vm627, 0.0, %v556
      %v637 = vsel %vm628, 0.0, %v557
      %v638 = vsel %vm629, 0.0, %v558
      %v639 = vsel %vm627, 0.0, %v559
      %v640 = vsel %vm628, 0.0, %v560
      %v641 = vsel %vm629, 0.0, %v561
      %v642 = vsel %vm627, 0.0, %v562
      %v643 = vsel %vm628, 0.0, %v563
      %v644 = vsel %vm629, 0.0, %v564
      %v645 = vsel %vm627, 0.0, %v565
      %v646 = vsel %vm628, 0.0, %v566
      %v647 = vsel %vm629, 0.0, %v567
      %v648 = vsel %vm627, 0.0, %v568
      %v649 = vsel %vm628, 0.0, %v569
      %v650 = vsel %vm629, 0.0, %v570
      %v651 = vsel %vm627, 0.0, %v571
      %v652 = vsel %vm628, 0.0, %v572
      %v653 = vsel %vm629, 0.0, %v573
      %v654 = vsel %vm627, 0.0, %v574
      %v655 = vsel %vm628, 0.0, %v575
      %v656 = vsel %vm629, 0.0, %v576
      %v657 = vsel %vm627, 0.0, %v577
      %v658 = vsel %vm628, 0.0, %v578
      %v659 = vsel %vm629, 0.0, %v579
      %v660 = vsel %vm627, 0.0, %v580
      %v661 = vsel %vm628, 0.0, %v581
      %v662 = vsel %vm629, 0.0, %v582
      %v663 = vsel %vm627, 0.0, %v583
      %v664 = vsel %vm628, 0.0, %v584
      %v665 = vsel %vm629, 0.0, %v585
      %v666 = vsel %vm627, 0.0, %v586
      %v667 = vsel %vm628, 0.0, %v587
      %v668 = vsel %vm629, 0.0, %v588
      %v669 = vsel %vm627, 0.0, %v589
      %v670 = vsel %vm628, 0.0, %v590
      %v671 = vsel %vm629, 0.0, %v591
      %v672 = vsel %vm627, 0.0, %v592
      %v673 = vsel %vm628, 0.0, %v593
      %v674 = vsel %vm629, 0.0, %v594
      %v675 = vsel %vm627, 0.0, %v595
      %v676 = vsel %vm628, 0.0, %v596
      %v677 = vsel %vm629, 0.0, %v597
      %v678 = vsel %vm627, 0.0, %v598
      %v679 = vsel %vm628, 0.0, %v599
      %v680 = vsel %vm629, 0.0, %v600
      %v681 = vsel %vm624, 0.0, %v601
      %v682 = vsel %vm625, 0.0, %v602
      %v683 = vsel %vm626, 0.0, %v603
      %v684 = vpack.c.bf16 %v631, %v630
      %v685 = vpack.c.bf16 %v632, %v632
      %v686 = vpack.c.bf16 %v634, %v633
      %v687 = vpack.c.bf16 %v635, %v635
      %v688 = vpack.c.bf16 %v637, %v636
      %v689 = vpack.c.bf16 %v638, %v638
      %v690 = vpack.c.bf16 %v640, %v639
      %v691 = vpack.c.bf16 %v641, %v641
      %v692 = vpack.c.bf16 %v643, %v642
      %v693 = vpack.c.bf16 %v644, %v644
      %v694 = vpack.c.bf16 %v646, %v645
      %v695 = vpack.c.bf16 %v647, %v647
      %v696 = vpack.c.bf16 %v649, %v648
      %v697 = vpack.c.bf16 %v650, %v650
      %v698 = vpack.c.bf16 %v652, %v651
      %v699 = vpack.c.bf16 %v653, %v653
      %v700 = vpack.c.bf16 %v655, %v654
      %v701 = vpack.c.bf16 %v656, %v656
      %v702 = vpack.c.bf16 %v658, %v657
      %v703 = vpack.c.bf16 %v659, %v659
      %v704 = vpack.c.bf16 %v661, %v660
      %v705 = vpack.c.bf16 %v662, %v662
      %v706 = vpack.c.bf16 %v664, %v663
      %v707 = vpack.c.bf16 %v665, %v665
      %v708 = vpack.c.bf16 %v667, %v666
      %v709 = vpack.c.bf16 %v668, %v668
      %v710 = vpack.c.bf16 %v670, %v669
      %v711 = vpack.c.bf16 %v671, %v671
      %v712 = vpack.c.bf16 %v673, %v672
      %v713 = vpack.c.bf16 %v674, %v674
      %v714 = vpack.c.bf16 %v676, %v675
      %v715 = vpack.c.bf16 %v677, %v677
      %v716 = vpack.c.bf16 %v679, %v678
      %v717 = vpack.c.bf16 %v680, %v680
      %v718 = vpack.c.bf16 %v682, %v681
      %v719 = vpack.c.bf16 %v683, %v683
      %v720 = vld [vmem:[%s1] sm:$0xf]
      %v721 = vld [vmem:[%s1 + $0x4] sm:$0xf]
      %v722 = vld [vmem:[%s1 + $0x8] sm:$0xf]
      %v723 = vld [vmem:[%s1 + $0xc] sm:$0xf]
      %v724 = vld [vmem:[%s1 + $0x10] sm:$0xf]
      %v725 = vld [vmem:[%s1 + $0x14] sm:$0xf]
      %v726 = vld [vmem:[%s1 + $0x18] sm:$0xf]
      %v727 = vld [vmem:[%s1 + $0x1c] sm:$0xf]
      %v728 = vld [vmem:[%s1 + $0x20] sm:$0xf]
      %v729 = vld [vmem:[%s1 + $0x24] sm:$0xf]
      %v730 = vld [vmem:[%s1 + $0x28] sm:$0xf]
      %v731 = vld [vmem:[%s1 + $0x2c] sm:$0xf]
      %v732 = vld [vmem:[%s1 + $0x30] sm:$0xf]
      %v733 = vld [vmem:[%s1 + $0x34] sm:$0xf]
      %v734 = vld [vmem:[%s1 + $0x38] sm:$0xf]
      %v735 = vld [vmem:[%s1 + $0x3c] sm:$0xf]
      %vm736 = vsmask.f32 7424
      %v738 = vshrl.u32 %v684, 16
      %v740 = vshll.u32 %v684, 16
      %v742 = vrot.slane %v740, 1
      %v743 = vor.u32 %v738, %v742
      %v745 = vshll.u32 %v685, 16
      %v747 = vrot.slane %v745, 1
      %v748 = vsel %vm736, %v743, %v747
      %v750 = vshrl.u32 %v686, 16
      %v752 = vshll.u32 %v686, 16
      %v754 = vrot.slane %v752, 1
      %v755 = vor.u32 %v750, %v754
      %v757 = vshll.u32 %v687, 16
      %v759 = vrot.slane %v757, 1
      %v760 = vsel %vm736, %v755, %v759
      %v762 = vshrl.u32 %v688, 16
      %v764 = vshll.u32 %v688, 16
      %v766 = vrot.slane %v764, 1
      %v767 = vor.u32 %v762, %v766
      %v769 = vshll.u32 %v689, 16
      %v771 = vrot.slane %v769, 1
      %v772 = vsel %vm736, %v767, %v771
      %v774 = vshrl.u32 %v690, 16
      %v776 = vshll.u32 %v690, 16
      %v778 = vrot.slane %v776, 1
      %v779 = vor.u32 %v774, %v778
      %v781 = vshll.u32 %v691, 16
      %v783 = vrot.slane %v781, 1
      %v784 = vsel %vm736, %v779, %v783
      %v786 = vshrl.u32 %v692, 16
      %v788 = vshll.u32 %v692, 16
      %v790 = vrot.slane %v788, 1
      %v791 = vor.u32 %v786, %v790
      %v793 = vshll.u32 %v693, 16
      %v795 = vrot.slane %v793, 1
      %v796 = vsel %vm736, %v791, %v795
      %v798 = vshrl.u32 %v694, 16
      %v800 = vshll.u32 %v694, 16
      %v802 = vrot.slane %v800, 1
      %v803 = vor.u32 %v798, %v802
      %v805 = vshll.u32 %v695, 16
      %v807 = vrot.slane %v805, 1
      %v808 = vsel %vm736, %v803, %v807
      %v810 = vshrl.u32 %v696, 16
      %v812 = vshll.u32 %v696, 16
      %v814 = vrot.slane %v812, 1
      %v815 = vor.u32 %v810, %v814
      %v817 = vshll.u32 %v697, 16
      %v819 = vrot.slane %v817, 1
      %v820 = vsel %vm736, %v815, %v819
      %v822 = vshrl.u32 %v698, 16
      %v824 = vshll.u32 %v698, 16
      %v826 = vrot.slane %v824, 1
      %v827 = vor.u32 %v822, %v826
      %v829 = vshll.u32 %v699, 16
      %v831 = vrot.slane %v829, 1
      %v832 = vsel %vm736, %v827, %v831
      %v834 = vshrl.u32 %v700, 16
      %v836 = vshll.u32 %v700, 16
      %v838 = vrot.slane %v836, 1
      %v839 = vor.u32 %v834, %v838
      %v841 = vshll.u32 %v701, 16
      %v843 = vrot.slane %v841, 1
      %v844 = vsel %vm736, %v839, %v843
      %v846 = vshrl.u32 %v702, 16
      %v848 = vshll.u32 %v702, 16
      %v850 = vrot.slane %v848, 1
      %v851 = vor.u32 %v846, %v850
      %v853 = vshll.u32 %v703, 16
      %v855 = vrot.slane %v853, 1
      %v856 = vsel %vm736, %v851, %v855
      %v858 = vshrl.u32 %v704, 16
      %v860 = vshll.u32 %v704, 16
      %v862 = vrot.slane %v860, 1
      %v863 = vor.u32 %v858, %v862
      %v865 = vshll.u32 %v705, 16
      %v867 = vrot.slane %v865, 1
      %v868 = vsel %vm736, %v863, %v867
      %v870 = vshrl.u32 %v706, 16
      %v872 = vshll.u32 %v706, 16
      %v874 = vrot.slane %v872, 1
      %v875 = vor.u32 %v870, %v874
      %v877 = vshll.u32 %v707, 16
      %v879 = vrot.slane %v877, 1
      %v880 = vsel %vm736, %v875, %v879
      %v882 = vshrl.u32 %v708, 16
      %v884 = vshll.u32 %v708, 16
      %v886 = vrot.slane %v884, 1
      %v887 = vor.u32 %v882, %v886
      %v889 = vshll.u32 %v709, 16
      %v891 = vrot.slane %v889, 1
      %v892 = vsel %vm736, %v887, %v891
      %v894 = vshrl.u32 %v710, 16
      %v896 = vshll.u32 %v710, 16
      %v898 = vrot.slane %v896, 1
      %v899 = vor.u32 %v894, %v898
      %v901 = vshll.u32 %v711, 16
      %v903 = vrot.slane %v901, 1
      %v904 = vsel %vm736, %v899, %v903
      %v906 = vshrl.u32 %v712, 16
      %v908 = vshll.u32 %v712, 16
      %v910 = vrot.slane %v908, 1
      %v911 = vor.u32 %v906, %v910
      %v913 = vshll.u32 %v713, 16
      %v915 = vrot.slane %v913, 1
      %v916 = vsel %vm736, %v911, %v915
      %v918 = vshrl.u32 %v714, 16
      %v920 = vshll.u32 %v714, 16
      %v922 = vrot.slane %v920, 1
      %v923 = vor.u32 %v918, %v922
      %v925 = vshll.u32 %v715, 16
      %v927 = vrot.slane %v925, 1
      %v928 = vsel %vm736, %v923, %v927
      %s945 = scalar_lea.vmem %s1, 64
      %v946 = vld [vmem:[%s945] sm:$0xf]
      %v947 = vld [vmem:[%s945 + $0x4] sm:$0xf]
      %v948 = vld [vmem:[%s945 + $0x8] sm:$0xf]
      %v949 = vld [vmem:[%s945 + $0xc] sm:$0xf]
      %v950 = vld [vmem:[%s945 + $0x10] sm:$0xf]
      %v951 = vld [vmem:[%s945 + $0x14] sm:$0xf]
      %v952 = vld [vmem:[%s945 + $0x18] sm:$0xf]
      %v953 = vld [vmem:[%s945 + $0x1c] sm:$0xf]
      %v954 = vld [vmem:[%s945 + $0x20] sm:$0xf]
      %v955 = vld [vmem:[%s945 + $0x24] sm:$0xf]
      %v956 = vld [vmem:[%s945 + $0x28] sm:$0xf]
      %v957 = vld [vmem:[%s945 + $0x2c] sm:$0xf]
      %v958 = vld [vmem:[%s945 + $0x30] sm:$0xf]
      %v959 = vld [vmem:[%s945 + $0x34] sm:$0xf]
      %v960 = vld [vmem:[%s945 + $0x38] sm:$0xf]
      %v961 = vld [vmem:[%s945 + $0x3c] sm:$0xf]
      %v978 = vunpack.c.l.b16 %v946
      %v979 = vunpack.c.l.b16 %v947
      %v980 = vunpack.c.l.b16 %v948
      %v981 = vunpack.c.l.b16 %v949
      %v982 = vunpack.c.l.b16 %v950
      %v983 = vunpack.c.l.b16 %v951
      %v984 = vunpack.c.l.b16 %v952
      %v985 = vunpack.c.l.b16 %v953
      %v986 = vunpack.c.l.b16 %v954
      %v987 = vunpack.c.l.b16 %v955
      %v988 = vunpack.c.l.b16 %v956
      %v989 = vunpack.c.l.b16 %v957
      %v990 = vunpack.c.l.b16 %v958
      %v991 = vunpack.c.l.b16 %v959
      %v992 = vunpack.c.l.b16 %v960
      %v993 = vunpack.c.l.b16 %v961
      %v994 = vpack.c.b16 %v979, %v978
      %v995 = vpack.c.b16 %v981, %v980
      %v996 = vpack.c.b16 %v983, %v982
      %v997 = vpack.c.b16 %v985, %v984
      %v998 = vpack.c.b16 %v987, %v986
      %v999 = vpack.c.b16 %v989, %v988
      %v1000 = vpack.c.b16 %v991, %v990
      %v1001 = vpack.c.b16 %v993, %v992
      %1010 = vmatprep.subr.bf16.mxu0 0
      %1011 = vmatpush1.bf16.msra.mxu0 %v994
      %1012 = vmatprep.subr.bf16.mxu0 0
      %1013 = vmatpush1.bf16.msra.mxu0 %v995
      %1014 = vmatprep.subr.bf16.mxu0 0
      %1015 = vmatpush1.bf16.msra.mxu0 %v996
      %1016 = vmatprep.subr.bf16.mxu0 0
      %1017 = vmatpush1.bf16.msra.mxu0 %v997
      %1018 = vmatprep.subr.bf16.mxu0 0
      %1019 = vmatpush1.bf16.msra.mxu0 %v998
      %1020 = vmatprep.subr.bf16.mxu0 0
      %1021 = vmatpush1.bf16.msra.mxu0 %v999
      %1022 = vmatprep.subr.bf16.mxu0 0
      %1023 = vmatpush1.bf16.msra.mxu0 %v1000
      %1024 = vmatprep.subr.bf16.mxu0 0
      %1025 = vmatpush1.bf16.msra.mxu0 %v1001
      %1026 = vmatprep.subr.bf16.mxu0 0
      %1027 = vmatpush1.bf16.msra.mxu0 0
      %1028 = vmatprep.subr.bf16.mxu0 0
      %1029 = vmatpush1.bf16.msra.mxu0 0
      %1030 = vmatprep.subr.bf16.mxu0 0
      %1031 = vmatpush1.bf16.msra.mxu0 0
      %1032 = vmatprep.subr.bf16.mxu0 0
      %1033 = vmatpush1.bf16.msra.mxu0 0
      %1034 = vmatprep.subr.bf16.mxu0 0
      %1035 = vmatpush1.bf16.msra.mxu0 0
      %1036 = vmatprep.subr.bf16.mxu0 0
      %1037 = vmatpush1.bf16.msra.mxu0 0
      %1038 = vmatprep.subr.bf16.mxu0 0
      %1039 = vmatpush1.bf16.msra.mxu0 0
      %1040 = vmatprep.subr.bf16.mxu0 0
      %1041 = vmatpush1.bf16.msra.mxu0 0
      %1042 = vmatprep.mubr.bf16.mxu0 0
      %1043 = vmatmul.mubr.bf16.gmra.mrb[0].mxu0 %v748
      %v1044 = vpop.f32.mrb[0].mxu0
      %v1045 = vadd.f32 0.0, %v1044
      %v1046 = vpop.f32.mrb[0].mxu0
      %v1047 = vpop.f32.mrb[0].mxu0
      %v1048 = vadd.f32 0.0, %v1047
      %v1049 = vpop.f32.mrb[0].mxu0
      %1050 = vmatprep.mubr.bf16.mxu0 0
      %1051 = vmatmul.mubr.bf16.gmra.mrb[0].mxu0 %v760
      %v1052 = vpop.f32.mrb[0].mxu0
      %v1053 = vadd.f32 0.0, %v1052
      %v1054 = vpop.f32.mrb[0].mxu0
      %v1055 = vpop.f32.mrb[0].mxu0
      %v1056 = vadd.f32 0.0, %v1055
      %v1057 = vpop.f32.mrb[0].mxu0
      %1058 = vmatprep.mubr.bf16.mxu0 0
      %1059 = vmatmul.mubr.bf16.gmra.mrb[0].mxu0 %v772
      %v1060 = vpop.f32.mrb[0].mxu0
      %v1061 = vadd.f32 0.0, %v1060
      %v1062 = vpop.f32.mrb[0].mxu0
      %v1063 = vpop.f32.mrb[0].mxu0
      %v1064 = vadd.f32 0.0, %v1063
      %v1065 = vpop.f32.mrb[0].mxu0
      %1066 = vmatprep.mubr.bf16.mxu0 0
      %1067 = vmatmul.mubr.bf16.gmra.mrb[0].mxu0 %v784
      %v1068 = vpop.f32.mrb[0].mxu0
      %v1069 = vadd.f32 0.0, %v1068
      %v1070 = vpop.f32.mrb[0].mxu0
      %v1071 = vpop.f32.mrb[0].mxu0
      %v1072 = vadd.f32 0.0, %v1071
      %v1073 = vpop.f32.mrb[0].mxu0
      %1074 = vmatprep.mubr.bf16.mxu0 0
      %1075 = vmatmul.mubr.bf16.gmra.mrb[0].mxu0 %v796
      %v1076 = vpop.f32.mrb[0].mxu0
      %v1077 = vadd.f32 0.0, %v1076
      %v1078 = vpop.f32.mrb[0].mxu0
      %v1079 = vpop.f32.mrb[0].mxu0
      %v1080 = vadd.f32 0.0, %v1079
      %v1081 = vpop.f32.mrb[0].mxu0
      %1082 = vmatprep.mubr.bf16.mxu0 0
      %1083 = vmatmul.mubr.bf16.gmra.mrb[0].mxu0 %v808
      %v1084 = vpop.f32.mrb[0].mxu0
      %v1085 = vadd.f32 0.0, %v1084
      %v1086 = vpop.f32.mrb[0].mxu0
      %v1087 = vpop.f32.mrb[0].mxu0
      %v1088 = vadd.f32 0.0, %v1087
      %v1089 = vpop.f32.mrb[0].mxu0
      %1090 = vmatprep.mubr.bf16.mxu0 0
      %1091 = vmatmul.mubr.bf16.gmra.mrb[0].mxu0 %v820
      %v1092 = vpop.f32.mrb[0].mxu0
      %v1093 = vadd.f32 0.0, %v1092
      %v1094 = vpop.f32.mrb[0].mxu0
      %v1095 = vpop.f32.mrb[0].mxu0
      %v1096 = vadd.f32 0.0, %v1095
      %v1097 = vpop.f32.mrb[0].mxu0
      %1098 = vmatprep.mubr.bf16.mxu0 0
      %1099 = vmatmul.mubr.bf16.gmra.mrb[0].mxu0 %v832
      %v1100 = vpop.f32.mrb[0].mxu0
      %v1101 = vadd.f32 0.0, %v1100
      %v1102 = vpop.f32.mrb[0].mxu0
      %v1103 = vpop.f32.mrb[0].mxu0
      %v1104 = vadd.f32 0.0, %v1103
      %v1105 = vpop.f32.mrb[0].mxu0
      %1106 = vmatprep.mubr.bf16.mxu0 0
      %1107 = vmatmul.mubr.bf16.gmra.mrb[0].mxu0 %v844
      %v1108 = vpop.f32.mrb[0].mxu0
      %v1109 = vadd.f32 0.0, %v1108
      %v1110 = vpop.f32.mrb[0].mxu0
      %v1111 = vpop.f32.mrb[0].mxu0
      %v1112 = vadd.f32 0.0, %v1111
      %v1113 = vpop.f32.mrb[0].mxu0
      %1114 = vmatprep.mubr.bf16.mxu0 0
      %1115 = vmatmul.mubr.bf16.gmra.mrb[0].mxu0 %v856
      %v1116 = vpop.f32.mrb[0].mxu0
      %v1117 = vadd.f32 0.0, %v1116
      %v1118 = vpop.f32.mrb[0].mxu0
      %v1119 = vpop.f32.mrb[0].mxu0
      %v1120 = vadd.f32 0.0, %v1119
      %v1121 = vpop.f32.mrb[0].mxu0
      %1122 = vmatprep.mubr.bf16.mxu0 0
      %1123 = vmatmul.mubr.bf16.gmra.mrb[0].mxu0 %v868
      %v1124 = vpop.f32.mrb[0].mxu0
      %v1125 = vadd.f32 0.0, %v1124
      %v1126 = vpop.f32.mrb[0].mxu0
      %v1127 = vpop.f32.mrb[0].mxu0
      %v1128 = vadd.f32 0.0, %v1127
      %v1129 = vpop.f32.mrb[0].mxu0
      %1130 = vmatprep.mubr.bf16.mxu0 0
      %1131 = vmatmul.mubr.bf16.gmra.mrb[0].mxu0 %v880
      %v1132 = vpop.f32.mrb[0].mxu0
      %v1133 = vadd.f32 0.0, %v1132
      %v1134 = vpop.f32.mrb[0].mxu0
      %v1135 = vpop.f32.mrb[0].mxu0
      %v1136 = vadd.f32 0.0, %v1135
      %v1137 = vpop.f32.mrb[0].mxu0
      %1138 = vmatprep.mubr.bf16.mxu0 0
      %1139 = vmatmul.mubr.bf16.gmra.mrb[0].mxu0 %v892
      %v1140 = vpop.f32.mrb[0].mxu0
      %v1141 = vadd.f32 0.0, %v1140
      %v1142 = vpop.f32.mrb[0].mxu0
      %v1143 = vpop.f32.mrb[0].mxu0
      %v1144 = vadd.f32 0.0, %v1143
      %v1145 = vpop.f32.mrb[0].mxu0
      %1146 = vmatprep.mubr.bf16.mxu0 0
      %1147 = vmatmul.mubr.bf16.gmra.mrb[0].mxu0 %v904
      %v1148 = vpop.f32.mrb[0].mxu0
      %v1149 = vadd.f32 0.0, %v1148
      %v1150 = vpop.f32.mrb[0].mxu0
      %v1151 = vpop.f32.mrb[0].mxu0
      %v1152 = vadd.f32 0.0, %v1151
      %v1153 = vpop.f32.mrb[0].mxu0
      %1154 = vmatprep.mubr.bf16.mxu0 0
      %1155 = vmatmul.mubr.bf16.gmra.mrb[0].mxu0 %v916
      %v1156 = vpop.f32.mrb[0].mxu0
      %v1157 = vadd.f32 0.0, %v1156
      %v1158 = vpop.f32.mrb[0].mxu0
      %v1159 = vpop.f32.mrb[0].mxu0
      %v1160 = vadd.f32 0.0, %v1159
      %v1161 = vpop.f32.mrb[0].mxu0
      %1162 = vmatprep.mubr.bf16.mxu0 0
      %1163 = vmatmul.mubr.bf16.gmra.mrb[0].mxu0 %v928
      %v1164 = vpop.f32.mrb[0].mxu0
      %v1165 = vadd.f32 0.0, %v1164
      %v1166 = vpop.f32.mrb[0].mxu0
      %v1167 = vpop.f32.mrb[0].mxu0
      %v1168 = vadd.f32 0.0, %v1167
      %v1169 = vpop.f32.mrb[0].mxu0
      %1170 = vdwg.mxu0
      %v1187 = vunpack.c.l.b16 %v720
      %v1188 = vunpack.c.l.b16 %v721
      %v1189 = vunpack.c.l.b16 %v722
      %v1190 = vunpack.c.l.b16 %v723
      %v1191 = vunpack.c.l.b16 %v724
      %v1192 = vunpack.c.l.b16 %v725
      %v1193 = vunpack.c.l.b16 %v726
      %v1194 = vunpack.c.l.b16 %v727
      %v1195 = vunpack.c.l.b16 %v728
      %v1196 = vunpack.c.l.b16 %v729
      %v1197 = vunpack.c.l.b16 %v730
      %v1198 = vunpack.c.l.b16 %v731
      %v1199 = vunpack.c.l.b16 %v732
      %v1200 = vunpack.c.l.b16 %v733
      %v1201 = vunpack.c.l.b16 %v734
      %v1202 = vunpack.c.l.b16 %v735
      %v1203 = vpack.c.b16 %v1188, %v1187
      %v1204 = vpack.c.b16 %v1190, %v1189
      %v1205 = vpack.c.b16 %v1192, %v1191
      %v1206 = vpack.c.b16 %v1194, %v1193
      %v1207 = vpack.c.b16 %v1196, %v1195
      %v1208 = vpack.c.b16 %v1198, %v1197
      %v1209 = vpack.c.b16 %v1200, %v1199
      %v1210 = vpack.c.b16 %v1202, %v1201
      %1219 = vmatprep.subr.bf16.mxu0 0
      %1220 = vmatpush1.bf16.msra.mxu0 %v1203
      %1221 = vmatprep.subr.bf16.mxu0 0
      %1222 = vmatpush1.bf16.msra.mxu0 %v1204
      %1223 = vmatprep.subr.bf16.mxu0 0
      %1224 = vmatpush1.bf16.msra.mxu0 %v1205
      %1225 = vmatprep.subr.bf16.mxu0 0
      %1226 = vmatpush1.bf16.msra.mxu0 %v1206
      %1227 = vmatprep.subr.bf16.mxu0 0
      %1228 = vmatpush1.bf16.msra.mxu0 %v1207
      %1229 = vmatprep.subr.bf16.mxu0 0
      %1230 = vmatpush1.bf16.msra.mxu0 %v1208
      %1231 = vmatprep.subr.bf16.mxu0 0
      %1232 = vmatpush1.bf16.msra.mxu0 %v1209
      %1233 = vmatprep.subr.bf16.mxu0 0
      %1234 = vmatpush1.bf16.msra.mxu0 %v1210
      %1235 = vmatprep.subr.bf16.mxu0 0
      %1236 = vmatpush1.bf16.msra.mxu0 0
      %1237 = vmatprep.subr.bf16.mxu0 0
      %1238 = vmatpush1.bf16.msra.mxu0 0
      %1239 = vmatprep.subr.bf16.mxu0 0
      %1240 = vmatpush1.bf16.msra.mxu0 0
      %1241 = vmatprep.subr.bf16.mxu0 0
      %1242 = vmatpush1.bf16.msra.mxu0 0
      %1243 = vmatprep.subr.bf16.mxu0 0
      %1244 = vmatpush1.bf16.msra.mxu0 0
      %1245 = vmatprep.subr.bf16.mxu0 0
      %1246 = vmatpush1.bf16.msra.mxu0 0
      %1247 = vmatprep.subr.bf16.mxu0 0
      %1248 = vmatpush1.bf16.msra.mxu0 0
      %1249 = vmatprep.subr.bf16.mxu0 0
      %1250 = vmatpush1.bf16.msra.mxu0 0
      %1251 = vmatprep.mubr.bf16.mxu0 0
      %1252 = vmatmul.mubr.bf16.gmra.mrb[0].mxu0 %v684
      %v1253 = vpop.f32.mrb[0].mxu0
      %v1254 = vadd.f32 %v1045, %v1253
      %v1255 = vpop.f32.mrb[0].mxu0
      %v1256 = vpop.f32.mrb[0].mxu0
      %v1257 = vadd.f32 %v1048, %v1256
      %v1258 = vpop.f32.mrb[0].mxu0
      %1259 = vmatprep.mubr.bf16.mxu0 0
      %1260 = vmatmul.mubr.bf16.gmra.mrb[0].mxu0 %v686
      %v1261 = vpop.f32.mrb[0].mxu0
      %v1262 = vadd.f32 %v1053, %v1261
      %v1263 = vpop.f32.mrb[0].mxu0
      %v1264 = vpop.f32.mrb[0].mxu0
      %v1265 = vadd.f32 %v1056, %v1264
      %v1266 = vpop.f32.mrb[0].mxu0
      %1267 = vmatprep.mubr.bf16.mxu0 0
      %1268 = vmatmul.mubr.bf16.gmra.mrb[0].mxu0 %v688
      %v1269 = vpop.f32.mrb[0].mxu0
      %v1270 = vadd.f32 %v1061, %v1269
      %v1271 = vpop.f32.mrb[0].mxu0
      %v1272 = vpop.f32.mrb[0].mxu0
      %v1273 = vadd.f32 %v1064, %v1272
      %v1274 = vpop.f32.mrb[0].mxu0
      %1275 = vmatprep.mubr.bf16.mxu0 0
      %1276 = vmatmul.mubr.bf16.gmra.mrb[0].mxu0 %v690
      %v1277 = vpop.f32.mrb[0].mxu0
      %v1278 = vadd.f32 %v1069, %v1277
      %v1279 = vpop.f32.mrb[0].mxu0
      %v1280 = vpop.f32.mrb[0].mxu0
      %v1281 = vadd.f32 %v1072, %v1280
      %v1282 = vpop.f32.mrb[0].mxu0
      %1283 = vmatprep.mubr.bf16.mxu0 0
      %1284 = vmatmul.mubr.bf16.gmra.mrb[0].mxu0 %v692
      %v1285 = vpop.f32.mrb[0].mxu0
      %v1286 = vadd.f32 %v1077, %v1285
      %v1287 = vpop.f32.mrb[0].mxu0
      %v1288 = vpop.f32.mrb[0].mxu0
      %v1289 = vadd.f32 %v1080, %v1288
      %v1290 = vpop.f32.mrb[0].mxu0
      %1291 = vmatprep.mubr.bf16.mxu0 0
      %1292 = vmatmul.mubr.bf16.gmra.mrb[0].mxu0 %v694
      %v1293 = vpop.f32.mrb[0].mxu0
      %v1294 = vadd.f32 %v1085, %v1293
      %v1295 = vpop.f32.mrb[0].mxu0
      %v1296 = vpop.f32.mrb[0].mxu0
      %v1297 = vadd.f32 %v1088, %v1296
      %v1298 = vpop.f32.mrb[0].mxu0
      %1299 = vmatprep.mubr.bf16.mxu0 0
      %1300 = vmatmul.mubr.bf16.gmra.mrb[0].mxu0 %v696
      %v1301 = vpop.f32.mrb[0].mxu0
      %v1302 = vadd.f32 %v1093, %v1301
      %v1303 = vpop.f32.mrb[0].mxu0
      %v1304 = vpop.f32.mrb[0].mxu0
      %v1305 = vadd.f32 %v1096, %v1304
      %v1306 = vpop.f32.mrb[0].mxu0
      %1307 = vmatprep.mubr.bf16.mxu0 0
      %1308 = vmatmul.mubr.bf16.gmra.mrb[0].mxu0 %v698
      %v1309 = vpop.f32.mrb[0].mxu0
      %v1310 = vadd.f32 %v1101, %v1309
      %v1311 = vpop.f32.mrb[0].mxu0
      %v1312 = vpop.f32.mrb[0].mxu0
      %v1313 = vadd.f32 %v1104, %v1312
      %v1314 = vpop.f32.mrb[0].mxu0
      %1315 = vmatprep.mubr.bf16.mxu0 0
      %1316 = vmatmul.mubr.bf16.gmra.mrb[0].mxu0 %v700
      %v1317 = vpop.f32.mrb[0].mxu0
      %v1318 = vadd.f32 %v1109, %v1317
      %v1319 = vpop.f32.mrb[0].mxu0
      %v1320 = vpop.f32.mrb[0].mxu0
      %v1321 = vadd.f32 %v1112, %v1320
      %v1322 = vpop.f32.mrb[0].mxu0
      %1323 = vmatprep.mubr.bf16.mxu0 0
      %1324 = vmatmul.mubr.bf16.gmra.mrb[0].mxu0 %v702
      %v1325 = vpop.f32.mrb[0].mxu0
      %v1326 = vadd.f32 %v1117, %v1325
      %v1327 = vpop.f32.mrb[0].mxu0
      %v1328 = vpop.f32.mrb[0].mxu0
      %v1329 = vadd.f32 %v1120, %v1328
      %v1330 = vpop.f32.mrb[0].mxu0
      %1331 = vmatprep.mubr.bf16.mxu0 0
      %1332 = vmatmul.mubr.bf16.gmra.mrb[0].mxu0 %v704
      %v1333 = vpop.f32.mrb[0].mxu0
      %v1334 = vadd.f32 %v1125, %v1333
      %v1335 = vpop.f32.mrb[0].mxu0
      %v1336 = vpop.f32.mrb[0].mxu0
      %v1337 = vadd.f32 %v1128, %v1336
      %v1338 = vpop.f32.mrb[0].mxu0
      %1339 = vmatprep.mubr.bf16.mxu0 0
      %1340 = vmatmul.mubr.bf16.gmra.mrb[0].mxu0 %v706
      %v1341 = vpop.f32.mrb[0].mxu0
      %v1342 = vadd.f32 %v1133, %v1341
      %v1343 = vpop.f32.mrb[0].mxu0
      %v1344 = vpop.f32.mrb[0].mxu0
      %v1345 = vadd.f32 %v1136, %v1344
      %v1346 = vpop.f32.mrb[0].mxu0
      %1347 = vmatprep.mubr.bf16.mxu0 0
      %1348 = vmatmul.mubr.bf16.gmra.mrb[0].mxu0 %v708
      %v1349 = vpop.f32.mrb[0].mxu0
      %v1350 = vadd.f32 %v1141, %v1349
      %v1351 = vpop.f32.mrb[0].mxu0
      %v1352 = vpop.f32.mrb[0].mxu0
      %v1353 = vadd.f32 %v1144, %v1352
      %v1354 = vpop.f32.mrb[0].mxu0
      %1355 = vmatprep.mubr.bf16.mxu0 0
      %1356 = vmatmul.mubr.bf16.gmra.mrb[0].mxu0 %v710
      %v1357 = vpop.f32.mrb[0].mxu0
      %v1358 = vadd.f32 %v1149, %v1357
      %v1359 = vpop.f32.mrb[0].mxu0
      %v1360 = vpop.f32.mrb[0].mxu0
      %v1361 = vadd.f32 %v1152, %v1360
      %v1362 = vpop.f32.mrb[0].mxu0
      %1363 = vmatprep.mubr.bf16.mxu0 0
      %1364 = vmatmul.mubr.bf16.gmra.mrb[0].mxu0 %v712
      %v1365 = vpop.f32.mrb[0].mxu0
      %v1366 = vadd.f32 %v1157, %v1365
      %v1367 = vpop.f32.mrb[0].mxu0
      %v1368 = vpop.f32.mrb[0].mxu0
      %v1369 = vadd.f32 %v1160, %v1368
      %v1370 = vpop.f32.mrb[0].mxu0
      %1371 = vmatprep.mubr.bf16.mxu0 0
      %1372 = vmatmul.mubr.bf16.gmra.mrb[0].mxu0 %v714
      %v1373 = vpop.f32.mrb[0].mxu0
      %v1374 = vadd.f32 %v1165, %v1373
      %v1375 = vpop.f32.mrb[0].mxu0
      %v1376 = vpop.f32.mrb[0].mxu0
      %v1377 = vadd.f32 %v1168, %v1376
      %v1378 = vpop.f32.mrb[0].mxu0
      %1379 = vdwg.mxu0
      %vm1412 = vcmask 1046528
      %v1413 = vrot.slane %v684, 1
      %v1414 = vrot.slane %v685, 1
      %v1415 = vsel %vm1412, %v1413, %v1414
      %v1416 = vrot.slane %v686, 1
      %v1417 = vrot.slane %v687, 1
      %v1418 = vsel %vm1412, %v1416, %v1417
      %v1419 = vrot.slane %v688, 1
      %v1420 = vrot.slane %v689, 1
      %v1421 = vsel %vm1412, %v1419, %v1420
      %v1422 = vrot.slane %v690, 1
      %v1423 = vrot.slane %v691, 1
      %v1424 = vsel %vm1412, %v1422, %v1423
      %v1425 = vrot.slane %v692, 1
      %v1426 = vrot.slane %v693, 1
      %v1427 = vsel %vm1412, %v1425, %v1426
      %v1428 = vrot.slane %v694, 1
      %v1429 = vrot.slane %v695, 1
      %v1430 = vsel %vm1412, %v1428, %v1429
      %v1431 = vrot.slane %v696, 1
      %v1432 = vrot.slane %v697, 1
      %v1433 = vsel %vm1412, %v1431, %v1432
      %v1434 = vrot.slane %v698, 1
      %v1435 = vrot.slane %v699, 1
      %v1436 = vsel %vm1412, %v1434, %v1435
      %v1437 = vrot.slane %v700, 1
      %v1438 = vrot.slane %v701, 1
      %v1439 = vsel %vm1412, %v1437, %v1438
      %v1440 = vrot.slane %v702, 1
      %v1441 = vrot.slane %v703, 1
      %v1442 = vsel %vm1412, %v1440, %v1441
      %v1443 = vrot.slane %v704, 1
      %v1444 = vrot.slane %v705, 1
      %v1445 = vsel %vm1412, %v1443, %v1444
      %v1446 = vrot.slane %v706, 1
      %v1447 = vrot.slane %v707, 1
      %v1448 = vsel %vm1412, %v1446, %v1447
      %v1449 = vrot.slane %v708, 1
      %v1450 = vrot.slane %v709, 1
      %v1451 = vsel %vm1412, %v1449, %v1450
      %v1452 = vrot.slane %v710, 1
      %v1453 = vrot.slane %v711, 1
      %v1454 = vsel %vm1412, %v1452, %v1453
      %v1455 = vrot.slane %v712, 1
      %v1456 = vrot.slane %v713, 1
      %v1457 = vsel %vm1412, %v1455, %v1456
      %v1458 = vrot.slane %v714, 1
      %v1459 = vrot.slane %v715, 1
      %v1460 = vsel %vm1412, %v1458, %v1459
      %s1477 = scalar_lea.vmem %s1, 128
      %v1478 = vld [vmem:[%s1477] sm:$0xf]
      %v1479 = vld [vmem:[%s1477 + $0x4] sm:$0xf]
      %v1480 = vld [vmem:[%s1477 + $0x8] sm:$0xf]
      %v1481 = vld [vmem:[%s1477 + $0xc] sm:$0xf]
      %v1482 = vld [vmem:[%s1477 + $0x10] sm:$0xf]
      %v1483 = vld [vmem:[%s1477 + $0x14] sm:$0xf]
      %v1484 = vld [vmem:[%s1477 + $0x18] sm:$0xf]
      %v1485 = vld [vmem:[%s1477 + $0x1c] sm:$0xf]
      %v1486 = vld [vmem:[%s1477 + $0x20] sm:$0xf]
      %v1487 = vld [vmem:[%s1477 + $0x24] sm:$0xf]
      %v1488 = vld [vmem:[%s1477 + $0x28] sm:$0xf]
      %v1489 = vld [vmem:[%s1477 + $0x2c] sm:$0xf]
      %v1490 = vld [vmem:[%s1477 + $0x30] sm:$0xf]
      %v1491 = vld [vmem:[%s1477 + $0x34] sm:$0xf]
      %v1492 = vld [vmem:[%s1477 + $0x38] sm:$0xf]
      %v1493 = vld [vmem:[%s1477 + $0x3c] sm:$0xf]
      %v1510 = vunpack.c.l.b16 %v1478
      %v1511 = vunpack.c.l.b16 %v1479
      %v1512 = vunpack.c.l.b16 %v1480
      %v1513 = vunpack.c.l.b16 %v1481
      %v1514 = vunpack.c.l.b16 %v1482
      %v1515 = vunpack.c.l.b16 %v1483
      %v1516 = vunpack.c.l.b16 %v1484
      %v1517 = vunpack.c.l.b16 %v1485
      %v1518 = vunpack.c.l.b16 %v1486
      %v1519 = vunpack.c.l.b16 %v1487
      %v1520 = vunpack.c.l.b16 %v1488
      %v1521 = vunpack.c.l.b16 %v1489
      %v1522 = vunpack.c.l.b16 %v1490
      %v1523 = vunpack.c.l.b16 %v1491
      %v1524 = vunpack.c.l.b16 %v1492
      %v1525 = vunpack.c.l.b16 %v1493
      %v1526 = vpack.c.b16 %v1511, %v1510
      %v1527 = vpack.c.b16 %v1513, %v1512
      %v1528 = vpack.c.b16 %v1515, %v1514
      %v1529 = vpack.c.b16 %v1517, %v1516
      %v1530 = vpack.c.b16 %v1519, %v1518
      %v1531 = vpack.c.b16 %v1521, %v1520
      %v1532 = vpack.c.b16 %v1523, %v1522
      %v1533 = vpack.c.b16 %v1525, %v1524
      %1542 = vmatprep.subr.bf16.mxu0 0
      %1543 = vmatpush1.bf16.msra.mxu0 %v1526
      %1544 = vmatprep.subr.bf16.mxu0 0
      %1545 = vmatpush1.bf16.msra.mxu0 %v1527
      %1546 = vmatprep.subr.bf16.mxu0 0
      %1547 = vmatpush1.bf16.msra.mxu0 %v1528
      %1548 = vmatprep.subr.bf16.mxu0 0
      %1549 = vmatpush1.bf16.msra.mxu0 %v1529
      %1550 = vmatprep.subr.bf16.mxu0 0
      %1551 = vmatpush1.bf16.msra.mxu0 %v1530
      %1552 = vmatprep.subr.bf16.mxu0 0
      %1553 = vmatpush1.bf16.msra.mxu0 %v1531
      %1554 = vmatprep.subr.bf16.mxu0 0
      %1555 = vmatpush1.bf16.msra.mxu0 %v1532
      %1556 = vmatprep.subr.bf16.mxu0 0
      %1557 = vmatpush1.bf16.msra.mxu0 %v1533
      %1558 = vmatprep.subr.bf16.mxu0 0
      %1559 = vmatpush1.bf16.msra.mxu0 0
      %1560 = vmatprep.subr.bf16.mxu0 0
      %1561 = vmatpush1.bf16.msra.mxu0 0
      %1562 = vmatprep.subr.bf16.mxu0 0
      %1563 = vmatpush1.bf16.msra.mxu0 0
      %1564 = vmatprep.subr.bf16.mxu0 0
      %1565 = vmatpush1.bf16.msra.mxu0 0
      %1566 = vmatprep.subr.bf16.mxu0 0
      %1567 = vmatpush1.bf16.msra.mxu0 0
      %1568 = vmatprep.subr.bf16.mxu0 0
      %1569 = vmatpush1.bf16.msra.mxu0 0
      %1570 = vmatprep.subr.bf16.mxu0 0
      %1571 = vmatpush1.bf16.msra.mxu0 0
      %1572 = vmatprep.subr.bf16.mxu0 0
      %1573 = vmatpush1.bf16.msra.mxu0 0
      %1574 = vmatprep.mubr.bf16.mxu0 0
      %1575 = vmatmul.mubr.bf16.gmra.mrb[0].mxu0 %v1415
      %v1576 = vpop.f32.mrb[0].mxu0
      %v1577 = vadd.f32 0.0, %v1576
      %v1578 = vpop.f32.mrb[0].mxu0
      %v1579 = vpop.f32.mrb[0].mxu0
      %v1580 = vadd.f32 0.0, %v1579
      %v1581 = vpop.f32.mrb[0].mxu0
      %1582 = vmatprep.mubr.bf16.mxu0 0
      %1583 = vmatmul.mubr.bf16.gmra.mrb[0].mxu0 %v1418
      %v1584 = vpop.f32.mrb[0].mxu0
      %v1585 = vadd.f32 0.0, %v1584
      %v1586 = vpop.f32.mrb[0].mxu0
      %v1587 = vpop.f32.mrb[0].mxu0
      %v1588 = vadd.f32 0.0, %v1587
      %v1589 = vpop.f32.mrb[0].mxu0
      %1590 = vmatprep.mubr.bf16.mxu0 0
      %1591 = vmatmul.mubr.bf16.gmra.mrb[0].mxu0 %v1421
      %v1592 = vpop.f32.mrb[0].mxu0
      %v1593 = vadd.f32 0.0, %v1592
      %v1594 = vpop.f32.mrb[0].mxu0
      %v1595 = vpop.f32.mrb[0].mxu0
      %v1596 = vadd.f32 0.0, %v1595
      %v1597 = vpop.f32.mrb[0].mxu0
      %1598 = vmatprep.mubr.bf16.mxu0 0
      %1599 = vmatmul.mubr.bf16.gmra.mrb[0].mxu0 %v1424
      %v1600 = vpop.f32.mrb[0].mxu0
      %v1601 = vadd.f32 0.0, %v1600
      %v1602 = vpop.f32.mrb[0].mxu0
      %v1603 = vpop.f32.mrb[0].mxu0
      %v1604 = vadd.f32 0.0, %v1603
      %v1605 = vpop.f32.mrb[0].mxu0
      %1606 = vmatprep.mubr.bf16.mxu0 0
      %1607 = vmatmul.mubr.bf16.gmra.mrb[0].mxu0 %v1427
      %v1608 = vpop.f32.mrb[0].mxu0
      %v1609 = vadd.f32 0.0, %v1608
      %v1610 = vpop.f32.mrb[0].mxu0
      %v1611 = vpop.f32.mrb[0].mxu0
      %v1612 = vadd.f32 0.0, %v1611
      %v1613 = vpop.f32.mrb[0].mxu0
      %1614 = vmatprep.mubr.bf16.mxu0 0
      %1615 = vmatmul.mubr.bf16.gmra.mrb[0].mxu0 %v1430
      %v1616 = vpop.f32.mrb[0].mxu0
      %v1617 = vadd.f32 0.0, %v1616
      %v1618 = vpop.f32.mrb[0].mxu0
      %v1619 = vpop.f32.mrb[0].mxu0
      %v1620 = vadd.f32 0.0, %v1619
      %v1621 = vpop.f32.mrb[0].mxu0
      %1622 = vmatprep.mubr.bf16.mxu0 0
      %1623 = vmatmul.mubr.bf16.gmra.mrb[0].mxu0 %v1433
      %v1624 = vpop.f32.mrb[0].mxu0
      %v1625 = vadd.f32 0.0, %v1624
      %v1626 = vpop.f32.mrb[0].mxu0
      %v1627 = vpop.f32.mrb[0].mxu0
      %v1628 = vadd.f32 0.0, %v1627
      %v1629 = vpop.f32.mrb[0].mxu0
      %1630 = vmatprep.mubr.bf16.mxu0 0
      %1631 = vmatmul.mubr.bf16.gmra.mrb[0].mxu0 %v1436
      %v1632 = vpop.f32.mrb[0].mxu0
      %v1633 = vadd.f32 0.0, %v1632
      %v1634 = vpop.f32.mrb[0].mxu0
      %v1635 = vpop.f32.mrb[0].mxu0
      %v1636 = vadd.f32 0.0, %v1635
      %v1637 = vpop.f32.mrb[0].mxu0
      %1638 = vmatprep.mubr.bf16.mxu0 0
      %1639 = vmatmul.mubr.bf16.gmra.mrb[0].mxu0 %v1439
      %v1640 = vpop.f32.mrb[0].mxu0
      %v1641 = vadd.f32 0.0, %v1640
      %v1642 = vpop.f32.mrb[0].mxu0
      %v1643 = vpop.f32.mrb[0].mxu0
      %v1644 = vadd.f32 0.0, %v1643
      %v1645 = vpop.f32.mrb[0].mxu0
      %1646 = vmatprep.mubr.bf16.mxu0 0
      %1647 = vmatmul.mubr.bf16.gmra.mrb[0].mxu0 %v1442
      %v1648 = vpop.f32.mrb[0].mxu0
      %v1649 = vadd.f32 0.0, %v1648
      %v1650 = vpop.f32.mrb[0].mxu0
      %v1651 = vpop.f32.mrb[0].mxu0
      %v1652 = vadd.f32 0.0, %v1651
      %v1653 = vpop.f32.mrb[0].mxu0
      %1654 = vmatprep.mubr.bf16.mxu0 0
      %1655 = vmatmul.mubr.bf16.gmra.mrb[0].mxu0 %v1445
      %v1656 = vpop.f32.mrb[0].mxu0
      %v1657 = vadd.f32 0.0, %v1656
      %v1658 = vpop.f32.mrb[0].mxu0
      %v1659 = vpop.f32.mrb[0].mxu0
      %v1660 = vadd.f32 0.0, %v1659
      %v1661 = vpop.f32.mrb[0].mxu0
      %1662 = vmatprep.mubr.bf16.mxu0 0
      %1663 = vmatmul.mubr.bf16.gmra.mrb[0].mxu0 %v1448
      %v1664 = vpop.f32.mrb[0].mxu0
      %v1665 = vadd.f32 0.0, %v1664
      %v1666 = vpop.f32.mrb[0].mxu0
      %v1667 = vpop.f32.mrb[0].mxu0
      %v1668 = vadd.f32 0.0, %v1667
      %v1669 = vpop.f32.mrb[0].mxu0
      %1670 = vmatprep.mubr.bf16.mxu0 0
      %1671 = vmatmul.mubr.bf16.gmra.mrb[0].mxu0 %v1451
      %v1672 = vpop.f32.mrb[0].mxu0
      %v1673 = vadd.f32 0.0, %v1672
      %v1674 = vpop.f32.mrb[0].mxu0
      %v1675 = vpop.f32.mrb[0].mxu0
      %v1676 = vadd.f32 0.0, %v1675
      %v1677 = vpop.f32.mrb[0].mxu0
      %1678 = vmatprep.mubr.bf16.mxu0 0
      %1679 = vmatmul.mubr.bf16.gmra.mrb[0].mxu0 %v1454
      %v1680 = vpop.f32.mrb[0].mxu0
      %v1681 = vadd.f32 0.0, %v1680
      %v1682 = vpop.f32.mrb[0].mxu0
      %v1683 = vpop.f32.mrb[0].mxu0
      %v1684 = vadd.f32 0.0, %v1683
      %v1685 = vpop.f32.mrb[0].mxu0
      %1686 = vmatprep.mubr.bf16.mxu0 0
      %1687 = vmatmul.mubr.bf16.gmra.mrb[0].mxu0 %v1457
      %v1688 = vpop.f32.mrb[0].mxu0
      %v1689 = vadd.f32 0.0, %v1688
      %v1690 = vpop.f32.mrb[0].mxu0
      %v1691 = vpop.f32.mrb[0].mxu0
      %v1692 = vadd.f32 0.0, %v1691
      %v1693 = vpop.f32.mrb[0].mxu0
      %1694 = vmatprep.mubr.bf16.mxu0 0
      %1695 = vmatmul.mubr.bf16.gmra.mrb[0].mxu0 %v1460
      %v1696 = vpop.f32.mrb[0].mxu0
      %v1697 = vadd.f32 0.0, %v1696
      %v1698 = vpop.f32.mrb[0].mxu0
      %v1699 = vpop.f32.mrb[0].mxu0
      %v1700 = vadd.f32 0.0, %v1699
      %v1701 = vpop.f32.mrb[0].mxu0
      %1702 = vdwg.mxu0
      %v1703 = vadd.f32 %v1254, %v1577
      %v1704 = vadd.f32 %v1257, %v1580
      %v1705 = vadd.f32 %v1262, %v1585
      %v1706 = vadd.f32 %v1265, %v1588
      %v1707 = vadd.f32 %v1270, %v1593
      %v1708 = vadd.f32 %v1273, %v1596
      %v1709 = vadd.f32 %v1278, %v1601
      %v1710 = vadd.f32 %v1281, %v1604
      %v1711 = vadd.f32 %v1286, %v1609
      %v1712 = vadd.f32 %v1289, %v1612
      %v1713 = vadd.f32 %v1294, %v1617
      %v1714 = vadd.f32 %v1297, %v1620
      %v1715 = vadd.f32 %v1302, %v1625
      %v1716 = vadd.f32 %v1305, %v1628
      %v1717 = vadd.f32 %v1310, %v1633
      %v1718 = vadd.f32 %v1313, %v1636
      %v1719 = vadd.f32 %v1318, %v1641
      %v1720 = vadd.f32 %v1321, %v1644
      %v1721 = vadd.f32 %v1326, %v1649
      %v1722 = vadd.f32 %v1329, %v1652
      %v1723 = vadd.f32 %v1334, %v1657
      %v1724 = vadd.f32 %v1337, %v1660
      %v1725 = vadd.f32 %v1342, %v1665
      %v1726 = vadd.f32 %v1345, %v1668
      %v1727 = vadd.f32 %v1350, %v1673
      %v1728 = vadd.f32 %v1353, %v1676
      %v1729 = vadd.f32 %v1358, %v1681
      %v1730 = vadd.f32 %v1361, %v1684
      %v1731 = vadd.f32 %v1366, %v1689
      %v1732 = vadd.f32 %v1369, %v1692
      %v1733 = vadd.f32 %v1374, %v1697
      %v1734 = vadd.f32 %v1377, %v1700
      %s1735 = scalar_lea.vmem %s1, 192
      %v1736 = vld [vmem:[%s1735] sm:$0xf]
      %v1737 = vld [vmem:[%s1735 + $0x4] sm:$0xf]
      %v1738 = vld [vmem:[%s1735 + $0x8] sm:$0xf]
      %v1739 = vld [vmem:[%s1735 + $0xc] sm:$0xf]
      %v1740 = vld [vmem:[%s1735 + $0x10] sm:$0xf]
      %v1741 = vld [vmem:[%s1735 + $0x14] sm:$0xf]
      %v1742 = vld [vmem:[%s1735 + $0x18] sm:$0xf]
      %v1743 = vld [vmem:[%s1735 + $0x1c] sm:$0xf]
      %v1744 = vld [vmem:[%s1735 + $0x20] sm:$0xf]
      %v1745 = vld [vmem:[%s1735 + $0x24] sm:$0xf]
      %v1746 = vld [vmem:[%s1735 + $0x28] sm:$0xf]
      %v1747 = vld [vmem:[%s1735 + $0x2c] sm:$0xf]
      %v1748 = vld [vmem:[%s1735 + $0x30] sm:$0xf]
      %v1749 = vld [vmem:[%s1735 + $0x34] sm:$0xf]
      %v1750 = vld [vmem:[%s1735 + $0x38] sm:$0xf]
      %v1751 = vld [vmem:[%s1735 + $0x3c] sm:$0xf]
      %v1768 = vunpack.c.l.b16 %v1736
      %v1769 = vunpack.c.l.b16 %v1737
      %v1770 = vunpack.c.l.b16 %v1738
      %v1771 = vunpack.c.l.b16 %v1739
      %v1772 = vunpack.c.l.b16 %v1740
      %v1773 = vunpack.c.l.b16 %v1741
      %v1774 = vunpack.c.l.b16 %v1742
      %v1775 = vunpack.c.l.b16 %v1743
      %v1776 = vunpack.c.l.b16 %v1744
      %v1777 = vunpack.c.l.b16 %v1745
      %v1778 = vunpack.c.l.b16 %v1746
      %v1779 = vunpack.c.l.b16 %v1747
      %v1780 = vunpack.c.l.b16 %v1748
      %v1781 = vunpack.c.l.b16 %v1749
      %v1782 = vunpack.c.l.b16 %v1750
      %v1783 = vunpack.c.l.b16 %v1751
      %v1784 = vpack.c.b16 %v1769, %v1768
      %v1785 = vpack.c.b16 %v1771, %v1770
      %v1786 = vpack.c.b16 %v1773, %v1772
      %v1787 = vpack.c.b16 %v1775, %v1774
      %v1788 = vpack.c.b16 %v1777, %v1776
      %v1789 = vpack.c.b16 %v1779, %v1778
      %v1790 = vpack.c.b16 %v1781, %v1780
      %v1791 = vpack.c.b16 %v1783, %v1782
      %1800 = vmatprep.subr.bf16.mxu0 0
      %1801 = vmatpush1.bf16.msra.mxu0 %v1784
      %1802 = vmatprep.subr.bf16.mxu0 0
      %1803 = vmatpush1.bf16.msra.mxu0 %v1785
      %1804 = vmatprep.subr.bf16.mxu0 0
      %1805 = vmatpush1.bf16.msra.mxu0 %v1786
      %1806 = vmatprep.subr.bf16.mxu0 0
      %1807 = vmatpush1.bf16.msra.mxu0 %v1787
      %1808 = vmatprep.subr.bf16.mxu0 0
      %1809 = vmatpush1.bf16.msra.mxu0 %v1788
      %1810 = vmatprep.subr.bf16.mxu0 0
      %1811 = vmatpush1.bf16.msra.mxu0 %v1789
      %1812 = vmatprep.subr.bf16.mxu0 0
      %1813 = vmatpush1.bf16.msra.mxu0 %v1790
      %1814 = vmatprep.subr.bf16.mxu0 0
      %1815 = vmatpush1.bf16.msra.mxu0 %v1791
      %1816 = vmatprep.subr.bf16.mxu0 0
      %1817 = vmatpush1.bf16.msra.mxu0 0
      %1818 = vmatprep.subr.bf16.mxu0 0
      %1819 = vmatpush1.bf16.msra.mxu0 0
      %1820 = vmatprep.subr.bf16.mxu0 0
      %1821 = vmatpush1.bf16.msra.mxu0 0
      %1822 = vmatprep.subr.bf16.mxu0 0
      %1823 = vmatpush1.bf16.msra.mxu0 0
      %1824 = vmatprep.subr.bf16.mxu0 0
      %1825 = vmatpush1.bf16.msra.mxu0 0
      %1826 = vmatprep.subr.bf16.mxu0 0
      %1827 = vmatpush1.bf16.msra.mxu0 0
      %1828 = vmatprep.subr.bf16.mxu0 0
      %1829 = vmatpush1.bf16.msra.mxu0 0
      %1830 = vmatprep.subr.bf16.mxu0 0
      %1831 = vmatpush1.bf16.msra.mxu0 0
      %1832 = vmatprep.mubr.bf16.mxu0 0
      %1833 = vmatmul.mubr.bf16.gmra.mrb[0].mxu0 %v686
      %v1834 = vpop.f32.mrb[0].mxu0
      %v1835 = vadd.f32 0.0, %v1834
      %v1836 = vpop.f32.mrb[0].mxu0
      %v1837 = vpop.f32.mrb[0].mxu0
      %v1838 = vadd.f32 0.0, %v1837
      %v1839 = vpop.f32.mrb[0].mxu0
      %1840 = vmatprep.mubr.bf16.mxu0 0
      %1841 = vmatmul.mubr.bf16.gmra.mrb[0].mxu0 %v688
      %v1842 = vpop.f32.mrb[0].mxu0
      %v1843 = vadd.f32 0.0, %v1842
      %v1844 = vpop.f32.mrb[0].mxu0
      %v1845 = vpop.f32.mrb[0].mxu0
      %v1846 = vadd.f32 0.0, %v1845
      %v1847 = vpop.f32.mrb[0].mxu0
      %1848 = vmatprep.mubr.bf16.mxu0 0
      %1849 = vmatmul.mubr.bf16.gmra.mrb[0].mxu0 %v690
      %v1850 = vpop.f32.mrb[0].mxu0
      %v1851 = vadd.f32 0.0, %v1850
      %v1852 = vpop.f32.mrb[0].mxu0
      %v1853 = vpop.f32.mrb[0].mxu0
      %v1854 = vadd.f32 0.0, %v1853
      %v1855 = vpop.f32.mrb[0].mxu0
      %1856 = vmatprep.mubr.bf16.mxu0 0
      %1857 = vmatmul.mubr.bf16.gmra.mrb[0].mxu0 %v692
      %v1858 = vpop.f32.mrb[0].mxu0
      %v1859 = vadd.f32 0.0, %v1858
      %v1860 = vpop.f32.mrb[0].mxu0
      %v1861 = vpop.f32.mrb[0].mxu0
      %v1862 = vadd.f32 0.0, %v1861
      %v1863 = vpop.f32.mrb[0].mxu0
      %1864 = vmatprep.mubr.bf16.mxu0 0
      %1865 = vmatmul.mubr.bf16.gmra.mrb[0].mxu0 %v694
      %v1866 = vpop.f32.mrb[0].mxu0
      %v1867 = vadd.f32 0.0, %v1866
      %v1868 = vpop.f32.mrb[0].mxu0
      %v1869 = vpop.f32.mrb[0].mxu0
      %v1870 = vadd.f32 0.0, %v1869
      %v1871 = vpop.f32.mrb[0].mxu0
      %1872 = vmatprep.mubr.bf16.mxu0 0
      %1873 = vmatmul.mubr.bf16.gmra.mrb[0].mxu0 %v696
      %v1874 = vpop.f32.mrb[0].mxu0
      %v1875 = vadd.f32 0.0, %v1874
      %v1876 = vpop.f32.mrb[0].mxu0
      %v1877 = vpop.f32.mrb[0].mxu0
      %v1878 = vadd.f32 0.0, %v1877
      %v1879 = vpop.f32.mrb[0].mxu0
      %1880 = vmatprep.mubr.bf16.mxu0 0
      %1881 = vmatmul.mubr.bf16.gmra.mrb[0].mxu0 %v698
      %v1882 = vpop.f32.mrb[0].mxu0
      %v1883 = vadd.f32 0.0, %v1882
      %v1884 = vpop.f32.mrb[0].mxu0
      %v1885 = vpop.f32.mrb[0].mxu0
      %v1886 = vadd.f32 0.0, %v1885
      %v1887 = vpop.f32.mrb[0].mxu0
      %1888 = vmatprep.mubr.bf16.mxu0 0
      %1889 = vmatmul.mubr.bf16.gmra.mrb[0].mxu0 %v700
      %v1890 = vpop.f32.mrb[0].mxu0
      %v1891 = vadd.f32 0.0, %v1890
      %v1892 = vpop.f32.mrb[0].mxu0
      %v1893 = vpop.f32.mrb[0].mxu0
      %v1894 = vadd.f32 0.0, %v1893
      %v1895 = vpop.f32.mrb[0].mxu0
      %1896 = vmatprep.mubr.bf16.mxu0 0
      %1897 = vmatmul.mubr.bf16.gmra.mrb[0].mxu0 %v702
      %v1898 = vpop.f32.mrb[0].mxu0
      %v1899 = vadd.f32 0.0, %v1898
      %v1900 = vpop.f32.mrb[0].mxu0
      %v1901 = vpop.f32.mrb[0].mxu0
      %v1902 = vadd.f32 0.0, %v1901
      %v1903 = vpop.f32.mrb[0].mxu0
      %1904 = vmatprep.mubr.bf16.mxu0 0
      %1905 = vmatmul.mubr.bf16.gmra.mrb[0].mxu0 %v704
      %v1906 = vpop.f32.mrb[0].mxu0
      %v1907 = vadd.f32 0.0, %v1906
      %v1908 = vpop.f32.mrb[0].mxu0
      %v1909 = vpop.f32.mrb[0].mxu0
      %v1910 = vadd.f32 0.0, %v1909
      %v1911 = vpop.f32.mrb[0].mxu0
      %1912 = vmatprep.mubr.bf16.mxu0 0
      %1913 = vmatmul.mubr.bf16.gmra.mrb[0].mxu0 %v706
      %v1914 = vpop.f32.mrb[0].mxu0
      %v1915 = vadd.f32 0.0, %v1914
      %v1916 = vpop.f32.mrb[0].mxu0
      %v1917 = vpop.f32.mrb[0].mxu0
      %v1918 = vadd.f32 0.0, %v1917
      %v1919 = vpop.f32.mrb[0].mxu0
      %1920 = vmatprep.mubr.bf16.mxu0 0
      %1921 = vmatmul.mubr.bf16.gmra.mrb[0].mxu0 %v708
      %v1922 = vpop.f32.mrb[0].mxu0
      %v1923 = vadd.f32 0.0, %v1922
      %v1924 = vpop.f32.mrb[0].mxu0
      %v1925 = vpop.f32.mrb[0].mxu0
      %v1926 = vadd.f32 0.0, %v1925
      %v1927 = vpop.f32.mrb[0].mxu0
      %1928 = vmatprep.mubr.bf16.mxu0 0
      %1929 = vmatmul.mubr.bf16.gmra.mrb[0].mxu0 %v710
      %v1930 = vpop.f32.mrb[0].mxu0
      %v1931 = vadd.f32 0.0, %v1930
      %v1932 = vpop.f32.mrb[0].mxu0
      %v1933 = vpop.f32.mrb[0].mxu0
      %v1934 = vadd.f32 0.0, %v1933
      %v1935 = vpop.f32.mrb[0].mxu0
      %1936 = vmatprep.mubr.bf16.mxu0 0
      %1937 = vmatmul.mubr.bf16.gmra.mrb[0].mxu0 %v712
      %v1938 = vpop.f32.mrb[0].mxu0
      %v1939 = vadd.f32 0.0, %v1938
      %v1940 = vpop.f32.mrb[0].mxu0
      %v1941 = vpop.f32.mrb[0].mxu0
      %v1942 = vadd.f32 0.0, %v1941
      %v1943 = vpop.f32.mrb[0].mxu0
      %1944 = vmatprep.mubr.bf16.mxu0 0
      %1945 = vmatmul.mubr.bf16.gmra.mrb[0].mxu0 %v714
      %v1946 = vpop.f32.mrb[0].mxu0
      %v1947 = vadd.f32 0.0, %v1946
      %v1948 = vpop.f32.mrb[0].mxu0
      %v1949 = vpop.f32.mrb[0].mxu0
      %v1950 = vadd.f32 0.0, %v1949
      %v1951 = vpop.f32.mrb[0].mxu0
      %1952 = vmatprep.mubr.bf16.mxu0 0
      %1953 = vmatmul.mubr.bf16.gmra.mrb[0].mxu0 %v716
      %v1954 = vpop.f32.mrb[0].mxu0
      %v1955 = vadd.f32 0.0, %v1954
      %v1956 = vpop.f32.mrb[0].mxu0
      %v1957 = vpop.f32.mrb[0].mxu0
      %v1958 = vadd.f32 0.0, %v1957
      %v1959 = vpop.f32.mrb[0].mxu0
      %1960 = vdwg.mxu0
      %v1961 = vadd.f32 %v1703, %v1835
      %v1962 = vadd.f32 %v1704, %v1838
      %v1963 = vadd.f32 %v1705, %v1843
      %v1964 = vadd.f32 %v1706, %v1846
      %v1965 = vadd.f32 %v1707, %v1851
      %v1966 = vadd.f32 %v1708, %v1854
      %v1967 = vadd.f32 %v1709, %v1859
      %v1968 = vadd.f32 %v1710, %v1862
      %v1969 = vadd.f32 %v1711, %v1867
      %v1970 = vadd.f32 %v1712, %v1870
      %v1971 = vadd.f32 %v1713, %v1875
      %v1972 = vadd.f32 %v1714, %v1878
      %v1973 = vadd.f32 %v1715, %v1883
      %v1974 = vadd.f32 %v1716, %v1886
      %v1975 = vadd.f32 %v1717, %v1891
      %v1976 = vadd.f32 %v1718, %v1894
      %v1977 = vadd.f32 %v1719, %v1899
      %v1978 = vadd.f32 %v1720, %v1902
      %v1979 = vadd.f32 %v1721, %v1907
      %v1980 = vadd.f32 %v1722, %v1910
      %v1981 = vadd.f32 %v1723, %v1915
      %v1982 = vadd.f32 %v1724, %v1918
      %v1983 = vadd.f32 %v1725, %v1923
      %v1984 = vadd.f32 %v1726, %v1926
      %v1985 = vadd.f32 %v1727, %v1931
      %v1986 = vadd.f32 %v1728, %v1934
      %v1987 = vadd.f32 %v1729, %v1939
      %v1988 = vadd.f32 %v1730, %v1942
      %v1989 = vadd.f32 %v1731, %v1947
      %v1990 = vadd.f32 %v1732, %v1950
      %v1991 = vadd.f32 %v1733, %v1955
      %v1992 = vadd.f32 %v1734, %v1958
      %v1994 = vshrl.u32 %v716, 16
      %v1996 = vshll.u32 %v716, 16
      %v1998 = vrot.slane %v1996, 1
      %v1999 = vor.u32 %v1994, %v1998
      %v2001 = vshll.u32 %v717, 16
      %v2003 = vrot.slane %v2001, 1
      %v2004 = vsel %vm736, %v1999, %v2003
      %s2006 = scalar_lea.vmem %s1, 256
      %v2007 = vld [vmem:[%s2006] sm:$0xf]
      %v2008 = vld [vmem:[%s2006 + $0x4] sm:$0xf]
      %v2009 = vld [vmem:[%s2006 + $0x8] sm:$0xf]
      %v2010 = vld [vmem:[%s2006 + $0xc] sm:$0xf]
      %v2011 = vld [vmem:[%s2006 + $0x10] sm:$0xf]
      %v2012 = vld [vmem:[%s2006 + $0x14] sm:$0xf]
      %v2013 = vld [vmem:[%s2006 + $0x18] sm:$0xf]
      %v2014 = vld [vmem:[%s2006 + $0x1c] sm:$0xf]
      %v2015 = vld [vmem:[%s2006 + $0x20] sm:$0xf]
      %v2016 = vld [vmem:[%s2006 + $0x24] sm:$0xf]
      %v2017 = vld [vmem:[%s2006 + $0x28] sm:$0xf]
      %v2018 = vld [vmem:[%s2006 + $0x2c] sm:$0xf]
      %v2019 = vld [vmem:[%s2006 + $0x30] sm:$0xf]
      %v2020 = vld [vmem:[%s2006 + $0x34] sm:$0xf]
      %v2021 = vld [vmem:[%s2006 + $0x38] sm:$0xf]
      %v2022 = vld [vmem:[%s2006 + $0x3c] sm:$0xf]
      %v2039 = vunpack.c.l.b16 %v2007
      %v2040 = vunpack.c.l.b16 %v2008
      %v2041 = vunpack.c.l.b16 %v2009
      %v2042 = vunpack.c.l.b16 %v2010
      %v2043 = vunpack.c.l.b16 %v2011
      %v2044 = vunpack.c.l.b16 %v2012
      %v2045 = vunpack.c.l.b16 %v2013
      %v2046 = vunpack.c.l.b16 %v2014
      %v2047 = vunpack.c.l.b16 %v2015
      %v2048 = vunpack.c.l.b16 %v2016
      %v2049 = vunpack.c.l.b16 %v2017
      %v2050 = vunpack.c.l.b16 %v2018
      %v2051 = vunpack.c.l.b16 %v2019
      %v2052 = vunpack.c.l.b16 %v2020
      %v2053 = vunpack.c.l.b16 %v2021
      %v2054 = vunpack.c.l.b16 %v2022
      %v2055 = vpack.c.b16 %v2040, %v2039
      %v2056 = vpack.c.b16 %v2042, %v2041
      %v2057 = vpack.c.b16 %v2044, %v2043
      %v2058 = vpack.c.b16 %v2046, %v2045
      %v2059 = vpack.c.b16 %v2048, %v2047
      %v2060 = vpack.c.b16 %v2050, %v2049
      %v2061 = vpack.c.b16 %v2052, %v2051
      %v2062 = vpack.c.b16 %v2054, %v2053
      %2071 = vmatprep.subr.bf16.mxu0 0
      %2072 = vmatpush1.bf16.msra.mxu0 %v2055
      %2073 = vmatprep.subr.bf16.mxu0 0
      %2074 = vmatpush1.bf16.msra.mxu0 %v2056
      %2075 = vmatprep.subr.bf16.mxu0 0
      %2076 = vmatpush1.bf16.msra.mxu0 %v2057
      %2077 = vmatprep.subr.bf16.mxu0 0
      %2078 = vmatpush1.bf16.msra.mxu0 %v2058
      %2079 = vmatprep.subr.bf16.mxu0 0
      %2080 = vmatpush1.bf16.msra.mxu0 %v2059
      %2081 = vmatprep.subr.bf16.mxu0 0
      %2082 = vmatpush1.bf16.msra.mxu0 %v2060
      %2083 = vmatprep.subr.bf16.mxu0 0
      %2084 = vmatpush1.bf16.msra.mxu0 %v2061
      %2085 = vmatprep.subr.bf16.mxu0 0
      %2086 = vmatpush1.bf16.msra.mxu0 %v2062
      %2087 = vmatprep.subr.bf16.mxu0 0
      %2088 = vmatpush1.bf16.msra.mxu0 0
      %2089 = vmatprep.subr.bf16.mxu0 0
      %2090 = vmatpush1.bf16.msra.mxu0 0
      %2091 = vmatprep.subr.bf16.mxu0 0
      %2092 = vmatpush1.bf16.msra.mxu0 0
      %2093 = vmatprep.subr.bf16.mxu0 0
      %2094 = vmatpush1.bf16.msra.mxu0 0
      %2095 = vmatprep.subr.bf16.mxu0 0
      %2096 = vmatpush1.bf16.msra.mxu0 0
      %2097 = vmatprep.subr.bf16.mxu0 0
      %2098 = vmatpush1.bf16.msra.mxu0 0
      %2099 = vmatprep.subr.bf16.mxu0 0
      %2100 = vmatpush1.bf16.msra.mxu0 0
      %2101 = vmatprep.subr.bf16.mxu0 0
      %2102 = vmatpush1.bf16.msra.mxu0 0
      %2103 = vmatprep.mubr.bf16.mxu0 0
      %2104 = vmatmul.mubr.bf16.gmra.mrb[0].mxu0 %v760
      %v2105 = vpop.f32.mrb[0].mxu0
      %v2106 = vadd.f32 0.0, %v2105
      %v2107 = vpop.f32.mrb[0].mxu0
      %v2108 = vpop.f32.mrb[0].mxu0
      %v2109 = vadd.f32 0.0, %v2108
      %v2110 = vpop.f32.mrb[0].mxu0
      %2111 = vmatprep.mubr.bf16.mxu0 0
      %2112 = vmatmul.mubr.bf16.gmra.mrb[0].mxu0 %v772
      %v2113 = vpop.f32.mrb[0].mxu0
      %v2114 = vadd.f32 0.0, %v2113
      %v2115 = vpop.f32.mrb[0].mxu0
      %v2116 = vpop.f32.mrb[0].mxu0
      %v2117 = vadd.f32 0.0, %v2116
      %v2118 = vpop.f32.mrb[0].mxu0
      %2119 = vmatprep.mubr.bf16.mxu0 0
      %2120 = vmatmul.mubr.bf16.gmra.mrb[0].mxu0 %v784
      %v2121 = vpop.f32.mrb[0].mxu0
      %v2122 = vadd.f32 0.0, %v2121
      %v2123 = vpop.f32.mrb[0].mxu0
      %v2124 = vpop.f32.mrb[0].mxu0
      %v2125 = vadd.f32 0.0, %v2124
      %v2126 = vpop.f32.mrb[0].mxu0
      %2127 = vmatprep.mubr.bf16.mxu0 0
      %2128 = vmatmul.mubr.bf16.gmra.mrb[0].mxu0 %v796
      %v2129 = vpop.f32.mrb[0].mxu0
      %v2130 = vadd.f32 0.0, %v2129
      %v2131 = vpop.f32.mrb[0].mxu0
      %v2132 = vpop.f32.mrb[0].mxu0
      %v2133 = vadd.f32 0.0, %v2132
      %v2134 = vpop.f32.mrb[0].mxu0
      %2135 = vmatprep.mubr.bf16.mxu0 0
      %2136 = vmatmul.mubr.bf16.gmra.mrb[0].mxu0 %v808
      %v2137 = vpop.f32.mrb[0].mxu0
      %v2138 = vadd.f32 0.0, %v2137
      %v2139 = vpop.f32.mrb[0].mxu0
      %v2140 = vpop.f32.mrb[0].mxu0
      %v2141 = vadd.f32 0.0, %v2140
      %v2142 = vpop.f32.mrb[0].mxu0
      %2143 = vmatprep.mubr.bf16.mxu0 0
      %2144 = vmatmul.mubr.bf16.gmra.mrb[0].mxu0 %v820
      %v2145 = vpop.f32.mrb[0].mxu0
      %v2146 = vadd.f32 0.0, %v2145
      %v2147 = vpop.f32.mrb[0].mxu0
      %v2148 = vpop.f32.mrb[0].mxu0
      %v2149 = vadd.f32 0.0, %v2148
      %v2150 = vpop.f32.mrb[0].mxu0
      %2151 = vmatprep.mubr.bf16.mxu0 0
      %2152 = vmatmul.mubr.bf16.gmra.mrb[0].mxu0 %v832
      %v2153 = vpop.f32.mrb[0].mxu0
      %v2154 = vadd.f32 0.0, %v2153
      %v2155 = vpop.f32.mrb[0].mxu0
      %v2156 = vpop.f32.mrb[0].mxu0
      %v2157 = vadd.f32 0.0, %v2156
      %v2158 = vpop.f32.mrb[0].mxu0
      %2159 = vmatprep.mubr.bf16.mxu0 0
      %2160 = vmatmul.mubr.bf16.gmra.mrb[0].mxu0 %v844
      %v2161 = vpop.f32.mrb[0].mxu0
      %v2162 = vadd.f32 0.0, %v2161
      %v2163 = vpop.f32.mrb[0].mxu0
      %v2164 = vpop.f32.mrb[0].mxu0
      %v2165 = vadd.f32 0.0, %v2164
      %v2166 = vpop.f32.mrb[0].mxu0
      %2167 = vmatprep.mubr.bf16.mxu0 0
      %2168 = vmatmul.mubr.bf16.gmra.mrb[0].mxu0 %v856
      %v2169 = vpop.f32.mrb[0].mxu0
      %v2170 = vadd.f32 0.0, %v2169
      %v2171 = vpop.f32.mrb[0].mxu0
      %v2172 = vpop.f32.mrb[0].mxu0
      %v2173 = vadd.f32 0.0, %v2172
      %v2174 = vpop.f32.mrb[0].mxu0
      %2175 = vmatprep.mubr.bf16.mxu0 0
      %2176 = vmatmul.mubr.bf16.gmra.mrb[0].mxu0 %v868
      %v2177 = vpop.f32.mrb[0].mxu0
      %v2178 = vadd.f32 0.0, %v2177
      %v2179 = vpop.f32.mrb[0].mxu0
      %v2180 = vpop.f32.mrb[0].mxu0
      %v2181 = vadd.f32 0.0, %v2180
      %v2182 = vpop.f32.mrb[0].mxu0
      %2183 = vmatprep.mubr.bf16.mxu0 0
      %2184 = vmatmul.mubr.bf16.gmra.mrb[0].mxu0 %v880
      %v2185 = vpop.f32.mrb[0].mxu0
      %v2186 = vadd.f32 0.0, %v2185
      %v2187 = vpop.f32.mrb[0].mxu0
      %v2188 = vpop.f32.mrb[0].mxu0
      %v2189 = vadd.f32 0.0, %v2188
      %v2190 = vpop.f32.mrb[0].mxu0
      %2191 = vmatprep.mubr.bf16.mxu0 0
      %2192 = vmatmul.mubr.bf16.gmra.mrb[0].mxu0 %v892
      %v2193 = vpop.f32.mrb[0].mxu0
      %v2194 = vadd.f32 0.0, %v2193
      %v2195 = vpop.f32.mrb[0].mxu0
      %v2196 = vpop.f32.mrb[0].mxu0
      %v2197 = vadd.f32 0.0, %v2196
      %v2198 = vpop.f32.mrb[0].mxu0
      %2199 = vmatprep.mubr.bf16.mxu0 0
      %2200 = vmatmul.mubr.bf16.gmra.mrb[0].mxu0 %v904
      %v2201 = vpop.f32.mrb[0].mxu0
      %v2202 = vadd.f32 0.0, %v2201
      %v2203 = vpop.f32.mrb[0].mxu0
      %v2204 = vpop.f32.mrb[0].mxu0
      %v2205 = vadd.f32 0.0, %v2204
      %v2206 = vpop.f32.mrb[0].mxu0
      %2207 = vmatprep.mubr.bf16.mxu0 0
      %2208 = vmatmul.mubr.bf16.gmra.mrb[0].mxu0 %v916
      %v2209 = vpop.f32.mrb[0].mxu0
      %v2210 = vadd.f32 0.0, %v2209
      %v2211 = vpop.f32.mrb[0].mxu0
      %v2212 = vpop.f32.mrb[0].mxu0
      %v2213 = vadd.f32 0.0, %v2212
      %v2214 = vpop.f32.mrb[0].mxu0
      %2215 = vmatprep.mubr.bf16.mxu0 0
      %2216 = vmatmul.mubr.bf16.gmra.mrb[0].mxu0 %v928
      %v2217 = vpop.f32.mrb[0].mxu0
      %v2218 = vadd.f32 0.0, %v2217
      %v2219 = vpop.f32.mrb[0].mxu0
      %v2220 = vpop.f32.mrb[0].mxu0
      %v2221 = vadd.f32 0.0, %v2220
      %v2222 = vpop.f32.mrb[0].mxu0
      %2223 = vmatprep.mubr.bf16.mxu0 0
      %2224 = vmatmul.mubr.bf16.gmra.mrb[0].mxu0 %v2004
      %v2225 = vpop.f32.mrb[0].mxu0
      %v2226 = vadd.f32 0.0, %v2225
      %v2227 = vpop.f32.mrb[0].mxu0
      %v2228 = vpop.f32.mrb[0].mxu0
      %v2229 = vadd.f32 0.0, %v2228
      %v2230 = vpop.f32.mrb[0].mxu0
      %2231 = vdwg.mxu0
      %v2232 = vadd.f32 %v1961, %v2106
      %v2233 = vadd.f32 %v1962, %v2109
      %v2234 = vadd.f32 %v1963, %v2114
      %v2235 = vadd.f32 %v1964, %v2117
      %v2236 = vadd.f32 %v1965, %v2122
      %v2237 = vadd.f32 %v1966, %v2125
      %v2238 = vadd.f32 %v1967, %v2130
      %v2239 = vadd.f32 %v1968, %v2133
      %v2240 = vadd.f32 %v1969, %v2138
      %v2241 = vadd.f32 %v1970, %v2141
      %v2242 = vadd.f32 %v1971, %v2146
      %v2243 = vadd.f32 %v1972, %v2149
      %v2244 = vadd.f32 %v1973, %v2154
      %v2245 = vadd.f32 %v1974, %v2157
      %v2246 = vadd.f32 %v1975, %v2162
      %v2247 = vadd.f32 %v1976, %v2165
      %v2248 = vadd.f32 %v1977, %v2170
      %v2249 = vadd.f32 %v1978, %v2173
      %v2250 = vadd.f32 %v1979, %v2178
      %v2251 = vadd.f32 %v1980, %v2181
      %v2252 = vadd.f32 %v1981, %v2186
      %v2253 = vadd.f32 %v1982, %v2189
      %v2254 = vadd.f32 %v1983, %v2194
      %v2255 = vadd.f32 %v1984, %v2197
      %v2256 = vadd.f32 %v1985, %v2202
      %v2257 = vadd.f32 %v1986, %v2205
      %v2258 = vadd.f32 %v1987, %v2210
      %v2259 = vadd.f32 %v1988, %v2213
      %v2260 = vadd.f32 %v1989, %v2218
      %v2261 = vadd.f32 %v1990, %v2221
      %v2262 = vadd.f32 %v1991, %v2226
      %v2263 = vadd.f32 %v1992, %v2229
      %v2266 = vrot.slane %v716, 1
      %v2267 = vrot.slane %v717, 1
      %v2268 = vsel %vm1412, %v2266, %v2267
      %s2270 = scalar_lea.vmem %s1, 320
      %v2271 = vld [vmem:[%s2270] sm:$0xf]
      %v2272 = vld [vmem:[%s2270 + $0x4] sm:$0xf]
      %v2273 = vld [vmem:[%s2270 + $0x8] sm:$0xf]
      %v2274 = vld [vmem:[%s2270 + $0xc] sm:$0xf]
      %v2275 = vld [vmem:[%s2270 + $0x10] sm:$0xf]
      %v2276 = vld [vmem:[%s2270 + $0x14] sm:$0xf]
      %v2277 = vld [vmem:[%s2270 + $0x18] sm:$0xf]
      %v2278 = vld [vmem:[%s2270 + $0x1c] sm:$0xf]
      %v2279 = vld [vmem:[%s2270 + $0x20] sm:$0xf]
      %v2280 = vld [vmem:[%s2270 + $0x24] sm:$0xf]
      %v2281 = vld [vmem:[%s2270 + $0x28] sm:$0xf]
      %v2282 = vld [vmem:[%s2270 + $0x2c] sm:$0xf]
      %v2283 = vld [vmem:[%s2270 + $0x30] sm:$0xf]
      %v2284 = vld [vmem:[%s2270 + $0x34] sm:$0xf]
      %v2285 = vld [vmem:[%s2270 + $0x38] sm:$0xf]
      %v2286 = vld [vmem:[%s2270 + $0x3c] sm:$0xf]
      %v2303 = vunpack.c.l.b16 %v2271
      %v2304 = vunpack.c.l.b16 %v2272
      %v2305 = vunpack.c.l.b16 %v2273
      %v2306 = vunpack.c.l.b16 %v2274
      %v2307 = vunpack.c.l.b16 %v2275
      %v2308 = vunpack.c.l.b16 %v2276
      %v2309 = vunpack.c.l.b16 %v2277
      %v2310 = vunpack.c.l.b16 %v2278
      %v2311 = vunpack.c.l.b16 %v2279
      %v2312 = vunpack.c.l.b16 %v2280
      %v2313 = vunpack.c.l.b16 %v2281
      %v2314 = vunpack.c.l.b16 %v2282
      %v2315 = vunpack.c.l.b16 %v2283
      %v2316 = vunpack.c.l.b16 %v2284
      %v2317 = vunpack.c.l.b16 %v2285
      %v2318 = vunpack.c.l.b16 %v2286
      %v2319 = vpack.c.b16 %v2304, %v2303
      %v2320 = vpack.c.b16 %v2306, %v2305
      %v2321 = vpack.c.b16 %v2308, %v2307
      %v2322 = vpack.c.b16 %v2310, %v2309
      %v2323 = vpack.c.b16 %v2312, %v2311
      %v2324 = vpack.c.b16 %v2314, %v2313
      %v2325 = vpack.c.b16 %v2316, %v2315
      %v2326 = vpack.c.b16 %v2318, %v2317
      %2335 = vmatprep.subr.bf16.mxu0 0
      %2336 = vmatpush1.bf16.msra.mxu0 %v2319
      %2337 = vmatprep.subr.bf16.mxu0 0
      %2338 = vmatpush1.bf16.msra.mxu0 %v2320
      %2339 = vmatprep.subr.bf16.mxu0 0
      %2340 = vmatpush1.bf16.msra.mxu0 %v2321
      %2341 = vmatprep.subr.bf16.mxu0 0
      %2342 = vmatpush1.bf16.msra.mxu0 %v2322
      %2343 = vmatprep.subr.bf16.mxu0 0
      %2344 = vmatpush1.bf16.msra.mxu0 %v2323
      %2345 = vmatprep.subr.bf16.mxu0 0
      %2346 = vmatpush1.bf16.msra.mxu0 %v2324
      %2347 = vmatprep.subr.bf16.mxu0 0
      %2348 = vmatpush1.bf16.msra.mxu0 %v2325
      %2349 = vmatprep.subr.bf16.mxu0 0
      %2350 = vmatpush1.bf16.msra.mxu0 %v2326
      %2351 = vmatprep.subr.bf16.mxu0 0
      %2352 = vmatpush1.bf16.msra.mxu0 0
      %2353 = vmatprep.subr.bf16.mxu0 0
      %2354 = vmatpush1.bf16.msra.mxu0 0
      %2355 = vmatprep.subr.bf16.mxu0 0
      %2356 = vmatpush1.bf16.msra.mxu0 0
      %2357 = vmatprep.subr.bf16.mxu0 0
      %2358 = vmatpush1.bf16.msra.mxu0 0
      %2359 = vmatprep.subr.bf16.mxu0 0
      %2360 = vmatpush1.bf16.msra.mxu0 0
      %2361 = vmatprep.subr.bf16.mxu0 0
      %2362 = vmatpush1.bf16.msra.mxu0 0
      %2363 = vmatprep.subr.bf16.mxu0 0
      %2364 = vmatpush1.bf16.msra.mxu0 0
      %2365 = vmatprep.subr.bf16.mxu0 0
      %2366 = vmatpush1.bf16.msra.mxu0 0
      %2367 = vmatprep.mubr.bf16.mxu0 0
      %2368 = vmatmul.mubr.bf16.gmra.mrb[0].mxu0 %v1418
      %v2369 = vpop.f32.mrb[0].mxu0
      %v2370 = vadd.f32 0.0, %v2369
      %v2371 = vpop.f32.mrb[0].mxu0
      %v2372 = vpop.f32.mrb[0].mxu0
      %v2373 = vadd.f32 0.0, %v2372
      %v2374 = vpop.f32.mrb[0].mxu0
      %2375 = vmatprep.mubr.bf16.mxu0 0
      %2376 = vmatmul.mubr.bf16.gmra.mrb[0].mxu0 %v1421
      %v2377 = vpop.f32.mrb[0].mxu0
      %v2378 = vadd.f32 0.0, %v2377
      %v2379 = vpop.f32.mrb[0].mxu0
      %v2380 = vpop.f32.mrb[0].mxu0
      %v2381 = vadd.f32 0.0, %v2380
      %v2382 = vpop.f32.mrb[0].mxu0
      %2383 = vmatprep.mubr.bf16.mxu0 0
      %2384 = vmatmul.mubr.bf16.gmra.mrb[0].mxu0 %v1424
      %v2385 = vpop.f32.mrb[0].mxu0
      %v2386 = vadd.f32 0.0, %v2385
      %v2387 = vpop.f32.mrb[0].mxu0
      %v2388 = vpop.f32.mrb[0].mxu0
      %v2389 = vadd.f32 0.0, %v2388
      %v2390 = vpop.f32.mrb[0].mxu0
      %2391 = vmatprep.mubr.bf16.mxu0 0
      %2392 = vmatmul.mubr.bf16.gmra.mrb[0].mxu0 %v1427
      %v2393 = vpop.f32.mrb[0].mxu0
      %v2394 = vadd.f32 0.0, %v2393
      %v2395 = vpop.f32.mrb[0].mxu0
      %v2396 = vpop.f32.mrb[0].mxu0
      %v2397 = vadd.f32 0.0, %v2396
      %v2398 = vpop.f32.mrb[0].mxu0
      %2399 = vmatprep.mubr.bf16.mxu0 0
      %2400 = vmatmul.mubr.bf16.gmra.mrb[0].mxu0 %v1430
      %v2401 = vpop.f32.mrb[0].mxu0
      %v2402 = vadd.f32 0.0, %v2401
      %v2403 = vpop.f32.mrb[0].mxu0
      %v2404 = vpop.f32.mrb[0].mxu0
      %v2405 = vadd.f32 0.0, %v2404
      %v2406 = vpop.f32.mrb[0].mxu0
      %2407 = vmatprep.mubr.bf16.mxu0 0
      %2408 = vmatmul.mubr.bf16.gmra.mrb[0].mxu0 %v1433
      %v2409 = vpop.f32.mrb[0].mxu0
      %v2410 = vadd.f32 0.0, %v2409
      %v2411 = vpop.f32.mrb[0].mxu0
      %v2412 = vpop.f32.mrb[0].mxu0
      %v2413 = vadd.f32 0.0, %v2412
      %v2414 = vpop.f32.mrb[0].mxu0
      %2415 = vmatprep.mubr.bf16.mxu0 0
      %2416 = vmatmul.mubr.bf16.gmra.mrb[0].mxu0 %v1436
      %v2417 = vpop.f32.mrb[0].mxu0
      %v2418 = vadd.f32 0.0, %v2417
      %v2419 = vpop.f32.mrb[0].mxu0
      %v2420 = vpop.f32.mrb[0].mxu0
      %v2421 = vadd.f32 0.0, %v2420
      %v2422 = vpop.f32.mrb[0].mxu0
      %2423 = vmatprep.mubr.bf16.mxu0 0
      %2424 = vmatmul.mubr.bf16.gmra.mrb[0].mxu0 %v1439
      %v2425 = vpop.f32.mrb[0].mxu0
      %v2426 = vadd.f32 0.0, %v2425
      %v2427 = vpop.f32.mrb[0].mxu0
      %v2428 = vpop.f32.mrb[0].mxu0
      %v2429 = vadd.f32 0.0, %v2428
      %v2430 = vpop.f32.mrb[0].mxu0
      %2431 = vmatprep.mubr.bf16.mxu0 0
      %2432 = vmatmul.mubr.bf16.gmra.mrb[0].mxu0 %v1442
      %v2433 = vpop.f32.mrb[0].mxu0
      %v2434 = vadd.f32 0.0, %v2433
      %v2435 = vpop.f32.mrb[0].mxu0
      %v2436 = vpop.f32.mrb[0].mxu0
      %v2437 = vadd.f32 0.0, %v2436
      %v2438 = vpop.f32.mrb[0].mxu0
      %2439 = vmatprep.mubr.bf16.mxu0 0
      %2440 = vmatmul.mubr.bf16.gmra.mrb[0].mxu0 %v1445
      %v2441 = vpop.f32.mrb[0].mxu0
      %v2442 = vadd.f32 0.0, %v2441
      %v2443 = vpop.f32.mrb[0].mxu0
      %v2444 = vpop.f32.mrb[0].mxu0
      %v2445 = vadd.f32 0.0, %v2444
      %v2446 = vpop.f32.mrb[0].mxu0
      %2447 = vmatprep.mubr.bf16.mxu0 0
      %2448 = vmatmul.mubr.bf16.gmra.mrb[0].mxu0 %v1448
      %v2449 = vpop.f32.mrb[0].mxu0
      %v2450 = vadd.f32 0.0, %v2449
      %v2451 = vpop.f32.mrb[0].mxu0
      %v2452 = vpop.f32.mrb[0].mxu0
      %v2453 = vadd.f32 0.0, %v2452
      %v2454 = vpop.f32.mrb[0].mxu0
      %2455 = vmatprep.mubr.bf16.mxu0 0
      %2456 = vmatmul.mubr.bf16.gmra.mrb[0].mxu0 %v1451
      %v2457 = vpop.f32.mrb[0].mxu0
      %v2458 = vadd.f32 0.0, %v2457
      %v2459 = vpop.f32.mrb[0].mxu0
      %v2460 = vpop.f32.mrb[0].mxu0
      %v2461 = vadd.f32 0.0, %v2460
      %v2462 = vpop.f32.mrb[0].mxu0
      %2463 = vmatprep.mubr.bf16.mxu0 0
      %2464 = vmatmul.mubr.bf16.gmra.mrb[0].mxu0 %v1454
      %v2465 = vpop.f32.mrb[0].mxu0
      %v2466 = vadd.f32 0.0, %v2465
      %v2467 = vpop.f32.mrb[0].mxu0
      %v2468 = vpop.f32.mrb[0].mxu0
      %v2469 = vadd.f32 0.0, %v2468
      %v2470 = vpop.f32.mrb[0].mxu0
      %2471 = vmatprep.mubr.bf16.mxu0 0
      %2472 = vmatmul.mubr.bf16.gmra.mrb[0].mxu0 %v1457
      %v2473 = vpop.f32.mrb[0].mxu0
      %v2474 = vadd.f32 0.0, %v2473
      %v2475 = vpop.f32.mrb[0].mxu0
      %v2476 = vpop.f32.mrb[0].mxu0
      %v2477 = vadd.f32 0.0, %v2476
      %v2478 = vpop.f32.mrb[0].mxu0
      %2479 = vmatprep.mubr.bf16.mxu0 0
      %2480 = vmatmul.mubr.bf16.gmra.mrb[0].mxu0 %v1460
      %v2481 = vpop.f32.mrb[0].mxu0
      %v2482 = vadd.f32 0.0, %v2481
      %v2483 = vpop.f32.mrb[0].mxu0
      %v2484 = vpop.f32.mrb[0].mxu0
      %v2485 = vadd.f32 0.0, %v2484
      %v2486 = vpop.f32.mrb[0].mxu0
      %2487 = vmatprep.mubr.bf16.mxu0 0
      %2488 = vmatmul.mubr.bf16.gmra.mrb[0].mxu0 %v2268
      %v2489 = vpop.f32.mrb[0].mxu0
      %v2490 = vadd.f32 0.0, %v2489
      %v2491 = vpop.f32.mrb[0].mxu0
      %v2492 = vpop.f32.mrb[0].mxu0
      %v2493 = vadd.f32 0.0, %v2492
      %v2494 = vpop.f32.mrb[0].mxu0
      %2495 = vdwg.mxu0
      %v2496 = vadd.f32 %v2232, %v2370
      %v2497 = vadd.f32 %v2233, %v2373
      %v2498 = vadd.f32 %v2234, %v2378
      %v2499 = vadd.f32 %v2235, %v2381
      %v2500 = vadd.f32 %v2236, %v2386
      %v2501 = vadd.f32 %v2237, %v2389
      %v2502 = vadd.f32 %v2238, %v2394
      %v2503 = vadd.f32 %v2239, %v2397
      %v2504 = vadd.f32 %v2240, %v2402
      %v2505 = vadd.f32 %v2241, %v2405
      %v2506 = vadd.f32 %v2242, %v2410
      %v2507 = vadd.f32 %v2243, %v2413
      %v2508 = vadd.f32 %v2244, %v2418
      %v2509 = vadd.f32 %v2245, %v2421
      %v2510 = vadd.f32 %v2246, %v2426
      %v2511 = vadd.f32 %v2247, %v2429
      %v2512 = vadd.f32 %v2248, %v2434
      %v2513 = vadd.f32 %v2249, %v2437
      %v2514 = vadd.f32 %v2250, %v2442
      %v2515 = vadd.f32 %v2251, %v2445
      %v2516 = vadd.f32 %v2252, %v2450
      %v2517 = vadd.f32 %v2253, %v2453
      %v2518 = vadd.f32 %v2254, %v2458
      %v2519 = vadd.f32 %v2255, %v2461
      %v2520 = vadd.f32 %v2256, %v2466
      %v2521 = vadd.f32 %v2257, %v2469
      %v2522 = vadd.f32 %v2258, %v2474
      %v2523 = vadd.f32 %v2259, %v2477
      %v2524 = vadd.f32 %v2260, %v2482
      %v2525 = vadd.f32 %v2261, %v2485
      %v2526 = vadd.f32 %v2262, %v2490
      %v2527 = vadd.f32 %v2263, %v2493
      %s2528 = scalar_lea.vmem %s1, 384
      %v2529 = vld [vmem:[%s2528] sm:$0xf]
      %v2530 = vld [vmem:[%s2528 + $0x4] sm:$0xf]
      %v2531 = vld [vmem:[%s2528 + $0x8] sm:$0xf]
      %v2532 = vld [vmem:[%s2528 + $0xc] sm:$0xf]
      %v2533 = vld [vmem:[%s2528 + $0x10] sm:$0xf]
      %v2534 = vld [vmem:[%s2528 + $0x14] sm:$0xf]
      %v2535 = vld [vmem:[%s2528 + $0x18] sm:$0xf]
      %v2536 = vld [vmem:[%s2528 + $0x1c] sm:$0xf]
      %v2537 = vld [vmem:[%s2528 + $0x20] sm:$0xf]
      %v2538 = vld [vmem:[%s2528 + $0x24] sm:$0xf]
      %v2539 = vld [vmem:[%s2528 + $0x28] sm:$0xf]
      %v2540 = vld [vmem:[%s2528 + $0x2c] sm:$0xf]
      %v2541 = vld [vmem:[%s2528 + $0x30] sm:$0xf]
      %v2542 = vld [vmem:[%s2528 + $0x34] sm:$0xf]
      %v2543 = vld [vmem:[%s2528 + $0x38] sm:$0xf]
      %v2544 = vld [vmem:[%s2528 + $0x3c] sm:$0xf]
      %v2561 = vunpack.c.l.b16 %v2529
      %v2562 = vunpack.c.l.b16 %v2530
      %v2563 = vunpack.c.l.b16 %v2531
      %v2564 = vunpack.c.l.b16 %v2532
      %v2565 = vunpack.c.l.b16 %v2533
      %v2566 = vunpack.c.l.b16 %v2534
      %v2567 = vunpack.c.l.b16 %v2535
      %v2568 = vunpack.c.l.b16 %v2536
      %v2569 = vunpack.c.l.b16 %v2537
      %v2570 = vunpack.c.l.b16 %v2538
      %v2571 = vunpack.c.l.b16 %v2539
      %v2572 = vunpack.c.l.b16 %v2540
      %v2573 = vunpack.c.l.b16 %v2541
      %v2574 = vunpack.c.l.b16 %v2542
      %v2575 = vunpack.c.l.b16 %v2543
      %v2576 = vunpack.c.l.b16 %v2544
      %v2577 = vpack.c.b16 %v2562, %v2561
      %v2578 = vpack.c.b16 %v2564, %v2563
      %v2579 = vpack.c.b16 %v2566, %v2565
      %v2580 = vpack.c.b16 %v2568, %v2567
      %v2581 = vpack.c.b16 %v2570, %v2569
      %v2582 = vpack.c.b16 %v2572, %v2571
      %v2583 = vpack.c.b16 %v2574, %v2573
      %v2584 = vpack.c.b16 %v2576, %v2575
      %2593 = vmatprep.subr.bf16.mxu0 0
      %2594 = vmatpush1.bf16.msra.mxu0 %v2577
      %2595 = vmatprep.subr.bf16.mxu0 0
      %2596 = vmatpush1.bf16.msra.mxu0 %v2578
      %2597 = vmatprep.subr.bf16.mxu0 0
      %2598 = vmatpush1.bf16.msra.mxu0 %v2579
      %2599 = vmatprep.subr.bf16.mxu0 0
      %2600 = vmatpush1.bf16.msra.mxu0 %v2580
      %2601 = vmatprep.subr.bf16.mxu0 0
      %2602 = vmatpush1.bf16.msra.mxu0 %v2581
      %2603 = vmatprep.subr.bf16.mxu0 0
      %2604 = vmatpush1.bf16.msra.mxu0 %v2582
      %2605 = vmatprep.subr.bf16.mxu0 0
      %2606 = vmatpush1.bf16.msra.mxu0 %v2583
      %2607 = vmatprep.subr.bf16.mxu0 0
      %2608 = vmatpush1.bf16.msra.mxu0 %v2584
      %2609 = vmatprep.subr.bf16.mxu0 0
      %2610 = vmatpush1.bf16.msra.mxu0 0
      %2611 = vmatprep.subr.bf16.mxu0 0
      %2612 = vmatpush1.bf16.msra.mxu0 0
      %2613 = vmatprep.subr.bf16.mxu0 0
      %2614 = vmatpush1.bf16.msra.mxu0 0
      %2615 = vmatprep.subr.bf16.mxu0 0
      %2616 = vmatpush1.bf16.msra.mxu0 0
      %2617 = vmatprep.subr.bf16.mxu0 0
      %2618 = vmatpush1.bf16.msra.mxu0 0
      %2619 = vmatprep.subr.bf16.mxu0 0
      %2620 = vmatpush1.bf16.msra.mxu0 0
      %2621 = vmatprep.subr.bf16.mxu0 0
      %2622 = vmatpush1.bf16.msra.mxu0 0
      %2623 = vmatprep.subr.bf16.mxu0 0
      %2624 = vmatpush1.bf16.msra.mxu0 0
      %2625 = vmatprep.mubr.bf16.mxu0 0
      %2626 = vmatmul.mubr.bf16.gmra.mrb[0].mxu0 %v688
      %v2627 = vpop.f32.mrb[0].mxu0
      %v2628 = vadd.f32 0.0, %v2627
      %v2629 = vpop.f32.mrb[0].mxu0
      %v2630 = vpop.f32.mrb[0].mxu0
      %v2631 = vadd.f32 0.0, %v2630
      %v2632 = vpop.f32.mrb[0].mxu0
      %2633 = vmatprep.mubr.bf16.mxu0 0
      %2634 = vmatmul.mubr.bf16.gmra.mrb[0].mxu0 %v690
      %v2635 = vpop.f32.mrb[0].mxu0
      %v2636 = vadd.f32 0.0, %v2635
      %v2637 = vpop.f32.mrb[0].mxu0
      %v2638 = vpop.f32.mrb[0].mxu0
      %v2639 = vadd.f32 0.0, %v2638
      %v2640 = vpop.f32.mrb[0].mxu0
      %2641 = vmatprep.mubr.bf16.mxu0 0
      %2642 = vmatmul.mubr.bf16.gmra.mrb[0].mxu0 %v692
      %v2643 = vpop.f32.mrb[0].mxu0
      %v2644 = vadd.f32 0.0, %v2643
      %v2645 = vpop.f32.mrb[0].mxu0
      %v2646 = vpop.f32.mrb[0].mxu0
      %v2647 = vadd.f32 0.0, %v2646
      %v2648 = vpop.f32.mrb[0].mxu0
      %2649 = vmatprep.mubr.bf16.mxu0 0
      %2650 = vmatmul.mubr.bf16.gmra.mrb[0].mxu0 %v694
      %v2651 = vpop.f32.mrb[0].mxu0
      %v2652 = vadd.f32 0.0, %v2651
      %v2653 = vpop.f32.mrb[0].mxu0
      %v2654 = vpop.f32.mrb[0].mxu0
      %v2655 = vadd.f32 0.0, %v2654
      %v2656 = vpop.f32.mrb[0].mxu0
      %2657 = vmatprep.mubr.bf16.mxu0 0
      %2658 = vmatmul.mubr.bf16.gmra.mrb[0].mxu0 %v696
      %v2659 = vpop.f32.mrb[0].mxu0
      %v2660 = vadd.f32 0.0, %v2659
      %v2661 = vpop.f32.mrb[0].mxu0
      %v2662 = vpop.f32.mrb[0].mxu0
      %v2663 = vadd.f32 0.0, %v2662
      %v2664 = vpop.f32.mrb[0].mxu0
      %2665 = vmatprep.mubr.bf16.mxu0 0
      %2666 = vmatmul.mubr.bf16.gmra.mrb[0].mxu0 %v698
      %v2667 = vpop.f32.mrb[0].mxu0
      %v2668 = vadd.f32 0.0, %v2667
      %v2669 = vpop.f32.mrb[0].mxu0
      %v2670 = vpop.f32.mrb[0].mxu0
      %v2671 = vadd.f32 0.0, %v2670
      %v2672 = vpop.f32.mrb[0].mxu0
      %2673 = vmatprep.mubr.bf16.mxu0 0
      %2674 = vmatmul.mubr.bf16.gmra.mrb[0].mxu0 %v700
      %v2675 = vpop.f32.mrb[0].mxu0
      %v2676 = vadd.f32 0.0, %v2675
      %v2677 = vpop.f32.mrb[0].mxu0
      %v2678 = vpop.f32.mrb[0].mxu0
      %v2679 = vadd.f32 0.0, %v2678
      %v2680 = vpop.f32.mrb[0].mxu0
      %2681 = vmatprep.mubr.bf16.mxu0 0
      %2682 = vmatmul.mubr.bf16.gmra.mrb[0].mxu0 %v702
      %v2683 = vpop.f32.mrb[0].mxu0
      %v2684 = vadd.f32 0.0, %v2683
      %v2685 = vpop.f32.mrb[0].mxu0
      %v2686 = vpop.f32.mrb[0].mxu0
      %v2687 = vadd.f32 0.0, %v2686
      %v2688 = vpop.f32.mrb[0].mxu0
      %2689 = vmatprep.mubr.bf16.mxu0 0
      %2690 = vmatmul.mubr.bf16.gmra.mrb[0].mxu0 %v704
      %v2691 = vpop.f32.mrb[0].mxu0
      %v2692 = vadd.f32 0.0, %v2691
      %v2693 = vpop.f32.mrb[0].mxu0
      %v2694 = vpop.f32.mrb[0].mxu0
      %v2695 = vadd.f32 0.0, %v2694
      %v2696 = vpop.f32.mrb[0].mxu0
      %2697 = vmatprep.mubr.bf16.mxu0 0
      %2698 = vmatmul.mubr.bf16.gmra.mrb[0].mxu0 %v706
      %v2699 = vpop.f32.mrb[0].mxu0
      %v2700 = vadd.f32 0.0, %v2699
      %v2701 = vpop.f32.mrb[0].mxu0
      %v2702 = vpop.f32.mrb[0].mxu0
      %v2703 = vadd.f32 0.0, %v2702
      %v2704 = vpop.f32.mrb[0].mxu0
      %2705 = vmatprep.mubr.bf16.mxu0 0
      %2706 = vmatmul.mubr.bf16.gmra.mrb[0].mxu0 %v708
      %v2707 = vpop.f32.mrb[0].mxu0
      %v2708 = vadd.f32 0.0, %v2707
      %v2709 = vpop.f32.mrb[0].mxu0
      %v2710 = vpop.f32.mrb[0].mxu0
      %v2711 = vadd.f32 0.0, %v2710
      %v2712 = vpop.f32.mrb[0].mxu0
      %2713 = vmatprep.mubr.bf16.mxu0 0
      %2714 = vmatmul.mubr.bf16.gmra.mrb[0].mxu0 %v710
      %v2715 = vpop.f32.mrb[0].mxu0
      %v2716 = vadd.f32 0.0, %v2715
      %v2717 = vpop.f32.mrb[0].mxu0
      %v2718 = vpop.f32.mrb[0].mxu0
      %v2719 = vadd.f32 0.0, %v2718
      %v2720 = vpop.f32.mrb[0].mxu0
      %2721 = vmatprep.mubr.bf16.mxu0 0
      %2722 = vmatmul.mubr.bf16.gmra.mrb[0].mxu0 %v712
      %v2723 = vpop.f32.mrb[0].mxu0
      %v2724 = vadd.f32 0.0, %v2723
      %v2725 = vpop.f32.mrb[0].mxu0
      %v2726 = vpop.f32.mrb[0].mxu0
      %v2727 = vadd.f32 0.0, %v2726
      %v2728 = vpop.f32.mrb[0].mxu0
      %2729 = vmatprep.mubr.bf16.mxu0 0
      %2730 = vmatmul.mubr.bf16.gmra.mrb[0].mxu0 %v714
      %v2731 = vpop.f32.mrb[0].mxu0
      %v2732 = vadd.f32 0.0, %v2731
      %v2733 = vpop.f32.mrb[0].mxu0
      %v2734 = vpop.f32.mrb[0].mxu0
      %v2735 = vadd.f32 0.0, %v2734
      %v2736 = vpop.f32.mrb[0].mxu0
      %2737 = vmatprep.mubr.bf16.mxu0 0
      %2738 = vmatmul.mubr.bf16.gmra.mrb[0].mxu0 %v716
      %v2739 = vpop.f32.mrb[0].mxu0
      %v2740 = vadd.f32 0.0, %v2739
      %v2741 = vpop.f32.mrb[0].mxu0
      %v2742 = vpop.f32.mrb[0].mxu0
      %v2743 = vadd.f32 0.0, %v2742
      %v2744 = vpop.f32.mrb[0].mxu0
      %2745 = vmatprep.mubr.bf16.mxu0 0
      %2746 = vmatmul.mubr.bf16.gmra.mrb[0].mxu0 %v718
      %v2747 = vpop.f32.mrb[0].mxu0
      %v2748 = vadd.f32 0.0, %v2747
      %v2749 = vpop.f32.mrb[0].mxu0
      %v2750 = vpop.f32.mrb[0].mxu0
      %v2751 = vadd.f32 0.0, %v2750
      %v2752 = vpop.f32.mrb[0].mxu0
      %2753 = vdwg.mxu0
      %v2754 = vadd.f32 %v2496, %v2628
      %v2755 = vadd.f32 %v2497, %v2631
      %v2756 = vadd.f32 %v2498, %v2636
      %v2757 = vadd.f32 %v2499, %v2639
      %v2758 = vadd.f32 %v2500, %v2644
      %v2759 = vadd.f32 %v2501, %v2647
      %v2760 = vadd.f32 %v2502, %v2652
      %v2761 = vadd.f32 %v2503, %v2655
      %v2762 = vadd.f32 %v2504, %v2660
      %v2763 = vadd.f32 %v2505, %v2663
      %v2764 = vadd.f32 %v2506, %v2668
      %v2765 = vadd.f32 %v2507, %v2671
      %v2766 = vadd.f32 %v2508, %v2676
      %v2767 = vadd.f32 %v2509, %v2679
      %v2768 = vadd.f32 %v2510, %v2684
      %v2769 = vadd.f32 %v2511, %v2687
      %v2770 = vadd.f32 %v2512, %v2692
      %v2771 = vadd.f32 %v2513, %v2695
      %v2772 = vadd.f32 %v2514, %v2700
      %v2773 = vadd.f32 %v2515, %v2703
      %v2774 = vadd.f32 %v2516, %v2708
      %v2775 = vadd.f32 %v2517, %v2711
      %v2776 = vadd.f32 %v2518, %v2716
      %v2777 = vadd.f32 %v2519, %v2719
      %v2778 = vadd.f32 %v2520, %v2724
      %v2779 = vadd.f32 %v2521, %v2727
      %v2780 = vadd.f32 %v2522, %v2732
      %v2781 = vadd.f32 %v2523, %v2735
      %v2782 = vadd.f32 %v2524, %v2740
      %v2783 = vadd.f32 %v2525, %v2743
      %v2784 = vadd.f32 %v2526, %v2748
      %v2785 = vadd.f32 %v2527, %v2751
      %v2787 = vshrl.u32 %v718, 16
      %v2789 = vshll.u32 %v718, 16
      %v2791 = vrot.slane %v2789, 1
      %v2792 = vor.u32 %v2787, %v2791
      %v2794 = vshll.u32 %v719, 16
      %v2796 = vrot.slane %v2794, 1
      %v2797 = vsel %vm736, %v2792, %v2796
      %s2799 = scalar_lea.vmem %s1, 448
      %v2800 = vld [vmem:[%s2799] sm:$0xf]
      %v2801 = vld [vmem:[%s2799 + $0x4] sm:$0xf]
      %v2802 = vld [vmem:[%s2799 + $0x8] sm:$0xf]
      %v2803 = vld [vmem:[%s2799 + $0xc] sm:$0xf]
      %v2804 = vld [vmem:[%s2799 + $0x10] sm:$0xf]
      %v2805 = vld [vmem:[%s2799 + $0x14] sm:$0xf]
      %v2806 = vld [vmem:[%s2799 + $0x18] sm:$0xf]
      %v2807 = vld [vmem:[%s2799 + $0x1c] sm:$0xf]
      %v2808 = vld [vmem:[%s2799 + $0x20] sm:$0xf]
      %v2809 = vld [vmem:[%s2799 + $0x24] sm:$0xf]
      %v2810 = vld [vmem:[%s2799 + $0x28] sm:$0xf]
      %v2811 = vld [vmem:[%s2799 + $0x2c] sm:$0xf]
      %v2812 = vld [vmem:[%s2799 + $0x30] sm:$0xf]
      %v2813 = vld [vmem:[%s2799 + $0x34] sm:$0xf]
      %v2814 = vld [vmem:[%s2799 + $0x38] sm:$0xf]
      %v2815 = vld [vmem:[%s2799 + $0x3c] sm:$0xf]
      %v2832 = vunpack.c.l.b16 %v2800
      %v2833 = vunpack.c.l.b16 %v2801
      %v2834 = vunpack.c.l.b16 %v2802
      %v2835 = vunpack.c.l.b16 %v2803
      %v2836 = vunpack.c.l.b16 %v2804
      %v2837 = vunpack.c.l.b16 %v2805
      %v2838 = vunpack.c.l.b16 %v2806
      %v2839 = vunpack.c.l.b16 %v2807
      %v2840 = vunpack.c.l.b16 %v2808
      %v2841 = vunpack.c.l.b16 %v2809
      %v2842 = vunpack.c.l.b16 %v2810
      %v2843 = vunpack.c.l.b16 %v2811
      %v2844 = vunpack.c.l.b16 %v2812
      %v2845 = vunpack.c.l.b16 %v2813
      %v2846 = vunpack.c.l.b16 %v2814
      %v2847 = vunpack.c.l.b16 %v2815
      %v2848 = vpack.c.b16 %v2833, %v2832
      %v2849 = vpack.c.b16 %v2835, %v2834
      %v2850 = vpack.c.b16 %v2837, %v2836
      %v2851 = vpack.c.b16 %v2839, %v2838
      %v2852 = vpack.c.b16 %v2841, %v2840
      %v2853 = vpack.c.b16 %v2843, %v2842
      %v2854 = vpack.c.b16 %v2845, %v2844
      %v2855 = vpack.c.b16 %v2847, %v2846
      %2864 = vmatprep.subr.bf16.mxu0 0
      %2865 = vmatpush1.bf16.msra.mxu0 %v2848
      %2866 = vmatprep.subr.bf16.mxu0 0
      %2867 = vmatpush1.bf16.msra.mxu0 %v2849
      %2868 = vmatprep.subr.bf16.mxu0 0
      %2869 = vmatpush1.bf16.msra.mxu0 %v2850
      %2870 = vmatprep.subr.bf16.mxu0 0
      %2871 = vmatpush1.bf16.msra.mxu0 %v2851
      %2872 = vmatprep.subr.bf16.mxu0 0
      %2873 = vmatpush1.bf16.msra.mxu0 %v2852
      %2874 = vmatprep.subr.bf16.mxu0 0
      %2875 = vmatpush1.bf16.msra.mxu0 %v2853
      %2876 = vmatprep.subr.bf16.mxu0 0
      %2877 = vmatpush1.bf16.msra.mxu0 %v2854
      %2878 = vmatprep.subr.bf16.mxu0 0
      %2879 = vmatpush1.bf16.msra.mxu0 %v2855
      %2880 = vmatprep.subr.bf16.mxu0 0
      %2881 = vmatpush1.bf16.msra.mxu0 0
      %2882 = vmatprep.subr.bf16.mxu0 0
      %2883 = vmatpush1.bf16.msra.mxu0 0
      %2884 = vmatprep.subr.bf16.mxu0 0
      %2885 = vmatpush1.bf16.msra.mxu0 0
      %2886 = vmatprep.subr.bf16.mxu0 0
      %2887 = vmatpush1.bf16.msra.mxu0 0
      %2888 = vmatprep.subr.bf16.mxu0 0
      %2889 = vmatpush1.bf16.msra.mxu0 0
      %2890 = vmatprep.subr.bf16.mxu0 0
      %2891 = vmatpush1.bf16.msra.mxu0 0
      %2892 = vmatprep.subr.bf16.mxu0 0
      %2893 = vmatpush1.bf16.msra.mxu0 0
      %2894 = vmatprep.subr.bf16.mxu0 0
      %2895 = vmatpush1.bf16.msra.mxu0 0
      %2896 = vmatprep.mubr.bf16.mxu0 0
      %2897 = vmatmul.mubr.bf16.gmra.mrb[0].mxu0 %v772
      %v2898 = vpop.f32.mrb[0].mxu0
      %v2899 = vadd.f32 0.0, %v2898
      %v2900 = vpop.f32.mrb[0].mxu0
      %v2901 = vpop.f32.mrb[0].mxu0
      %v2902 = vadd.f32 0.0, %v2901
      %v2903 = vpop.f32.mrb[0].mxu0
      %2904 = vmatprep.mubr.bf16.mxu0 0
      %2905 = vmatmul.mubr.bf16.gmra.mrb[0].mxu0 %v784
      %v2906 = vpop.f32.mrb[0].mxu0
      %v2907 = vadd.f32 0.0, %v2906
      %v2908 = vpop.f32.mrb[0].mxu0
      %v2909 = vpop.f32.mrb[0].mxu0
      %v2910 = vadd.f32 0.0, %v2909
      %v2911 = vpop.f32.mrb[0].mxu0
      %2912 = vmatprep.mubr.bf16.mxu0 0
      %2913 = vmatmul.mubr.bf16.gmra.mrb[0].mxu0 %v796
      %v2914 = vpop.f32.mrb[0].mxu0
      %v2915 = vadd.f32 0.0, %v2914
      %v2916 = vpop.f32.mrb[0].mxu0
      %v2917 = vpop.f32.mrb[0].mxu0
      %v2918 = vadd.f32 0.0, %v2917
      %v2919 = vpop.f32.mrb[0].mxu0
      %2920 = vmatprep.mubr.bf16.mxu0 0
      %2921 = vmatmul.mubr.bf16.gmra.mrb[0].mxu0 %v808
      %v2922 = vpop.f32.mrb[0].mxu0
      %v2923 = vadd.f32 0.0, %v2922
      %v2924 = vpop.f32.mrb[0].mxu0
      %v2925 = vpop.f32.mrb[0].mxu0
      %v2926 = vadd.f32 0.0, %v2925
      %v2927 = vpop.f32.mrb[0].mxu0
      %2928 = vmatprep.mubr.bf16.mxu0 0
      %2929 = vmatmul.mubr.bf16.gmra.mrb[0].mxu0 %v820
      %v2930 = vpop.f32.mrb[0].mxu0
      %v2931 = vadd.f32 0.0, %v2930
      %v2932 = vpop.f32.mrb[0].mxu0
      %v2933 = vpop.f32.mrb[0].mxu0
      %v2934 = vadd.f32 0.0, %v2933
      %v2935 = vpop.f32.mrb[0].mxu0
      %2936 = vmatprep.mubr.bf16.mxu0 0
      %2937 = vmatmul.mubr.bf16.gmra.mrb[0].mxu0 %v832
      %v2938 = vpop.f32.mrb[0].mxu0
      %v2939 = vadd.f32 0.0, %v2938
      %v2940 = vpop.f32.mrb[0].mxu0
      %v2941 = vpop.f32.mrb[0].mxu0
      %v2942 = vadd.f32 0.0, %v2941
      %v2943 = vpop.f32.mrb[0].mxu0
      %2944 = vmatprep.mubr.bf16.mxu0 0
      %2945 = vmatmul.mubr.bf16.gmra.mrb[0].mxu0 %v844
      %v2946 = vpop.f32.mrb[0].mxu0
      %v2947 = vadd.f32 0.0, %v2946
      %v2948 = vpop.f32.mrb[0].mxu0
      %v2949 = vpop.f32.mrb[0].mxu0
      %v2950 = vadd.f32 0.0, %v2949
      %v2951 = vpop.f32.mrb[0].mxu0
      %2952 = vmatprep.mubr.bf16.mxu0 0
      %2953 = vmatmul.mubr.bf16.gmra.mrb[0].mxu0 %v856
      %v2954 = vpop.f32.mrb[0].mxu0
      %v2955 = vadd.f32 0.0, %v2954
      %v2956 = vpop.f32.mrb[0].mxu0
      %v2957 = vpop.f32.mrb[0].mxu0
      %v2958 = vadd.f32 0.0, %v2957
      %v2959 = vpop.f32.mrb[0].mxu0
      %2960 = vmatprep.mubr.bf16.mxu0 0
      %2961 = vmatmul.mubr.bf16.gmra.mrb[0].mxu0 %v868
      %v2962 = vpop.f32.mrb[0].mxu0
      %v2963 = vadd.f32 0.0, %v2962
      %v2964 = vpop.f32.mrb[0].mxu0
      %v2965 = vpop.f32.mrb[0].mxu0
      %v2966 = vadd.f32 0.0, %v2965
      %v2967 = vpop.f32.mrb[0].mxu0
      %2968 = vmatprep.mubr.bf16.mxu0 0
      %2969 = vmatmul.mubr.bf16.gmra.mrb[0].mxu0 %v880
      %v2970 = vpop.f32.mrb[0].mxu0
      %v2971 = vadd.f32 0.0, %v2970
      %v2972 = vpop.f32.mrb[0].mxu0
      %v2973 = vpop.f32.mrb[0].mxu0
      %v2974 = vadd.f32 0.0, %v2973
      %v2975 = vpop.f32.mrb[0].mxu0
      %2976 = vmatprep.mubr.bf16.mxu0 0
      %2977 = vmatmul.mubr.bf16.gmra.mrb[0].mxu0 %v892
      %v2978 = vpop.f32.mrb[0].mxu0
      %v2979 = vadd.f32 0.0, %v2978
      %v2980 = vpop.f32.mrb[0].mxu0
      %v2981 = vpop.f32.mrb[0].mxu0
      %v2982 = vadd.f32 0.0, %v2981
      %v2983 = vpop.f32.mrb[0].mxu0
      %2984 = vmatprep.mubr.bf16.mxu0 0
      %2985 = vmatmul.mubr.bf16.gmra.mrb[0].mxu0 %v904
      %v2986 = vpop.f32.mrb[0].mxu0
      %v2987 = vadd.f32 0.0, %v2986
      %v2988 = vpop.f32.mrb[0].mxu0
      %v2989 = vpop.f32.mrb[0].mxu0
      %v2990 = vadd.f32 0.0, %v2989
      %v2991 = vpop.f32.mrb[0].mxu0
      %2992 = vmatprep.mubr.bf16.mxu0 0
      %2993 = vmatmul.mubr.bf16.gmra.mrb[0].mxu0 %v916
      %v2994 = vpop.f32.mrb[0].mxu0
      %v2995 = vadd.f32 0.0, %v2994
      %v2996 = vpop.f32.mrb[0].mxu0
      %v2997 = vpop.f32.mrb[0].mxu0
      %v2998 = vadd.f32 0.0, %v2997
      %v2999 = vpop.f32.mrb[0].mxu0
      %3000 = vmatprep.mubr.bf16.mxu0 0
      %3001 = vmatmul.mubr.bf16.gmra.mrb[0].mxu0 %v928
      %v3002 = vpop.f32.mrb[0].mxu0
      %v3003 = vadd.f32 0.0, %v3002
      %v3004 = vpop.f32.mrb[0].mxu0
      %v3005 = vpop.f32.mrb[0].mxu0
      %v3006 = vadd.f32 0.0, %v3005
      %v3007 = vpop.f32.mrb[0].mxu0
      %3008 = vmatprep.mubr.bf16.mxu0 0
      %3009 = vmatmul.mubr.bf16.gmra.mrb[0].mxu0 %v2004
      %v3010 = vpop.f32.mrb[0].mxu0
      %v3011 = vadd.f32 0.0, %v3010
      %v3012 = vpop.f32.mrb[0].mxu0
      %v3013 = vpop.f32.mrb[0].mxu0
      %v3014 = vadd.f32 0.0, %v3013
      %v3015 = vpop.f32.mrb[0].mxu0
      %3016 = vmatprep.mubr.bf16.mxu0 0
      %3017 = vmatmul.mubr.bf16.gmra.mrb[0].mxu0 %v2797
      %v3018 = vpop.f32.mrb[0].mxu0
      %v3019 = vadd.f32 0.0, %v3018
      %v3020 = vpop.f32.mrb[0].mxu0
      %v3021 = vpop.f32.mrb[0].mxu0
      %v3022 = vadd.f32 0.0, %v3021
      %v3023 = vpop.f32.mrb[0].mxu0
      %3024 = vdwg.mxu0
      %v3025 = vadd.f32 %v2754, %v2899
      %v3026 = vadd.f32 %v2755, %v2902
      %v3027 = vadd.f32 %v2756, %v2907
      %v3028 = vadd.f32 %v2757, %v2910
      %v3029 = vadd.f32 %v2758, %v2915
      %v3030 = vadd.f32 %v2759, %v2918
      %v3031 = vadd.f32 %v2760, %v2923
      %v3032 = vadd.f32 %v2761, %v2926
      %v3033 = vadd.f32 %v2762, %v2931
      %v3034 = vadd.f32 %v2763, %v2934
      %v3035 = vadd.f32 %v2764, %v2939
      %v3036 = vadd.f32 %v2765, %v2942
      %v3037 = vadd.f32 %v2766, %v2947
      %v3038 = vadd.f32 %v2767, %v2950
      %v3039 = vadd.f32 %v2768, %v2955
      %v3040 = vadd.f32 %v2769, %v2958
      %v3041 = vadd.f32 %v2770, %v2963
      %v3042 = vadd.f32 %v2771, %v2966
      %v3043 = vadd.f32 %v2772, %v2971
      %v3044 = vadd.f32 %v2773, %v2974
      %v3045 = vadd.f32 %v2774, %v2979
      %v3046 = vadd.f32 %v2775, %v2982
      %v3047 = vadd.f32 %v2776, %v2987
      %v3048 = vadd.f32 %v2777, %v2990
      %v3049 = vadd.f32 %v2778, %v2995
      %v3050 = vadd.f32 %v2779, %v2998
      %v3051 = vadd.f32 %v2780, %v3003
      %v3052 = vadd.f32 %v2781, %v3006
      %v3053 = vadd.f32 %v2782, %v3011
      %v3054 = vadd.f32 %v2783, %v3014
      %v3055 = vadd.f32 %v2784, %v3019
      %v3056 = vadd.f32 %v2785, %v3022
      %v3059 = vrot.slane %v718, 1
      %v3060 = vrot.slane %v719, 1
      %v3061 = vsel %vm1412, %v3059, %v3060
      %s3063 = scalar_lea.vmem %s1, 512
      %v3064 = vld [vmem:[%s3063] sm:$0xf]
      %v3065 = vld [vmem:[%s3063 + $0x4] sm:$0xf]
      %v3066 = vld [vmem:[%s3063 + $0x8] sm:$0xf]
      %v3067 = vld [vmem:[%s3063 + $0xc] sm:$0xf]
      %v3068 = vld [vmem:[%s3063 + $0x10] sm:$0xf]
      %v3069 = vld [vmem:[%s3063 + $0x14] sm:$0xf]
      %v3070 = vld [vmem:[%s3063 + $0x18] sm:$0xf]
      %v3071 = vld [vmem:[%s3063 + $0x1c] sm:$0xf]
      %v3072 = vld [vmem:[%s3063 + $0x20] sm:$0xf]
      %v3073 = vld [vmem:[%s3063 + $0x24] sm:$0xf]
      %v3074 = vld [vmem:[%s3063 + $0x28] sm:$0xf]
      %v3075 = vld [vmem:[%s3063 + $0x2c] sm:$0xf]
      %v3076 = vld [vmem:[%s3063 + $0x30] sm:$0xf]
      %v3077 = vld [vmem:[%s3063 + $0x34] sm:$0xf]
      %v3078 = vld [vmem:[%s3063 + $0x38] sm:$0xf]
      %v3079 = vld [vmem:[%s3063 + $0x3c] sm:$0xf]
      %v3096 = vunpack.c.l.b16 %v3064
      %v3097 = vunpack.c.l.b16 %v3065
      %v3098 = vunpack.c.l.b16 %v3066
      %v3099 = vunpack.c.l.b16 %v3067
      %v3100 = vunpack.c.l.b16 %v3068
      %v3101 = vunpack.c.l.b16 %v3069
      %v3102 = vunpack.c.l.b16 %v3070
      %v3103 = vunpack.c.l.b16 %v3071
      %v3104 = vunpack.c.l.b16 %v3072
      %v3105 = vunpack.c.l.b16 %v3073
      %v3106 = vunpack.c.l.b16 %v3074
      %v3107 = vunpack.c.l.b16 %v3075
      %v3108 = vunpack.c.l.b16 %v3076
      %v3109 = vunpack.c.l.b16 %v3077
      %v3110 = vunpack.c.l.b16 %v3078
      %v3111 = vunpack.c.l.b16 %v3079
      %v3112 = vpack.c.b16 %v3097, %v3096
      %v3113 = vpack.c.b16 %v3099, %v3098
      %v3114 = vpack.c.b16 %v3101, %v3100
      %v3115 = vpack.c.b16 %v3103, %v3102
      %v3116 = vpack.c.b16 %v3105, %v3104
      %v3117 = vpack.c.b16 %v3107, %v3106
      %v3118 = vpack.c.b16 %v3109, %v3108
      %v3119 = vpack.c.b16 %v3111, %v3110
      %3128 = vmatprep.subr.bf16.mxu0 0
      %3129 = vmatpush1.bf16.msra.mxu0 %v3112
      %3130 = vmatprep.subr.bf16.mxu0 0
      %3131 = vmatpush1.bf16.msra.mxu0 %v3113
      %3132 = vmatprep.subr.bf16.mxu0 0
      %3133 = vmatpush1.bf16.msra.mxu0 %v3114
      %3134 = vmatprep.subr.bf16.mxu0 0
      %3135 = vmatpush1.bf16.msra.mxu0 %v3115
      %3136 = vmatprep.subr.bf16.mxu0 0
      %3137 = vmatpush1.bf16.msra.mxu0 %v3116
      %3138 = vmatprep.subr.bf16.mxu0 0
      %3139 = vmatpush1.bf16.msra.mxu0 %v3117
      %3140 = vmatprep.subr.bf16.mxu0 0
      %3141 = vmatpush1.bf16.msra.mxu0 %v3118
      %3142 = vmatprep.subr.bf16.mxu0 0
      %3143 = vmatpush1.bf16.msra.mxu0 %v3119
      %3144 = vmatprep.subr.bf16.mxu0 0
      %3145 = vmatpush1.bf16.msra.mxu0 0
      %3146 = vmatprep.subr.bf16.mxu0 0
      %3147 = vmatpush1.bf16.msra.mxu0 0
      %3148 = vmatprep.subr.bf16.mxu0 0
      %3149 = vmatpush1.bf16.msra.mxu0 0
      %3150 = vmatprep.subr.bf16.mxu0 0
      %3151 = vmatpush1.bf16.msra.mxu0 0
      %3152 = vmatprep.subr.bf16.mxu0 0
      %3153 = vmatpush1.bf16.msra.mxu0 0
      %3154 = vmatprep.subr.bf16.mxu0 0
      %3155 = vmatpush1.bf16.msra.mxu0 0
      %3156 = vmatprep.subr.bf16.mxu0 0
      %3157 = vmatpush1.bf16.msra.mxu0 0
      %3158 = vmatprep.subr.bf16.mxu0 0
      %3159 = vmatpush1.bf16.msra.mxu0 0
      %3160 = vmatprep.mubr.bf16.mxu0 0
      %3161 = vmatmul.mubr.bf16.gmra.mrb[0].mxu0 %v1421
      %v3162 = vpop.f32.mrb[0].mxu0
      %v3163 = vadd.f32 0.0, %v3162
      %v3164 = vpop.f32.mrb[0].mxu0
      %v3165 = vpop.f32.mrb[0].mxu0
      %v3166 = vadd.f32 0.0, %v3165
      %v3167 = vpop.f32.mrb[0].mxu0
      %3168 = vmatprep.mubr.bf16.mxu0 0
      %3169 = vmatmul.mubr.bf16.gmra.mrb[0].mxu0 %v1424
      %v3170 = vpop.f32.mrb[0].mxu0
      %v3171 = vadd.f32 0.0, %v3170
      %v3172 = vpop.f32.mrb[0].mxu0
      %v3173 = vpop.f32.mrb[0].mxu0
      %v3174 = vadd.f32 0.0, %v3173
      %v3175 = vpop.f32.mrb[0].mxu0
      %3176 = vmatprep.mubr.bf16.mxu0 0
      %3177 = vmatmul.mubr.bf16.gmra.mrb[0].mxu0 %v1427
      %v3178 = vpop.f32.mrb[0].mxu0
      %v3179 = vadd.f32 0.0, %v3178
      %v3180 = vpop.f32.mrb[0].mxu0
      %v3181 = vpop.f32.mrb[0].mxu0
      %v3182 = vadd.f32 0.0, %v3181
      %v3183 = vpop.f32.mrb[0].mxu0
      %3184 = vmatprep.mubr.bf16.mxu0 0
      %3185 = vmatmul.mubr.bf16.gmra.mrb[0].mxu0 %v1430
      %v3186 = vpop.f32.mrb[0].mxu0
      %v3187 = vadd.f32 0.0, %v3186
      %v3188 = vpop.f32.mrb[0].mxu0
      %v3189 = vpop.f32.mrb[0].mxu0
      %v3190 = vadd.f32 0.0, %v3189
      %v3191 = vpop.f32.mrb[0].mxu0
      %3192 = vmatprep.mubr.bf16.mxu0 0
      %3193 = vmatmul.mubr.bf16.gmra.mrb[0].mxu0 %v1433
      %v3194 = vpop.f32.mrb[0].mxu0
      %v3195 = vadd.f32 0.0, %v3194
      %v3196 = vpop.f32.mrb[0].mxu0
      %v3197 = vpop.f32.mrb[0].mxu0
      %v3198 = vadd.f32 0.0, %v3197
      %v3199 = vpop.f32.mrb[0].mxu0
      %3200 = vmatprep.mubr.bf16.mxu0 0
      %3201 = vmatmul.mubr.bf16.gmra.mrb[0].mxu0 %v1436
      %v3202 = vpop.f32.mrb[0].mxu0
      %v3203 = vadd.f32 0.0, %v3202
      %v3204 = vpop.f32.mrb[0].mxu0
      %v3205 = vpop.f32.mrb[0].mxu0
      %v3206 = vadd.f32 0.0, %v3205
      %v3207 = vpop.f32.mrb[0].mxu0
      %3208 = vmatprep.mubr.bf16.mxu0 0
      %3209 = vmatmul.mubr.bf16.gmra.mrb[0].mxu0 %v1439
      %v3210 = vpop.f32.mrb[0].mxu0
      %v3211 = vadd.f32 0.0, %v3210
      %v3212 = vpop.f32.mrb[0].mxu0
      %v3213 = vpop.f32.mrb[0].mxu0
      %v3214 = vadd.f32 0.0, %v3213
      %v3215 = vpop.f32.mrb[0].mxu0
      %3216 = vmatprep.mubr.bf16.mxu0 0
      %3217 = vmatmul.mubr.bf16.gmra.mrb[0].mxu0 %v1442
      %v3218 = vpop.f32.mrb[0].mxu0
      %v3219 = vadd.f32 0.0, %v3218
      %v3220 = vpop.f32.mrb[0].mxu0
      %v3221 = vpop.f32.mrb[0].mxu0
      %v3222 = vadd.f32 0.0, %v3221
      %v3223 = vpop.f32.mrb[0].mxu0
      %3224 = vmatprep.mubr.bf16.mxu0 0
      %3225 = vmatmul.mubr.bf16.gmra.mrb[0].mxu0 %v1445
      %v3226 = vpop.f32.mrb[0].mxu0
      %v3227 = vadd.f32 0.0, %v3226
      %v3228 = vpop.f32.mrb[0].mxu0
      %v3229 = vpop.f32.mrb[0].mxu0
      %v3230 = vadd.f32 0.0, %v3229
      %v3231 = vpop.f32.mrb[0].mxu0
      %3232 = vmatprep.mubr.bf16.mxu0 0
      %3233 = vmatmul.mubr.bf16.gmra.mrb[0].mxu0 %v1448
      %v3234 = vpop.f32.mrb[0].mxu0
      %v3235 = vadd.f32 0.0, %v3234
      %v3236 = vpop.f32.mrb[0].mxu0
      %v3237 = vpop.f32.mrb[0].mxu0
      %v3238 = vadd.f32 0.0, %v3237
      %v3239 = vpop.f32.mrb[0].mxu0
      %3240 = vmatprep.mubr.bf16.mxu0 0
      %3241 = vmatmul.mubr.bf16.gmra.mrb[0].mxu0 %v1451
      %v3242 = vpop.f32.mrb[0].mxu0
      %v3243 = vadd.f32 0.0, %v3242
      %v3244 = vpop.f32.mrb[0].mxu0
      %v3245 = vpop.f32.mrb[0].mxu0
      %v3246 = vadd.f32 0.0, %v3245
      %v3247 = vpop.f32.mrb[0].mxu0
      %3248 = vmatprep.mubr.bf16.mxu0 0
      %3249 = vmatmul.mubr.bf16.gmra.mrb[0].mxu0 %v1454
      %v3250 = vpop.f32.mrb[0].mxu0
      %v3251 = vadd.f32 0.0, %v3250
      %v3252 = vpop.f32.mrb[0].mxu0
      %v3253 = vpop.f32.mrb[0].mxu0
      %v3254 = vadd.f32 0.0, %v3253
      %v3255 = vpop.f32.mrb[0].mxu0
      %3256 = vmatprep.mubr.bf16.mxu0 0
      %3257 = vmatmul.mubr.bf16.gmra.mrb[0].mxu0 %v1457
      %v3258 = vpop.f32.mrb[0].mxu0
      %v3259 = vadd.f32 0.0, %v3258
      %v3260 = vpop.f32.mrb[0].mxu0
      %v3261 = vpop.f32.mrb[0].mxu0
      %v3262 = vadd.f32 0.0, %v3261
      %v3263 = vpop.f32.mrb[0].mxu0
      %3264 = vmatprep.mubr.bf16.mxu0 0
      %3265 = vmatmul.mubr.bf16.gmra.mrb[0].mxu0 %v1460
      %v3266 = vpop.f32.mrb[0].mxu0
      %v3267 = vadd.f32 0.0, %v3266
      %v3268 = vpop.f32.mrb[0].mxu0
      %v3269 = vpop.f32.mrb[0].mxu0
      %v3270 = vadd.f32 0.0, %v3269
      %v3271 = vpop.f32.mrb[0].mxu0
      %3272 = vmatprep.mubr.bf16.mxu0 0
      %3273 = vmatmul.mubr.bf16.gmra.mrb[0].mxu0 %v2268
      %v3274 = vpop.f32.mrb[0].mxu0
      %v3275 = vadd.f32 0.0, %v3274
      %v3276 = vpop.f32.mrb[0].mxu0
      %v3277 = vpop.f32.mrb[0].mxu0
      %v3278 = vadd.f32 0.0, %v3277
      %v3279 = vpop.f32.mrb[0].mxu0
      %3280 = vmatprep.mubr.bf16.mxu0 0
      %3281 = vmatmul.mubr.bf16.gmra.mrb[0].mxu0 %v3061
      %v3282 = vpop.f32.mrb[0].mxu0
      %v3283 = vadd.f32 0.0, %v3282
      %v3284 = vpop.f32.mrb[0].mxu0
      %v3285 = vpop.f32.mrb[0].mxu0
      %v3286 = vadd.f32 0.0, %v3285
      %v3287 = vpop.f32.mrb[0].mxu0
      %3288 = vdwg.mxu0
      %v3289 = vadd.f32 %v3025, %v3163
      %v3290 = vadd.f32 %v3026, %v3166
      %v3291 = vadd.f32 %v3027, %v3171
      %v3292 = vadd.f32 %v3028, %v3174
      %v3293 = vadd.f32 %v3029, %v3179
      %v3294 = vadd.f32 %v3030, %v3182
      %v3295 = vadd.f32 %v3031, %v3187
      %v3296 = vadd.f32 %v3032, %v3190
      %v3297 = vadd.f32 %v3033, %v3195
      %v3298 = vadd.f32 %v3034, %v3198
      %v3299 = vadd.f32 %v3035, %v3203
      %v3300 = vadd.f32 %v3036, %v3206
      %v3301 = vadd.f32 %v3037, %v3211
      %v3302 = vadd.f32 %v3038, %v3214
      %v3303 = vadd.f32 %v3039, %v3219
      %v3304 = vadd.f32 %v3040, %v3222
      %v3305 = vadd.f32 %v3041, %v3227
      %v3306 = vadd.f32 %v3042, %v3230
      %v3307 = vadd.f32 %v3043, %v3235
      %v3308 = vadd.f32 %v3044, %v3238
      %v3309 = vadd.f32 %v3045, %v3243
      %v3310 = vadd.f32 %v3046, %v3246
      %v3311 = vadd.f32 %v3047, %v3251
      %v3312 = vadd.f32 %v3048, %v3254
      %v3313 = vadd.f32 %v3049, %v3259
      %v3314 = vadd.f32 %v3050, %v3262
      %v3315 = vadd.f32 %v3051, %v3267
      %v3316 = vadd.f32 %v3052, %v3270
      %v3317 = vadd.f32 %v3053, %v3275
      %v3318 = vadd.f32 %v3054, %v3278
      %v3319 = vadd.f32 %v3055, %v3283
      %v3320 = vadd.f32 %v3056, %v3286
      %v3321 = vld [vmem:[%s2] sm:$0x1]
      %v3323 = vlaneseq
      %v3324 = vshrl.u32 %v3323, 7
      %v3325 = vsub.s32 0, %v3324
      %v3326 = vrot.slane %v3321, %v3325
      %v3328 = vadd.f32 %v3289, %v3326
      %v3329 = vadd.f32 %v3290, %v3326
      %v3330 = vadd.f32 %v3291, %v3326
      %v3331 = vadd.f32 %v3292, %v3326
      %v3332 = vadd.f32 %v3293, %v3326
      %v3333 = vadd.f32 %v3294, %v3326
      %v3334 = vadd.f32 %v3295, %v3326
      %v3335 = vadd.f32 %v3296, %v3326
      %v3336 = vadd.f32 %v3297, %v3326
      %v3337 = vadd.f32 %v3298, %v3326
      %v3338 = vadd.f32 %v3299, %v3326
      %v3339 = vadd.f32 %v3300, %v3326
      %v3340 = vadd.f32 %v3301, %v3326
      %v3341 = vadd.f32 %v3302, %v3326
      %v3342 = vadd.f32 %v3303, %v3326
      %v3343 = vadd.f32 %v3304, %v3326
      %v3344 = vadd.f32 %v3305, %v3326
      %v3345 = vadd.f32 %v3306, %v3326
      %v3346 = vadd.f32 %v3307, %v3326
      %v3347 = vadd.f32 %v3308, %v3326
      %v3348 = vadd.f32 %v3309, %v3326
      %v3349 = vadd.f32 %v3310, %v3326
      %v3350 = vadd.f32 %v3311, %v3326
      %v3351 = vadd.f32 %v3312, %v3326
      %v3352 = vadd.f32 %v3313, %v3326
      %v3353 = vadd.f32 %v3314, %v3326
      %v3354 = vadd.f32 %v3315, %v3326
      %v3355 = vadd.f32 %v3316, %v3326
      %v3356 = vadd.f32 %v3317, %v3326
      %v3357 = vadd.f32 %v3318, %v3326
      %v3358 = vadd.f32 %v3319, %v3326
      %v3359 = vadd.f32 %v3320, %v3326
      %v3360 = vadd.f32 %v3328, %v3329
      %v3361 = vadd.f32 %v3360, %v3330
      %v3362 = vadd.f32 %v3361, %v3331
      %v3363 = vadd.f32 %v3362, %v3332
      %v3364 = vadd.f32 %v3363, %v3333
      %v3365 = vadd.f32 %v3364, %v3334
      %v3366 = vadd.f32 %v3365, %v3335
      %v3367 = vadd.f32 %v3366, %v3336
      %v3368 = vadd.f32 %v3367, %v3337
      %v3369 = vadd.f32 %v3368, %v3338
      %v3370 = vadd.f32 %v3369, %v3339
      %v3371 = vadd.f32 %v3370, %v3340
      %v3372 = vadd.f32 %v3371, %v3341
      %v3373 = vadd.f32 %v3372, %v3342
      %v3374 = vadd.f32 %v3373, %v3343
      %v3375 = vadd.f32 %v3374, %v3344
      %v3376 = vadd.f32 %v3375, %v3345
      %v3377 = vadd.f32 %v3376, %v3346
      %v3378 = vadd.f32 %v3377, %v3347
      %v3379 = vadd.f32 %v3378, %v3348
      %v3380 = vadd.f32 %v3379, %v3349
      %v3381 = vadd.f32 %v3380, %v3350
      %v3382 = vadd.f32 %v3381, %v3351
      %v3383 = vadd.f32 %v3382, %v3352
      %v3384 = vadd.f32 %v3383, %v3353
      %v3385 = vadd.f32 %v3384, %v3354
      %v3386 = vadd.f32 %v3385, %v3355
      %v3387 = vadd.f32 %v3386, %v3356
      %v3388 = vadd.f32 %v3387, %v3357
      %v3389 = vadd.f32 %v3388, %v3358
      %v3390 = vadd.f32 %v3389, %v3359
      %v3391 = vrot.slane %v3390, 4
      %v3392 = vadd.f32 %v3390, %v3391
      %v3393 = vrot.slane %v3392, 2
      %v3394 = vadd.f32 %v3392, %v3393
      %v3395 = vrot.slane %v3394, 1
      %v3396 = vadd.f32 %v3394, %v3395
      %3397 = vst [vmem:[%s317] sm:$0x1] %v3396
      %v3398 = vmul.f32 %v3328, %v3328
      %v3399 = vmul.f32 %v3329, %v3329
      %v3400 = vmul.f32 %v3330, %v3330
      %v3401 = vmul.f32 %v3331, %v3331
      %v3402 = vmul.f32 %v3332, %v3332
      %v3403 = vmul.f32 %v3333, %v3333
      %v3404 = vmul.f32 %v3334, %v3334
      %v3405 = vmul.f32 %v3335, %v3335
      %v3406 = vmul.f32 %v3336, %v3336
      %v3407 = vmul.f32 %v3337, %v3337
      %v3408 = vmul.f32 %v3338, %v3338
      %v3409 = vmul.f32 %v3339, %v3339
      %v3410 = vmul.f32 %v3340, %v3340
      %v3411 = vmul.f32 %v3341, %v3341
      %v3412 = vmul.f32 %v3342, %v3342
      %v3413 = vmul.f32 %v3343, %v3343
      %v3414 = vmul.f32 %v3344, %v3344
      %v3415 = vmul.f32 %v3345, %v3345
      %v3416 = vmul.f32 %v3346, %v3346
      %v3417 = vmul.f32 %v3347, %v3347
      %v3418 = vmul.f32 %v3348, %v3348
      %v3419 = vmul.f32 %v3349, %v3349
      %v3420 = vmul.f32 %v3350, %v3350
      %v3421 = vmul.f32 %v3351, %v3351
      %v3422 = vmul.f32 %v3352, %v3352
      %v3423 = vmul.f32 %v3353, %v3353
      %v3424 = vmul.f32 %v3354, %v3354
      %v3425 = vmul.f32 %v3355, %v3355
      %v3426 = vmul.f32 %v3356, %v3356
      %v3427 = vmul.f32 %v3357, %v3357
      %v3428 = vmul.f32 %v3358, %v3358
      %v3429 = vmul.f32 %v3359, %v3359
      %v3430 = vadd.f32 %v3398, %v3399
      %v3431 = vadd.f32 %v3430, %v3400
      %v3432 = vadd.f32 %v3431, %v3401
      %v3433 = vadd.f32 %v3432, %v3402
      %v3434 = vadd.f32 %v3433, %v3403
      %v3435 = vadd.f32 %v3434, %v3404
      %v3436 = vadd.f32 %v3435, %v3405
      %v3437 = vadd.f32 %v3436, %v3406
      %v3438 = vadd.f32 %v3437, %v3407
      %v3439 = vadd.f32 %v3438, %v3408
      %v3440 = vadd.f32 %v3439, %v3409
      %v3441 = vadd.f32 %v3440, %v3410
      %v3442 = vadd.f32 %v3441, %v3411
      %v3443 = vadd.f32 %v3442, %v3412
      %v3444 = vadd.f32 %v3443, %v3413
      %v3445 = vadd.f32 %v3444, %v3414
      %v3446 = vadd.f32 %v3445, %v3415
      %v3447 = vadd.f32 %v3446, %v3416
      %v3448 = vadd.f32 %v3447, %v3417
      %v3449 = vadd.f32 %v3448, %v3418
      %v3450 = vadd.f32 %v3449, %v3419
      %v3451 = vadd.f32 %v3450, %v3420
      %v3452 = vadd.f32 %v3451, %v3421
      %v3453 = vadd.f32 %v3452, %v3422
      %v3454 = vadd.f32 %v3453, %v3423
      %v3455 = vadd.f32 %v3454, %v3424
      %v3456 = vadd.f32 %v3455, %v3425
      %v3457 = vadd.f32 %v3456, %v3426
      %v3458 = vadd.f32 %v3457, %v3427
      %v3459 = vadd.f32 %v3458, %v3428
      %v3460 = vadd.f32 %v3459, %v3429
      %v3461 = vrot.slane %v3460, 4
      %v3462 = vadd.f32 %v3460, %v3461
      %v3463 = vrot.slane %v3462, 2
      %v3464 = vadd.f32 %v3462, %v3463
      %v3465 = vrot.slane %v3464, 1
      %v3466 = vadd.f32 %v3464, %v3465
      %3467 = vst [vmem:[%s317 + $0x1] sm:$0x1] %v3466
      %v3468 = vpack.c.bf16 %v3329, %v3328
      %v3469 = vpack.c.bf16 %v3331, %v3330
      %v3470 = vpack.c.bf16 %v3333, %v3332
      %v3471 = vpack.c.bf16 %v3335, %v3334
      %v3472 = vpack.c.bf16 %v3337, %v3336
      %v3473 = vpack.c.bf16 %v3339, %v3338
      %v3474 = vpack.c.bf16 %v3341, %v3340
      %v3475 = vpack.c.bf16 %v3343, %v3342
      %v3476 = vpack.c.bf16 %v3345, %v3344
      %v3477 = vpack.c.bf16 %v3347, %v3346
      %v3478 = vpack.c.bf16 %v3349, %v3348
      %v3479 = vpack.c.bf16 %v3351, %v3350
      %v3480 = vpack.c.bf16 %v3353, %v3352
      %v3481 = vpack.c.bf16 %v3355, %v3354
      %v3482 = vpack.c.bf16 %v3357, %v3356
      %v3483 = vpack.c.bf16 %v3359, %v3358
      %v3500 = vunpack.c.l.b16 %v3468
      %v3501 = vunpack.c.h.b16 %v3468
      %v3502 = vunpack.c.l.b16 %v3469
      %v3503 = vunpack.c.h.b16 %v3469
      %v3504 = vunpack.c.l.b16 %v3470
      %v3505 = vunpack.c.h.b16 %v3470
      %v3506 = vunpack.c.l.b16 %v3471
      %v3507 = vunpack.c.h.b16 %v3471
      %v3508 = vunpack.c.l.b16 %v3472
      %v3509 = vunpack.c.h.b16 %v3472
      %v3510 = vunpack.c.l.b16 %v3473
      %v3511 = vunpack.c.h.b16 %v3473
      %v3512 = vunpack.c.l.b16 %v3474
      %v3513 = vunpack.c.h.b16 %v3474
      %v3514 = vunpack.c.l.b16 %v3475
      %v3515 = vunpack.c.h.b16 %v3475
      %v3516 = vunpack.c.l.b16 %v3476
      %v3517 = vunpack.c.h.b16 %v3476
      %v3518 = vunpack.c.l.b16 %v3477
      %v3519 = vunpack.c.h.b16 %v3477
      %v3520 = vunpack.c.l.b16 %v3478
      %v3521 = vunpack.c.h.b16 %v3478
      %v3522 = vunpack.c.l.b16 %v3479
      %v3523 = vunpack.c.h.b16 %v3479
      %v3524 = vunpack.c.l.b16 %v3480
      %v3525 = vunpack.c.h.b16 %v3480
      %v3526 = vunpack.c.l.b16 %v3481
      %v3527 = vunpack.c.h.b16 %v3481
      %v3528 = vunpack.c.l.b16 %v3482
      %v3529 = vunpack.c.h.b16 %v3482
      %v3530 = vunpack.c.l.b16 %v3483
      %v3531 = vunpack.c.h.b16 %v3483
      %v3532 = vpack.c.b16 %v3500, %v3500
      %v3533 = vpack.c.b16 %v3501, %v3501
      %v3534 = vpack.c.b16 %v3502, %v3502
      %v3535 = vpack.c.b16 %v3503, %v3503
      %v3536 = vpack.c.b16 %v3504, %v3504
      %v3537 = vpack.c.b16 %v3505, %v3505
      %v3538 = vpack.c.b16 %v3506, %v3506
      %v3539 = vpack.c.b16 %v3507, %v3507
      %v3540 = vpack.c.b16 %v3508, %v3508
      %v3541 = vpack.c.b16 %v3509, %v3509
      %v3542 = vpack.c.b16 %v3510, %v3510
      %v3543 = vpack.c.b16 %v3511, %v3511
      %v3544 = vpack.c.b16 %v3512, %v3512
      %v3545 = vpack.c.b16 %v3513, %v3513
      %v3546 = vpack.c.b16 %v3514, %v3514
      %v3547 = vpack.c.b16 %v3515, %v3515
      %v3548 = vpack.c.b16 %v3516, %v3516
      %v3549 = vpack.c.b16 %v3517, %v3517
      %v3550 = vpack.c.b16 %v3518, %v3518
      %v3551 = vpack.c.b16 %v3519, %v3519
      %v3552 = vpack.c.b16 %v3520, %v3520
      %v3553 = vpack.c.b16 %v3521, %v3521
      %v3554 = vpack.c.b16 %v3522, %v3522
      %v3555 = vpack.c.b16 %v3523, %v3523
      %v3556 = vpack.c.b16 %v3524, %v3524
      %v3557 = vpack.c.b16 %v3525, %v3525
      %v3558 = vpack.c.b16 %v3526, %v3526
      %v3559 = vpack.c.b16 %v3527, %v3527
      %v3560 = vpack.c.b16 %v3528, %v3528
      %v3561 = vpack.c.b16 %v3529, %v3529
      %v3562 = vpack.c.b16 %v3530, %v3530
      %v3563 = vpack.c.b16 %v3531, %v3531
      %3596 = vst [vmem:[%s311] sm:$0xf] %v3532
      %3597 = vst [vmem:[%s311 + $0x4] sm:$0xf] %v3533
      %3598 = vst [vmem:[%s311 + $0x8] sm:$0xf] %v3534
      %3599 = vst [vmem:[%s311 + $0xc] sm:$0xf] %v3535
      %3600 = vst [vmem:[%s311 + $0x10] sm:$0xf] %v3536
      %3601 = vst [vmem:[%s311 + $0x14] sm:$0xf] %v3537
      %3602 = vst [vmem:[%s311 + $0x18] sm:$0xf] %v3538
      %3603 = vst [vmem:[%s311 + $0x1c] sm:$0xf] %v3539
      %3604 = vst [vmem:[%s311 + $0x20] sm:$0xf] %v3540
      %3605 = vst [vmem:[%s311 + $0x24] sm:$0xf] %v3541
      %3606 = vst [vmem:[%s311 + $0x28] sm:$0xf] %v3542
      %3607 = vst [vmem:[%s311 + $0x2c] sm:$0xf] %v3543
      %3608 = vst [vmem:[%s311 + $0x30] sm:$0xf] %v3544
      %3609 = vst [vmem:[%s311 + $0x34] sm:$0xf] %v3545
      %3610 = vst [vmem:[%s311 + $0x38] sm:$0xf] %v3546
      %3611 = vst [vmem:[%s311 + $0x3c] sm:$0xf] %v3547
      %3612 = vst [vmem:[%s311 + $0x40] sm:$0xf] %v3548
      %3613 = vst [vmem:[%s311 + $0x44] sm:$0xf] %v3549
      %3614 = vst [vmem:[%s311 + $0x48] sm:$0xf] %v3550
      %3615 = vst [vmem:[%s311 + $0x4c] sm:$0xf] %v3551
      %3616 = vst [vmem:[%s311 + $0x50] sm:$0xf] %v3552
      %3617 = vst [vmem:[%s311 + $0x54] sm:$0xf] %v3553
      %3618 = vst [vmem:[%s311 + $0x58] sm:$0xf] %v3554
      %3619 = vst [vmem:[%s311 + $0x5c] sm:$0xf] %v3555
      %3620 = vst [vmem:[%s311 + $0x60] sm:$0xf] %v3556
      %3621 = vst [vmem:[%s311 + $0x64] sm:$0xf] %v3557
      %3622 = vst [vmem:[%s311 + $0x68] sm:$0xf] %v3558
      %3623 = vst [vmem:[%s311 + $0x6c] sm:$0xf] %v3559
      %3624 = vst [vmem:[%s311 + $0x70] sm:$0xf] %v3560
      %3625 = vst [vmem:[%s311 + $0x74] sm:$0xf] %v3561
      %3626 = vst [vmem:[%s311 + $0x78] sm:$0xf] %v3562
      %3627 = vst [vmem:[%s311 + $0x7c] sm:$0xf] %v3563
      %s3628 = sadd.s32 %s23, %s24
      %p3629 = scmp.lt.s32.totalorder %s3628, 1
      %s3630 = scalar_select %p3629, %s3628, 1
      %s3631 = smul.addr %s3630, 32
      %s3632 = smul.addr %s3631, 4
      %s3633 = scalar_lea.vmem %s6, %s3632
      %s3634 = sadd.s32 %s23, %s24
      %p3635 = scmp.lt.s32.totalorder %s3634, 1
      %s3636 = scalar_select %p3635, %s3634, 1
      %s3637 = smul.addr %s3636, 8
      %s3638 = scalar_lea.vmem %s7, %s3637
      // Predicated region
      $region45: #{up_forward.5} parent=43 // pred_check
        %p3639 = pneg %p184
      $region46: #{up_forward.5} parent=43 // pred_check_branch
        %3641 = sbr.rel (%p3639) target = $region48
      $region47: #{up_forward.5} parent=43 // pred_region
        %s3642 = sadd.s32 %s23, %s24
      $region48: #{up_forward.5} parent=43 // pred_fallthru
        _
      // Predicated region
      $region49: #{up_forward.5} parent=43 // pred_check
        %p3643 = pneg %p212
      $region50: #{up_forward.5} parent=43 // pred_check_branch
        %3645 = sbr.rel (%p3643) target = $region52
      $region51: #{up_forward.5} parent=43 // pred_region
        %s3646 = sadd.s32 %s23, %s24
      $region52: #{up_forward.5} parent=43 // pred_fallthru
        _
    $region44: #{up_forward.5} parent=5 // pred_fallthru
      _
    %p3647 = scmp.le.s32.totalorder 2, %s14
    // Predicated region
    $region53: #{up_forward.5} parent=5 // pred_check
      %p3648 = pneg %p3647
    $region54: #{up_forward.5} parent=5 // pred_check_branch
      %3650 = sbr.rel (%p3648) target = $region56
    $region55: #{up_forward.5} parent=5 // pred_region
      %s3651 = ssub.s32 %s14, 2
      // Predicated region
      $region57: #{up_forward.5} parent=55 // pred_check
        %p3652 = pneg %p190
      $region58: #{up_forward.5} parent=55 // pred_check_branch
        %3654 = sbr.rel (%p3652) target = $region60
      $region59: #{up_forward.5} parent=55 // pred_region
        %s3655 = sadd.s32 %s25, %s26
        %p3656 = scmp.lt.s32.totalorder %s3655, 1
        %s3657 = scalar_select %p3656, %s3655, 1
        %s3658 = smul.addr %s3657, 32
        %s3659 = smul.addr %s3658, 4
        %s3660 = scalar_lea.vmem %s6, %s3659
      $region60: #{up_forward.5} parent=55 // pred_fallthru
        _
      // Predicated region
      $region61: #{up_forward.5} parent=55 // pred_check
        %p3661 = pneg %p218
      $region62: #{up_forward.5} parent=55 // pred_check_branch
        %3663 = sbr.rel (%p3661) target = $region64
      $region63: #{up_forward.5} parent=55 // pred_region
        %s3664 = sadd.s32 %s25, %s26
        %p3665 = scmp.lt.s32.totalorder %s3664, 1
        %s3666 = scalar_select %p3665, %s3664, 1
        %s3667 = smul.addr %s3666, 8
        %s3668 = scalar_lea.vmem %s7, %s3667
      $region64: #{up_forward.5} parent=55 // pred_fallthru
        _
    $region56: #{up_forward.5} parent=5 // pred_fallthru
      _
  $region6: #{up_forward.5} parent=0 // loop_footer
    %s18 = sadd.s32 1, %s14
  $region7: #{up_forward.5} parent=0 // loop_footer_branch
    %13 = sbr.rel target = $region3
  $region8: #{up_forward.5} parent=0 // loop_exit
    _

</llo_original>
